<compile_context>
chip_gen: v7x
topology: tpu7x:2x2x1
jax: 0.10.0
libtpu: 0.0.40
codegen_flags: <defaults>
</compile_context>

<pallas_src>
import math
from functools import partial

import jax
import jax.numpy as jnp
from jax.experimental import pallas as pl
from jax.experimental.pallas import tpu as pltpu


# ------------------------------ fused decoder kernel ------------------------------

def _layernorm(x, gamma, beta, eps=1e-5):
    # PyTorch nn.LayerNorm semantics (eps=1e-5), f32 math.
    mu = jnp.mean(x, axis=-1, keepdims=True)
    var = jnp.mean(jnp.square(x - mu), axis=-1, keepdims=True)
    return (x - mu) * jax.lax.rsqrt(var + eps) * gamma + beta


def _decoder_stack_kernel(
        # inputs
        x0_ref, mem_ref, mask_ref,
        wqkv_ref, bqkv_ref, wos_ref, bos_ref,
        wvc_ref, bvc_ref, woc_ref, boc_ref,
        w1_ref, b1_ref, w2_ref, b2_ref, ln_ref,
        ow_ref, ob_ref,
        # outputs
        logits_ref,
        # scratch (persists across the layer axis; per-core on megacore)
        x_sc,
        *, num_heads, seq):
    layer = pl.program_id(1)
    n_layers = pl.num_programs(1)
    BS, E = x_sc.shape            # rows of this batch block (= Bblk * seq), model width
    Bb = BS // seq
    H = num_heads
    Dh = E // H
    scale = 1.0 / math.sqrt(Dh)
    bf16, f32 = jnp.bfloat16, jnp.float32

    # NOTE: this layer==0 init MUST precede the unconditional x_sc read below.  Pallas stateful
    # semantics preserve program order; do not hoist the read above it when refactoring.
    @pl.when(layer == 0)
    def _init():
        x_sc[...] = x0_ref[...]

    x = x_sc[...]                 # [BS, E] f32, resident activation
    mask = mask_ref[...]          # [S, S] additive causal mask

    # ------------- masked multi-head self-attention (fused QKV, batched over (b, h)) -------------
    qkv = (jnp.dot(x.astype(bf16), wqkv_ref[...], preferred_element_type=f32)
           + bqkv_ref[...])                              # [BS, 3E]
    q, k, v = qkv[:, 0:E], qkv[:, E:2 * E], qkv[:, 2 * E:3 * E]   # aligned 128-lane slices

    def to_heads(t):              # [BS, E] -> [Bb*H, S, Dh]  (single relayout per tensor)
        t4 = t.reshape(Bb, seq, H, Dh)
        return jnp.transpose(t4, (0, 2, 1, 3)).reshape(Bb * H, seq, Dh)

    qh, kh, vh = to_heads(q), to_heads(k), to_heads(v)
    s = jnp.einsum("bqd,bkd->bqk", qh, kh, preferred_element_type=f32) * scale   # [Bb*H, S, S]
    s = s + mask[None, :, :]
    s = s - jnp.max(s, axis=-1, keepdims=True)
    p = jnp.exp(s)
    # approx reciprocal lives on the EUP slot (nearly free); tiny deviation from exact softmax.
    p = p * pl.reciprocal(jnp.sum(p, axis=-1, keepdims=True), approx=True)
    o = jnp.einsum("bqk,bkd->bqd", p, vh, preferred_element_type=f32)            # [Bb*H, S, Dh]
    # merge heads (contiguous along lanes) and apply the full Wo in ONE matmul (bf16 weight)
    o = jnp.transpose(o.reshape(Bb, H, seq, Dh), (0, 2, 1, 3)).reshape(BS, E)
    sa = (jnp.dot(o.astype(bf16), wos_ref[...], preferred_element_type=f32) + bos_ref[...])
    x = _layernorm(x + sa, ln_ref[0:1, :], ln_ref[1:2, :])

    # ---- cross-attention: memory length == 1, no mask => softmax == 1 => out_proj(v_proj(mem)) ----
    # mem_ref already holds graph_projection(graph_encoding) broadcast over seq, in bf16.
    mem_v = (jnp.dot(mem_ref[...], wvc_ref[...], preferred_element_type=f32) + bvc_ref[...])
    ca = (jnp.dot(mem_v.astype(bf16), woc_ref[...], preferred_element_type=f32) + boc_ref[...])
    x = _layernorm(x + ca, ln_ref[2:3, :], ln_ref[3:4, :])

    # ---------------------------------- feed-forward (ReLU) ----------------------------------
    h1 = jnp.maximum(
        jnp.dot(x.astype(bf16), w1_ref[...], preferred_element_type=f32) + b1_ref[...], 0.0)
    ff = (jnp.dot(h1.astype(bf16), w2_ref[...], preferred_element_type=f32) + b2_ref[...])
    x = _layernorm(x + ff, ln_ref[4:5, :], ln_ref[5:6, :])

    # residual stream kept in f32 (intentional: residual / LayerNorm precision); matmul inputs
    # are cast to bf16 at each use site.
    x_sc[...] = x

    @pl.when(layer == n_layers - 1)
    def _final():
        # output projection folded into the last layer; only lane-dense [BS, vocab] hits HBM
        logits_ref[...] = (jnp.dot(x.astype(bf16), ow_ref[...], preferred_element_type=f32)
                           + ob_ref[...])


@partial(jax.jit, static_argnames=("num_heads", "batch_blocks"))
def decoder_forward(params, graph_encoding, target, target_mask, *, num_heads, batch_blocks=1):
    """graph_encoding: [B, input_dim] f32, target: [B, S] int32, target_mask: [S, S] additive."""
    B, S = target.shape
    E = params["embedding"].shape[1]
    V = params["out_w"].shape[1]
    L, _, dff = params["w1"].shape
    BS = B * S
    assert B % batch_blocks == 0
    Bblk = B // batch_blocks
    BSblk = Bblk * S

    # TODO(synk): embedding gather + positional-encoding add kept in plain JAX (irregular integer
    # gather has no clean BlockSpec path).  Dropout is identity (eval mode).
    x0 = (params["embedding"][target] + params["pe"][:S][None, :, :]).reshape(BS, E)

    # graph_projection is a one-shot [B,In]@[In,E] matmul: done here (XLA) instead of keeping
    # graph_w/graph_b + a [B,E] scratch resident in VMEM across the whole layer grid.  Broadcast
    # over seq so the kernel's cross-attention block is a plain per-row matmul.
    mem = graph_encoding @ params["graph_w"] + params["graph_b"]                 # [B, E] f32
    mem_bs = jnp.broadcast_to(mem[:, None, :], (B, S, E)).reshape(BS, E).astype(jnp.bfloat16)

    xmap = lambda b, l: (b, 0)        # per-batch-block operands (constant across layers)
    cmap = lambda b, l: (0, 0)        # fully shared operands
    lmap = lambda b, l: (l, 0, 0)     # per-layer stacked weights, streamed (double-buffered)

    # v5e option if weight DMA is exposed: pass pipeline_mode=pl.Buffered(3) on wqkv/w1/w2 specs.
    logits = pl.pallas_call(
        partial(_decoder_stack_kernel, num_heads=num_heads, seq=S),
        out_shape=jax.ShapeDtypeStruct((BS, V), jnp.float32),
        grid=(batch_blocks, L),
        in_specs=[
            pl.BlockSpec((BSblk, E), xmap),             # x0 (embedded + pos-enc)
            pl.BlockSpec((BSblk, E), xmap),             # projected memory, broadcast, bf16
            pl.BlockSpec((S, S), cmap),                 # causal mask
            pl.BlockSpec((None, E, 3 * E), lmap),       # wqkv      (bf16, fused Q|K|V)
            pl.BlockSpec((None, 1, 3 * E), lmap),       # bqkv
            pl.BlockSpec((None, E, E), lmap),           # wo_self   (bf16)
            pl.BlockSpec((None, 1, E), lmap),           # bo_self
            pl.BlockSpec((None, E, E), lmap),           # wv_cross  (bf16)
            pl.BlockSpec((None, 1, E), lmap),           # bv_cross
            pl.BlockSpec((None, E, E), lmap),           # wo_cross  (bf16)
            pl.BlockSpec((None, 1, E), lmap),           # bo_cross
            pl.BlockSpec((None, E, dff), lmap),         # w1        (bf16)
            pl.BlockSpec((None, 1, dff), lmap),         # b1
            pl.BlockSpec((None, dff, E), lmap),         # w2        (bf16)
            pl.BlockSpec((None, 1, E), lmap),           # b2
            pl.BlockSpec((None, 6, E), lmap),           # layernorm [g1,b1,g2,b2,g3,b3]
            pl.BlockSpec((E, V), cmap),                 # out_w     (bf16)
            pl.BlockSpec((1, V), cmap),                 # out_b
        ],
        out_specs=pl.BlockSpec((BSblk, V), xmap),
        scratch_shapes=[
            pltpu.VMEM((BSblk, E), jnp.float32),        # resident activation (per batch block)
        ],
        compiler_params=pltpu.CompilerParams(
            # batch blocks are independent -> "parallel" (megacore split on v7x);
            # layers carry the activation scratch -> "arbitrary" (sequential).
            dimension_semantics=("parallel", "arbitrary"),
            # 48 MB fits under v7x's 64 MiB physical VMEM with headroom; raise toward 100-120 MB
            # on v6e when E/dff scale up.
            vmem_limit_bytes=48 * 1024 * 1024),
    )(x0, mem_bs, target_mask,
      params["wqkv"], params["bqkv"], params["wo_s"], params["bo_s"],
      params["wv_c"], params["bv_c"], params["wo_c"], params["bo_c"],
      params["w1"], params["b1"], params["w2"], params["b2"], params["ln"],
      params["out_w"], params["out_b"])
    return logits.reshape(B, S, V)


# --------------------------- parameter construction (plain JAX) -------------------------

def _xavier(key, shape):
    fan_in, fan_out = shape
    bound = math.sqrt(6.0 / (fan_in + fan_out))
    return jax.random.uniform(key, shape, jnp.float32, -bound, bound)


def make_positional_encoding(max_len, d_model):
    pos = jnp.arange(max_len, dtype=jnp.float32)[:, None]
    div = jnp.exp(jnp.arange(0, d_model, 2, dtype=jnp.float32)
                  * (-math.log(10000.0) / d_model))
    pe_sin = jnp.sin(pos * div)
    pe_cos = jnp.cos(pos * div)
    # interleave -> pe[:, 0::2] = sin, pe[:, 1::2] = cos
    return jnp.stack([pe_sin, pe_cos], axis=-1).reshape(max_len, d_model)


def init_params(key, *, input_dim, hidden_dim, vocab_size, max_length, num_layers, dff):
    E = hidden_dim
    keys = jax.random.split(key, 3 + num_layers)
    params = {
        "embedding": _xavier(keys[0], (vocab_size, E)),
        "graph_w": _xavier(keys[1], (input_dim, E)),                # f32 (used in the wrapper)
        "graph_b": jnp.zeros((1, E), jnp.float32),
        "out_w": _xavier(keys[2], (E, vocab_size)).astype(jnp.bfloat16),
        "out_b": jnp.zeros((1, vocab_size), jnp.float32),
        "pe": make_positional_encoding(max_length, E),
    }
    wqkv, wos, wvc, woc, w1, w2 = [], [], [], [], [], []
    for l in range(num_layers):
        lk = jax.random.split(keys[3 + l], 8)
        wq, wk, wv = _xavier(lk[0], (E, E)), _xavier(lk[1], (E, E)), _xavier(lk[2], (E, E))
        wqkv.append(jnp.concatenate([wq, wk, wv], axis=1))          # fused Q|K|V: [E, 3E]
        wos.append(_xavier(lk[3], (E, E)))
        wvc.append(_xavier(lk[4], (E, E)))
        woc.append(_xavier(lk[5], (E, E)))
        w1.append(_xavier(lk[6], (E, dff)))
        w2.append(_xavier(lk[7], (dff, E)))
    L = num_layers
    params.update({
        "wqkv": jnp.stack(wqkv).astype(jnp.bfloat16),               # [L, E, 3E]
        "bqkv": jnp.zeros((L, 1, 3 * E), jnp.float32),
        "wo_s": jnp.stack(wos).astype(jnp.bfloat16),                # [L, E, E]  (now bf16)
        "bo_s": jnp.zeros((L, 1, E), jnp.float32),
        "wv_c": jnp.stack(wvc).astype(jnp.bfloat16),                # [L, E, E]
        "bv_c": jnp.zeros((L, 1, E), jnp.float32),
        "wo_c": jnp.stack(woc).astype(jnp.bfloat16),                # [L, E, E]
        "bo_c": jnp.zeros((L, 1, E), jnp.float32),
        "w1": jnp.stack(w1).astype(jnp.bfloat16),                   # [L, E, dff]
        "b1": jnp.zeros((L, 1, dff), jnp.float32),
        "w2": jnp.stack(w2).astype(jnp.bfloat16),                   # [L, dff, E]
        "b2": jnp.zeros((L, 1, E), jnp.float32),
        # LayerNorm params packed by rows: [g1, b1, g2, b2, g3, b3]
        "ln": jnp.tile(jnp.array([1., 0., 1., 0., 1., 0.], jnp.float32)[None, :, None],
                       (L, 1, E)),
    })
    return params


# --------------------------------------- main ---------------------------------------

if __name__ == "__main__":
    # Small shapes consistent with the module (num_heads=8, dff=2048 are hardcoded there).
    # hidden_dim = 128 keeps every tile lane-dense (128-lane width).
    B, S = 2, 8
    input_dim, hidden_dim, vocab_size, max_length = 64, 128, 128, 16
    num_layers, num_heads, dff = 2, 8, 2048

    key = jax.random.PRNGKey(0)
    kp, kg, kt = jax.random.split(key, 3)

    params = init_params(kp, input_dim=input_dim, hidden_dim=hidden_dim,
                         vocab_size=vocab_size, max_length=max_length,
                         num_layers=num_layers, dff=dff)

    graph_encoding = jax.random.normal(kg, (B, input_dim), jnp.float32)
    target = jax.random.randint(kt, (B, S), 0, vocab_size, dtype=jnp.int32)
    # causal mask, same semantics as nn.Transformer.generate_square_subsequent_mask
    target_mask = jnp.where(jnp.triu(jnp.ones((S, S), bool), k=1), -1e30, 0.0).astype(jnp.float32)

    # batch_blocks=2 exercises the "parallel" batch axis (v7x megacore); use 1 on v5e/v6e to
    # avoid re-streaming the per-layer weights.
    logits = decoder_forward(params, graph_encoding, target, target_mask,
                             num_heads=num_heads, batch_blocks=2)
    jax.block_until_ready(logits)

    assert logits.shape == (B, S, vocab_size), logits.shape
    assert bool(jnp.all(jnp.isfinite(logits)))
    print("KERNEL_OK")
</pallas_src>

<mosaic_0001>
module attributes {stable_mosaic.version = 11 : i64} {
  func.func @_decoder_stack_kernel(%arg0: i32, %arg1: i32, %arg2: memref<8x128xf32, #tpu.memory_space<vmem>>, %arg3: memref<8x128xbf16, #tpu.memory_space<vmem>>, %arg4: memref<8x8xf32, #tpu.memory_space<vmem>>, %arg5: memref<1x128x384xbf16, #tpu.memory_space<vmem>>, %arg6: memref<1x1x384xf32, #tpu.memory_space<vmem>>, %arg7: memref<1x128x128xbf16, #tpu.memory_space<vmem>>, %arg8: memref<1x1x128xf32, #tpu.memory_space<vmem>>, %arg9: memref<1x128x128xbf16, #tpu.memory_space<vmem>>, %arg10: memref<1x1x128xf32, #tpu.memory_space<vmem>>, %arg11: memref<1x128x128xbf16, #tpu.memory_space<vmem>>, %arg12: memref<1x1x128xf32, #tpu.memory_space<vmem>>, %arg13: memref<1x128x2048xbf16, #tpu.memory_space<vmem>>, %arg14: memref<1x1x2048xf32, #tpu.memory_space<vmem>>, %arg15: memref<1x2048x128xbf16, #tpu.memory_space<vmem>>, %arg16: memref<1x1x128xf32, #tpu.memory_space<vmem>>, %arg17: memref<1x6x128xf32, #tpu.memory_space<vmem>>, %arg18: memref<128x128xbf16, #tpu.memory_space<vmem>>, %arg19: memref<1x128xf32, #tpu.memory_space<vmem>>, %arg20: memref<8x128xf32, #tpu.memory_space<vmem>>, %arg21: memref<8x128xf32, #tpu.memory_space<vmem>>) attributes {dimension_semantics = [#tpu.dimension_semantics<parallel>, #tpu.dimension_semantics<arbitrary>], iteration_bounds = array<i64: 2, 2>, scalar_prefetch = 0 : i64, scratch_operands = 1 : i64, tpu.core_type = #tpu.core_type<tc>, window_params = [{transform_indices = @transform_0, window_bounds = array<i64: 8, 128>}, {transform_indices = @transform_1, window_bounds = array<i64: 8, 128>}, {pipeline_mode = #tpu.pipeline_mode<synchronous>, transform_indices = @transform_2, window_bounds = array<i64: 8, 8>}, {transform_indices = @transform_3, window_bounds = array<i64: 1, 128, 384>}, {transform_indices = @transform_4, window_bounds = array<i64: 1, 1, 384>}, {transform_indices = @transform_5, window_bounds = array<i64: 1, 128, 128>}, {transform_indices = @transform_6, window_bounds = array<i64: 1, 1, 128>}, {transform_indices = @transform_7, window_bounds = array<i64: 1, 128, 128>}, {transform_indices = @transform_8, window_bounds = array<i64: 1, 1, 128>}, {transform_indices = @transform_9, window_bounds = array<i64: 1, 128, 128>}, {transform_indices = @transform_10, window_bounds = array<i64: 1, 1, 128>}, {transform_indices = @transform_11, window_bounds = array<i64: 1, 128, 2048>}, {transform_indices = @transform_12, window_bounds = array<i64: 1, 1, 2048>}, {transform_indices = @transform_13, window_bounds = array<i64: 1, 2048, 128>}, {transform_indices = @transform_14, window_bounds = array<i64: 1, 1, 128>}, {transform_indices = @transform_15, window_bounds = array<i64: 1, 6, 128>}, {pipeline_mode = #tpu.pipeline_mode<synchronous>, transform_indices = @transform_16, window_bounds = array<i64: 128, 128>}, {pipeline_mode = #tpu.pipeline_mode<synchronous>, transform_indices = @transform_17, window_bounds = array<i64: 1, 128>}, {transform_indices = @transform_18, window_bounds = array<i64: 8, 128>}]} {
    %c0_i32 = arith.constant 0 : i32
    %0 = arith.cmpi eq, %arg1, %c0_i32 : i32
    %1 = arith.extui %0 : i1 to i32
    %c0_i32_0 = arith.constant 0 : i32
    %2 = arith.cmpi ne, %1, %c0_i32_0 : i32
    scf.if %2 {
      %c0_84 = arith.constant 0 : index
      %c0_85 = arith.constant 0 : index
      %172 = vector.load %arg2[%c0_84, %c0_85] : memref<8x128xf32, #tpu.memory_space<vmem>>, vector<8x128xf32>
      %c0_86 = arith.constant 0 : index
      %c0_87 = arith.constant 0 : index
      %173 = vector.load %arg21[%c0_86, %c0_87] : memref<8x128xf32, #tpu.memory_space<vmem>>, vector<8x128xf32>
      tpu.vector_store %arg21[%c0_86, %c0_87], %172 {strides = array<i32>} : memref<8x128xf32, #tpu.memory_space<vmem>>, vector<8x128xf32>,
    } else {
    }
    %c0 = arith.constant 0 : index
    %c0_1 = arith.constant 0 : index
    %3 = vector.load %arg21[%c0, %c0_1] : memref<8x128xf32, #tpu.memory_space<vmem>>, vector<8x128xf32>
    %c0_2 = arith.constant 0 : index
    %c0_3 = arith.constant 0 : index
    %4 = vector.load %arg4[%c0_2, %c0_3] : memref<8x8xf32, #tpu.memory_space<vmem>>, vector<8x8xf32>
    %5 = arith.truncf %3 : vector<8x128xf32> to vector<8x128xbf16>
    %c0_4 = arith.constant 0 : index
    %c0_5 = arith.constant 0 : index
    %c0_6 = arith.constant 0 : index
    %6 = vector.load %arg5[%c0_4, %c0_5, %c0_6] : memref<1x128x384xbf16, #tpu.memory_space<vmem>>, vector<1x128x384xbf16>
    %7 = vector.shape_cast %6 : vector<1x128x384xbf16> to vector<128x384xbf16>
    %cst = arith.constant dense<0.000000e+00> : vector<8x384xf32>
    %8 = tpu.matmul %5, %7, %cst {dimension_numbers = #tpu.dot_dimension_numbers<[1], [0], [0], [1], [0, 0, 1, 1], [], []>} : vector<8x128xbf16>, vector<128x384xbf16>, vector<8x384xf32> -> vector<8x384xf32>
    %c0_7 = arith.constant 0 : index
    %c0_8 = arith.constant 0 : index
    %c0_9 = arith.constant 0 : index
    %9 = vector.load %arg6[%c0_7, %c0_8, %c0_9] : memref<1x1x384xf32, #tpu.memory_space<vmem>>, vector<1x1x384xf32>
    %10 = vector.shape_cast %9 : vector<1x1x384xf32> to vector<1x384xf32>
    %11 = vector.broadcast %10 : vector<1x384xf32> to vector<8x384xf32>
    %12 = arith.addf %8, %11 : vector<8x384xf32>
    %13 = vector.extract_strided_slice %12 {offsets = [0, 0], sizes = [8, 128], strides = [1, 1]} : vector<8x384xf32> to vector<8x128xf32>
    %14 = vector.extract_strided_slice %12 {offsets = [0, 128], sizes = [8, 128], strides = [1, 1]} : vector<8x384xf32> to vector<8x128xf32>
    %15 = vector.extract_strided_slice %12 {offsets = [0, 256], sizes = [8, 128], strides = [1, 1]} : vector<8x384xf32> to vector<8x128xf32>
    %16 = vector.shape_cast %13 : vector<8x128xf32> to vector<1x8x8x16xf32>
    %17 = tpu.transpose %16, [0, 2, 1, 3] : vector<1x8x8x16xf32> -> vector<1x8x8x16xf32>
    %18 = vector.shape_cast %17 : vector<1x8x8x16xf32> to vector<8x8x16xf32>
    %19 = vector.shape_cast %14 : vector<8x128xf32> to vector<1x8x8x16xf32>
    %20 = tpu.transpose %19, [0, 2, 1, 3] : vector<1x8x8x16xf32> -> vector<1x8x8x16xf32>
    %21 = vector.shape_cast %20 : vector<1x8x8x16xf32> to vector<8x8x16xf32>
    %22 = vector.shape_cast %15 : vector<8x128xf32> to vector<1x8x8x16xf32>
    %23 = tpu.transpose %22, [0, 2, 1, 3] : vector<1x8x8x16xf32> -> vector<1x8x8x16xf32>
    %24 = vector.shape_cast %23 : vector<1x8x8x16xf32> to vector<8x8x16xf32>
    "tpu.trace_start"() <{level = 10 : i32, message = "bqd,bkd->bqk"}> : () -> ()
    %cst_10 = arith.constant dense<0.000000e+00> : vector<8x8x8xf32>
    %25 = tpu.matmul %18, %21, %cst_10 {dimension_numbers = #tpu.dot_dimension_numbers<[2], [2], [1], [1], [0, 0, 0, 1, 1, 1], [0], [0]>} : vector<8x8x16xf32>, vector<8x8x16xf32>, vector<8x8x8xf32> -> vector<8x8x8xf32>
    "tpu.trace_stop"() : () -> ()
    %cst_11 = arith.constant 2.500000e-01 : f32
    %26 = vector.broadcast %cst_11 : f32 to vector<8x8x8xf32>
    %27 = arith.mulf %25, %26 : vector<8x8x8xf32>
    %28 = vector.shape_cast %4 : vector<8x8xf32> to vector<1x8x8xf32>
    %29 = vector.broadcast %28 : vector<1x8x8xf32> to vector<8x8x8xf32>
    %30 = arith.addf %27, %29 : vector<8x8x8xf32>
    %cst_12 = arith.constant dense<0xFF800000> : vector<8x8xf32>
    %31 = vector.multi_reduction <maximumf>, %30, %cst_12 [2] : vector<8x8x8xf32> to vector<8x8xf32>
    %32 = vector.shape_cast %31 : vector<8x8xf32> to vector<8x8x1xf32>
    %33 = vector.broadcast %32 : vector<8x8x1xf32> to vector<8x8x8xf32>
    %34 = arith.subf %30, %33 : vector<8x8x8xf32>
    %35 = math.exp %34 : vector<8x8x8xf32>
    %cst_13 = arith.constant dense<0.000000e+00> : vector<8x8xf32>
    %36 = vector.multi_reduction <add>, %35, %cst_13 [2] : vector<8x8x8xf32> to vector<8x8xf32>
    %37 = vector.shape_cast %36 : vector<8x8xf32> to vector<8x8x1xf32>
    %38 = tpu.reciprocal %37 {approx = true} : vector<8x8x1xf32> -> vector<8x8x1xf32>
    %39 = vector.broadcast %38 : vector<8x8x1xf32> to vector<8x8x8xf32>
    %40 = arith.mulf %35, %39 : vector<8x8x8xf32>
    "tpu.trace_start"() <{level = 10 : i32, message = "bqk,bkd->bqd"}> : () -> ()
    %cst_14 = arith.constant dense<0.000000e+00> : vector<8x8x16xf32>
    %41 = tpu.matmul %40, %24, %cst_14 {dimension_numbers = #tpu.dot_dimension_numbers<[2], [1], [1], [2], [0, 0, 0, 1, 1, 2], [0], [0]>} : vector<8x8x8xf32>, vector<8x8x16xf32>, vector<8x8x16xf32> -> vector<8x8x16xf32>
    "tpu.trace_stop"() : () -> ()
    %42 = vector.shape_cast %41 : vector<8x8x16xf32> to vector<1x8x8x16xf32>
    %43 = tpu.transpose %42, [0, 2, 1, 3] : vector<1x8x8x16xf32> -> vector<1x8x8x16xf32>
    %44 = vector.shape_cast %43 : vector<1x8x8x16xf32> to vector<8x128xf32>
    %45 = arith.truncf %44 : vector<8x128xf32> to vector<8x128xbf16>
    %c0_15 = arith.constant 0 : index
    %c0_16 = arith.constant 0 : index
    %c0_17 = arith.constant 0 : index
    %46 = vector.load %arg7[%c0_15, %c0_16, %c0_17] : memref<1x128x128xbf16, #tpu.memory_space<vmem>>, vector<1x128x128xbf16>
    %47 = vector.shape_cast %46 : vector<1x128x128xbf16> to vector<128x128xbf16>
    %cst_18 = arith.constant dense<0.000000e+00> : vector<8x128xf32>
    %48 = tpu.matmul %45, %47, %cst_18 {dimension_numbers = #tpu.dot_dimension_numbers<[1], [0], [0], [1], [0, 0, 1, 1], [], []>} : vector<8x128xbf16>, vector<128x128xbf16>, vector<8x128xf32> -> vector<8x128xf32>
    %c0_19 = arith.constant 0 : index
    %c0_20 = arith.constant 0 : index
    %c0_21 = arith.constant 0 : index
    %49 = vector.load %arg8[%c0_19, %c0_20, %c0_21] : memref<1x1x128xf32, #tpu.memory_space<vmem>>, vector<1x1x128xf32>
    %50 = vector.shape_cast %49 : vector<1x1x128xf32> to vector<1x128xf32>
    %51 = vector.broadcast %50 : vector<1x128xf32> to vector<8x128xf32>
    %52 = arith.addf %48, %51 : vector<8x128xf32>
    %53 = arith.addf %3, %52 : vector<8x128xf32>
    %c0_22 = arith.constant 0 : index
    %c0_23 = arith.constant 0 : index
    %c0_24 = arith.constant 0 : index
    %54 = vector.load %arg17[%c0_22, %c0_23, %c0_24] : memref<1x6x128xf32, #tpu.memory_space<vmem>>, vector<1x1x128xf32>
    %55 = vector.shape_cast %54 : vector<1x1x128xf32> to vector<1x128xf32>
    %c0_25 = arith.constant 0 : index
    %c1 = arith.constant 1 : index
    %c0_26 = arith.constant 0 : index
    %56 = vector.load %arg17[%c0_25, %c1, %c0_26] : memref<1x6x128xf32, #tpu.memory_space<vmem>>, vector<1x1x128xf32>
    %57 = vector.shape_cast %56 : vector<1x1x128xf32> to vector<1x128xf32>
    %cst_27 = arith.constant dense<0.000000e+00> : vector<8xf32>
    %58 = vector.multi_reduction <add>, %53, %cst_27 [1] : vector<8x128xf32> to vector<8xf32>
    %59 = vector.shape_cast %58 : vector<8xf32> to vector<8x1xf32>
    %cst_28 = arith.constant 1.280000e+02 : f32
    %60 = vector.broadcast %cst_28 : f32 to vector<8x1xf32>
    %61 = arith.divf %59, %60 : vector<8x1xf32>
    %62 = vector.broadcast %61 : vector<8x1xf32> to vector<8x128xf32>
    %63 = arith.subf %53, %62 : vector<8x128xf32>
    %64 = arith.mulf %63, %63 : vector<8x128xf32>
    %cst_29 = arith.constant dense<0.000000e+00> : vector<8xf32>
    %65 = vector.multi_reduction <add>, %64, %cst_29 [1] : vector<8x128xf32> to vector<8xf32>
    %66 = vector.shape_cast %65 : vector<8xf32> to vector<8x1xf32>
    %cst_30 = arith.constant 1.280000e+02 : f32
    %67 = vector.broadcast %cst_30 : f32 to vector<8x1xf32>
    %68 = arith.divf %66, %67 : vector<8x1xf32>
    %69 = vector.broadcast %61 : vector<8x1xf32> to vector<8x128xf32>
    %70 = arith.subf %53, %69 : vector<8x128xf32>
    %cst_31 = arith.constant 9.99999974E-6 : f32
    %71 = vector.broadcast %cst_31 : f32 to vector<8x1xf32>
    %72 = arith.addf %68, %71 : vector<8x1xf32>
    %73 = math.rsqrt %72 : vector<8x1xf32>
    %74 = vector.broadcast %73 : vector<8x1xf32> to vector<8x128xf32>
    %75 = arith.mulf %70, %74 : vector<8x128xf32>
    %76 = vector.broadcast %55 : vector<1x128xf32> to vector<8x128xf32>
    %77 = arith.mulf %75, %76 : vector<8x128xf32>
    %78 = vector.broadcast %57 : vector<1x128xf32> to vector<8x128xf32>
    %79 = arith.addf %77, %78 : vector<8x128xf32>
    %c0_32 = arith.constant 0 : index
    %c0_33 = arith.constant 0 : index
    %80 = vector.load %arg3[%c0_32, %c0_33] : memref<8x128xbf16, #tpu.memory_space<vmem>>, vector<8x128xbf16>
    %c0_34 = arith.constant 0 : index
    %c0_35 = arith.constant 0 : index
    %c0_36 = arith.constant 0 : index
    %81 = vector.load %arg9[%c0_34, %c0_35, %c0_36] : memref<1x128x128xbf16, #tpu.memory_space<vmem>>, vector<1x128x128xbf16>
    %82 = vector.shape_cast %81 : vector<1x128x128xbf16> to vector<128x128xbf16>
    %cst_37 = arith.constant dense<0.000000e+00> : vector<8x128xf32>
    %83 = tpu.matmul %80, %82, %cst_37 {dimension_numbers = #tpu.dot_dimension_numbers<[1], [0], [0], [1], [0, 0, 1, 1], [], []>} : vector<8x128xbf16>, vector<128x128xbf16>, vector<8x128xf32> -> vector<8x128xf32>
    %c0_38 = arith.constant 0 : index
    %c0_39 = arith.constant 0 : index
    %c0_40 = arith.constant 0 : index
    %84 = vector.load %arg10[%c0_38, %c0_39, %c0_40] : memref<1x1x128xf32, #tpu.memory_space<vmem>>, vector<1x1x128xf32>
    %85 = vector.shape_cast %84 : vector<1x1x128xf32> to vector<1x128xf32>
    %86 = vector.broadcast %85 : vector<1x128xf32> to vector<8x128xf32>
    %87 = arith.addf %83, %86 : vector<8x128xf32>
    %88 = arith.truncf %87 : vector<8x128xf32> to vector<8x128xbf16>
    %c0_41 = arith.constant 0 : index
    %c0_42 = arith.constant 0 : index
    %c0_43 = arith.constant 0 : index
    %89 = vector.load %arg11[%c0_41, %c0_42, %c0_43] : memref<1x128x128xbf16, #tpu.memory_space<vmem>>, vector<1x128x128xbf16>
    %90 = vector.shape_cast %89 : vector<1x128x128xbf16> to vector<128x128xbf16>
    %cst_44 = arith.constant dense<0.000000e+00> : vector<8x128xf32>
    %91 = tpu.matmul %88, %90, %cst_44 {dimension_numbers = #tpu.dot_dimension_numbers<[1], [0], [0], [1], [0, 0, 1, 1], [], []>} : vector<8x128xbf16>, vector<128x128xbf16>, vector<8x128xf32> -> vector<8x128xf32>
    %c0_45 = arith.constant 0 : index
    %c0_46 = arith.constant 0 : index
    %c0_47 = arith.constant 0 : index
    %92 = vector.load %arg12[%c0_45, %c0_46, %c0_47] : memref<1x1x128xf32, #tpu.memory_space<vmem>>, vector<1x1x128xf32>
    %93 = vector.shape_cast %92 : vector<1x1x128xf32> to vector<1x128xf32>
    %94 = vector.broadcast %93 : vector<1x128xf32> to vector<8x128xf32>
    %95 = arith.addf %91, %94 : vector<8x128xf32>
    %96 = arith.addf %79, %95 : vector<8x128xf32>
    %c0_48 = arith.constant 0 : index
    %c2 = arith.constant 2 : index
    %c0_49 = arith.constant 0 : index
    %97 = vector.load %arg17[%c0_48, %c2, %c0_49] : memref<1x6x128xf32, #tpu.memory_space<vmem>>, vector<1x1x128xf32>
    %98 = vector.shape_cast %97 : vector<1x1x128xf32> to vector<1x128xf32>
    %c0_50 = arith.constant 0 : index
    %c3 = arith.constant 3 : index
    %c0_51 = arith.constant 0 : index
    %99 = vector.load %arg17[%c0_50, %c3, %c0_51] : memref<1x6x128xf32, #tpu.memory_space<vmem>>, vector<1x1x128xf32>
    %100 = vector.shape_cast %99 : vector<1x1x128xf32> to vector<1x128xf32>
    %cst_52 = arith.constant dense<0.000000e+00> : vector<8xf32>
    %101 = vector.multi_reduction <add>, %96, %cst_52 [1] : vector<8x128xf32> to vector<8xf32>
    %102 = vector.shape_cast %101 : vector<8xf32> to vector<8x1xf32>
    %cst_53 = arith.constant 1.280000e+02 : f32
    %103 = vector.broadcast %cst_53 : f32 to vector<8x1xf32>
    %104 = arith.divf %102, %103 : vector<8x1xf32>
    %105 = vector.broadcast %104 : vector<8x1xf32> to vector<8x128xf32>
    %106 = arith.subf %96, %105 : vector<8x128xf32>
    %107 = arith.mulf %106, %106 : vector<8x128xf32>
    %cst_54 = arith.constant dense<0.000000e+00> : vector<8xf32>
    %108 = vector.multi_reduction <add>, %107, %cst_54 [1] : vector<8x128xf32> to vector<8xf32>
    %109 = vector.shape_cast %108 : vector<8xf32> to vector<8x1xf32>
    %cst_55 = arith.constant 1.280000e+02 : f32
    %110 = vector.broadcast %cst_55 : f32 to vector<8x1xf32>
    %111 = arith.divf %109, %110 : vector<8x1xf32>
    %112 = vector.broadcast %104 : vector<8x1xf32> to vector<8x128xf32>
    %113 = arith.subf %96, %112 : vector<8x128xf32>
    %cst_56 = arith.constant 9.99999974E-6 : f32
    %114 = vector.broadcast %cst_56 : f32 to vector<8x1xf32>
    %115 = arith.addf %111, %114 : vector<8x1xf32>
    %116 = math.rsqrt %115 : vector<8x1xf32>
    %117 = vector.broadcast %116 : vector<8x1xf32> to vector<8x128xf32>
    %118 = arith.mulf %113, %117 : vector<8x128xf32>
    %119 = vector.broadcast %98 : vector<1x128xf32> to vector<8x128xf32>
    %120 = arith.mulf %118, %119 : vector<8x128xf32>
    %121 = vector.broadcast %100 : vector<1x128xf32> to vector<8x128xf32>
    %122 = arith.addf %120, %121 : vector<8x128xf32>
    %123 = arith.truncf %122 : vector<8x128xf32> to vector<8x128xbf16>
    %c0_57 = arith.constant 0 : index
    %c0_58 = arith.constant 0 : index
    %c0_59 = arith.constant 0 : index
    %124 = vector.load %arg13[%c0_57, %c0_58, %c0_59] : memref<1x128x2048xbf16, #tpu.memory_space<vmem>>, vector<1x128x2048xbf16>
    %125 = vector.shape_cast %124 : vector<1x128x2048xbf16> to vector<128x2048xbf16>
    %cst_60 = arith.constant dense<0.000000e+00> : vector<8x2048xf32>
    %126 = tpu.matmul %123, %125, %cst_60 {dimension_numbers = #tpu.dot_dimension_numbers<[1], [0], [0], [1], [0, 0, 1, 1], [], []>} : vector<8x128xbf16>, vector<128x2048xbf16>, vector<8x2048xf32> -> vector<8x2048xf32>
    %c0_61 = arith.constant 0 : index
    %c0_62 = arith.constant 0 : index
    %c0_63 = arith.constant 0 : index
    %127 = vector.load %arg14[%c0_61, %c0_62, %c0_63] : memref<1x1x2048xf32, #tpu.memory_space<vmem>>, vector<1x1x2048xf32>
    %128 = vector.shape_cast %127 : vector<1x1x2048xf32> to vector<1x2048xf32>
    %129 = vector.broadcast %128 : vector<1x2048xf32> to vector<8x2048xf32>
    %130 = arith.addf %126, %129 : vector<8x2048xf32>
    %cst_64 = arith.constant 0.000000e+00 : f32
    %131 = vector.broadcast %cst_64 : f32 to vector<8x2048xf32>
    %132 = arith.maximumf %130, %131 : vector<8x2048xf32>
    %133 = arith.truncf %132 : vector<8x2048xf32> to vector<8x2048xbf16>
    %c0_65 = arith.constant 0 : index
    %c0_66 = arith.constant 0 : index
    %c0_67 = arith.constant 0 : index
    %134 = vector.load %arg15[%c0_65, %c0_66, %c0_67] : memref<1x2048x128xbf16, #tpu.memory_space<vmem>>, vector<1x2048x128xbf16>
    %135 = vector.shape_cast %134 : vector<1x2048x128xbf16> to vector<2048x128xbf16>
    %cst_68 = arith.constant dense<0.000000e+00> : vector<8x128xf32>
    %136 = tpu.matmul %133, %135, %cst_68 {dimension_numbers = #tpu.dot_dimension_numbers<[1], [0], [0], [1], [0, 0, 1, 1], [], []>} : vector<8x2048xbf16>, vector<2048x128xbf16>, vector<8x128xf32> -> vector<8x128xf32>
    %c0_69 = arith.constant 0 : index
    %c0_70 = arith.constant 0 : index
    %c0_71 = arith.constant 0 : index
    %137 = vector.load %arg16[%c0_69, %c0_70, %c0_71] : memref<1x1x128xf32, #tpu.memory_space<vmem>>, vector<1x1x128xf32>
    %138 = vector.shape_cast %137 : vector<1x1x128xf32> to vector<1x128xf32>
    %139 = vector.broadcast %138 : vector<1x128xf32> to vector<8x128xf32>
    %140 = arith.addf %136, %139 : vector<8x128xf32>
    %141 = arith.addf %122, %140 : vector<8x128xf32>
    %c0_72 = arith.constant 0 : index
    %c4 = arith.constant 4 : index
    %c0_73 = arith.constant 0 : index
    %142 = vector.load %arg17[%c0_72, %c4, %c0_73] : memref<1x6x128xf32, #tpu.memory_space<vmem>>, vector<1x1x128xf32>
    %143 = vector.shape_cast %142 : vector<1x1x128xf32> to vector<1x128xf32>
    %c0_74 = arith.constant 0 : index
    %c5 = arith.constant 5 : index
    %c0_75 = arith.constant 0 : index
    %144 = vector.load %arg17[%c0_74, %c5, %c0_75] : memref<1x6x128xf32, #tpu.memory_space<vmem>>, vector<1x1x128xf32>
    %145 = vector.shape_cast %144 : vector<1x1x128xf32> to vector<1x128xf32>
    %cst_76 = arith.constant dense<0.000000e+00> : vector<8xf32>
    %146 = vector.multi_reduction <add>, %141, %cst_76 [1] : vector<8x128xf32> to vector<8xf32>
    %147 = vector.shape_cast %146 : vector<8xf32> to vector<8x1xf32>
    %cst_77 = arith.constant 1.280000e+02 : f32
    %148 = vector.broadcast %cst_77 : f32 to vector<8x1xf32>
    %149 = arith.divf %147, %148 : vector<8x1xf32>
    %150 = vector.broadcast %149 : vector<8x1xf32> to vector<8x128xf32>
    %151 = arith.subf %141, %150 : vector<8x128xf32>
    %152 = arith.mulf %151, %151 : vector<8x128xf32>
    %cst_78 = arith.constant dense<0.000000e+00> : vector<8xf32>
    %153 = vector.multi_reduction <add>, %152, %cst_78 [1] : vector<8x128xf32> to vector<8xf32>
    %154 = vector.shape_cast %153 : vector<8xf32> to vector<8x1xf32>
    %cst_79 = arith.constant 1.280000e+02 : f32
    %155 = vector.broadcast %cst_79 : f32 to vector<8x1xf32>
    %156 = arith.divf %154, %155 : vector<8x1xf32>
    %157 = vector.broadcast %149 : vector<8x1xf32> to vector<8x128xf32>
    %158 = arith.subf %141, %157 : vector<8x128xf32>
    %cst_80 = arith.constant 9.99999974E-6 : f32
    %159 = vector.broadcast %cst_80 : f32 to vector<8x1xf32>
    %160 = arith.addf %156, %159 : vector<8x1xf32>
    %161 = math.rsqrt %160 : vector<8x1xf32>
    %162 = vector.broadcast %161 : vector<8x1xf32> to vector<8x128xf32>
    %163 = arith.mulf %158, %162 : vector<8x128xf32>
    %164 = vector.broadcast %143 : vector<1x128xf32> to vector<8x128xf32>
    %165 = arith.mulf %163, %164 : vector<8x128xf32>
    %166 = vector.broadcast %145 : vector<1x128xf32> to vector<8x128xf32>
    %167 = arith.addf %165, %166 : vector<8x128xf32>
    %c0_81 = arith.constant 0 : index
    %c0_82 = arith.constant 0 : index
    %168 = vector.load %arg21[%c0_81, %c0_82] : memref<8x128xf32, #tpu.memory_space<vmem>>, vector<8x128xf32>
    tpu.vector_store %arg21[%c0_81, %c0_82], %167 {strides = array<i32>} : memref<8x128xf32, #tpu.memory_space<vmem>>, vector<8x128xf32>,
    %c1_i32 = arith.constant 1 : i32
    %169 = arith.cmpi eq, %arg1, %c1_i32 : i32
    %170 = arith.extui %169 : i1 to i32
    %c0_i32_83 = arith.constant 0 : i32
    %171 = arith.cmpi ne, %170, %c0_i32_83 : i32
    scf.if %171 {
      %172 = arith.truncf %167 : vector<8x128xf32> to vector<8x128xbf16>
      %c0_84 = arith.constant 0 : index
      %c0_85 = arith.constant 0 : index
      %173 = vector.load %arg18[%c0_84, %c0_85] : memref<128x128xbf16, #tpu.memory_space<vmem>>, vector<128x128xbf16>
      %cst_86 = arith.constant dense<0.000000e+00> : vector<8x128xf32>
      %174 = tpu.matmul %172, %173, %cst_86 {dimension_numbers = #tpu.dot_dimension_numbers<[1], [0], [0], [1], [0, 0, 1, 1], [], []>} : vector<8x128xbf16>, vector<128x128xbf16>, vector<8x128xf32> -> vector<8x128xf32>
      %c0_87 = arith.constant 0 : index
      %c0_88 = arith.constant 0 : index
      %175 = vector.load %arg19[%c0_87, %c0_88] : memref<1x128xf32, #tpu.memory_space<vmem>>, vector<1x128xf32>
      %176 = vector.broadcast %175 : vector<1x128xf32> to vector<8x128xf32>
      %177 = arith.addf %174, %176 : vector<8x128xf32>
      %c0_89 = arith.constant 0 : index
      %c0_90 = arith.constant 0 : index
      %178 = vector.load %arg20[%c0_89, %c0_90] : memref<8x128xf32, #tpu.memory_space<vmem>>, vector<8x128xf32>
      tpu.vector_store %arg20[%c0_89, %c0_90], %177 {strides = array<i32>} : memref<8x128xf32, #tpu.memory_space<vmem>>, vector<8x128xf32>,
    } else {
    }
    return
  }
  func.func @transform_0(%arg0: i32, %arg1: i32) -> (i32, i32) {
    %c0_i32 = arith.constant 0 : i32
    %c0_i32_0 = arith.constant 0 : i32
    return %arg0, %c0_i32 : i32, i32
  }
  func.func @transform_1(%arg0: i32, %arg1: i32) -> (i32, i32) {
    %c0_i32 = arith.constant 0 : i32
    %c0_i32_0 = arith.constant 0 : i32
    return %arg0, %c0_i32 : i32, i32
  }
  func.func @transform_2(%arg0: i32, %arg1: i32) -> (i32, i32) {
    %c0_i32 = arith.constant 0 : i32
    %c0_i32_0 = arith.constant 0 : i32
    %c0_i32_1 = arith.constant 0 : i32
    return %c0_i32, %c0_i32_0 : i32, i32
  }
  func.func @transform_3(%arg0: i32, %arg1: i32) -> (i32, i32, i32) {
    %c0_i32 = arith.constant 0 : i32
    %c0_i32_0 = arith.constant 0 : i32
    %c0_i32_1 = arith.constant 0 : i32
    return %arg1, %c0_i32, %c0_i32_0 : i32, i32, i32
  }
  func.func @transform_4(%arg0: i32, %arg1: i32) -> (i32, i32, i32) {
    %c0_i32 = arith.constant 0 : i32
    %c0_i32_0 = arith.constant 0 : i32
    %c0_i32_1 = arith.constant 0 : i32
    return %arg1, %c0_i32, %c0_i32_0 : i32, i32, i32
  }
  func.func @transform_5(%arg0: i32, %arg1: i32) -> (i32, i32, i32) {
    %c0_i32 = arith.constant 0 : i32
    %c0_i32_0 = arith.constant 0 : i32
    %c0_i32_1 = arith.constant 0 : i32
    return %arg1, %c0_i32, %c0_i32_0 : i32, i32, i32
  }
  func.func @transform_6(%arg0: i32, %arg1: i32) -> (i32, i32, i32) {
    %c0_i32 = arith.constant 0 : i32
    %c0_i32_0 = arith.constant 0 : i32
    %c0_i32_1 = arith.constant 0 : i32
    return %arg1, %c0_i32, %c0_i32_0 : i32, i32, i32
  }
  func.func @transform_7(%arg0: i32, %arg1: i32) -> (i32, i32, i32) {
    %c0_i32 = arith.constant 0 : i32
    %c0_i32_0 = arith.constant 0 : i32
    %c0_i32_1 = arith.constant 0 : i32
    return %arg1, %c0_i32, %c0_i32_0 : i32, i32, i32
  }
  func.func @transform_8(%arg0: i32, %arg1: i32) -> (i32, i32, i32) {
    %c0_i32 = arith.constant 0 : i32
    %c0_i32_0 = arith.constant 0 : i32
    %c0_i32_1 = arith.constant 0 : i32
    return %arg1, %c0_i32, %c0_i32_0 : i32, i32, i32
  }
  func.func @transform_9(%arg0: i32, %arg1: i32) -> (i32, i32, i32) {
    %c0_i32 = arith.constant 0 : i32
    %c0_i32_0 = arith.constant 0 : i32
    %c0_i32_1 = arith.constant 0 : i32
    return %arg1, %c0_i32, %c0_i32_0 : i32, i32, i32
  }
  func.func @transform_10(%arg0: i32, %arg1: i32) -> (i32, i32, i32) {
    %c0_i32 = arith.constant 0 : i32
    %c0_i32_0 = arith.constant 0 : i32
    %c0_i32_1 = arith.constant 0 : i32
    return %arg1, %c0_i32, %c0_i32_0 : i32, i32, i32
  }
  func.func @transform_11(%arg0: i32, %arg1: i32) -> (i32, i32, i32) {
    %c0_i32 = arith.constant 0 : i32
    %c0_i32_0 = arith.constant 0 : i32
    %c0_i32_1 = arith.constant 0 : i32
    return %arg1, %c0_i32, %c0_i32_0 : i32, i32, i32
  }
  func.func @transform_12(%arg0: i32, %arg1: i32) -> (i32, i32, i32) {
    %c0_i32 = arith.constant 0 : i32
    %c0_i32_0 = arith.constant 0 : i32
    %c0_i32_1 = arith.constant 0 : i32
    return %arg1, %c0_i32, %c0_i32_0 : i32, i32, i32
  }
  func.func @transform_13(%arg0: i32, %arg1: i32) -> (i32, i32, i32) {
    %c0_i32 = arith.constant 0 : i32
    %c0_i32_0 = arith.constant 0 : i32
    %c0_i32_1 = arith.constant 0 : i32
    return %arg1, %c0_i32, %c0_i32_0 : i32, i32, i32
  }
  func.func @transform_14(%arg0: i32, %arg1: i32) -> (i32, i32, i32) {
    %c0_i32 = arith.constant 0 : i32
    %c0_i32_0 = arith.constant 0 : i32
    %c0_i32_1 = arith.constant 0 : i32
    return %arg1, %c0_i32, %c0_i32_0 : i32, i32, i32
  }
  func.func @transform_15(%arg0: i32, %arg1: i32) -> (i32, i32, i32) {
    %c0_i32 = arith.constant 0 : i32
    %c0_i32_0 = arith.constant 0 : i32
    %c0_i32_1 = arith.constant 0 : i32
    return %arg1, %c0_i32, %c0_i32_0 : i32, i32, i32
  }
  func.func @transform_16(%arg0: i32, %arg1: i32) -> (i32, i32) {
    %c0_i32 = arith.constant 0 : i32
    %c0_i32_0 = arith.constant 0 : i32
    %c0_i32_1 = arith.constant 0 : i32
    return %c0_i32, %c0_i32_0 : i32, i32
  }
  func.func @transform_17(%arg0: i32, %arg1: i32) -> (i32, i32) {
    %c0_i32 = arith.constant 0 : i32
    %c0_i32_0 = arith.constant 0 : i32
    %c0_i32_1 = arith.constant 0 : i32
    return %c0_i32, %c0_i32_0 : i32, i32
  }
  func.func @transform_18(%arg0: i32, %arg1: i32) -> (i32, i32) {
    %c0_i32 = arith.constant 0 : i32
    %c0_i32_0 = arith.constant 0 : i32
    return %arg0, %c0_i32 : i32, i32
  }
}

</mosaic_0001>

<llo_original>
// kernel: decoder_forward.1
$region0: #{decoder_forward.1}
  #allocation0 [shape = 'u32[]', space=smem, size = 0x4, offset = 0x4, fixed_abs, tag = 'smem constant byte address 0x4 - core index']
  #allocation1 [shape = 'u32[144,128]{1,0:T(1,128)}', space=vmem, size = 0x12000, scoped, tag = 'internal scratch']
  #allocation2 [shape = 'f32[8,128]{1,0:T(8,128)}', space=vmem, size = 0x1000, scoped, tag = 'scratch operand']
  %s0 = inlined_call_operand.vmem [shape: f32[16,128], index: 0, kind: input, shape index: {}]
  %s1 = inlined_call_operand.vmem [shape: bf16[16,128], index: 1, kind: input, shape index: {}]
  %s2 = inlined_call_operand.vmem [shape: f32[8,8], index: 2, kind: input, shape index: {}]
  %s3 = inlined_call_operand.vmem [shape: bf16[2,128,384], index: 3, kind: input, shape index: {}]
  %s4 = inlined_call_operand.vmem [shape: f32[2,1,384], index: 4, kind: input, shape index: {}]
  %s5 = inlined_call_operand.hbm [shape: bf16[2,128,128], index: 5, kind: input, shape index: {}]
  %s6 = inlined_call_operand.hbm [shape: f32[2,1,128], index: 6, kind: input, shape index: {}]
  %s7 = inlined_call_operand.hbm [shape: bf16[2,128,128], index: 7, kind: input, shape index: {}]
  %s8 = inlined_call_operand.hbm [shape: f32[2,1,128], index: 8, kind: input, shape index: {}]
  %s9 = inlined_call_operand.hbm [shape: bf16[2,128,128], index: 9, kind: input, shape index: {}]
  %s10 = inlined_call_operand.hbm [shape: f32[2,1,128], index: 10, kind: input, shape index: {}]
  %s11 = inlined_call_operand.hbm [shape: bf16[2,128,2048], index: 11, kind: input, shape index: {}]
  %s12 = inlined_call_operand.hbm [shape: f32[2,1,2048], index: 12, kind: input, shape index: {}]
  %s13 = inlined_call_operand.hbm [shape: bf16[2,2048,128], index: 13, kind: input, shape index: {}]
  %s14 = inlined_call_operand.hbm [shape: f32[2,1,128], index: 14, kind: input, shape index: {}]
  %s15 = inlined_call_operand.vmem [shape: f32[2,6,128], index: 15, kind: input, shape index: {}]
  %s16 = inlined_call_operand.hbm [shape: bf16[128,128], index: 16, kind: input, shape index: {}]
  %s17 = inlined_call_operand.vmem [shape: f32[1,128], index: 17, kind: input, shape index: {}]
  %s18 = inlined_call_operand.hbm [shape: f32[16,128], index: 18, kind: output, shape index: {}]
  %s19 = sld [smem:[#allocation0]]
  $region157: #{decoder_forward.1} parent=0
    _
  %s21 = ssub.s32 1, %s19
  %s22 = scalar_select 0, %s21, %s19
  $region1: #{decoder_forward.1} parent=0
    #allocation3 [shape = 'u8[65536]{0}', space=vmem, size = 0x10000, scoped, tag = 'input window, operand 5']
    #allocation4 [shape = 's32[2]{0}', space=sflag, size = 0x8, scoped, tag = 'scoped memory for decoder_forward.1']
    #allocation5 [shape = 's32[2]{0}', space=sflag, size = 0x8, scoped, tag = 'scoped memory for decoder_forward.1']
    #allocation6 [shape = 'u8[1024]{0}', space=vmem, size = 0x400, scoped, tag = 'input window, operand 6']
    #allocation7 [shape = 's32[2]{0}', space=sflag, size = 0x8, scoped, tag = 'scoped memory for decoder_forward.1']
    #allocation8 [shape = 'u8[65536]{0}', space=vmem, size = 0x10000, scoped, tag = 'input window, operand 7']
    #allocation9 [shape = 'u8[1024]{0}', space=vmem, size = 0x400, scoped, tag = 'input window, operand 8']
    #allocation10 [shape = 's32[2]{0}', space=sflag, size = 0x8, scoped, tag = 'scoped memory for decoder_forward.1']
    #allocation11 [shape = 'u8[65536]{0}', space=vmem, size = 0x10000, scoped, tag = 'input window, operand 9']
    #allocation12 [shape = 'u8[1024]{0}', space=vmem, size = 0x400, scoped, tag = 'input window, operand 10']
    #allocation13 [shape = 's32[2]{0}', space=sflag, size = 0x8, scoped, tag = 'scoped memory for decoder_forward.1']
    #allocation14 [shape = 'u8[1048576]{0}', space=vmem, size = 0x100000, scoped, tag = 'input window, operand 11']
    #allocation15 [shape = 'u8[16384]{0}', space=vmem, size = 0x4000, scoped, tag = 'input window, operand 12']
    #allocation16 [shape = 's32[2]{0}', space=sflag, size = 0x8, scoped, tag = 'scoped memory for decoder_forward.1']
    #allocation17 [shape = 'u8[1048576]{0}', space=vmem, size = 0x100000, scoped, tag = 'input window, operand 13']
    #allocation18 [shape = 'u8[1024]{0}', space=vmem, size = 0x400, scoped, tag = 'input window, operand 14']
    #allocation19 [shape = 's32[2]{0}', space=sflag, size = 0x8, scoped, tag = 'scoped memory for decoder_forward.1']
    #allocation20 [shape = 'u8[32768]{0}', space=vmem, size = 0x8000, scoped, tag = 'input window, operand 16, single buffered']
    #allocation21 [shape = 'u8[8192]{0}', space=vmem, size = 0x2000, scoped, tag = 'output window, operand 0']
    %23 = vsyncpa [#allocation4], 0
    %s24 = scalar_lea.sflag [#allocation4], 1
    %25 = vsyncpa %s24, 0
    %26 = vsyncpa [#allocation7], 0
    %s27 = scalar_lea.sflag [#allocation7], 1
    %28 = vsyncpa %s27, 0
    %29 = vsyncpa [#allocation10], 0
    %s30 = scalar_lea.sflag [#allocation10], 1
    %31 = vsyncpa %s30, 0
    %32 = vsyncpa [#allocation13], 0
    %s33 = scalar_lea.sflag [#allocation13], 1
    %34 = vsyncpa %s33, 0
    %35 = vsyncpa [#allocation16], 0
    %s36 = scalar_lea.sflag [#allocation16], 1
    %37 = vsyncpa %s36, 0
    %38 = vsyncpa [#allocation19], 0
    %s39 = scalar_lea.sflag [#allocation19], 1
    %40 = vsyncpa %s39, 0
    %41 = vsyncpa [#allocation5], 0
    %s42 = scalar_lea.sflag [#allocation5], 1
    %43 = vsyncpa %s42, 0
    loop: start=0, step=1, limit=6
    $region2: #{decoder_forward.1} parent=1 // loop_pre_header
      _
    $region3: #{decoder_forward.1} parent=1 // loop_header
      %s45 = sphi 0, %s49
      %p46 = scmp.ge.s32.totalorder %s45, 6
      %s52 = sphi 0, %s64
      %s53 = sphi 0, %s60
      %s54 = sphi 0, %s52
      %s55 = sphi 0, %s53
      %s56 = sphi 0, %s54
      %s57 = sphi 0, %s55
      %s67 = sphi 0, %s69
      %s70 = sphi 0, %s67
      %s71 = sphi 0, %s70
      %s87 = sphi 0, %s71
      %s93 = sphi 0, %s95
      %s96 = sphi 0, %s93
      %s97 = sphi 0, %s96
      %s113 = sphi 0, %s97
      %s117 = sphi 0, %s117
      %s119 = sphi 0, %s117
      %s120 = sphi 0, %s119
      %s134 = sphi 0, %s120
      %s140 = sphi 0, %s142
      %s143 = sphi 0, %s140
      %s144 = sphi 0, %s143
      %s160 = sphi 0, %s144
      %s166 = sphi 0, %s168
      %s169 = sphi 0, %s166
      %s170 = sphi 0, %s169
      %s186 = sphi 0, %s170
      %s192 = sphi 0, %s194
      %s195 = sphi 0, %s192
      %s196 = sphi 0, %s195
      %s212 = sphi 0, %s196
      %s218 = sphi 0, %s220
      %s221 = sphi 0, %s218
      %s222 = sphi 0, %s221
      %s238 = sphi 0, %s222
      %s244 = sphi 0, %s246
      %s247 = sphi 0, %s244
      %s248 = sphi 0, %s247
      %s264 = sphi 0, %s248
      %s270 = sphi 0, %s272
      %s273 = sphi 0, %s270
      %s274 = sphi 0, %s273
      %s290 = sphi 0, %s274
      %s296 = sphi 0, %s298
      %s299 = sphi 0, %s296
      %s300 = sphi 0, %s299
      %s316 = sphi 0, %s300
      %s322 = sphi 0, %s324
      %s325 = sphi 0, %s322
      %s326 = sphi 0, %s325
      %s342 = sphi 0, %s326
      %s348 = sphi 0, %s350
      %s351 = sphi 0, %s348
      %s352 = sphi 0, %s351
      %s368 = sphi 0, %s352
      %s374 = sphi 0, %s376
      %s377 = sphi 0, %s374
      %s378 = sphi 0, %s377
      %s394 = sphi 0, %s378
      %s400 = sphi 0, %s402
      %s403 = sphi 0, %s400
      %s404 = sphi 0, %s403
      %s420 = sphi 0, %s404
      %s426 = sphi 0, %s428
      %s429 = sphi 0, %s426
      %s430 = sphi 0, %s429
      %s446 = sphi 0, %s430
      %s452 = sphi 0, %s454
      %s455 = sphi 0, %s452
      %s456 = sphi 0, %s455
      %s472 = sphi 0, %s456
      %s476 = sphi 0, %s476
      %s478 = sphi 0, %s476
      %s479 = sphi 0, %s478
      %s493 = sphi 0, %s479
      %s497 = sphi 0, %s497
      %s499 = sphi 0, %s497
      %s500 = sphi 0, %s499
      %s514 = sphi 0, %s500
      %s520 = sphi 0, %s522
      %s523 = sphi 0, %s520
      %s524 = sphi 0, %s523
      %s540 = sphi 0, %s524
    $region4: #{decoder_forward.1} parent=1 // loop_header_branch
      %48 = sbr.rel (%p46) target = $region8
    $region5: #{decoder_forward.1} parent=1 // loop_body
      %s50 = ssub.s32 %s45, 1
      %s51 = ssub.s32 %s45, 2
      %s58 = sadd.s32 1, %s53
      %p59 = scmp.ge.s32.totalorder %s58, 2
      %s60 = scalar_select %p59, 0, %s58
      %s61 = sadd.s32 1, %s52
      %s62 = scalar_select %p59, %s61, %s52
      %p63 = scmp.ge.s32.totalorder %s62, 2
      %s64 = scalar_select %p63, 0, %s62
      %s65 = ssub.s32 %s52, %s64
      %p66 = scmp.eq.s32.totalorder %s65, 0
      %s68 = sadd.s32 %s67, 1
      %s69 = scalar_select %p66, %s67, %s68
      %p72 = pneg %p66
      %p73 = scmp.eq.s32.totalorder %s45, 3
      %p74 = por %p72, %p73
      %p75 = scmp.ne.s32.totalorder %s67, %s70
      %p76 = scmp.eq.s32.totalorder %s45, 0
      %p77 = por %p75, %p76
      %p78 = scmp.ne.s32.totalorder %s67, %s70
      %p79 = scmp.eq.s32.totalorder %s50, 3
      %p80 = por %p78, %p79
      %p81 = scmp.ne.s32.totalorder %s70, %s71
      %p82 = scmp.eq.s32.totalorder %s50, 0
      %p83 = por %p81, %p82
      %p84 = scmp.ne.s32.totalorder %s70, %s71
      %p85 = scmp.eq.s32.totalorder %s51, 3
      %p86 = por %p84, %p85
      %p88 = scmp.ne.s32.totalorder %s71, %s87
      %p89 = scmp.eq.s32.totalorder %s51, 0
      %p90 = por %p88, %p89
      %s91 = ssub.s32 %s52, %s64
      %p92 = scmp.eq.s32.totalorder %s91, 0
      %s94 = sadd.s32 %s93, 1
      %s95 = scalar_select %p92, %s93, %s94
      %p98 = pneg %p92
      %p99 = scmp.eq.s32.totalorder %s45, 3
      %p100 = por %p98, %p99
      %p101 = scmp.ne.s32.totalorder %s93, %s96
      %p102 = scmp.eq.s32.totalorder %s45, 0
      %p103 = por %p101, %p102
      %p104 = scmp.ne.s32.totalorder %s93, %s96
      %p105 = scmp.eq.s32.totalorder %s50, 3
      %p106 = por %p104, %p105
      %p107 = scmp.ne.s32.totalorder %s96, %s97
      %p108 = scmp.eq.s32.totalorder %s50, 0
      %p109 = por %p107, %p108
      %p110 = scmp.ne.s32.totalorder %s96, %s97
      %p111 = scmp.eq.s32.totalorder %s51, 3
      %p112 = por %p110, %p111
      %p114 = scmp.ne.s32.totalorder %s97, %s113
      %p115 = scmp.eq.s32.totalorder %s51, 0
      %p116 = por %p114, %p115
      %s118 = sadd.s32 %s117, 1
      %p121 = scmp.eq.s32.totalorder %s45, 3
      %p122 = scmp.ne.s32.totalorder %s117, %s119
      %p123 = scmp.eq.s32.totalorder %s45, 0
      %p124 = por %p122, %p123
      %p125 = scmp.ne.s32.totalorder %s117, %s119
      %p126 = scmp.eq.s32.totalorder %s50, 3
      %p127 = por %p125, %p126
      %p128 = scmp.ne.s32.totalorder %s119, %s120
      %p129 = scmp.eq.s32.totalorder %s50, 0
      %p130 = por %p128, %p129
      %p131 = scmp.ne.s32.totalorder %s119, %s120
      %p132 = scmp.eq.s32.totalorder %s51, 3
      %p133 = por %p131, %p132
      %p135 = scmp.ne.s32.totalorder %s120, %s134
      %p136 = scmp.eq.s32.totalorder %s51, 0
      %p137 = por %p135, %p136
      %s138 = ssub.s32 %s53, %s60
      %p139 = scmp.eq.s32.totalorder %s138, 0
      %s141 = sadd.s32 %s140, 1
      %s142 = scalar_select %p139, %s140, %s141
      %p145 = pneg %p139
      %p146 = scmp.eq.s32.totalorder %s45, 3
      %p147 = por %p145, %p146
      %p148 = scmp.ne.s32.totalorder %s140, %s143
      %p149 = scmp.eq.s32.totalorder %s45, 0
      %p150 = por %p148, %p149
      %p151 = scmp.ne.s32.totalorder %s140, %s143
      %p152 = scmp.eq.s32.totalorder %s50, 3
      %p153 = por %p151, %p152
      %p154 = scmp.ne.s32.totalorder %s143, %s144
      %p155 = scmp.eq.s32.totalorder %s50, 0
      %p156 = por %p154, %p155
      %p157 = scmp.ne.s32.totalorder %s143, %s144
      %p158 = scmp.eq.s32.totalorder %s51, 3
      %p159 = por %p157, %p158
      %p161 = scmp.ne.s32.totalorder %s144, %s160
      %p162 = scmp.eq.s32.totalorder %s51, 0
      %p163 = por %p161, %p162
      %s164 = ssub.s32 %s53, %s60
      %p165 = scmp.eq.s32.totalorder %s164, 0
      %s167 = sadd.s32 %s166, 1
      %s168 = scalar_select %p165, %s166, %s167
      %p171 = pneg %p165
      %p172 = scmp.eq.s32.totalorder %s45, 3
      %p173 = por %p171, %p172
      %p174 = scmp.ne.s32.totalorder %s166, %s169
      %p175 = scmp.eq.s32.totalorder %s45, 0
      %p176 = por %p174, %p175
      %p177 = scmp.ne.s32.totalorder %s166, %s169
      %p178 = scmp.eq.s32.totalorder %s50, 3
      %p179 = por %p177, %p178
      %p180 = scmp.ne.s32.totalorder %s169, %s170
      %p181 = scmp.eq.s32.totalorder %s50, 0
      %p182 = por %p180, %p181
      %p183 = scmp.ne.s32.totalorder %s169, %s170
      %p184 = scmp.eq.s32.totalorder %s51, 3
      %p185 = por %p183, %p184
      %p187 = scmp.ne.s32.totalorder %s170, %s186
      %p188 = scmp.eq.s32.totalorder %s51, 0
      %p189 = por %p187, %p188
      %s190 = ssub.s32 %s53, %s60
      %p191 = scmp.eq.s32.totalorder %s190, 0
      %s193 = sadd.s32 %s192, 1
      %s194 = scalar_select %p191, %s192, %s193
      %p197 = pneg %p191
      %p198 = scmp.eq.s32.totalorder %s45, 3
      %p199 = por %p197, %p198
      %p200 = scmp.ne.s32.totalorder %s192, %s195
      %p201 = scmp.eq.s32.totalorder %s45, 0
      %p202 = por %p200, %p201
      %p203 = scmp.ne.s32.totalorder %s192, %s195
      %p204 = scmp.eq.s32.totalorder %s50, 3
      %p205 = por %p203, %p204
      %p206 = scmp.ne.s32.totalorder %s195, %s196
      %p207 = scmp.eq.s32.totalorder %s50, 0
      %p208 = por %p206, %p207
      %p209 = scmp.ne.s32.totalorder %s195, %s196
      %p210 = scmp.eq.s32.totalorder %s51, 3
      %p211 = por %p209, %p210
      %p213 = scmp.ne.s32.totalorder %s196, %s212
      %p214 = scmp.eq.s32.totalorder %s51, 0
      %p215 = por %p213, %p214
      %s216 = ssub.s32 %s53, %s60
      %p217 = scmp.eq.s32.totalorder %s216, 0
      %s219 = sadd.s32 %s218, 1
      %s220 = scalar_select %p217, %s218, %s219
      %p223 = pneg %p217
      %p224 = scmp.eq.s32.totalorder %s45, 3
      %p225 = por %p223, %p224
      %p226 = scmp.ne.s32.totalorder %s218, %s221
      %p227 = scmp.eq.s32.totalorder %s45, 0
      %p228 = por %p226, %p227
      %p229 = scmp.ne.s32.totalorder %s218, %s221
      %p230 = scmp.eq.s32.totalorder %s50, 3
      %p231 = por %p229, %p230
      %p232 = scmp.ne.s32.totalorder %s221, %s222
      %p233 = scmp.eq.s32.totalorder %s50, 0
      %p234 = por %p232, %p233
      %p235 = scmp.ne.s32.totalorder %s221, %s222
      %p236 = scmp.eq.s32.totalorder %s51, 3
      %p237 = por %p235, %p236
      %p239 = scmp.ne.s32.totalorder %s222, %s238
      %p240 = scmp.eq.s32.totalorder %s51, 0
      %p241 = por %p239, %p240
      %s242 = ssub.s32 %s53, %s60
      %p243 = scmp.eq.s32.totalorder %s242, 0
      %s245 = sadd.s32 %s244, 1
      %s246 = scalar_select %p243, %s244, %s245
      %p249 = pneg %p243
      %p250 = scmp.eq.s32.totalorder %s45, 3
      %p251 = por %p249, %p250
      %p252 = scmp.ne.s32.totalorder %s244, %s247
      %p253 = scmp.eq.s32.totalorder %s45, 0
      %p254 = por %p252, %p253
      %p255 = scmp.ne.s32.totalorder %s244, %s247
      %p256 = scmp.eq.s32.totalorder %s50, 3
      %p257 = por %p255, %p256
      %p258 = scmp.ne.s32.totalorder %s247, %s248
      %p259 = scmp.eq.s32.totalorder %s50, 0
      %p260 = por %p258, %p259
      %p261 = scmp.ne.s32.totalorder %s247, %s248
      %p262 = scmp.eq.s32.totalorder %s51, 3
      %p263 = por %p261, %p262
      %p265 = scmp.ne.s32.totalorder %s248, %s264
      %p266 = scmp.eq.s32.totalorder %s51, 0
      %p267 = por %p265, %p266
      %s268 = ssub.s32 %s53, %s60
      %p269 = scmp.eq.s32.totalorder %s268, 0
      %s271 = sadd.s32 %s270, 1
      %s272 = scalar_select %p269, %s270, %s271
      %p275 = pneg %p269
      %p276 = scmp.eq.s32.totalorder %s45, 3
      %p277 = por %p275, %p276
      %p278 = scmp.ne.s32.totalorder %s270, %s273
      %p279 = scmp.eq.s32.totalorder %s45, 0
      %p280 = por %p278, %p279
      %p281 = scmp.ne.s32.totalorder %s270, %s273
      %p282 = scmp.eq.s32.totalorder %s50, 3
      %p283 = por %p281, %p282
      %p284 = scmp.ne.s32.totalorder %s273, %s274
      %p285 = scmp.eq.s32.totalorder %s50, 0
      %p286 = por %p284, %p285
      %p287 = scmp.ne.s32.totalorder %s273, %s274
      %p288 = scmp.eq.s32.totalorder %s51, 3
      %p289 = por %p287, %p288
      %p291 = scmp.ne.s32.totalorder %s274, %s290
      %p292 = scmp.eq.s32.totalorder %s51, 0
      %p293 = por %p291, %p292
      %s294 = ssub.s32 %s53, %s60
      %p295 = scmp.eq.s32.totalorder %s294, 0
      %s297 = sadd.s32 %s296, 1
      %s298 = scalar_select %p295, %s296, %s297
      %p301 = pneg %p295
      %p302 = scmp.eq.s32.totalorder %s45, 3
      %p303 = por %p301, %p302
      %p304 = scmp.ne.s32.totalorder %s296, %s299
      %p305 = scmp.eq.s32.totalorder %s45, 0
      %p306 = por %p304, %p305
      %p307 = scmp.ne.s32.totalorder %s296, %s299
      %p308 = scmp.eq.s32.totalorder %s50, 3
      %p309 = por %p307, %p308
      %p310 = scmp.ne.s32.totalorder %s299, %s300
      %p311 = scmp.eq.s32.totalorder %s50, 0
      %p312 = por %p310, %p311
      %p313 = scmp.ne.s32.totalorder %s299, %s300
      %p314 = scmp.eq.s32.totalorder %s51, 3
      %p315 = por %p313, %p314
      %p317 = scmp.ne.s32.totalorder %s300, %s316
      %p318 = scmp.eq.s32.totalorder %s51, 0
      %p319 = por %p317, %p318
      %s320 = ssub.s32 %s53, %s60
      %p321 = scmp.eq.s32.totalorder %s320, 0
      %s323 = sadd.s32 %s322, 1
      %s324 = scalar_select %p321, %s322, %s323
      %p327 = pneg %p321
      %p328 = scmp.eq.s32.totalorder %s45, 3
      %p329 = por %p327, %p328
      %p330 = scmp.ne.s32.totalorder %s322, %s325
      %p331 = scmp.eq.s32.totalorder %s45, 0
      %p332 = por %p330, %p331
      %p333 = scmp.ne.s32.totalorder %s322, %s325
      %p334 = scmp.eq.s32.totalorder %s50, 3
      %p335 = por %p333, %p334
      %p336 = scmp.ne.s32.totalorder %s325, %s326
      %p337 = scmp.eq.s32.totalorder %s50, 0
      %p338 = por %p336, %p337
      %p339 = scmp.ne.s32.totalorder %s325, %s326
      %p340 = scmp.eq.s32.totalorder %s51, 3
      %p341 = por %p339, %p340
      %p343 = scmp.ne.s32.totalorder %s326, %s342
      %p344 = scmp.eq.s32.totalorder %s51, 0
      %p345 = por %p343, %p344
      %s346 = ssub.s32 %s53, %s60
      %p347 = scmp.eq.s32.totalorder %s346, 0
      %s349 = sadd.s32 %s348, 1
      %s350 = scalar_select %p347, %s348, %s349
      %p353 = pneg %p347
      %p354 = scmp.eq.s32.totalorder %s45, 3
      %p355 = por %p353, %p354
      %p356 = scmp.ne.s32.totalorder %s348, %s351
      %p357 = scmp.eq.s32.totalorder %s45, 0
      %p358 = por %p356, %p357
      %p359 = scmp.ne.s32.totalorder %s348, %s351
      %p360 = scmp.eq.s32.totalorder %s50, 3
      %p361 = por %p359, %p360
      %p362 = scmp.ne.s32.totalorder %s351, %s352
      %p363 = scmp.eq.s32.totalorder %s50, 0
      %p364 = por %p362, %p363
      %p365 = scmp.ne.s32.totalorder %s351, %s352
      %p366 = scmp.eq.s32.totalorder %s51, 3
      %p367 = por %p365, %p366
      %p369 = scmp.ne.s32.totalorder %s352, %s368
      %p370 = scmp.eq.s32.totalorder %s51, 0
      %p371 = por %p369, %p370
      %s372 = ssub.s32 %s53, %s60
      %p373 = scmp.eq.s32.totalorder %s372, 0
      %s375 = sadd.s32 %s374, 1
      %s376 = scalar_select %p373, %s374, %s375
      %p379 = pneg %p373
      %p380 = scmp.eq.s32.totalorder %s45, 3
      %p381 = por %p379, %p380
      %p382 = scmp.ne.s32.totalorder %s374, %s377
      %p383 = scmp.eq.s32.totalorder %s45, 0
      %p384 = por %p382, %p383
      %p385 = scmp.ne.s32.totalorder %s374, %s377
      %p386 = scmp.eq.s32.totalorder %s50, 3
      %p387 = por %p385, %p386
      %p388 = scmp.ne.s32.totalorder %s377, %s378
      %p389 = scmp.eq.s32.totalorder %s50, 0
      %p390 = por %p388, %p389
      %p391 = scmp.ne.s32.totalorder %s377, %s378
      %p392 = scmp.eq.s32.totalorder %s51, 3
      %p393 = por %p391, %p392
      %p395 = scmp.ne.s32.totalorder %s378, %s394
      %p396 = scmp.eq.s32.totalorder %s51, 0
      %p397 = por %p395, %p396
      %s398 = ssub.s32 %s53, %s60
      %p399 = scmp.eq.s32.totalorder %s398, 0
      %s401 = sadd.s32 %s400, 1
      %s402 = scalar_select %p399, %s400, %s401
      %p405 = pneg %p399
      %p406 = scmp.eq.s32.totalorder %s45, 3
      %p407 = por %p405, %p406
      %p408 = scmp.ne.s32.totalorder %s400, %s403
      %p409 = scmp.eq.s32.totalorder %s45, 0
      %p410 = por %p408, %p409
      %p411 = scmp.ne.s32.totalorder %s400, %s403
      %p412 = scmp.eq.s32.totalorder %s50, 3
      %p413 = por %p411, %p412
      %p414 = scmp.ne.s32.totalorder %s403, %s404
      %p415 = scmp.eq.s32.totalorder %s50, 0
      %p416 = por %p414, %p415
      %p417 = scmp.ne.s32.totalorder %s403, %s404
      %p418 = scmp.eq.s32.totalorder %s51, 3
      %p419 = por %p417, %p418
      %p421 = scmp.ne.s32.totalorder %s404, %s420
      %p422 = scmp.eq.s32.totalorder %s51, 0
      %p423 = por %p421, %p422
      %s424 = ssub.s32 %s53, %s60
      %p425 = scmp.eq.s32.totalorder %s424, 0
      %s427 = sadd.s32 %s426, 1
      %s428 = scalar_select %p425, %s426, %s427
      %p431 = pneg %p425
      %p432 = scmp.eq.s32.totalorder %s45, 3
      %p433 = por %p431, %p432
      %p434 = scmp.ne.s32.totalorder %s426, %s429
      %p435 = scmp.eq.s32.totalorder %s45, 0
      %p436 = por %p434, %p435
      %p437 = scmp.ne.s32.totalorder %s426, %s429
      %p438 = scmp.eq.s32.totalorder %s50, 3
      %p439 = por %p437, %p438
      %p440 = scmp.ne.s32.totalorder %s429, %s430
      %p441 = scmp.eq.s32.totalorder %s50, 0
      %p442 = por %p440, %p441
      %p443 = scmp.ne.s32.totalorder %s429, %s430
      %p444 = scmp.eq.s32.totalorder %s51, 3
      %p445 = por %p443, %p444
      %p447 = scmp.ne.s32.totalorder %s430, %s446
      %p448 = scmp.eq.s32.totalorder %s51, 0
      %p449 = por %p447, %p448
      %s450 = ssub.s32 %s53, %s60
      %p451 = scmp.eq.s32.totalorder %s450, 0
      %s453 = sadd.s32 %s452, 1
      %s454 = scalar_select %p451, %s452, %s453
      %p457 = pneg %p451
      %p458 = scmp.eq.s32.totalorder %s45, 3
      %p459 = por %p457, %p458
      %p460 = scmp.ne.s32.totalorder %s452, %s455
      %p461 = scmp.eq.s32.totalorder %s45, 0
      %p462 = por %p460, %p461
      %p463 = scmp.ne.s32.totalorder %s452, %s455
      %p464 = scmp.eq.s32.totalorder %s50, 3
      %p465 = por %p463, %p464
      %p466 = scmp.ne.s32.totalorder %s455, %s456
      %p467 = scmp.eq.s32.totalorder %s50, 0
      %p468 = por %p466, %p467
      %p469 = scmp.ne.s32.totalorder %s455, %s456
      %p470 = scmp.eq.s32.totalorder %s51, 3
      %p471 = por %p469, %p470
      %p473 = scmp.ne.s32.totalorder %s456, %s472
      %p474 = scmp.eq.s32.totalorder %s51, 0
      %p475 = por %p473, %p474
      %s477 = sadd.s32 %s476, 1
      %p480 = scmp.eq.s32.totalorder %s45, 3
      %p481 = scmp.ne.s32.totalorder %s476, %s478
      %p482 = scmp.eq.s32.totalorder %s45, 0
      %p483 = por %p481, %p482
      %p484 = scmp.ne.s32.totalorder %s476, %s478
      %p485 = scmp.eq.s32.totalorder %s50, 3
      %p486 = por %p484, %p485
      %p487 = scmp.ne.s32.totalorder %s478, %s479
      %p488 = scmp.eq.s32.totalorder %s50, 0
      %p489 = por %p487, %p488
      %p490 = scmp.ne.s32.totalorder %s478, %s479
      %p491 = scmp.eq.s32.totalorder %s51, 3
      %p492 = por %p490, %p491
      %p494 = scmp.ne.s32.totalorder %s479, %s493
      %p495 = scmp.eq.s32.totalorder %s51, 0
      %p496 = por %p494, %p495
      %s498 = sadd.s32 %s497, 1
      %p501 = scmp.eq.s32.totalorder %s45, 3
      %p502 = scmp.ne.s32.totalorder %s497, %s499
      %p503 = scmp.eq.s32.totalorder %s45, 0
      %p504 = por %p502, %p503
      %p505 = scmp.ne.s32.totalorder %s497, %s499
      %p506 = scmp.eq.s32.totalorder %s50, 3
      %p507 = por %p505, %p506
      %p508 = scmp.ne.s32.totalorder %s499, %s500
      %p509 = scmp.eq.s32.totalorder %s50, 0
      %p510 = por %p508, %p509
      %p511 = scmp.ne.s32.totalorder %s499, %s500
      %p512 = scmp.eq.s32.totalorder %s51, 3
      %p513 = por %p511, %p512
      %p515 = scmp.ne.s32.totalorder %s500, %s514
      %p516 = scmp.eq.s32.totalorder %s51, 0
      %p517 = por %p515, %p516
      %s518 = ssub.s32 %s52, %s64
      %p519 = scmp.eq.s32.totalorder %s518, 0
      %s521 = sadd.s32 %s520, 1
      %s522 = scalar_select %p519, %s520, %s521
      %p525 = pneg %p519
      %p526 = scmp.eq.s32.totalorder %s45, 3
      %p527 = por %p525, %p526
      %p528 = scmp.ne.s32.totalorder %s520, %s523
      %p529 = scmp.eq.s32.totalorder %s45, 0
      %p530 = por %p528, %p529
      %p531 = scmp.ne.s32.totalorder %s520, %s523
      %p532 = scmp.eq.s32.totalorder %s50, 3
      %p533 = por %p531, %p532
      %p534 = scmp.ne.s32.totalorder %s523, %s524
      %p535 = scmp.eq.s32.totalorder %s50, 0
      %p536 = por %p534, %p535
      %p537 = scmp.ne.s32.totalorder %s523, %s524
      %p538 = scmp.eq.s32.totalorder %s51, 3
      %p539 = por %p537, %p538
      %p541 = scmp.ne.s32.totalorder %s524, %s540
      %p542 = scmp.eq.s32.totalorder %s51, 0
      %p543 = por %p541, %p542
      %p544 = scmp.le.s32.totalorder 1, %s45
      %p545 = scmp.lt.s32.totalorder %s45, 5
      %p546 = pnand %p544, %p545
      %p547 = pneg %p546
      // Predicated region
      $region9: #{decoder_forward.1} parent=5 // pred_check
        _
      $region10: #{decoder_forward.1} parent=5 // pred_check_branch
        %549 = sbr.rel (%p546) target = $region12
      $region11: #{decoder_forward.1} parent=5 // pred_region
        %s550 = ssub.s32 %s45, 1
        // Predicated region
        $region13: #{decoder_forward.1} parent=11 // pred_check
          %p551 = pneg %p130
        $region14: #{decoder_forward.1} parent=11 // pred_check_branch
          %553 = sbr.rel (%p551) target = $region16
        $region15: #{decoder_forward.1} parent=11 // pred_region
          _
        $region16: #{decoder_forward.1} parent=11 // pred_fallthru
          _
        // Predicated region
        $region17: #{decoder_forward.1} parent=11 // pred_check
          %p554 = pneg %p489
        $region18: #{decoder_forward.1} parent=11 // pred_check_branch
          %556 = sbr.rel (%p554) target = $region20
        $region19: #{decoder_forward.1} parent=11 // pred_region
          %s558 = ssub.s32 1024, 1024
          %559 = vsyncadd [#allocation19], %s558
          %s560 = sshll.u32 [#allocation20], 4
          %s561 = int_to_ptr.vmem [resolvable:$true] %s560
          %566 = dma.hbm_to_vmem [thread:$0]  %s16, 1024, %s561, [#allocation19], 64, 64, 4
        $region20: #{decoder_forward.1} parent=11 // pred_fallthru
          _
        // Predicated region
        $region21: #{decoder_forward.1} parent=11 // pred_check
          %p567 = pneg %p510
        $region22: #{decoder_forward.1} parent=11 // pred_check_branch
          %569 = sbr.rel (%p567) target = $region24
        $region23: #{decoder_forward.1} parent=11 // pred_region
          _
        $region24: #{decoder_forward.1} parent=11 // pred_fallthru
          _
      $region12: #{decoder_forward.1} parent=5 // pred_fallthru
        _
      %p570 = scmp.lt.s32.totalorder %s45, 4
      // Predicated region
      $region25: #{decoder_forward.1} parent=5 // pred_check
        %p571 = pneg %p570
      $region26: #{decoder_forward.1} parent=5 // pred_check_branch
        %573 = sbr.rel (%p571) target = $region28
      $region27: #{decoder_forward.1} parent=5 // pred_region
        // Predicated region
        $region29: #{decoder_forward.1} parent=27 // pred_check
          %p574 = pneg %p77
        $region30: #{decoder_forward.1} parent=27 // pred_check_branch
          %576 = sbr.rel (%p574) target = $region32
        $region31: #{decoder_forward.1} parent=27 // pred_region
          %p577 = scmp.lt.s32.totalorder %s52, 1
          %s578 = scalar_select %p577, %s52, 1
          %s579 = smul.addr %s578, 8
          %s580 = scalar_lea.vmem %s0, %s579
        $region32: #{decoder_forward.1} parent=27 // pred_fallthru
          _
        // Predicated region
        $region33: #{decoder_forward.1} parent=27 // pred_check
          %p581 = pneg %p103
        $region34: #{decoder_forward.1} parent=27 // pred_check_branch
          %583 = sbr.rel (%p581) target = $region36
        $region35: #{decoder_forward.1} parent=27 // pred_region
          %p584 = scmp.lt.s32.totalorder %s52, 1
          %s585 = scalar_select %p584, %s52, 1
          %s586 = smul.addr %s585, 4
          %s587 = scalar_lea.vmem %s1, %s586
        $region36: #{decoder_forward.1} parent=27 // pred_fallthru
          _
        // Predicated region
        $region37: #{decoder_forward.1} parent=27 // pred_check
          %p588 = pneg %p150
        $region38: #{decoder_forward.1} parent=27 // pred_check_branch
          %590 = sbr.rel (%p588) target = $region40
        $region39: #{decoder_forward.1} parent=27 // pred_region
          %p591 = scmp.lt.s32.totalorder %s53, 1
          %s592 = scalar_select %p591, %s53, 1
          %s593 = smul.addr %s592, 48
          %s594 = smul.addr %s593, 4
          %s595 = scalar_lea.vmem %s3, %s594
        $region40: #{decoder_forward.1} parent=27 // pred_fallthru
          _
        // Predicated region
        $region41: #{decoder_forward.1} parent=27 // pred_check
          %p596 = pneg %p176
        $region42: #{decoder_forward.1} parent=27 // pred_check_branch
          %598 = sbr.rel (%p596) target = $region44
        $region43: #{decoder_forward.1} parent=27 // pred_region
          %p599 = scmp.lt.s32.totalorder %s53, 1
          %s600 = scalar_select %p599, %s53, 1
          %s601 = smul.addr %s600, 3
          %s602 = scalar_lea.vmem %s4, %s601
        $region44: #{decoder_forward.1} parent=27 // pred_fallthru
          _
        // Predicated region
        $region45: #{decoder_forward.1} parent=27 // pred_check
          %p603 = pneg %p202
        $region46: #{decoder_forward.1} parent=27 // pred_check_branch
          %605 = sbr.rel (%p603) target = $region48
        $region47: #{decoder_forward.1} parent=27 // pred_region
          %s606 = sand.u32 %s192, 1
          %s607 = scalar_lea.sflag [#allocation4], %s606
          %s608 = sand.u32 %s192, 1
          %s609 = smul.addr %s608, 64
          %s610 = scalar_lea.vmem [#allocation3], %s609
          %s612 = ssub.s32 1024, 1024
          %613 = vsyncadd %s607, %s612
          %s614 = smul.addr %s53, 16
          %s615 = smul.addr %s614, 64
          %s616 = scalar_lea.hbm %s5, %s615
          %s617 = sshll.u32 %s610, 4
          %s618 = int_to_ptr.vmem [resolvable:$true] %s617
          %623 = dma.hbm_to_vmem [thread:$0]  %s616, 1024, %s618, %s607, 64, 64, 4
        $region48: #{decoder_forward.1} parent=27 // pred_fallthru
          _
        // Predicated region
        $region49: #{decoder_forward.1} parent=27 // pred_check
          %p624 = pneg %p228
        $region50: #{decoder_forward.1} parent=27 // pred_check_branch
          %626 = sbr.rel (%p624) target = $region52
        $region51: #{decoder_forward.1} parent=27 // pred_region
          %s627 = sand.u32 %s45, 1
          %s628 = scalar_lea.sflag [#allocation7], %s627
          %s629 = sand.u32 %s218, 1
          %s630 = scalar_lea.vmem [#allocation6], %s629
          %s632 = ssub.s32 16, 16
          %633 = vsyncadd %s628, %s632
          %s634 = smul.addr %s53, 16
          %s635 = scalar_lea.hbm %s6, %s634
          %s637 = sshll.u32 %s630, 4
          %s638 = int_to_ptr.vmem [resolvable:$true] %s637
          %640 = dma.hbm_to_vmem [thread:$0]  %s635, 16, %s638, %s628
        $region52: #{decoder_forward.1} parent=27 // pred_fallthru
          _
        // Predicated region
        $region53: #{decoder_forward.1} parent=27 // pred_check
          %p641 = pneg %p254
        $region54: #{decoder_forward.1} parent=27 // pred_check_branch
          %643 = sbr.rel (%p641) target = $region56
        $region55: #{decoder_forward.1} parent=27 // pred_region
          %s644 = sand.u32 %s45, 1
          %s645 = scalar_lea.sflag [#allocation7], %s644
          %s646 = sand.u32 %s244, 1
          %s647 = smul.addr %s646, 64
          %s648 = scalar_lea.vmem [#allocation8], %s647
          %s650 = ssub.s32 1024, 1024
          %651 = vsyncadd %s645, %s650
          %s652 = smul.addr %s53, 16
          %s653 = smul.addr %s652, 64
          %s654 = scalar_lea.hbm %s7, %s653
          %s655 = sshll.u32 %s648, 4
          %s656 = int_to_ptr.vmem [resolvable:$true] %s655
          %661 = dma.hbm_to_vmem [thread:$0]  %s654, 1024, %s656, %s645, 64, 64, 4
        $region56: #{decoder_forward.1} parent=27 // pred_fallthru
          _
        // Predicated region
        $region57: #{decoder_forward.1} parent=27 // pred_check
          %p662 = pneg %p280
        $region58: #{decoder_forward.1} parent=27 // pred_check_branch
          %664 = sbr.rel (%p662) target = $region60
        $region59: #{decoder_forward.1} parent=27 // pred_region
          %s665 = sand.u32 %s45, 1
          %s666 = scalar_lea.sflag [#allocation10], %s665
          %s667 = sand.u32 %s270, 1
          %s668 = scalar_lea.vmem [#allocation9], %s667
          %s670 = ssub.s32 16, 16
          %671 = vsyncadd %s666, %s670
          %s672 = smul.addr %s53, 16
          %s673 = scalar_lea.hbm %s8, %s672
          %s675 = sshll.u32 %s668, 4
          %s676 = int_to_ptr.vmem [resolvable:$true] %s675
          %678 = dma.hbm_to_vmem [thread:$0]  %s673, 16, %s676, %s666
        $region60: #{decoder_forward.1} parent=27 // pred_fallthru
          _
        // Predicated region
        $region61: #{decoder_forward.1} parent=27 // pred_check
          %p679 = pneg %p306
        $region62: #{decoder_forward.1} parent=27 // pred_check_branch
          %681 = sbr.rel (%p679) target = $region64
        $region63: #{decoder_forward.1} parent=27 // pred_region
          %s682 = sand.u32 %s45, 1
          %s683 = scalar_lea.sflag [#allocation10], %s682
          %s684 = sand.u32 %s296, 1
          %s685 = smul.addr %s684, 64
          %s686 = scalar_lea.vmem [#allocation11], %s685
          %s688 = ssub.s32 1024, 1024
          %689 = vsyncadd %s683, %s688
          %s690 = smul.addr %s53, 16
          %s691 = smul.addr %s690, 64
          %s692 = scalar_lea.hbm %s9, %s691
          %s693 = sshll.u32 %s686, 4
          %s694 = int_to_ptr.vmem [resolvable:$true] %s693
          %699 = dma.hbm_to_vmem [thread:$0]  %s692, 1024, %s694, %s683, 64, 64, 4
        $region64: #{decoder_forward.1} parent=27 // pred_fallthru
          _
        // Predicated region
        $region65: #{decoder_forward.1} parent=27 // pred_check
          %p700 = pneg %p332
        $region66: #{decoder_forward.1} parent=27 // pred_check_branch
          %702 = sbr.rel (%p700) target = $region68
        $region67: #{decoder_forward.1} parent=27 // pred_region
          %s703 = sand.u32 %s45, 1
          %s704 = scalar_lea.sflag [#allocation13], %s703
          %s705 = sand.u32 %s322, 1
          %s706 = scalar_lea.vmem [#allocation12], %s705
          %s708 = ssub.s32 16, 16
          %709 = vsyncadd %s704, %s708
          %s710 = smul.addr %s53, 16
          %s711 = scalar_lea.hbm %s10, %s710
          %s713 = sshll.u32 %s706, 4
          %s714 = int_to_ptr.vmem [resolvable:$true] %s713
          %716 = dma.hbm_to_vmem [thread:$0]  %s711, 16, %s714, %s704
        $region68: #{decoder_forward.1} parent=27 // pred_fallthru
          _
        // Predicated region
        $region69: #{decoder_forward.1} parent=27 // pred_check
          %p717 = pneg %p358
        $region70: #{decoder_forward.1} parent=27 // pred_check_branch
          %719 = sbr.rel (%p717) target = $region72
        $region71: #{decoder_forward.1} parent=27 // pred_region
          %s720 = sand.u32 %s45, 1
          %s721 = scalar_lea.sflag [#allocation13], %s720
          %s722 = sand.u32 %s348, 1
          %s723 = smul.addr %s722, 1024
          %s724 = scalar_lea.vmem [#allocation14], %s723
          %s726 = ssub.s32 16384, 16384
          %727 = vsyncadd %s721, %s726
          %s728 = smul.addr %s53, 256
          %s729 = smul.addr %s728, 64
          %s730 = scalar_lea.hbm %s11, %s729
          %s731 = sshll.u32 %s724, 4
          %s732 = int_to_ptr.vmem [resolvable:$true] %s731
          %737 = dma.hbm_to_vmem [thread:$0]  %s730, 16384, %s732, %s721, 1024, 1024, 64
        $region72: #{decoder_forward.1} parent=27 // pred_fallthru
          _
        // Predicated region
        $region73: #{decoder_forward.1} parent=27 // pred_check
          %p738 = pneg %p384
        $region74: #{decoder_forward.1} parent=27 // pred_check_branch
          %740 = sbr.rel (%p738) target = $region76
        $region75: #{decoder_forward.1} parent=27 // pred_region
          %s741 = sand.u32 %s45, 1
          %s742 = scalar_lea.sflag [#allocation16], %s741
          %s743 = sand.u32 %s374, 1
          %s744 = smul.addr %s743, 16
          %s745 = scalar_lea.vmem [#allocation15], %s744
          %s747 = ssub.s32 256, 256
          %748 = vsyncadd %s742, %s747
          %s749 = smul.addr %s53, 16
          %s750 = smul.addr %s749, 16
          %s751 = scalar_lea.hbm %s12, %s750
          %s753 = sshll.u32 %s745, 4
          %s754 = int_to_ptr.vmem [resolvable:$true] %s753
          %756 = dma.hbm_to_vmem [thread:$0]  %s751, 256, %s754, %s742
        $region76: #{decoder_forward.1} parent=27 // pred_fallthru
          _
        // Predicated region
        $region77: #{decoder_forward.1} parent=27 // pred_check
          %p757 = pneg %p410
        $region78: #{decoder_forward.1} parent=27 // pred_check_branch
          %759 = sbr.rel (%p757) target = $region80
        $region79: #{decoder_forward.1} parent=27 // pred_region
          %s760 = sand.u32 %s45, 1
          %s761 = scalar_lea.sflag [#allocation16], %s760
          %s762 = sand.u32 %s400, 1
          %s763 = smul.addr %s762, 1024
          %s764 = scalar_lea.vmem [#allocation17], %s763
          %s766 = ssub.s32 16384, 16384
          %767 = vsyncadd %s761, %s766
          %s768 = smul.addr %s53, 256
          %s769 = smul.addr %s768, 64
          %s770 = scalar_lea.hbm %s13, %s769
          %s771 = sshll.u32 %s764, 4
          %s772 = int_to_ptr.vmem [resolvable:$true] %s771
          %777 = dma.hbm_to_vmem [thread:$0]  %s770, 16384, %s772, %s761, 64, 64, 4
        $region80: #{decoder_forward.1} parent=27 // pred_fallthru
          _
        // Predicated region
        $region81: #{decoder_forward.1} parent=27 // pred_check
          %p778 = pneg %p436
        $region82: #{decoder_forward.1} parent=27 // pred_check_branch
          %780 = sbr.rel (%p778) target = $region84
        $region83: #{decoder_forward.1} parent=27 // pred_region
          %s781 = sand.u32 %s45, 1
          %s782 = scalar_lea.sflag [#allocation19], %s781
          %s783 = sand.u32 %s426, 1
          %s784 = scalar_lea.vmem [#allocation18], %s783
          %s786 = ssub.s32 16, 16
          %787 = vsyncadd %s782, %s786
          %s788 = smul.addr %s53, 16
          %s789 = scalar_lea.hbm %s14, %s788
          %s791 = sshll.u32 %s784, 4
          %s792 = int_to_ptr.vmem [resolvable:$true] %s791
          %794 = dma.hbm_to_vmem [thread:$0]  %s789, 16, %s792, %s782
        $region84: #{decoder_forward.1} parent=27 // pred_fallthru
          _
        // Predicated region
        $region85: #{decoder_forward.1} parent=27 // pred_check
          %p795 = pneg %p462
        $region86: #{decoder_forward.1} parent=27 // pred_check_branch
          %797 = sbr.rel (%p795) target = $region88
        $region87: #{decoder_forward.1} parent=27 // pred_region
          %p798 = scmp.lt.s32.totalorder %s53, 1
          %s799 = scalar_select %p798, %s53, 1
          %s800 = smul.addr %s799, 8
          %s801 = scalar_lea.vmem %s15, %s800
        $region88: #{decoder_forward.1} parent=27 // pred_fallthru
          _
      $region28: #{decoder_forward.1} parent=5 // pred_fallthru
        _
      %p802 = scmp.le.s32.totalorder 1, %s45
      %p803 = scmp.lt.s32.totalorder %s45, 5
      %p804 = pnand %p802, %p803
      %p805 = pneg %p804
      // Predicated region
      $region89: #{decoder_forward.1} parent=5 // pred_check
        _
      $region90: #{decoder_forward.1} parent=5 // pred_check_branch
        %807 = sbr.rel (%p804) target = $region92
      $region91: #{decoder_forward.1} parent=5 // pred_region
        %s808 = ssub.s32 %s45, 1
        %s809 = sand.u32 %s195, 1
        %s810 = scalar_lea.sflag [#allocation4], %s809
        %s811 = sand.u32 %s195, 1
        %s812 = smul.addr %s811, 64
        %s813 = scalar_lea.vmem [#allocation3], %s812
        // Predicated region
        $region93: #{decoder_forward.1} parent=91 // pred_check
          %p814 = pneg %p208
        $region94: #{decoder_forward.1} parent=91 // pred_check_branch
          %816 = sbr.rel (%p814) target = $region96
        $region95: #{decoder_forward.1} parent=91 // pred_region
          %817 = dma.done %s810, 1024
        $region96: #{decoder_forward.1} parent=91 // pred_fallthru
          _
        %s818 = sand.u32 %s50, 1
        %s819 = scalar_lea.sflag [#allocation7], %s818
        %s820 = sand.u32 %s221, 1
        %s821 = scalar_lea.vmem [#allocation6], %s820
        // Predicated region
        $region97: #{decoder_forward.1} parent=91 // pred_check
          %p822 = pneg %p234
        $region98: #{decoder_forward.1} parent=91 // pred_check_branch
          %824 = sbr.rel (%p822) target = $region100
        $region99: #{decoder_forward.1} parent=91 // pred_region
          %825 = dma.done %s819, 16
        $region100: #{decoder_forward.1} parent=91 // pred_fallthru
          _
        %s826 = sand.u32 %s50, 1
        %s827 = scalar_lea.sflag [#allocation7], %s826
        %s828 = sand.u32 %s247, 1
        %s829 = smul.addr %s828, 64
        %s830 = scalar_lea.vmem [#allocation8], %s829
        // Predicated region
        $region101: #{decoder_forward.1} parent=91 // pred_check
          %p831 = pneg %p260
        $region102: #{decoder_forward.1} parent=91 // pred_check_branch
          %833 = sbr.rel (%p831) target = $region104
        $region103: #{decoder_forward.1} parent=91 // pred_region
          %834 = dma.done %s827, 1024
        $region104: #{decoder_forward.1} parent=91 // pred_fallthru
          _
        %s835 = sand.u32 %s50, 1
        %s836 = scalar_lea.sflag [#allocation10], %s835
        %s837 = sand.u32 %s273, 1
        %s838 = scalar_lea.vmem [#allocation9], %s837
        // Predicated region
        $region105: #{decoder_forward.1} parent=91 // pred_check
          %p839 = pneg %p286
        $region106: #{decoder_forward.1} parent=91 // pred_check_branch
          %841 = sbr.rel (%p839) target = $region108
        $region107: #{decoder_forward.1} parent=91 // pred_region
          %842 = dma.done %s836, 16
        $region108: #{decoder_forward.1} parent=91 // pred_fallthru
          _
        %s843 = sand.u32 %s50, 1
        %s844 = scalar_lea.sflag [#allocation10], %s843
        %s845 = sand.u32 %s299, 1
        %s846 = smul.addr %s845, 64
        %s847 = scalar_lea.vmem [#allocation11], %s846
        // Predicated region
        $region109: #{decoder_forward.1} parent=91 // pred_check
          %p848 = pneg %p312
        $region110: #{decoder_forward.1} parent=91 // pred_check_branch
          %850 = sbr.rel (%p848) target = $region112
        $region111: #{decoder_forward.1} parent=91 // pred_region
          %851 = dma.done %s844, 1024
        $region112: #{decoder_forward.1} parent=91 // pred_fallthru
          _
        %s852 = sand.u32 %s50, 1
        %s853 = scalar_lea.sflag [#allocation13], %s852
        %s854 = sand.u32 %s325, 1
        %s855 = scalar_lea.vmem [#allocation12], %s854
        // Predicated region
        $region113: #{decoder_forward.1} parent=91 // pred_check
          %p856 = pneg %p338
        $region114: #{decoder_forward.1} parent=91 // pred_check_branch
          %858 = sbr.rel (%p856) target = $region116
        $region115: #{decoder_forward.1} parent=91 // pred_region
          %859 = dma.done %s853, 16
        $region116: #{decoder_forward.1} parent=91 // pred_fallthru
          _
        %s860 = sand.u32 %s50, 1
        %s861 = scalar_lea.sflag [#allocation13], %s860
        %s862 = sand.u32 %s351, 1
        %s863 = smul.addr %s862, 1024
        %s864 = scalar_lea.vmem [#allocation14], %s863
        // Predicated region
        $region117: #{decoder_forward.1} parent=91 // pred_check
          %p865 = pneg %p364
        $region118: #{decoder_forward.1} parent=91 // pred_check_branch
          %867 = sbr.rel (%p865) target = $region120
        $region119: #{decoder_forward.1} parent=91 // pred_region
          %868 = dma.done %s861, 16384
        $region120: #{decoder_forward.1} parent=91 // pred_fallthru
          _
        %s869 = sand.u32 %s50, 1
        %s870 = scalar_lea.sflag [#allocation16], %s869
        %s871 = sand.u32 %s377, 1
        %s872 = smul.addr %s871, 16
        %s873 = scalar_lea.vmem [#allocation15], %s872
        // Predicated region
        $region121: #{decoder_forward.1} parent=91 // pred_check
          %p874 = pneg %p390
        $region122: #{decoder_forward.1} parent=91 // pred_check_branch
          %876 = sbr.rel (%p874) target = $region124
        $region123: #{decoder_forward.1} parent=91 // pred_region
          %877 = dma.done %s870, 256
        $region124: #{decoder_forward.1} parent=91 // pred_fallthru
          _
        %s878 = sand.u32 %s50, 1
        %s879 = scalar_lea.sflag [#allocation16], %s878
        %s880 = sand.u32 %s403, 1
        %s881 = smul.addr %s880, 1024
        %s882 = scalar_lea.vmem [#allocation17], %s881
        // Predicated region
        $region125: #{decoder_forward.1} parent=91 // pred_check
          %p883 = pneg %p416
        $region126: #{decoder_forward.1} parent=91 // pred_check_branch
          %885 = sbr.rel (%p883) target = $region128
        $region127: #{decoder_forward.1} parent=91 // pred_region
          %886 = dma.done %s879, 16384
        $region128: #{decoder_forward.1} parent=91 // pred_fallthru
          _
        %s887 = sand.u32 %s50, 1
        %s888 = scalar_lea.sflag [#allocation19], %s887
        %s889 = sand.u32 %s429, 1
        %s890 = scalar_lea.vmem [#allocation18], %s889
        // Predicated region
        $region129: #{decoder_forward.1} parent=91 // pred_check
          %p891 = pneg %p442
        $region130: #{decoder_forward.1} parent=91 // pred_check_branch
          %893 = sbr.rel (%p891) target = $region132
        $region131: #{decoder_forward.1} parent=91 // pred_region
          %894 = dma.done %s888, 16
        $region132: #{decoder_forward.1} parent=91 // pred_fallthru
          _
        // Predicated region
        $region133: #{decoder_forward.1} parent=91 // pred_check
          %p895 = pneg %p489
        $region134: #{decoder_forward.1} parent=91 // pred_check_branch
          %897 = sbr.rel (%p895) target = $region136
        $region135: #{decoder_forward.1} parent=91 // pred_region
          %898 = dma.done [#allocation19], 1024
        $region136: #{decoder_forward.1} parent=91 // pred_fallthru
          _
        %p899 = scmp.lt.s32.totalorder %s54, 1
        %s900 = scalar_select %p899, %s54, 1
        %s901 = smul.addr %s900, 8
        %s902 = scalar_lea.vmem %s0, %s901
        %p903 = pneg %p83
        %p904 = pneg %p80
        %p905 = scmp.lt.s32.totalorder %s54, 1
        %s906 = scalar_select %p905, %s54, 1
        %s907 = smul.addr %s906, 4
        %s908 = scalar_lea.vmem %s1, %s907
        %p909 = pneg %p109
        %p910 = pneg %p106
        %p911 = pneg %p130
        %p912 = pneg %p127
        %p913 = scmp.lt.s32.totalorder %s55, 1
        %s914 = scalar_select %p913, %s55, 1
        %s915 = smul.addr %s914, 48
        %s916 = smul.addr %s915, 4
        %s917 = scalar_lea.vmem %s3, %s916
        %p918 = pneg %p156
        %p919 = pneg %p153
        %p920 = scmp.lt.s32.totalorder %s55, 1
        %s921 = scalar_select %p920, %s55, 1
        %s922 = smul.addr %s921, 3
        %s923 = scalar_lea.vmem %s4, %s922
        %p924 = pneg %p182
        %p925 = pneg %p179
        %s926 = sand.u32 %s195, 1
        %s927 = scalar_lea.sflag [#allocation4], %s926
        %s928 = sand.u32 %s195, 1
        %s929 = smul.addr %s928, 64
        %s930 = scalar_lea.vmem [#allocation3], %s929
        %p931 = pneg %p208
        %p932 = pneg %p205
        %s933 = sand.u32 %s50, 1
        %s934 = scalar_lea.sflag [#allocation7], %s933
        %s935 = sand.u32 %s221, 1
        %s936 = scalar_lea.vmem [#allocation6], %s935
        %p937 = pneg %p234
        %p938 = pneg %p231
        %s939 = sand.u32 %s50, 1
        %s940 = scalar_lea.sflag [#allocation7], %s939
        %s941 = sand.u32 %s247, 1
        %s942 = smul.addr %s941, 64
        %s943 = scalar_lea.vmem [#allocation8], %s942
        %p944 = pneg %p260
        %p945 = pneg %p257
        %s946 = sand.u32 %s50, 1
        %s947 = scalar_lea.sflag [#allocation10], %s946
        %s948 = sand.u32 %s273, 1
        %s949 = scalar_lea.vmem [#allocation9], %s948
        %p950 = pneg %p286
        %p951 = pneg %p283
        %s952 = sand.u32 %s50, 1
        %s953 = scalar_lea.sflag [#allocation10], %s952
        %s954 = sand.u32 %s299, 1
        %s955 = smul.addr %s954, 64
        %s956 = scalar_lea.vmem [#allocation11], %s955
        %p957 = pneg %p312
        %p958 = pneg %p309
        %s959 = sand.u32 %s50, 1
        %s960 = scalar_lea.sflag [#allocation13], %s959
        %s961 = sand.u32 %s325, 1
        %s962 = scalar_lea.vmem [#allocation12], %s961
        %p963 = pneg %p338
        %p964 = pneg %p335
        %s965 = sand.u32 %s50, 1
        %s966 = scalar_lea.sflag [#allocation13], %s965
        %s967 = sand.u32 %s351, 1
        %s968 = smul.addr %s967, 1024
        %s969 = scalar_lea.vmem [#allocation14], %s968
        %p970 = pneg %p364
        %p971 = pneg %p361
        %s972 = sand.u32 %s50, 1
        %s973 = scalar_lea.sflag [#allocation16], %s972
        %s974 = sand.u32 %s377, 1
        %s975 = smul.addr %s974, 16
        %s976 = scalar_lea.vmem [#allocation15], %s975
        %p977 = pneg %p390
        %p978 = pneg %p387
        %s979 = sand.u32 %s50, 1
        %s980 = scalar_lea.sflag [#allocation16], %s979
        %s981 = sand.u32 %s403, 1
        %s982 = smul.addr %s981, 1024
        %s983 = scalar_lea.vmem [#allocation17], %s982
        %p984 = pneg %p416
        %p985 = pneg %p413
        %s986 = sand.u32 %s50, 1
        %s987 = scalar_lea.sflag [#allocation19], %s986
        %s988 = sand.u32 %s429, 1
        %s989 = scalar_lea.vmem [#allocation18], %s988
        %p990 = pneg %p442
        %p991 = pneg %p439
        %p992 = scmp.lt.s32.totalorder %s55, 1
        %s993 = scalar_select %p992, %s55, 1
        %s994 = smul.addr %s993, 8
        %s995 = scalar_lea.vmem %s15, %s994
        %p996 = pneg %p468
        %p997 = pneg %p465
        %p998 = pneg %p489
        %p999 = pneg %p486
        %p1000 = pneg %p510
        %p1001 = pneg %p507
        %p1002 = pneg %p536
        %p1003 = pneg %p533
        %s1004 = sand.u32 %s523, 1
        %s1005 = scalar_lea.sflag [#allocation5], %s1004
        %s1006 = sand.u32 %s523, 1
        %s1007 = smul.addr %s1006, 8
        %s1008 = scalar_lea.vmem [#allocation21], %s1007
        %p1009 = scmp.lt.s32.totalorder %s54, 1
        %s1010 = scalar_select %p1009, %s54, 1
        %s1011 = smul.addr %s1010, 8
        %s1012 = scalar_lea.vmem %s0, %s1011
        %p1013 = scmp.lt.s32.totalorder %s54, 1
        %s1014 = scalar_select %p1013, %s54, 1
        %s1015 = smul.addr %s1014, 4
        %s1016 = scalar_lea.vmem %s1, %s1015
        %p1017 = scmp.lt.s32.totalorder %s55, 1
        %s1018 = scalar_select %p1017, %s55, 1
        %s1019 = smul.addr %s1018, 48
        %s1020 = smul.addr %s1019, 4
        %s1021 = scalar_lea.vmem %s3, %s1020
        %p1022 = scmp.lt.s32.totalorder %s55, 1
        %s1023 = scalar_select %p1022, %s55, 1
        %s1024 = smul.addr %s1023, 3
        %s1025 = scalar_lea.vmem %s4, %s1024
        %p1026 = scmp.lt.s32.totalorder %s55, 1
        %s1027 = scalar_select %p1026, %s55, 1
        %s1028 = smul.addr %s1027, 8
        %s1029 = scalar_lea.vmem %s15, %s1028
        %p1031 = scmp.eq.s32.totalorder %s55, 0
        // Predicated region
        $region137: #{decoder_forward.1} parent=91 // pred_check
          %p1032 = pneg %p1031
        $region138: #{decoder_forward.1} parent=91 // pred_check_branch
          %1034 = sbr.rel (%p1032) target = $region140
        $region139: #{decoder_forward.1} parent=91 // pred_region
          %v1035 = vld [vmem:[%s1012] sm:$0xff]
          %1036 = vst [vmem:[#allocation2] sm:$0xff] %v1035
        $region140: #{decoder_forward.1} parent=91 // pred_fallthru
          _
        %v1037 = vld [vmem:[#allocation2] sm:$0xff]
        %v1038 = vld [vmem:[%s2] sm:$0xff]
        %v1039 = vpack.c.bf16 %v1037, %v1037
        %v1040 = vld [vmem:[%s1021] sm:$0xff]
        %v1041 = vld [vmem:[%s1021 + $0x8] sm:$0xf]
        %v1042 = vld [vmem:[%s1021 + $0xc] sm:$0xff]
        %v1043 = vld [vmem:[%s1021 + $0x14] sm:$0xf]
        %v1044 = vld [vmem:[%s1021 + $0x18] sm:$0xff]
        %v1045 = vld [vmem:[%s1021 + $0x20] sm:$0xf]
        %v1046 = vld [vmem:[%s1021 + $0x24] sm:$0xff]
        %v1047 = vld [vmem:[%s1021 + $0x2c] sm:$0xf]
        %v1048 = vld [vmem:[%s1021 + $0x30] sm:$0xff]
        %v1049 = vld [vmem:[%s1021 + $0x38] sm:$0xf]
        %v1050 = vld [vmem:[%s1021 + $0x3c] sm:$0xff]
        %v1051 = vld [vmem:[%s1021 + $0x44] sm:$0xf]
        %v1052 = vld [vmem:[%s1021 + $0x48] sm:$0xff]
        %v1053 = vld [vmem:[%s1021 + $0x50] sm:$0xf]
        %v1054 = vld [vmem:[%s1021 + $0x54] sm:$0xff]
        %v1055 = vld [vmem:[%s1021 + $0x5c] sm:$0xf]
        %v1056 = vld [vmem:[%s1021 + $0x60] sm:$0xff]
        %v1057 = vld [vmem:[%s1021 + $0x68] sm:$0xf]
        %v1058 = vld [vmem:[%s1021 + $0x6c] sm:$0xff]
        %v1059 = vld [vmem:[%s1021 + $0x74] sm:$0xf]
        %v1060 = vld [vmem:[%s1021 + $0x78] sm:$0xff]
        %v1061 = vld [vmem:[%s1021 + $0x80] sm:$0xf]
        %v1062 = vld [vmem:[%s1021 + $0x84] sm:$0xff]
        %v1063 = vld [vmem:[%s1021 + $0x8c] sm:$0xf]
        %v1064 = vld [vmem:[%s1021 + $0x90] sm:$0xff]
        %v1065 = vld [vmem:[%s1021 + $0x98] sm:$0xf]
        %v1066 = vld [vmem:[%s1021 + $0x9c] sm:$0xff]
        %v1067 = vld [vmem:[%s1021 + $0xa4] sm:$0xf]
        %v1068 = vld [vmem:[%s1021 + $0xa8] sm:$0xff]
        %v1069 = vld [vmem:[%s1021 + $0xb0] sm:$0xf]
        %v1070 = vld [vmem:[%s1021 + $0xb4] sm:$0xff]
        %v1071 = vld [vmem:[%s1021 + $0xbc] sm:$0xf]
        %v1072 = vld [vmem:[%s1025] sm:$0x7]
        %v1074 = vlaneseq
        %v1075 = vshrl.u32 %v1074, 7
        %v1076 = vsub.s32 0, %v1075
        %v1077 = vrot.slane %v1072, %v1076
        %v1078 = vlaneseq
        %v1079 = vshrl.u32 %v1078, 7
        %v1080 = vsub.s32 1, %v1079
        %v1081 = vrot.slane %v1072, %v1080
        %v1082 = vlaneseq
        %v1083 = vshrl.u32 %v1082, 7
        %v1084 = vsub.s32 2, %v1083
        %v1085 = vrot.slane %v1072, %v1084
        %v1121 = vunpack.c.l.b16 %v1040
        %v1122 = vunpack.c.h.b16 %v1040
        %v1123 = vunpack.c.l.b16 %v1041
        %v1124 = vunpack.c.l.b16 %v1042
        %v1125 = vunpack.c.h.b16 %v1042
        %v1126 = vunpack.c.l.b16 %v1043
        %v1127 = vunpack.c.l.b16 %v1044
        %v1128 = vunpack.c.h.b16 %v1044
        %v1129 = vunpack.c.l.b16 %v1045
        %v1130 = vunpack.c.l.b16 %v1046
        %v1131 = vunpack.c.h.b16 %v1046
        %v1132 = vunpack.c.l.b16 %v1047
        %v1133 = vunpack.c.l.b16 %v1048
        %v1134 = vunpack.c.h.b16 %v1048
        %v1135 = vunpack.c.l.b16 %v1049
        %v1136 = vunpack.c.l.b16 %v1050
        %v1137 = vunpack.c.h.b16 %v1050
        %v1138 = vunpack.c.l.b16 %v1051
        %v1139 = vunpack.c.l.b16 %v1052
        %v1140 = vunpack.c.h.b16 %v1052
        %v1141 = vunpack.c.l.b16 %v1053
        %v1142 = vunpack.c.l.b16 %v1054
        %v1143 = vunpack.c.h.b16 %v1054
        %v1144 = vunpack.c.l.b16 %v1055
        %v1145 = vunpack.c.l.b16 %v1056
        %v1146 = vunpack.c.h.b16 %v1056
        %v1147 = vunpack.c.l.b16 %v1057
        %v1148 = vunpack.c.l.b16 %v1058
        %v1149 = vunpack.c.h.b16 %v1058
        %v1150 = vunpack.c.l.b16 %v1059
        %v1151 = vunpack.c.l.b16 %v1060
        %v1152 = vunpack.c.h.b16 %v1060
        %v1153 = vunpack.c.l.b16 %v1061
        %v1154 = vunpack.c.l.b16 %v1062
        %v1155 = vunpack.c.h.b16 %v1062
        %v1156 = vunpack.c.l.b16 %v1063
        %v1157 = vunpack.c.l.b16 %v1064
        %v1158 = vunpack.c.h.b16 %v1064
        %v1159 = vunpack.c.l.b16 %v1065
        %v1160 = vunpack.c.l.b16 %v1066
        %v1161 = vunpack.c.h.b16 %v1066
        %v1162 = vunpack.c.l.b16 %v1067
        %v1163 = vunpack.c.l.b16 %v1068
        %v1164 = vunpack.c.h.b16 %v1068
        %v1165 = vunpack.c.l.b16 %v1069
        %v1166 = vunpack.c.l.b16 %v1070
        %v1167 = vunpack.c.h.b16 %v1070
        %v1168 = vunpack.c.l.b16 %v1071
        %v1169 = vpack.c.b16 %v1124, %v1121
        %v1170 = vpack.c.b16 %v1125, %v1122
        %v1171 = vpack.c.b16 %v1126, %v1123
        %v1172 = vpack.c.b16 %v1130, %v1127
        %v1173 = vpack.c.b16 %v1131, %v1128
        %v1174 = vpack.c.b16 %v1132, %v1129
        %v1175 = vpack.c.b16 %v1136, %v1133
        %v1176 = vpack.c.b16 %v1137, %v1134
        %v1177 = vpack.c.b16 %v1138, %v1135
        %v1178 = vpack.c.b16 %v1142, %v1139
        %v1179 = vpack.c.b16 %v1143, %v1140
        %v1180 = vpack.c.b16 %v1144, %v1141
        %v1181 = vpack.c.b16 %v1148, %v1145
        %v1182 = vpack.c.b16 %v1149, %v1146
        %v1183 = vpack.c.b16 %v1150, %v1147
        %v1184 = vpack.c.b16 %v1154, %v1151
        %v1185 = vpack.c.b16 %v1155, %v1152
        %v1186 = vpack.c.b16 %v1156, %v1153
        %v1187 = vpack.c.b16 %v1160, %v1157
        %v1188 = vpack.c.b16 %v1161, %v1158
        %v1189 = vpack.c.b16 %v1162, %v1159
        %v1190 = vpack.c.b16 %v1166, %v1163
        %v1191 = vpack.c.b16 %v1167, %v1164
        %v1192 = vpack.c.b16 %v1168, %v1165
        %1217 = vmatprep.subr.bf16.mxu0 %v1170
        %1218 = vmatpush1.bf16.msra.mxu0 %v1169
        %1219 = vmatprep.subr.bf16.mxu0 %v1173
        %1220 = vmatpush1.bf16.msra.mxu0 %v1172
        %1221 = vmatprep.subr.bf16.mxu0 %v1176
        %1222 = vmatpush1.bf16.msra.mxu0 %v1175
        %1223 = vmatprep.subr.bf16.mxu0 %v1179
        %1224 = vmatpush1.bf16.msra.mxu0 %v1178
        %1225 = vmatprep.subr.bf16.mxu0 %v1182
        %1226 = vmatpush1.bf16.msra.mxu0 %v1181
        %1227 = vmatprep.subr.bf16.mxu0 %v1185
        %1228 = vmatpush1.bf16.msra.mxu0 %v1184
        %1229 = vmatprep.subr.bf16.mxu0 %v1188
        %1230 = vmatpush1.bf16.msra.mxu0 %v1187
        %1231 = vmatprep.subr.bf16.mxu0 %v1191
        %1232 = vmatpush1.bf16.msra.mxu0 %v1190
        %1233 = vmatprep.subr.bf16.mxu0 0
        %1234 = vmatpush1.bf16.msra.mxu0 0
        %1235 = vmatprep.subr.bf16.mxu0 0
        %1236 = vmatpush1.bf16.msra.mxu0 0
        %1237 = vmatprep.subr.bf16.mxu0 0
        %1238 = vmatpush1.bf16.msra.mxu0 0
        %1239 = vmatprep.subr.bf16.mxu0 0
        %1240 = vmatpush1.bf16.msra.mxu0 0
        %1241 = vmatprep.subr.bf16.mxu0 0
        %1242 = vmatpush1.bf16.msra.mxu0 0
        %1243 = vmatprep.subr.bf16.mxu0 0
        %1244 = vmatpush1.bf16.msra.mxu0 0
        %1245 = vmatprep.subr.bf16.mxu0 0
        %1246 = vmatpush1.bf16.msra.mxu0 0
        %1247 = vmatprep.subr.bf16.mxu0 0
        %1248 = vmatpush1.bf16.msra.mxu0 0
        %1249 = vmatprep.mubr.bf16.mxu0 0
        %1250 = vmatmul.mubr.bf16.gmra.mrb[0].mxu0 %v1039
        %v1251 = vpop.f32.mrb[0].mxu0
        %v1252 = vadd.f32 %v1077, %v1251
        %v1253 = vpop.f32.mrb[0].mxu0
        %v1254 = vadd.f32 %v1081, %v1253
        %v1255 = vpop.f32.mrb[0].mxu0
        %v1256 = vpop.f32.mrb[0].mxu0
        %1257 = vdwg.mxu0
        %1258 = vmatprep.subr.bf16.mxu0 0
        %1259 = vmatpush1.bf16.msra.mxu0 %v1171
        %1260 = vmatprep.subr.bf16.mxu0 0
        %1261 = vmatpush1.bf16.msra.mxu0 %v1174
        %1262 = vmatprep.subr.bf16.mxu0 0
        %1263 = vmatpush1.bf16.msra.mxu0 %v1177
        %1264 = vmatprep.subr.bf16.mxu0 0
        %1265 = vmatpush1.bf16.msra.mxu0 %v1180
        %1266 = vmatprep.subr.bf16.mxu0 0
        %1267 = vmatpush1.bf16.msra.mxu0 %v1183
        %1268 = vmatprep.subr.bf16.mxu0 0
        %1269 = vmatpush1.bf16.msra.mxu0 %v1186
        %1270 = vmatprep.subr.bf16.mxu0 0
        %1271 = vmatpush1.bf16.msra.mxu0 %v1189
        %1272 = vmatprep.subr.bf16.mxu0 0
        %1273 = vmatpush1.bf16.msra.mxu0 %v1192
        %1274 = vmatprep.subr.bf16.mxu0 0
        %1275 = vmatpush1.bf16.msra.mxu0 0
        %1276 = vmatprep.subr.bf16.mxu0 0
        %1277 = vmatpush1.bf16.msra.mxu0 0
        %1278 = vmatprep.subr.bf16.mxu0 0
        %1279 = vmatpush1.bf16.msra.mxu0 0
        %1280 = vmatprep.subr.bf16.mxu0 0
        %1281 = vmatpush1.bf16.msra.mxu0 0
        %1282 = vmatprep.subr.bf16.mxu0 0
        %1283 = vmatpush1.bf16.msra.mxu0 0
        %1284 = vmatprep.subr.bf16.mxu0 0
        %1285 = vmatpush1.bf16.msra.mxu0 0
        %1286 = vmatprep.subr.bf16.mxu0 0
        %1287 = vmatpush1.bf16.msra.mxu0 0
        %1288 = vmatprep.subr.bf16.mxu0 0
        %1289 = vmatpush1.bf16.msra.mxu0 0
        %1290 = vmatprep.mubr.bf16.mxu0 0
        %1291 = vmatmul.mubr.bf16.gmra.mrb[0].mxu0 %v1039
        %v1292 = vpop.f32.mrb[0].mxu0
        %v1293 = vadd.f32 %v1085, %v1292
        %v1294 = vpop.f32.mrb[0].mxu0
        %v1295 = vpop.f32.mrb[0].mxu0
        %v1296 = vpop.f32.mrb[0].mxu0
        %1297 = vdwg.mxu0
        %1299 = vrot.lane.b32.xlu0 %v1252, 112
        %v1300 = vpop.permute.xlu0 %1299
        %1302 = vrot.lane.b32.xlu0 %v1252, 96
        %v1303 = vpop.permute.xlu0 %1302
        %1305 = vrot.lane.b32.xlu0 %v1252, 80
        %v1306 = vpop.permute.xlu0 %1305
        %1308 = vrot.lane.b32.xlu0 %v1252, 64
        %v1309 = vpop.permute.xlu0 %1308
        %1311 = vrot.lane.b32.xlu0 %v1252, 48
        %v1312 = vpop.permute.xlu0 %1311
        %1314 = vrot.lane.b32.xlu0 %v1252, 32
        %v1315 = vpop.permute.xlu0 %1314
        %1317 = vrot.lane.b32.xlu0 %v1252, 16
        %v1318 = vpop.permute.xlu0 %1317
        %v1320 = vcombine.low %v1252, %v1303
        %v1321 = vcombine.high %v1252, %v1303
        %v1323 = vunpack.c.l.s4 1983009808
        %v1324 = vunpack.c.0.s8 %v1323
        %v1325 = vlaneseq
        %v1326 = vshrl.u32 %v1325, 7
        %v1327 = vsub.s32 %v1324, %v1326
        %v1328 = vrot.slane %v1320, %v1327
        %v1330 = vunpack.c.l.s4 1983009808
        %v1331 = vunpack.c.0.s8 %v1330
        %v1332 = vlaneseq
        %v1333 = vshrl.u32 %v1332, 7
        %v1334 = vsub.s32 %v1331, %v1333
        %v1335 = vrot.slane %v1321, %v1334
        %v1336 = vcombine.low %v1300, %v1306
        %v1337 = vcombine.high %v1300, %v1306
        %v1339 = vunpack.c.l.s4 1983009808
        %v1340 = vunpack.c.0.s8 %v1339
        %v1341 = vlaneseq
        %v1342 = vshrl.u32 %v1341, 7
        %v1343 = vsub.s32 %v1340, %v1342
        %v1344 = vrot.slane %v1336, %v1343
        %v1346 = vunpack.c.l.s4 1983009808
        %v1347 = vunpack.c.0.s8 %v1346
        %v1348 = vlaneseq
        %v1349 = vshrl.u32 %v1348, 7
        %v1350 = vsub.s32 %v1347, %v1349
        %v1351 = vrot.slane %v1337, %v1350
        %v1352 = vcombine.low %v1309, %v1315
        %v1353 = vcombine.high %v1309, %v1315
        %v1355 = vunpack.c.l.s4 1983009808
        %v1356 = vunpack.c.0.s8 %v1355
        %v1357 = vlaneseq
        %v1358 = vshrl.u32 %v1357, 7
        %v1359 = vsub.s32 %v1356, %v1358
        %v1360 = vrot.slane %v1352, %v1359
        %v1362 = vunpack.c.l.s4 1983009808
        %v1363 = vunpack.c.0.s8 %v1362
        %v1364 = vlaneseq
        %v1365 = vshrl.u32 %v1364, 7
        %v1366 = vsub.s32 %v1363, %v1365
        %v1367 = vrot.slane %v1353, %v1366
        %v1368 = vcombine.low %v1312, %v1318
        %v1369 = vcombine.high %v1312, %v1318
        %v1371 = vunpack.c.l.s4 1983009808
        %v1372 = vunpack.c.0.s8 %v1371
        %v1373 = vlaneseq
        %v1374 = vshrl.u32 %v1373, 7
        %v1375 = vsub.s32 %v1372, %v1374
        %v1376 = vrot.slane %v1368, %v1375
        %v1378 = vunpack.c.l.s4 1983009808
        %v1379 = vunpack.c.0.s8 %v1378
        %v1380 = vlaneseq
        %v1381 = vshrl.u32 %v1380, 7
        %v1382 = vsub.s32 %v1379, %v1381
        %v1383 = vrot.slane %v1369, %v1382
        %v1384 = vcombine.low %v1328, %v1344
        %v1385 = vcombine.high %v1328, %v1344
        %v1387 = vunpack.c.l.s4 1934713408
        %v1388 = vunpack.c.0.s8 %v1387
        %v1389 = vlaneseq
        %v1390 = vshrl.u32 %v1389, 7
        %v1391 = vsub.s32 %v1388, %v1390
        %v1392 = vrot.slane %v1384, %v1391
        %v1394 = vunpack.c.l.s4 1934713408
        %v1395 = vunpack.c.0.s8 %v1394
        %v1396 = vlaneseq
        %v1397 = vshrl.u32 %v1396, 7
        %v1398 = vsub.s32 %v1395, %v1397
        %v1399 = vrot.slane %v1385, %v1398
        %v1400 = vcombine.low %v1335, %v1351
        %v1401 = vcombine.high %v1335, %v1351
        %v1403 = vunpack.c.l.s4 1934713408
        %v1404 = vunpack.c.0.s8 %v1403
        %v1405 = vlaneseq
        %v1406 = vshrl.u32 %v1405, 7
        %v1407 = vsub.s32 %v1404, %v1406
        %v1408 = vrot.slane %v1400, %v1407
        %v1410 = vunpack.c.l.s4 1934713408
        %v1411 = vunpack.c.0.s8 %v1410
        %v1412 = vlaneseq
        %v1413 = vshrl.u32 %v1412, 7
        %v1414 = vsub.s32 %v1411, %v1413
        %v1415 = vrot.slane %v1401, %v1414
        %v1416 = vcombine.low %v1360, %v1376
        %v1417 = vcombine.high %v1360, %v1376
        %v1419 = vunpack.c.l.s4 1934713408
        %v1420 = vunpack.c.0.s8 %v1419
        %v1421 = vlaneseq
        %v1422 = vshrl.u32 %v1421, 7
        %v1423 = vsub.s32 %v1420, %v1422
        %v1424 = vrot.slane %v1416, %v1423
        %v1426 = vunpack.c.l.s4 1934713408
        %v1427 = vunpack.c.0.s8 %v1426
        %v1428 = vlaneseq
        %v1429 = vshrl.u32 %v1428, 7
        %v1430 = vsub.s32 %v1427, %v1429
        %v1431 = vrot.slane %v1417, %v1430
        %v1432 = vcombine.low %v1367, %v1383
        %v1433 = vcombine.high %v1367, %v1383
        %v1435 = vunpack.c.l.s4 1934713408
        %v1436 = vunpack.c.0.s8 %v1435
        %v1437 = vlaneseq
        %v1438 = vshrl.u32 %v1437, 7
        %v1439 = vsub.s32 %v1436, %v1438
        %v1440 = vrot.slane %v1432, %v1439
        %v1442 = vunpack.c.l.s4 1934713408
        %v1443 = vunpack.c.0.s8 %v1442
        %v1444 = vlaneseq
        %v1445 = vshrl.u32 %v1444, 7
        %v1446 = vsub.s32 %v1443, %v1445
        %v1447 = vrot.slane %v1433, %v1446
        %v1448 = vcombine.low %v1392, %v1424
        %v1449 = vcombine.high %v1392, %v1424
        %v1450 = vcombine.low %v1399, %v1431
        %v1451 = vcombine.high %v1399, %v1431
        %v1452 = vcombine.low %v1408, %v1440
        %v1453 = vcombine.high %v1408, %v1440
        %v1454 = vcombine.low %v1415, %v1447
        %v1455 = vcombine.high %v1415, %v1447
        %v1456 = vcombine.low %v1448, %v1450
        %v1457 = vcombine.high %v1448, %v1450
        %v1459 = vunpack.c.l.s4 1983009808
        %v1460 = vunpack.c.0.s8 %v1459
        %v1461 = vlaneseq
        %v1462 = vshrl.u32 %v1461, 7
        %v1463 = vsub.s32 %v1460, %v1462
        %v1464 = vrot.slane %v1456, %v1463
        %v1466 = vunpack.c.l.s4 1983009808
        %v1467 = vunpack.c.0.s8 %v1466
        %v1468 = vlaneseq
        %v1469 = vshrl.u32 %v1468, 7
        %v1470 = vsub.s32 %v1467, %v1469
        %v1471 = vrot.slane %v1457, %v1470
        %v1472 = vcombine.low %v1449, %v1451
        %v1473 = vcombine.high %v1449, %v1451
        %v1475 = vunpack.c.l.s4 1983009808
        %v1476 = vunpack.c.0.s8 %v1475
        %v1477 = vlaneseq
        %v1478 = vshrl.u32 %v1477, 7
        %v1479 = vsub.s32 %v1476, %v1478
        %v1480 = vrot.slane %v1472, %v1479
        %v1482 = vunpack.c.l.s4 1983009808
        %v1483 = vunpack.c.0.s8 %v1482
        %v1484 = vlaneseq
        %v1485 = vshrl.u32 %v1484, 7
        %v1486 = vsub.s32 %v1483, %v1485
        %v1487 = vrot.slane %v1473, %v1486
        %v1488 = vcombine.low %v1452, %v1454
        %v1489 = vcombine.high %v1452, %v1454
        %v1491 = vunpack.c.l.s4 1983009808
        %v1492 = vunpack.c.0.s8 %v1491
        %v1493 = vlaneseq
        %v1494 = vshrl.u32 %v1493, 7
        %v1495 = vsub.s32 %v1492, %v1494
        %v1496 = vrot.slane %v1488, %v1495
        %v1498 = vunpack.c.l.s4 1983009808
        %v1499 = vunpack.c.0.s8 %v1498
        %v1500 = vlaneseq
        %v1501 = vshrl.u32 %v1500, 7
        %v1502 = vsub.s32 %v1499, %v1501
        %v1503 = vrot.slane %v1489, %v1502
        %v1504 = vcombine.low %v1453, %v1455
        %v1505 = vcombine.high %v1453, %v1455
        %v1507 = vunpack.c.l.s4 1983009808
        %v1508 = vunpack.c.0.s8 %v1507
        %v1509 = vlaneseq
        %v1510 = vshrl.u32 %v1509, 7
        %v1511 = vsub.s32 %v1508, %v1510
        %v1512 = vrot.slane %v1504, %v1511
        %v1514 = vunpack.c.l.s4 1983009808
        %v1515 = vunpack.c.0.s8 %v1514
        %v1516 = vlaneseq
        %v1517 = vshrl.u32 %v1516, 7
        %v1518 = vsub.s32 %v1515, %v1517
        %v1519 = vrot.slane %v1505, %v1518
        %v1520 = vcombine.low %v1464, %v1480
        %v1521 = vcombine.high %v1464, %v1480
        %v1523 = vunpack.c.l.s4 1934713408
        %v1524 = vunpack.c.0.s8 %v1523
        %v1525 = vlaneseq
        %v1526 = vshrl.u32 %v1525, 7
        %v1527 = vsub.s32 %v1524, %v1526
        %v1528 = vrot.slane %v1520, %v1527
        %v1530 = vunpack.c.l.s4 1934713408
        %v1531 = vunpack.c.0.s8 %v1530
        %v1532 = vlaneseq
        %v1533 = vshrl.u32 %v1532, 7
        %v1534 = vsub.s32 %v1531, %v1533
        %v1535 = vrot.slane %v1521, %v1534
        %v1536 = vcombine.low %v1471, %v1487
        %v1537 = vcombine.high %v1471, %v1487
        %v1539 = vunpack.c.l.s4 1934713408
        %v1540 = vunpack.c.0.s8 %v1539
        %v1541 = vlaneseq
        %v1542 = vshrl.u32 %v1541, 7
        %v1543 = vsub.s32 %v1540, %v1542
        %v1544 = vrot.slane %v1536, %v1543
        %v1546 = vunpack.c.l.s4 1934713408
        %v1547 = vunpack.c.0.s8 %v1546
        %v1548 = vlaneseq
        %v1549 = vshrl.u32 %v1548, 7
        %v1550 = vsub.s32 %v1547, %v1549
        %v1551 = vrot.slane %v1537, %v1550
        %v1552 = vcombine.low %v1496, %v1512
        %v1553 = vcombine.high %v1496, %v1512
        %v1555 = vunpack.c.l.s4 1934713408
        %v1556 = vunpack.c.0.s8 %v1555
        %v1557 = vlaneseq
        %v1558 = vshrl.u32 %v1557, 7
        %v1559 = vsub.s32 %v1556, %v1558
        %v1560 = vrot.slane %v1552, %v1559
        %v1562 = vunpack.c.l.s4 1934713408
        %v1563 = vunpack.c.0.s8 %v1562
        %v1564 = vlaneseq
        %v1565 = vshrl.u32 %v1564, 7
        %v1566 = vsub.s32 %v1563, %v1565
        %v1567 = vrot.slane %v1553, %v1566
        %v1568 = vcombine.low %v1503, %v1519
        %v1569 = vcombine.high %v1503, %v1519
        %v1571 = vunpack.c.l.s4 1934713408
        %v1572 = vunpack.c.0.s8 %v1571
        %v1573 = vlaneseq
        %v1574 = vshrl.u32 %v1573, 7
        %v1575 = vsub.s32 %v1572, %v1574
        %v1576 = vrot.slane %v1568, %v1575
        %v1578 = vunpack.c.l.s4 1934713408
        %v1579 = vunpack.c.0.s8 %v1578
        %v1580 = vlaneseq
        %v1581 = vshrl.u32 %v1580, 7
        %v1582 = vsub.s32 %v1579, %v1581
        %v1583 = vrot.slane %v1569, %v1582
        %v1584 = vcombine.low %v1528, %v1560
        %v1585 = vcombine.high %v1528, %v1560
        %v1586 = vcombine.low %v1535, %v1567
        %v1587 = vcombine.high %v1535, %v1567
        %v1588 = vcombine.low %v1544, %v1576
        %v1589 = vcombine.high %v1544, %v1576
        %v1590 = vcombine.low %v1551, %v1583
        %v1591 = vcombine.high %v1551, %v1583
        %1593 = vrot.lane.b32.xlu0 %v1254, 112
        %v1594 = vpop.permute.xlu0 %1593
        %1596 = vrot.lane.b32.xlu0 %v1254, 96
        %v1597 = vpop.permute.xlu0 %1596
        %1599 = vrot.lane.b32.xlu0 %v1254, 80
        %v1600 = vpop.permute.xlu0 %1599
        %1602 = vrot.lane.b32.xlu0 %v1254, 64
        %v1603 = vpop.permute.xlu0 %1602
        %1605 = vrot.lane.b32.xlu0 %v1254, 48
        %v1606 = vpop.permute.xlu0 %1605
        %1608 = vrot.lane.b32.xlu0 %v1254, 32
        %v1609 = vpop.permute.xlu0 %1608
        %1611 = vrot.lane.b32.xlu0 %v1254, 16
        %v1612 = vpop.permute.xlu0 %1611
        %v1614 = vcombine.low %v1254, %v1597
        %v1615 = vcombine.high %v1254, %v1597
        %v1617 = vunpack.c.l.s4 1983009808
        %v1618 = vunpack.c.0.s8 %v1617
        %v1619 = vlaneseq
        %v1620 = vshrl.u32 %v1619, 7
        %v1621 = vsub.s32 %v1618, %v1620
        %v1622 = vrot.slane %v1614, %v1621
        %v1624 = vunpack.c.l.s4 1983009808
        %v1625 = vunpack.c.0.s8 %v1624
        %v1626 = vlaneseq
        %v1627 = vshrl.u32 %v1626, 7
        %v1628 = vsub.s32 %v1625, %v1627
        %v1629 = vrot.slane %v1615, %v1628
        %v1630 = vcombine.low %v1594, %v1600
        %v1631 = vcombine.high %v1594, %v1600
        %v1633 = vunpack.c.l.s4 1983009808
        %v1634 = vunpack.c.0.s8 %v1633
        %v1635 = vlaneseq
        %v1636 = vshrl.u32 %v1635, 7
        %v1637 = vsub.s32 %v1634, %v1636
        %v1638 = vrot.slane %v1630, %v1637
        %v1640 = vunpack.c.l.s4 1983009808
        %v1641 = vunpack.c.0.s8 %v1640
        %v1642 = vlaneseq
        %v1643 = vshrl.u32 %v1642, 7
        %v1644 = vsub.s32 %v1641, %v1643
        %v1645 = vrot.slane %v1631, %v1644
        %v1646 = vcombine.low %v1603, %v1609
        %v1647 = vcombine.high %v1603, %v1609
        %v1649 = vunpack.c.l.s4 1983009808
        %v1650 = vunpack.c.0.s8 %v1649
        %v1651 = vlaneseq
        %v1652 = vshrl.u32 %v1651, 7
        %v1653 = vsub.s32 %v1650, %v1652
        %v1654 = vrot.slane %v1646, %v1653
        %v1656 = vunpack.c.l.s4 1983009808
        %v1657 = vunpack.c.0.s8 %v1656
        %v1658 = vlaneseq
        %v1659 = vshrl.u32 %v1658, 7
        %v1660 = vsub.s32 %v1657, %v1659
        %v1661 = vrot.slane %v1647, %v1660
        %v1662 = vcombine.low %v1606, %v1612
        %v1663 = vcombine.high %v1606, %v1612
        %v1665 = vunpack.c.l.s4 1983009808
        %v1666 = vunpack.c.0.s8 %v1665
        %v1667 = vlaneseq
        %v1668 = vshrl.u32 %v1667, 7
        %v1669 = vsub.s32 %v1666, %v1668
        %v1670 = vrot.slane %v1662, %v1669
        %v1672 = vunpack.c.l.s4 1983009808
        %v1673 = vunpack.c.0.s8 %v1672
        %v1674 = vlaneseq
        %v1675 = vshrl.u32 %v1674, 7
        %v1676 = vsub.s32 %v1673, %v1675
        %v1677 = vrot.slane %v1663, %v1676
        %v1678 = vcombine.low %v1622, %v1638
        %v1679 = vcombine.high %v1622, %v1638
        %v1681 = vunpack.c.l.s4 1934713408
        %v1682 = vunpack.c.0.s8 %v1681
        %v1683 = vlaneseq
        %v1684 = vshrl.u32 %v1683, 7
        %v1685 = vsub.s32 %v1682, %v1684
        %v1686 = vrot.slane %v1678, %v1685
        %v1688 = vunpack.c.l.s4 1934713408
        %v1689 = vunpack.c.0.s8 %v1688
        %v1690 = vlaneseq
        %v1691 = vshrl.u32 %v1690, 7
        %v1692 = vsub.s32 %v1689, %v1691
        %v1693 = vrot.slane %v1679, %v1692
        %v1694 = vcombine.low %v1629, %v1645
        %v1695 = vcombine.high %v1629, %v1645
        %v1697 = vunpack.c.l.s4 1934713408
        %v1698 = vunpack.c.0.s8 %v1697
        %v1699 = vlaneseq
        %v1700 = vshrl.u32 %v1699, 7
        %v1701 = vsub.s32 %v1698, %v1700
        %v1702 = vrot.slane %v1694, %v1701
        %v1704 = vunpack.c.l.s4 1934713408
        %v1705 = vunpack.c.0.s8 %v1704
        %v1706 = vlaneseq
        %v1707 = vshrl.u32 %v1706, 7
        %v1708 = vsub.s32 %v1705, %v1707
        %v1709 = vrot.slane %v1695, %v1708
        %v1710 = vcombine.low %v1654, %v1670
        %v1711 = vcombine.high %v1654, %v1670
        %v1713 = vunpack.c.l.s4 1934713408
        %v1714 = vunpack.c.0.s8 %v1713
        %v1715 = vlaneseq
        %v1716 = vshrl.u32 %v1715, 7
        %v1717 = vsub.s32 %v1714, %v1716
        %v1718 = vrot.slane %v1710, %v1717
        %v1720 = vunpack.c.l.s4 1934713408
        %v1721 = vunpack.c.0.s8 %v1720
        %v1722 = vlaneseq
        %v1723 = vshrl.u32 %v1722, 7
        %v1724 = vsub.s32 %v1721, %v1723
        %v1725 = vrot.slane %v1711, %v1724
        %v1726 = vcombine.low %v1661, %v1677
        %v1727 = vcombine.high %v1661, %v1677
        %v1729 = vunpack.c.l.s4 1934713408
        %v1730 = vunpack.c.0.s8 %v1729
        %v1731 = vlaneseq
        %v1732 = vshrl.u32 %v1731, 7
        %v1733 = vsub.s32 %v1730, %v1732
        %v1734 = vrot.slane %v1726, %v1733
        %v1736 = vunpack.c.l.s4 1934713408
        %v1737 = vunpack.c.0.s8 %v1736
        %v1738 = vlaneseq
        %v1739 = vshrl.u32 %v1738, 7
        %v1740 = vsub.s32 %v1737, %v1739
        %v1741 = vrot.slane %v1727, %v1740
        %v1742 = vcombine.low %v1686, %v1718
        %v1743 = vcombine.high %v1686, %v1718
        %v1744 = vcombine.low %v1693, %v1725
        %v1745 = vcombine.high %v1693, %v1725
        %v1746 = vcombine.low %v1702, %v1734
        %v1747 = vcombine.high %v1702, %v1734
        %v1748 = vcombine.low %v1709, %v1741
        %v1749 = vcombine.high %v1709, %v1741
        %v1750 = vcombine.low %v1742, %v1744
        %v1751 = vcombine.high %v1742, %v1744
        %v1753 = vunpack.c.l.s4 1983009808
        %v1754 = vunpack.c.0.s8 %v1753
        %v1755 = vlaneseq
        %v1756 = vshrl.u32 %v1755, 7
        %v1757 = vsub.s32 %v1754, %v1756
        %v1758 = vrot.slane %v1750, %v1757
        %v1760 = vunpack.c.l.s4 1983009808
        %v1761 = vunpack.c.0.s8 %v1760
        %v1762 = vlaneseq
        %v1763 = vshrl.u32 %v1762, 7
        %v1764 = vsub.s32 %v1761, %v1763
        %v1765 = vrot.slane %v1751, %v1764
        %v1766 = vcombine.low %v1743, %v1745
        %v1767 = vcombine.high %v1743, %v1745
        %v1769 = vunpack.c.l.s4 1983009808
        %v1770 = vunpack.c.0.s8 %v1769
        %v1771 = vlaneseq
        %v1772 = vshrl.u32 %v1771, 7
        %v1773 = vsub.s32 %v1770, %v1772
        %v1774 = vrot.slane %v1766, %v1773
        %v1776 = vunpack.c.l.s4 1983009808
        %v1777 = vunpack.c.0.s8 %v1776
        %v1778 = vlaneseq
        %v1779 = vshrl.u32 %v1778, 7
        %v1780 = vsub.s32 %v1777, %v1779
        %v1781 = vrot.slane %v1767, %v1780
        %v1782 = vcombine.low %v1746, %v1748
        %v1783 = vcombine.high %v1746, %v1748
        %v1785 = vunpack.c.l.s4 1983009808
        %v1786 = vunpack.c.0.s8 %v1785
        %v1787 = vlaneseq
        %v1788 = vshrl.u32 %v1787, 7
        %v1789 = vsub.s32 %v1786, %v1788
        %v1790 = vrot.slane %v1782, %v1789
        %v1792 = vunpack.c.l.s4 1983009808
        %v1793 = vunpack.c.0.s8 %v1792
        %v1794 = vlaneseq
        %v1795 = vshrl.u32 %v1794, 7
        %v1796 = vsub.s32 %v1793, %v1795
        %v1797 = vrot.slane %v1783, %v1796
        %v1798 = vcombine.low %v1747, %v1749
        %v1799 = vcombine.high %v1747, %v1749
        %v1801 = vunpack.c.l.s4 1983009808
        %v1802 = vunpack.c.0.s8 %v1801
        %v1803 = vlaneseq
        %v1804 = vshrl.u32 %v1803, 7
        %v1805 = vsub.s32 %v1802, %v1804
        %v1806 = vrot.slane %v1798, %v1805
        %v1808 = vunpack.c.l.s4 1983009808
        %v1809 = vunpack.c.0.s8 %v1808
        %v1810 = vlaneseq
        %v1811 = vshrl.u32 %v1810, 7
        %v1812 = vsub.s32 %v1809, %v1811
        %v1813 = vrot.slane %v1799, %v1812
        %v1814 = vcombine.low %v1758, %v1774
        %v1815 = vcombine.high %v1758, %v1774
        %v1817 = vunpack.c.l.s4 1934713408
        %v1818 = vunpack.c.0.s8 %v1817
        %v1819 = vlaneseq
        %v1820 = vshrl.u32 %v1819, 7
        %v1821 = vsub.s32 %v1818, %v1820
        %v1822 = vrot.slane %v1814, %v1821
        %v1824 = vunpack.c.l.s4 1934713408
        %v1825 = vunpack.c.0.s8 %v1824
        %v1826 = vlaneseq
        %v1827 = vshrl.u32 %v1826, 7
        %v1828 = vsub.s32 %v1825, %v1827
        %v1829 = vrot.slane %v1815, %v1828
        %v1830 = vcombine.low %v1765, %v1781
        %v1831 = vcombine.high %v1765, %v1781
        %v1833 = vunpack.c.l.s4 1934713408
        %v1834 = vunpack.c.0.s8 %v1833
        %v1835 = vlaneseq
        %v1836 = vshrl.u32 %v1835, 7
        %v1837 = vsub.s32 %v1834, %v1836
        %v1838 = vrot.slane %v1830, %v1837
        %v1840 = vunpack.c.l.s4 1934713408
        %v1841 = vunpack.c.0.s8 %v1840
        %v1842 = vlaneseq
        %v1843 = vshrl.u32 %v1842, 7
        %v1844 = vsub.s32 %v1841, %v1843
        %v1845 = vrot.slane %v1831, %v1844
        %v1846 = vcombine.low %v1790, %v1806
        %v1847 = vcombine.high %v1790, %v1806
        %v1849 = vunpack.c.l.s4 1934713408
        %v1850 = vunpack.c.0.s8 %v1849
        %v1851 = vlaneseq
        %v1852 = vshrl.u32 %v1851, 7
        %v1853 = vsub.s32 %v1850, %v1852
        %v1854 = vrot.slane %v1846, %v1853
        %v1856 = vunpack.c.l.s4 1934713408
        %v1857 = vunpack.c.0.s8 %v1856
        %v1858 = vlaneseq
        %v1859 = vshrl.u32 %v1858, 7
        %v1860 = vsub.s32 %v1857, %v1859
        %v1861 = vrot.slane %v1847, %v1860
        %v1862 = vcombine.low %v1797, %v1813
        %v1863 = vcombine.high %v1797, %v1813
        %v1865 = vunpack.c.l.s4 1934713408
        %v1866 = vunpack.c.0.s8 %v1865
        %v1867 = vlaneseq
        %v1868 = vshrl.u32 %v1867, 7
        %v1869 = vsub.s32 %v1866, %v1868
        %v1870 = vrot.slane %v1862, %v1869
        %v1872 = vunpack.c.l.s4 1934713408
        %v1873 = vunpack.c.0.s8 %v1872
        %v1874 = vlaneseq
        %v1875 = vshrl.u32 %v1874, 7
        %v1876 = vsub.s32 %v1873, %v1875
        %v1877 = vrot.slane %v1863, %v1876
        %v1878 = vcombine.low %v1822, %v1854
        %v1879 = vcombine.high %v1822, %v1854
        %v1880 = vcombine.low %v1829, %v1861
        %v1881 = vcombine.high %v1829, %v1861
        %v1882 = vcombine.low %v1838, %v1870
        %v1883 = vcombine.high %v1838, %v1870
        %v1884 = vcombine.low %v1845, %v1877
        %v1885 = vcombine.high %v1845, %v1877
        %1887 = vrot.lane.b32.xlu0 %v1293, 112
        %v1888 = vpop.permute.xlu0 %1887
        %1890 = vrot.lane.b32.xlu0 %v1293, 96
        %v1891 = vpop.permute.xlu0 %1890
        %1893 = vrot.lane.b32.xlu0 %v1293, 80
        %v1894 = vpop.permute.xlu0 %1893
        %1896 = vrot.lane.b32.xlu0 %v1293, 64
        %v1897 = vpop.permute.xlu0 %1896
        %1899 = vrot.lane.b32.xlu0 %v1293, 48
        %v1900 = vpop.permute.xlu0 %1899
        %1902 = vrot.lane.b32.xlu0 %v1293, 32
        %v1903 = vpop.permute.xlu0 %1902
        %1905 = vrot.lane.b32.xlu0 %v1293, 16
        %v1906 = vpop.permute.xlu0 %1905
        %v1908 = vcombine.low %v1293, %v1891
        %v1909 = vcombine.high %v1293, %v1891
        %v1911 = vunpack.c.l.s4 1983009808
        %v1912 = vunpack.c.0.s8 %v1911
        %v1913 = vlaneseq
        %v1914 = vshrl.u32 %v1913, 7
        %v1915 = vsub.s32 %v1912, %v1914
        %v1916 = vrot.slane %v1908, %v1915
        %v1918 = vunpack.c.l.s4 1983009808
        %v1919 = vunpack.c.0.s8 %v1918
        %v1920 = vlaneseq
        %v1921 = vshrl.u32 %v1920, 7
        %v1922 = vsub.s32 %v1919, %v1921
        %v1923 = vrot.slane %v1909, %v1922
        %v1924 = vcombine.low %v1888, %v1894
        %v1925 = vcombine.high %v1888, %v1894
        %v1927 = vunpack.c.l.s4 1983009808
        %v1928 = vunpack.c.0.s8 %v1927
        %v1929 = vlaneseq
        %v1930 = vshrl.u32 %v1929, 7
        %v1931 = vsub.s32 %v1928, %v1930
        %v1932 = vrot.slane %v1924, %v1931
        %v1934 = vunpack.c.l.s4 1983009808
        %v1935 = vunpack.c.0.s8 %v1934
        %v1936 = vlaneseq
        %v1937 = vshrl.u32 %v1936, 7
        %v1938 = vsub.s32 %v1935, %v1937
        %v1939 = vrot.slane %v1925, %v1938
        %v1940 = vcombine.low %v1897, %v1903
        %v1941 = vcombine.high %v1897, %v1903
        %v1943 = vunpack.c.l.s4 1983009808
        %v1944 = vunpack.c.0.s8 %v1943
        %v1945 = vlaneseq
        %v1946 = vshrl.u32 %v1945, 7
        %v1947 = vsub.s32 %v1944, %v1946
        %v1948 = vrot.slane %v1940, %v1947
        %v1950 = vunpack.c.l.s4 1983009808
        %v1951 = vunpack.c.0.s8 %v1950
        %v1952 = vlaneseq
        %v1953 = vshrl.u32 %v1952, 7
        %v1954 = vsub.s32 %v1951, %v1953
        %v1955 = vrot.slane %v1941, %v1954
        %v1956 = vcombine.low %v1900, %v1906
        %v1957 = vcombine.high %v1900, %v1906
        %v1959 = vunpack.c.l.s4 1983009808
        %v1960 = vunpack.c.0.s8 %v1959
        %v1961 = vlaneseq
        %v1962 = vshrl.u32 %v1961, 7
        %v1963 = vsub.s32 %v1960, %v1962
        %v1964 = vrot.slane %v1956, %v1963
        %v1966 = vunpack.c.l.s4 1983009808
        %v1967 = vunpack.c.0.s8 %v1966
        %v1968 = vlaneseq
        %v1969 = vshrl.u32 %v1968, 7
        %v1970 = vsub.s32 %v1967, %v1969
        %v1971 = vrot.slane %v1957, %v1970
        %v1972 = vcombine.low %v1916, %v1932
        %v1973 = vcombine.high %v1916, %v1932
        %v1975 = vunpack.c.l.s4 1934713408
        %v1976 = vunpack.c.0.s8 %v1975
        %v1977 = vlaneseq
        %v1978 = vshrl.u32 %v1977, 7
        %v1979 = vsub.s32 %v1976, %v1978
        %v1980 = vrot.slane %v1972, %v1979
        %v1982 = vunpack.c.l.s4 1934713408
        %v1983 = vunpack.c.0.s8 %v1982
        %v1984 = vlaneseq
        %v1985 = vshrl.u32 %v1984, 7
        %v1986 = vsub.s32 %v1983, %v1985
        %v1987 = vrot.slane %v1973, %v1986
        %v1988 = vcombine.low %v1923, %v1939
        %v1989 = vcombine.high %v1923, %v1939
        %v1991 = vunpack.c.l.s4 1934713408
        %v1992 = vunpack.c.0.s8 %v1991
        %v1993 = vlaneseq
        %v1994 = vshrl.u32 %v1993, 7
        %v1995 = vsub.s32 %v1992, %v1994
        %v1996 = vrot.slane %v1988, %v1995
        %v1998 = vunpack.c.l.s4 1934713408
        %v1999 = vunpack.c.0.s8 %v1998
        %v2000 = vlaneseq
        %v2001 = vshrl.u32 %v2000, 7
        %v2002 = vsub.s32 %v1999, %v2001
        %v2003 = vrot.slane %v1989, %v2002
        %v2004 = vcombine.low %v1948, %v1964
        %v2005 = vcombine.high %v1948, %v1964
        %v2007 = vunpack.c.l.s4 1934713408
        %v2008 = vunpack.c.0.s8 %v2007
        %v2009 = vlaneseq
        %v2010 = vshrl.u32 %v2009, 7
        %v2011 = vsub.s32 %v2008, %v2010
        %v2012 = vrot.slane %v2004, %v2011
        %v2014 = vunpack.c.l.s4 1934713408
        %v2015 = vunpack.c.0.s8 %v2014
        %v2016 = vlaneseq
        %v2017 = vshrl.u32 %v2016, 7
        %v2018 = vsub.s32 %v2015, %v2017
        %v2019 = vrot.slane %v2005, %v2018
        %v2020 = vcombine.low %v1955, %v1971
        %v2021 = vcombine.high %v1955, %v1971
        %v2023 = vunpack.c.l.s4 1934713408
        %v2024 = vunpack.c.0.s8 %v2023
        %v2025 = vlaneseq
        %v2026 = vshrl.u32 %v2025, 7
        %v2027 = vsub.s32 %v2024, %v2026
        %v2028 = vrot.slane %v2020, %v2027
        %v2030 = vunpack.c.l.s4 1934713408
        %v2031 = vunpack.c.0.s8 %v2030
        %v2032 = vlaneseq
        %v2033 = vshrl.u32 %v2032, 7
        %v2034 = vsub.s32 %v2031, %v2033
        %v2035 = vrot.slane %v2021, %v2034
        %v2036 = vcombine.low %v1980, %v2012
        %v2037 = vcombine.high %v1980, %v2012
        %v2038 = vcombine.low %v1987, %v2019
        %v2039 = vcombine.high %v1987, %v2019
        %v2040 = vcombine.low %v1996, %v2028
        %v2041 = vcombine.high %v1996, %v2028
        %v2042 = vcombine.low %v2003, %v2035
        %v2043 = vcombine.high %v2003, %v2035
        %v2044 = vcombine.low %v2036, %v2038
        %v2045 = vcombine.high %v2036, %v2038
        %v2047 = vunpack.c.l.s4 1983009808
        %v2048 = vunpack.c.0.s8 %v2047
        %v2049 = vlaneseq
        %v2050 = vshrl.u32 %v2049, 7
        %v2051 = vsub.s32 %v2048, %v2050
        %v2052 = vrot.slane %v2044, %v2051
        %v2054 = vunpack.c.l.s4 1983009808
        %v2055 = vunpack.c.0.s8 %v2054
        %v2056 = vlaneseq
        %v2057 = vshrl.u32 %v2056, 7
        %v2058 = vsub.s32 %v2055, %v2057
        %v2059 = vrot.slane %v2045, %v2058
        %v2060 = vcombine.low %v2037, %v2039
        %v2061 = vcombine.high %v2037, %v2039
        %v2063 = vunpack.c.l.s4 1983009808
        %v2064 = vunpack.c.0.s8 %v2063
        %v2065 = vlaneseq
        %v2066 = vshrl.u32 %v2065, 7
        %v2067 = vsub.s32 %v2064, %v2066
        %v2068 = vrot.slane %v2060, %v2067
        %v2070 = vunpack.c.l.s4 1983009808
        %v2071 = vunpack.c.0.s8 %v2070
        %v2072 = vlaneseq
        %v2073 = vshrl.u32 %v2072, 7
        %v2074 = vsub.s32 %v2071, %v2073
        %v2075 = vrot.slane %v2061, %v2074
        %v2076 = vcombine.low %v2040, %v2042
        %v2077 = vcombine.high %v2040, %v2042
        %v2079 = vunpack.c.l.s4 1983009808
        %v2080 = vunpack.c.0.s8 %v2079
        %v2081 = vlaneseq
        %v2082 = vshrl.u32 %v2081, 7
        %v2083 = vsub.s32 %v2080, %v2082
        %v2084 = vrot.slane %v2076, %v2083
        %v2086 = vunpack.c.l.s4 1983009808
        %v2087 = vunpack.c.0.s8 %v2086
        %v2088 = vlaneseq
        %v2089 = vshrl.u32 %v2088, 7
        %v2090 = vsub.s32 %v2087, %v2089
        %v2091 = vrot.slane %v2077, %v2090
        %v2092 = vcombine.low %v2041, %v2043
        %v2093 = vcombine.high %v2041, %v2043
        %v2095 = vunpack.c.l.s4 1983009808
        %v2096 = vunpack.c.0.s8 %v2095
        %v2097 = vlaneseq
        %v2098 = vshrl.u32 %v2097, 7
        %v2099 = vsub.s32 %v2096, %v2098
        %v2100 = vrot.slane %v2092, %v2099
        %v2102 = vunpack.c.l.s4 1983009808
        %v2103 = vunpack.c.0.s8 %v2102
        %v2104 = vlaneseq
        %v2105 = vshrl.u32 %v2104, 7
        %v2106 = vsub.s32 %v2103, %v2105
        %v2107 = vrot.slane %v2093, %v2106
        %v2108 = vcombine.low %v2052, %v2068
        %v2109 = vcombine.high %v2052, %v2068
        %v2111 = vunpack.c.l.s4 1934713408
        %v2112 = vunpack.c.0.s8 %v2111
        %v2113 = vlaneseq
        %v2114 = vshrl.u32 %v2113, 7
        %v2115 = vsub.s32 %v2112, %v2114
        %v2116 = vrot.slane %v2108, %v2115
        %v2118 = vunpack.c.l.s4 1934713408
        %v2119 = vunpack.c.0.s8 %v2118
        %v2120 = vlaneseq
        %v2121 = vshrl.u32 %v2120, 7
        %v2122 = vsub.s32 %v2119, %v2121
        %v2123 = vrot.slane %v2109, %v2122
        %v2124 = vcombine.low %v2059, %v2075
        %v2125 = vcombine.high %v2059, %v2075
        %v2127 = vunpack.c.l.s4 1934713408
        %v2128 = vunpack.c.0.s8 %v2127
        %v2129 = vlaneseq
        %v2130 = vshrl.u32 %v2129, 7
        %v2131 = vsub.s32 %v2128, %v2130
        %v2132 = vrot.slane %v2124, %v2131
        %v2134 = vunpack.c.l.s4 1934713408
        %v2135 = vunpack.c.0.s8 %v2134
        %v2136 = vlaneseq
        %v2137 = vshrl.u32 %v2136, 7
        %v2138 = vsub.s32 %v2135, %v2137
        %v2139 = vrot.slane %v2125, %v2138
        %v2140 = vcombine.low %v2084, %v2100
        %v2141 = vcombine.high %v2084, %v2100
        %v2143 = vunpack.c.l.s4 1934713408
        %v2144 = vunpack.c.0.s8 %v2143
        %v2145 = vlaneseq
        %v2146 = vshrl.u32 %v2145, 7
        %v2147 = vsub.s32 %v2144, %v2146
        %v2148 = vrot.slane %v2140, %v2147
        %v2150 = vunpack.c.l.s4 1934713408
        %v2151 = vunpack.c.0.s8 %v2150
        %v2152 = vlaneseq
        %v2153 = vshrl.u32 %v2152, 7
        %v2154 = vsub.s32 %v2151, %v2153
        %v2155 = vrot.slane %v2141, %v2154
        %v2156 = vcombine.low %v2091, %v2107
        %v2157 = vcombine.high %v2091, %v2107
        %v2159 = vunpack.c.l.s4 1934713408
        %v2160 = vunpack.c.0.s8 %v2159
        %v2161 = vlaneseq
        %v2162 = vshrl.u32 %v2161, 7
        %v2163 = vsub.s32 %v2160, %v2162
        %v2164 = vrot.slane %v2156, %v2163
        %v2166 = vunpack.c.l.s4 1934713408
        %v2167 = vunpack.c.0.s8 %v2166
        %v2168 = vlaneseq
        %v2169 = vshrl.u32 %v2168, 7
        %v2170 = vsub.s32 %v2167, %v2169
        %v2171 = vrot.slane %v2157, %v2170
        %v2172 = vcombine.low %v2116, %v2148
        %v2173 = vcombine.high %v2116, %v2148
        %v2174 = vcombine.low %v2123, %v2155
        %v2175 = vcombine.high %v2123, %v2155
        %v2176 = vcombine.low %v2132, %v2164
        %v2177 = vcombine.high %v2132, %v2164
        %v2178 = vcombine.low %v2139, %v2171
        %v2179 = vcombine.high %v2139, %v2171
        %vm2180 = vcmask 130048
        %v2182 = vsel %vm2180, %v1584, 0
        %v2185 = vsel %vm2180, %v1878, 0
        %2187 = vmatprep.subr.mxu0 0.0
        %2188 = vmatpush1.xpose.msra.mxu0 %v2185
        %2189 = vmatprep.subr.mxu0 0.0
        %2190 = vmatpush1.xpose.msra.mxu0 0.0
        %2191 = vmatprep.subr.mxu0 0.0
        %2192 = vmatpush1.xpose.msra.mxu0 0.0
        %2193 = vmatprep.subr.mxu0 0.0
        %2194 = vmatpush1.xpose.msra.mxu0 0.0
        %2195 = vmatprep.subr.mxu0 0.0
        %2196 = vmatpush1.xpose.msra.mxu0 0.0
        %2197 = vmatprep.subr.mxu0 0.0
        %2198 = vmatpush1.xpose.msra.mxu0 0.0
        %2199 = vmatprep.subr.mxu0 0.0
        %2200 = vmatpush1.xpose.msra.mxu0 0.0
        %2201 = vmatprep.subr.mxu0 0.0
        %2202 = vmatpush1.xpose.msra.mxu0 0.0
        %2203 = vmatprep.subr.mxu0 0.0
        %2204 = vmatpush1.xpose.msra.mxu0 0.0
        %2205 = vmatprep.subr.mxu0 0.0
        %2206 = vmatpush1.xpose.msra.mxu0 0.0
        %2207 = vmatprep.subr.mxu0 0.0
        %2208 = vmatpush1.xpose.msra.mxu0 0.0
        %2209 = vmatprep.subr.mxu0 0.0
        %2210 = vmatpush1.xpose.msra.mxu0 0.0
        %2211 = vmatprep.subr.mxu0 0.0
        %2212 = vmatpush1.xpose.msra.mxu0 0.0
        %2213 = vmatprep.subr.mxu0 0.0
        %2214 = vmatpush1.xpose.msra.mxu0 0.0
        %2215 = vmatprep.subr.mxu0 0.0
        %2216 = vmatpush1.xpose.msra.mxu0 0.0
        %2217 = vmatprep.subr.mxu0 0.0
        %2218 = vmatpush1.xpose.msra.mxu0 0.0
        %2219 = vmatprep.subr.mxu0 0.0
        %2220 = vmatpush1.xpose.msra.mxu0 0.0
        %2221 = vmatprep.subr.mxu0 0.0
        %2222 = vmatpush1.xpose.msra.mxu0 0.0
        %2223 = vmatprep.subr.mxu0 0.0
        %2224 = vmatpush1.xpose.msra.mxu0 0.0
        %2225 = vmatprep.subr.mxu0 0.0
        %2226 = vmatpush1.xpose.msra.mxu0 0.0
        %2227 = vmatprep.subr.mxu0 0.0
        %2228 = vmatpush1.xpose.msra.mxu0 0.0
        %2229 = vmatprep.subr.mxu0 0.0
        %2230 = vmatpush1.xpose.msra.mxu0 0.0
        %2231 = vmatprep.subr.mxu0 0.0
        %2232 = vmatpush1.xpose.msra.mxu0 0.0
        %2233 = vmatprep.subr.mxu0 0.0
        %2234 = vmatpush1.xpose.msra.mxu0 0.0
        %2235 = vmatprep.subr.mxu0 0.0
        %2236 = vmatpush1.xpose.msra.mxu0 0.0
        %2237 = vmatprep.subr.mxu0 0.0
        %2238 = vmatpush1.xpose.msra.mxu0 0.0
        %2239 = vmatprep.subr.mxu0 0.0
        %2240 = vmatpush1.xpose.msra.mxu0 0.0
        %2241 = vmatprep.subr.mxu0 0.0
        %2242 = vmatpush1.xpose.msra.mxu0 0.0
        %2243 = vmatprep.subr.mxu0 0.0
        %2244 = vmatpush1.xpose.msra.mxu0 0.0
        %2245 = vmatprep.subr.mxu0 0.0
        %2246 = vmatpush1.xpose.msra.mxu0 0.0
        %2247 = vmatprep.subr.mxu0 0.0
        %2248 = vmatpush1.xpose.msra.mxu0 0.0
        %2249 = vmatprep.subr.mxu0 0.0
        %2250 = vmatpush1.xpose.msra.mxu0 0.0
        %2251 = vmatprep.mubr.f32.mxu0 0.0
        %2252 = vmatmul.mubr.f32.gmra.mrb[0].mxu0 %v2182
        %v2253 = vpop.f32.mrb[0].mxu0
        %v2254 = vadd.f32 0.0, %v2253
        %v2255 = vpop.f32.mrb[0].mxu0
        %2256 = vdwg.mxu0
        %v2258 = vsel %vm2180, %v1585, 0
        %v2261 = vsel %vm2180, %v1879, 0
        %2263 = vmatprep.subr.mxu0 0.0
        %2264 = vmatpush1.xpose.msra.mxu0 %v2261
        %2265 = vmatprep.subr.mxu0 0.0
        %2266 = vmatpush1.xpose.msra.mxu0 0.0
        %2267 = vmatprep.subr.mxu0 0.0
        %2268 = vmatpush1.xpose.msra.mxu0 0.0
        %2269 = vmatprep.subr.mxu0 0.0
        %2270 = vmatpush1.xpose.msra.mxu0 0.0
        %2271 = vmatprep.subr.mxu0 0.0
        %2272 = vmatpush1.xpose.msra.mxu0 0.0
        %2273 = vmatprep.subr.mxu0 0.0
        %2274 = vmatpush1.xpose.msra.mxu0 0.0
        %2275 = vmatprep.subr.mxu0 0.0
        %2276 = vmatpush1.xpose.msra.mxu0 0.0
        %2277 = vmatprep.subr.mxu0 0.0
        %2278 = vmatpush1.xpose.msra.mxu0 0.0
        %2279 = vmatprep.subr.mxu0 0.0
        %2280 = vmatpush1.xpose.msra.mxu0 0.0
        %2281 = vmatprep.subr.mxu0 0.0
        %2282 = vmatpush1.xpose.msra.mxu0 0.0
        %2283 = vmatprep.subr.mxu0 0.0
        %2284 = vmatpush1.xpose.msra.mxu0 0.0
        %2285 = vmatprep.subr.mxu0 0.0
        %2286 = vmatpush1.xpose.msra.mxu0 0.0
        %2287 = vmatprep.subr.mxu0 0.0
        %2288 = vmatpush1.xpose.msra.mxu0 0.0
        %2289 = vmatprep.subr.mxu0 0.0
        %2290 = vmatpush1.xpose.msra.mxu0 0.0
        %2291 = vmatprep.subr.mxu0 0.0
        %2292 = vmatpush1.xpose.msra.mxu0 0.0
        %2293 = vmatprep.subr.mxu0 0.0
        %2294 = vmatpush1.xpose.msra.mxu0 0.0
        %2295 = vmatprep.subr.mxu0 0.0
        %2296 = vmatpush1.xpose.msra.mxu0 0.0
        %2297 = vmatprep.subr.mxu0 0.0
        %2298 = vmatpush1.xpose.msra.mxu0 0.0
        %2299 = vmatprep.subr.mxu0 0.0
        %2300 = vmatpush1.xpose.msra.mxu0 0.0
        %2301 = vmatprep.subr.mxu0 0.0
        %2302 = vmatpush1.xpose.msra.mxu0 0.0
        %2303 = vmatprep.subr.mxu0 0.0
        %2304 = vmatpush1.xpose.msra.mxu0 0.0
        %2305 = vmatprep.subr.mxu0 0.0
        %2306 = vmatpush1.xpose.msra.mxu0 0.0
        %2307 = vmatprep.subr.mxu0 0.0
        %2308 = vmatpush1.xpose.msra.mxu0 0.0
        %2309 = vmatprep.subr.mxu0 0.0
        %2310 = vmatpush1.xpose.msra.mxu0 0.0
        %2311 = vmatprep.subr.mxu0 0.0
        %2312 = vmatpush1.xpose.msra.mxu0 0.0
        %2313 = vmatprep.subr.mxu0 0.0
        %2314 = vmatpush1.xpose.msra.mxu0 0.0
        %2315 = vmatprep.subr.mxu0 0.0
        %2316 = vmatpush1.xpose.msra.mxu0 0.0
        %2317 = vmatprep.subr.mxu0 0.0
        %2318 = vmatpush1.xpose.msra.mxu0 0.0
        %2319 = vmatprep.subr.mxu0 0.0
        %2320 = vmatpush1.xpose.msra.mxu0 0.0
        %2321 = vmatprep.subr.mxu0 0.0
        %2322 = vmatpush1.xpose.msra.mxu0 0.0
        %2323 = vmatprep.subr.mxu0 0.0
        %2324 = vmatpush1.xpose.msra.mxu0 0.0
        %2325 = vmatprep.subr.mxu0 0.0
        %2326 = vmatpush1.xpose.msra.mxu0 0.0
        %2327 = vmatprep.mubr.f32.mxu0 0.0
        %2328 = vmatmul.mubr.f32.gmra.mrb[0].mxu0 %v2258
        %v2329 = vpop.f32.mrb[0].mxu0
        %v2330 = vadd.f32 0.0, %v2329
        %v2331 = vpop.f32.mrb[0].mxu0
        %2332 = vdwg.mxu0
        %v2334 = vsel %vm2180, %v1586, 0
        %v2337 = vsel %vm2180, %v1880, 0
        %2339 = vmatprep.subr.mxu0 0.0
        %2340 = vmatpush1.xpose.msra.mxu0 %v2337
        %2341 = vmatprep.subr.mxu0 0.0
        %2342 = vmatpush1.xpose.msra.mxu0 0.0
        %2343 = vmatprep.subr.mxu0 0.0
        %2344 = vmatpush1.xpose.msra.mxu0 0.0
        %2345 = vmatprep.subr.mxu0 0.0
        %2346 = vmatpush1.xpose.msra.mxu0 0.0
        %2347 = vmatprep.subr.mxu0 0.0
        %2348 = vmatpush1.xpose.msra.mxu0 0.0
        %2349 = vmatprep.subr.mxu0 0.0
        %2350 = vmatpush1.xpose.msra.mxu0 0.0
        %2351 = vmatprep.subr.mxu0 0.0
        %2352 = vmatpush1.xpose.msra.mxu0 0.0
        %2353 = vmatprep.subr.mxu0 0.0
        %2354 = vmatpush1.xpose.msra.mxu0 0.0
        %2355 = vmatprep.subr.mxu0 0.0
        %2356 = vmatpush1.xpose.msra.mxu0 0.0
        %2357 = vmatprep.subr.mxu0 0.0
        %2358 = vmatpush1.xpose.msra.mxu0 0.0
        %2359 = vmatprep.subr.mxu0 0.0
        %2360 = vmatpush1.xpose.msra.mxu0 0.0
        %2361 = vmatprep.subr.mxu0 0.0
        %2362 = vmatpush1.xpose.msra.mxu0 0.0
        %2363 = vmatprep.subr.mxu0 0.0
        %2364 = vmatpush1.xpose.msra.mxu0 0.0
        %2365 = vmatprep.subr.mxu0 0.0
        %2366 = vmatpush1.xpose.msra.mxu0 0.0
        %2367 = vmatprep.subr.mxu0 0.0
        %2368 = vmatpush1.xpose.msra.mxu0 0.0
        %2369 = vmatprep.subr.mxu0 0.0
        %2370 = vmatpush1.xpose.msra.mxu0 0.0
        %2371 = vmatprep.subr.mxu0 0.0
        %2372 = vmatpush1.xpose.msra.mxu0 0.0
        %2373 = vmatprep.subr.mxu0 0.0
        %2374 = vmatpush1.xpose.msra.mxu0 0.0
        %2375 = vmatprep.subr.mxu0 0.0
        %2376 = vmatpush1.xpose.msra.mxu0 0.0
        %2377 = vmatprep.subr.mxu0 0.0
        %2378 = vmatpush1.xpose.msra.mxu0 0.0
        %2379 = vmatprep.subr.mxu0 0.0
        %2380 = vmatpush1.xpose.msra.mxu0 0.0
        %2381 = vmatprep.subr.mxu0 0.0
        %2382 = vmatpush1.xpose.msra.mxu0 0.0
        %2383 = vmatprep.subr.mxu0 0.0
        %2384 = vmatpush1.xpose.msra.mxu0 0.0
        %2385 = vmatprep.subr.mxu0 0.0
        %2386 = vmatpush1.xpose.msra.mxu0 0.0
        %2387 = vmatprep.subr.mxu0 0.0
        %2388 = vmatpush1.xpose.msra.mxu0 0.0
        %2389 = vmatprep.subr.mxu0 0.0
        %2390 = vmatpush1.xpose.msra.mxu0 0.0
        %2391 = vmatprep.subr.mxu0 0.0
        %2392 = vmatpush1.xpose.msra.mxu0 0.0
        %2393 = vmatprep.subr.mxu0 0.0
        %2394 = vmatpush1.xpose.msra.mxu0 0.0
        %2395 = vmatprep.subr.mxu0 0.0
        %2396 = vmatpush1.xpose.msra.mxu0 0.0
        %2397 = vmatprep.subr.mxu0 0.0
        %2398 = vmatpush1.xpose.msra.mxu0 0.0
        %2399 = vmatprep.subr.mxu0 0.0
        %2400 = vmatpush1.xpose.msra.mxu0 0.0
        %2401 = vmatprep.subr.mxu0 0.0
        %2402 = vmatpush1.xpose.msra.mxu0 0.0
        %2403 = vmatprep.mubr.f32.mxu0 0.0
        %2404 = vmatmul.mubr.f32.gmra.mrb[0].mxu0 %v2334
        %v2405 = vpop.f32.mrb[0].mxu0
        %v2406 = vadd.f32 0.0, %v2405
        %v2407 = vpop.f32.mrb[0].mxu0
        %2408 = vdwg.mxu0
        %v2410 = vsel %vm2180, %v1587, 0
        %v2413 = vsel %vm2180, %v1881, 0
        %2415 = vmatprep.subr.mxu0 0.0
        %2416 = vmatpush1.xpose.msra.mxu0 %v2413
        %2417 = vmatprep.subr.mxu0 0.0
        %2418 = vmatpush1.xpose.msra.mxu0 0.0
        %2419 = vmatprep.subr.mxu0 0.0
        %2420 = vmatpush1.xpose.msra.mxu0 0.0
        %2421 = vmatprep.subr.mxu0 0.0
        %2422 = vmatpush1.xpose.msra.mxu0 0.0
        %2423 = vmatprep.subr.mxu0 0.0
        %2424 = vmatpush1.xpose.msra.mxu0 0.0
        %2425 = vmatprep.subr.mxu0 0.0
        %2426 = vmatpush1.xpose.msra.mxu0 0.0
        %2427 = vmatprep.subr.mxu0 0.0
        %2428 = vmatpush1.xpose.msra.mxu0 0.0
        %2429 = vmatprep.subr.mxu0 0.0
        %2430 = vmatpush1.xpose.msra.mxu0 0.0
        %2431 = vmatprep.subr.mxu0 0.0
        %2432 = vmatpush1.xpose.msra.mxu0 0.0
        %2433 = vmatprep.subr.mxu0 0.0
        %2434 = vmatpush1.xpose.msra.mxu0 0.0
        %2435 = vmatprep.subr.mxu0 0.0
        %2436 = vmatpush1.xpose.msra.mxu0 0.0
        %2437 = vmatprep.subr.mxu0 0.0
        %2438 = vmatpush1.xpose.msra.mxu0 0.0
        %2439 = vmatprep.subr.mxu0 0.0
        %2440 = vmatpush1.xpose.msra.mxu0 0.0
        %2441 = vmatprep.subr.mxu0 0.0
        %2442 = vmatpush1.xpose.msra.mxu0 0.0
        %2443 = vmatprep.subr.mxu0 0.0
        %2444 = vmatpush1.xpose.msra.mxu0 0.0
        %2445 = vmatprep.subr.mxu0 0.0
        %2446 = vmatpush1.xpose.msra.mxu0 0.0
        %2447 = vmatprep.subr.mxu0 0.0
        %2448 = vmatpush1.xpose.msra.mxu0 0.0
        %2449 = vmatprep.subr.mxu0 0.0
        %2450 = vmatpush1.xpose.msra.mxu0 0.0
        %2451 = vmatprep.subr.mxu0 0.0
        %2452 = vmatpush1.xpose.msra.mxu0 0.0
        %2453 = vmatprep.subr.mxu0 0.0
        %2454 = vmatpush1.xpose.msra.mxu0 0.0
        %2455 = vmatprep.subr.mxu0 0.0
        %2456 = vmatpush1.xpose.msra.mxu0 0.0
        %2457 = vmatprep.subr.mxu0 0.0
        %2458 = vmatpush1.xpose.msra.mxu0 0.0
        %2459 = vmatprep.subr.mxu0 0.0
        %2460 = vmatpush1.xpose.msra.mxu0 0.0
        %2461 = vmatprep.subr.mxu0 0.0
        %2462 = vmatpush1.xpose.msra.mxu0 0.0
        %2463 = vmatprep.subr.mxu0 0.0
        %2464 = vmatpush1.xpose.msra.mxu0 0.0
        %2465 = vmatprep.subr.mxu0 0.0
        %2466 = vmatpush1.xpose.msra.mxu0 0.0
        %2467 = vmatprep.subr.mxu0 0.0
        %2468 = vmatpush1.xpose.msra.mxu0 0.0
        %2469 = vmatprep.subr.mxu0 0.0
        %2470 = vmatpush1.xpose.msra.mxu0 0.0
        %2471 = vmatprep.subr.mxu0 0.0
        %2472 = vmatpush1.xpose.msra.mxu0 0.0
        %2473 = vmatprep.subr.mxu0 0.0
        %2474 = vmatpush1.xpose.msra.mxu0 0.0
        %2475 = vmatprep.subr.mxu0 0.0
        %2476 = vmatpush1.xpose.msra.mxu0 0.0
        %2477 = vmatprep.subr.mxu0 0.0
        %2478 = vmatpush1.xpose.msra.mxu0 0.0
        %2479 = vmatprep.mubr.f32.mxu0 0.0
        %2480 = vmatmul.mubr.f32.gmra.mrb[0].mxu0 %v2410
        %v2481 = vpop.f32.mrb[0].mxu0
        %v2482 = vadd.f32 0.0, %v2481
        %v2483 = vpop.f32.mrb[0].mxu0
        %2484 = vdwg.mxu0
        %v2486 = vsel %vm2180, %v1588, 0
        %v2489 = vsel %vm2180, %v1882, 0
        %2491 = vmatprep.subr.mxu0 0.0
        %2492 = vmatpush1.xpose.msra.mxu0 %v2489
        %2493 = vmatprep.subr.mxu0 0.0
        %2494 = vmatpush1.xpose.msra.mxu0 0.0
        %2495 = vmatprep.subr.mxu0 0.0
        %2496 = vmatpush1.xpose.msra.mxu0 0.0
        %2497 = vmatprep.subr.mxu0 0.0
        %2498 = vmatpush1.xpose.msra.mxu0 0.0
        %2499 = vmatprep.subr.mxu0 0.0
        %2500 = vmatpush1.xpose.msra.mxu0 0.0
        %2501 = vmatprep.subr.mxu0 0.0
        %2502 = vmatpush1.xpose.msra.mxu0 0.0
        %2503 = vmatprep.subr.mxu0 0.0
        %2504 = vmatpush1.xpose.msra.mxu0 0.0
        %2505 = vmatprep.subr.mxu0 0.0
        %2506 = vmatpush1.xpose.msra.mxu0 0.0
        %2507 = vmatprep.subr.mxu0 0.0
        %2508 = vmatpush1.xpose.msra.mxu0 0.0
        %2509 = vmatprep.subr.mxu0 0.0
        %2510 = vmatpush1.xpose.msra.mxu0 0.0
        %2511 = vmatprep.subr.mxu0 0.0
        %2512 = vmatpush1.xpose.msra.mxu0 0.0
        %2513 = vmatprep.subr.mxu0 0.0
        %2514 = vmatpush1.xpose.msra.mxu0 0.0
        %2515 = vmatprep.subr.mxu0 0.0
        %2516 = vmatpush1.xpose.msra.mxu0 0.0
        %2517 = vmatprep.subr.mxu0 0.0
        %2518 = vmatpush1.xpose.msra.mxu0 0.0
        %2519 = vmatprep.subr.mxu0 0.0
        %2520 = vmatpush1.xpose.msra.mxu0 0.0
        %2521 = vmatprep.subr.mxu0 0.0
        %2522 = vmatpush1.xpose.msra.mxu0 0.0
        %2523 = vmatprep.subr.mxu0 0.0
        %2524 = vmatpush1.xpose.msra.mxu0 0.0
        %2525 = vmatprep.subr.mxu0 0.0
        %2526 = vmatpush1.xpose.msra.mxu0 0.0
        %2527 = vmatprep.subr.mxu0 0.0
        %2528 = vmatpush1.xpose.msra.mxu0 0.0
        %2529 = vmatprep.subr.mxu0 0.0
        %2530 = vmatpush1.xpose.msra.mxu0 0.0
        %2531 = vmatprep.subr.mxu0 0.0
        %2532 = vmatpush1.xpose.msra.mxu0 0.0
        %2533 = vmatprep.subr.mxu0 0.0
        %2534 = vmatpush1.xpose.msra.mxu0 0.0
        %2535 = vmatprep.subr.mxu0 0.0
        %2536 = vmatpush1.xpose.msra.mxu0 0.0
        %2537 = vmatprep.subr.mxu0 0.0
        %2538 = vmatpush1.xpose.msra.mxu0 0.0
        %2539 = vmatprep.subr.mxu0 0.0
        %2540 = vmatpush1.xpose.msra.mxu0 0.0
        %2541 = vmatprep.subr.mxu0 0.0
        %2542 = vmatpush1.xpose.msra.mxu0 0.0
        %2543 = vmatprep.subr.mxu0 0.0
        %2544 = vmatpush1.xpose.msra.mxu0 0.0
        %2545 = vmatprep.subr.mxu0 0.0
        %2546 = vmatpush1.xpose.msra.mxu0 0.0
        %2547 = vmatprep.subr.mxu0 0.0
        %2548 = vmatpush1.xpose.msra.mxu0 0.0
        %2549 = vmatprep.subr.mxu0 0.0
        %2550 = vmatpush1.xpose.msra.mxu0 0.0
        %2551 = vmatprep.subr.mxu0 0.0
        %2552 = vmatpush1.xpose.msra.mxu0 0.0
        %2553 = vmatprep.subr.mxu0 0.0
        %2554 = vmatpush1.xpose.msra.mxu0 0.0
        %2555 = vmatprep.mubr.f32.mxu0 0.0
        %2556 = vmatmul.mubr.f32.gmra.mrb[0].mxu0 %v2486
        %v2557 = vpop.f32.mrb[0].mxu0
        %v2558 = vadd.f32 0.0, %v2557
        %v2559 = vpop.f32.mrb[0].mxu0
        %2560 = vdwg.mxu0
        %v2562 = vsel %vm2180, %v1589, 0
        %v2565 = vsel %vm2180, %v1883, 0
        %2567 = vmatprep.subr.mxu0 0.0
        %2568 = vmatpush1.xpose.msra.mxu0 %v2565
        %2569 = vmatprep.subr.mxu0 0.0
        %2570 = vmatpush1.xpose.msra.mxu0 0.0
        %2571 = vmatprep.subr.mxu0 0.0
        %2572 = vmatpush1.xpose.msra.mxu0 0.0
        %2573 = vmatprep.subr.mxu0 0.0
        %2574 = vmatpush1.xpose.msra.mxu0 0.0
        %2575 = vmatprep.subr.mxu0 0.0
        %2576 = vmatpush1.xpose.msra.mxu0 0.0
        %2577 = vmatprep.subr.mxu0 0.0
        %2578 = vmatpush1.xpose.msra.mxu0 0.0
        %2579 = vmatprep.subr.mxu0 0.0
        %2580 = vmatpush1.xpose.msra.mxu0 0.0
        %2581 = vmatprep.subr.mxu0 0.0
        %2582 = vmatpush1.xpose.msra.mxu0 0.0
        %2583 = vmatprep.subr.mxu0 0.0
        %2584 = vmatpush1.xpose.msra.mxu0 0.0
        %2585 = vmatprep.subr.mxu0 0.0
        %2586 = vmatpush1.xpose.msra.mxu0 0.0
        %2587 = vmatprep.subr.mxu0 0.0
        %2588 = vmatpush1.xpose.msra.mxu0 0.0
        %2589 = vmatprep.subr.mxu0 0.0
        %2590 = vmatpush1.xpose.msra.mxu0 0.0
        %2591 = vmatprep.subr.mxu0 0.0
        %2592 = vmatpush1.xpose.msra.mxu0 0.0
        %2593 = vmatprep.subr.mxu0 0.0
        %2594 = vmatpush1.xpose.msra.mxu0 0.0
        %2595 = vmatprep.subr.mxu0 0.0
        %2596 = vmatpush1.xpose.msra.mxu0 0.0
        %2597 = vmatprep.subr.mxu0 0.0
        %2598 = vmatpush1.xpose.msra.mxu0 0.0
        %2599 = vmatprep.subr.mxu0 0.0
        %2600 = vmatpush1.xpose.msra.mxu0 0.0
        %2601 = vmatprep.subr.mxu0 0.0
        %2602 = vmatpush1.xpose.msra.mxu0 0.0
        %2603 = vmatprep.subr.mxu0 0.0
        %2604 = vmatpush1.xpose.msra.mxu0 0.0
        %2605 = vmatprep.subr.mxu0 0.0
        %2606 = vmatpush1.xpose.msra.mxu0 0.0
        %2607 = vmatprep.subr.mxu0 0.0
        %2608 = vmatpush1.xpose.msra.mxu0 0.0
        %2609 = vmatprep.subr.mxu0 0.0
        %2610 = vmatpush1.xpose.msra.mxu0 0.0
        %2611 = vmatprep.subr.mxu0 0.0
        %2612 = vmatpush1.xpose.msra.mxu0 0.0
        %2613 = vmatprep.subr.mxu0 0.0
        %2614 = vmatpush1.xpose.msra.mxu0 0.0
        %2615 = vmatprep.subr.mxu0 0.0
        %2616 = vmatpush1.xpose.msra.mxu0 0.0
        %2617 = vmatprep.subr.mxu0 0.0
        %2618 = vmatpush1.xpose.msra.mxu0 0.0
        %2619 = vmatprep.subr.mxu0 0.0
        %2620 = vmatpush1.xpose.msra.mxu0 0.0
        %2621 = vmatprep.subr.mxu0 0.0
        %2622 = vmatpush1.xpose.msra.mxu0 0.0
        %2623 = vmatprep.subr.mxu0 0.0
        %2624 = vmatpush1.xpose.msra.mxu0 0.0
        %2625 = vmatprep.subr.mxu0 0.0
        %2626 = vmatpush1.xpose.msra.mxu0 0.0
        %2627 = vmatprep.subr.mxu0 0.0
        %2628 = vmatpush1.xpose.msra.mxu0 0.0
        %2629 = vmatprep.subr.mxu0 0.0
        %2630 = vmatpush1.xpose.msra.mxu0 0.0
        %2631 = vmatprep.mubr.f32.mxu0 0.0
        %2632 = vmatmul.mubr.f32.gmra.mrb[0].mxu0 %v2562
        %v2633 = vpop.f32.mrb[0].mxu0
        %v2634 = vadd.f32 0.0, %v2633
        %v2635 = vpop.f32.mrb[0].mxu0
        %2636 = vdwg.mxu0
        %v2638 = vsel %vm2180, %v1590, 0
        %v2641 = vsel %vm2180, %v1884, 0
        %2643 = vmatprep.subr.mxu0 0.0
        %2644 = vmatpush1.xpose.msra.mxu0 %v2641
        %2645 = vmatprep.subr.mxu0 0.0
        %2646 = vmatpush1.xpose.msra.mxu0 0.0
        %2647 = vmatprep.subr.mxu0 0.0
        %2648 = vmatpush1.xpose.msra.mxu0 0.0
        %2649 = vmatprep.subr.mxu0 0.0
        %2650 = vmatpush1.xpose.msra.mxu0 0.0
        %2651 = vmatprep.subr.mxu0 0.0
        %2652 = vmatpush1.xpose.msra.mxu0 0.0
        %2653 = vmatprep.subr.mxu0 0.0
        %2654 = vmatpush1.xpose.msra.mxu0 0.0
        %2655 = vmatprep.subr.mxu0 0.0
        %2656 = vmatpush1.xpose.msra.mxu0 0.0
        %2657 = vmatprep.subr.mxu0 0.0
        %2658 = vmatpush1.xpose.msra.mxu0 0.0
        %2659 = vmatprep.subr.mxu0 0.0
        %2660 = vmatpush1.xpose.msra.mxu0 0.0
        %2661 = vmatprep.subr.mxu0 0.0
        %2662 = vmatpush1.xpose.msra.mxu0 0.0
        %2663 = vmatprep.subr.mxu0 0.0
        %2664 = vmatpush1.xpose.msra.mxu0 0.0
        %2665 = vmatprep.subr.mxu0 0.0
        %2666 = vmatpush1.xpose.msra.mxu0 0.0
        %2667 = vmatprep.subr.mxu0 0.0
        %2668 = vmatpush1.xpose.msra.mxu0 0.0
        %2669 = vmatprep.subr.mxu0 0.0
        %2670 = vmatpush1.xpose.msra.mxu0 0.0
        %2671 = vmatprep.subr.mxu0 0.0
        %2672 = vmatpush1.xpose.msra.mxu0 0.0
        %2673 = vmatprep.subr.mxu0 0.0
        %2674 = vmatpush1.xpose.msra.mxu0 0.0
        %2675 = vmatprep.subr.mxu0 0.0
        %2676 = vmatpush1.xpose.msra.mxu0 0.0
        %2677 = vmatprep.subr.mxu0 0.0
        %2678 = vmatpush1.xpose.msra.mxu0 0.0
        %2679 = vmatprep.subr.mxu0 0.0
        %2680 = vmatpush1.xpose.msra.mxu0 0.0
        %2681 = vmatprep.subr.mxu0 0.0
        %2682 = vmatpush1.xpose.msra.mxu0 0.0
        %2683 = vmatprep.subr.mxu0 0.0
        %2684 = vmatpush1.xpose.msra.mxu0 0.0
        %2685 = vmatprep.subr.mxu0 0.0
        %2686 = vmatpush1.xpose.msra.mxu0 0.0
        %2687 = vmatprep.subr.mxu0 0.0
        %2688 = vmatpush1.xpose.msra.mxu0 0.0
        %2689 = vmatprep.subr.mxu0 0.0
        %2690 = vmatpush1.xpose.msra.mxu0 0.0
        %2691 = vmatprep.subr.mxu0 0.0
        %2692 = vmatpush1.xpose.msra.mxu0 0.0
        %2693 = vmatprep.subr.mxu0 0.0
        %2694 = vmatpush1.xpose.msra.mxu0 0.0
        %2695 = vmatprep.subr.mxu0 0.0
        %2696 = vmatpush1.xpose.msra.mxu0 0.0
        %2697 = vmatprep.subr.mxu0 0.0
        %2698 = vmatpush1.xpose.msra.mxu0 0.0
        %2699 = vmatprep.subr.mxu0 0.0
        %2700 = vmatpush1.xpose.msra.mxu0 0.0
        %2701 = vmatprep.subr.mxu0 0.0
        %2702 = vmatpush1.xpose.msra.mxu0 0.0
        %2703 = vmatprep.subr.mxu0 0.0
        %2704 = vmatpush1.xpose.msra.mxu0 0.0
        %2705 = vmatprep.subr.mxu0 0.0
        %2706 = vmatpush1.xpose.msra.mxu0 0.0
        %2707 = vmatprep.mubr.f32.mxu0 0.0
        %2708 = vmatmul.mubr.f32.gmra.mrb[0].mxu0 %v2638
        %v2709 = vpop.f32.mrb[0].mxu0
        %v2710 = vadd.f32 0.0, %v2709
        %v2711 = vpop.f32.mrb[0].mxu0
        %2712 = vdwg.mxu0
        %v2714 = vsel %vm2180, %v1591, 0
        %v2717 = vsel %vm2180, %v1885, 0
        %2719 = vmatprep.subr.mxu0 0.0
        %2720 = vmatpush1.xpose.msra.mxu0 %v2717
        %2721 = vmatprep.subr.mxu0 0.0
        %2722 = vmatpush1.xpose.msra.mxu0 0.0
        %2723 = vmatprep.subr.mxu0 0.0
        %2724 = vmatpush1.xpose.msra.mxu0 0.0
        %2725 = vmatprep.subr.mxu0 0.0
        %2726 = vmatpush1.xpose.msra.mxu0 0.0
        %2727 = vmatprep.subr.mxu0 0.0
        %2728 = vmatpush1.xpose.msra.mxu0 0.0
        %2729 = vmatprep.subr.mxu0 0.0
        %2730 = vmatpush1.xpose.msra.mxu0 0.0
        %2731 = vmatprep.subr.mxu0 0.0
        %2732 = vmatpush1.xpose.msra.mxu0 0.0
        %2733 = vmatprep.subr.mxu0 0.0
        %2734 = vmatpush1.xpose.msra.mxu0 0.0
        %2735 = vmatprep.subr.mxu0 0.0
        %2736 = vmatpush1.xpose.msra.mxu0 0.0
        %2737 = vmatprep.subr.mxu0 0.0
        %2738 = vmatpush1.xpose.msra.mxu0 0.0
        %2739 = vmatprep.subr.mxu0 0.0
        %2740 = vmatpush1.xpose.msra.mxu0 0.0
        %2741 = vmatprep.subr.mxu0 0.0
        %2742 = vmatpush1.xpose.msra.mxu0 0.0
        %2743 = vmatprep.subr.mxu0 0.0
        %2744 = vmatpush1.xpose.msra.mxu0 0.0
        %2745 = vmatprep.subr.mxu0 0.0
        %2746 = vmatpush1.xpose.msra.mxu0 0.0
        %2747 = vmatprep.subr.mxu0 0.0
        %2748 = vmatpush1.xpose.msra.mxu0 0.0
        %2749 = vmatprep.subr.mxu0 0.0
        %2750 = vmatpush1.xpose.msra.mxu0 0.0
        %2751 = vmatprep.subr.mxu0 0.0
        %2752 = vmatpush1.xpose.msra.mxu0 0.0
        %2753 = vmatprep.subr.mxu0 0.0
        %2754 = vmatpush1.xpose.msra.mxu0 0.0
        %2755 = vmatprep.subr.mxu0 0.0
        %2756 = vmatpush1.xpose.msra.mxu0 0.0
        %2757 = vmatprep.subr.mxu0 0.0
        %2758 = vmatpush1.xpose.msra.mxu0 0.0
        %2759 = vmatprep.subr.mxu0 0.0
        %2760 = vmatpush1.xpose.msra.mxu0 0.0
        %2761 = vmatprep.subr.mxu0 0.0
        %2762 = vmatpush1.xpose.msra.mxu0 0.0
        %2763 = vmatprep.subr.mxu0 0.0
        %2764 = vmatpush1.xpose.msra.mxu0 0.0
        %2765 = vmatprep.subr.mxu0 0.0
        %2766 = vmatpush1.xpose.msra.mxu0 0.0
        %2767 = vmatprep.subr.mxu0 0.0
        %2768 = vmatpush1.xpose.msra.mxu0 0.0
        %2769 = vmatprep.subr.mxu0 0.0
        %2770 = vmatpush1.xpose.msra.mxu0 0.0
        %2771 = vmatprep.subr.mxu0 0.0
        %2772 = vmatpush1.xpose.msra.mxu0 0.0
        %2773 = vmatprep.subr.mxu0 0.0
        %2774 = vmatpush1.xpose.msra.mxu0 0.0
        %2775 = vmatprep.subr.mxu0 0.0
        %2776 = vmatpush1.xpose.msra.mxu0 0.0
        %2777 = vmatprep.subr.mxu0 0.0
        %2778 = vmatpush1.xpose.msra.mxu0 0.0
        %2779 = vmatprep.subr.mxu0 0.0
        %2780 = vmatpush1.xpose.msra.mxu0 0.0
        %2781 = vmatprep.subr.mxu0 0.0
        %2782 = vmatpush1.xpose.msra.mxu0 0.0
        %2783 = vmatprep.mubr.f32.mxu0 0.0
        %2784 = vmatmul.mubr.f32.gmra.mrb[0].mxu0 %v2714
        %v2785 = vpop.f32.mrb[0].mxu0
        %v2786 = vadd.f32 0.0, %v2785
        %v2787 = vpop.f32.mrb[0].mxu0
        %2788 = vdwg.mxu0
        %v2789 = vmul.f32 %v2254, 0.25
        %v2790 = vmul.f32 %v2330, 0.25
        %v2791 = vmul.f32 %v2406, 0.25
        %v2792 = vmul.f32 %v2482, 0.25
        %v2793 = vmul.f32 %v2558, 0.25
        %v2794 = vmul.f32 %v2634, 0.25
        %v2795 = vmul.f32 %v2710, 0.25
        %v2796 = vmul.f32 %v2786, 0.25
        %v2797 = vadd.f32 %v2789, %v1038
        %v2798 = vadd.f32 %v2790, %v1038
        %v2799 = vadd.f32 %v2791, %v1038
        %v2800 = vadd.f32 %v2792, %v1038
        %v2801 = vadd.f32 %v2793, %v1038
        %v2802 = vadd.f32 %v2794, %v1038
        %v2803 = vadd.f32 %v2795, %v1038
        %v2804 = vadd.f32 %v2796, %v1038
        %vm2805 = vcmask 64512
        %v2806 = vsel %vm2805, %v2797, -inf
        %2807 = vmax.xlane.f32.xlu0 %v2806
        %v2808 = vpop.xlane.xlu0 %2807
        %v2809 = vsel %vm2805, %v2798, -inf
        %2810 = vmax.xlane.f32.xlu0 %v2809
        %v2811 = vpop.xlane.xlu0 %2810
        %v2812 = vsel %vm2805, %v2799, -inf
        %2813 = vmax.xlane.f32.xlu0 %v2812
        %v2814 = vpop.xlane.xlu0 %2813
        %v2815 = vsel %vm2805, %v2800, -inf
        %2816 = vmax.xlane.f32.xlu0 %v2815
        %v2817 = vpop.xlane.xlu0 %2816
        %v2818 = vsel %vm2805, %v2801, -inf
        %2819 = vmax.xlane.f32.xlu0 %v2818
        %v2820 = vpop.xlane.xlu0 %2819
        %v2821 = vsel %vm2805, %v2802, -inf
        %2822 = vmax.xlane.f32.xlu0 %v2821
        %v2823 = vpop.xlane.xlu0 %2822
        %v2824 = vsel %vm2805, %v2803, -inf
        %2825 = vmax.xlane.f32.xlu0 %v2824
        %v2826 = vpop.xlane.xlu0 %2825
        %v2827 = vsel %vm2805, %v2804, -inf
        %2828 = vmax.xlane.f32.xlu0 %v2827
        %v2829 = vpop.xlane.xlu0 %2828
        %v2830 = vsub.f32 %v2797, %v2808
        %v2831 = vsub.f32 %v2798, %v2811
        %v2832 = vsub.f32 %v2799, %v2814
        %v2833 = vsub.f32 %v2800, %v2817
        %v2834 = vsub.f32 %v2801, %v2820
        %v2835 = vsub.f32 %v2802, %v2823
        %v2836 = vsub.f32 %v2803, %v2826
        %v2837 = vsub.f32 %v2804, %v2829
        %v2838 = vmul.f32 %v2830, 1.442695
        %v2839 = vpow.pop %v2838
        %v2840 = vmul.f32 %v2831, 1.442695
        %v2841 = vpow.pop %v2840
        %v2842 = vmul.f32 %v2832, 1.442695
        %v2843 = vpow.pop %v2842
        %v2844 = vmul.f32 %v2833, 1.442695
        %v2845 = vpow.pop %v2844
        %v2846 = vmul.f32 %v2834, 1.442695
        %v2847 = vpow.pop %v2846
        %v2848 = vmul.f32 %v2835, 1.442695
        %v2849 = vpow.pop %v2848
        %v2850 = vmul.f32 %v2836, 1.442695
        %v2851 = vpow.pop %v2850
        %v2852 = vmul.f32 %v2837, 1.442695
        %v2853 = vpow.pop %v2852
        %v2854 = vsel %vm2805, %v2839, 0.0
        %2855 = vadd.xlane.f32.xlu0 %v2854
        %v2856 = vpop.xlane.xlu0 %2855
        %v2857 = vsel %vm2805, %v2841, 0.0
        %2858 = vadd.xlane.f32.xlu0 %v2857
        %v2859 = vpop.xlane.xlu0 %2858
        %v2860 = vsel %vm2805, %v2843, 0.0
        %2861 = vadd.xlane.f32.xlu0 %v2860
        %v2862 = vpop.xlane.xlu0 %2861
        %v2863 = vsel %vm2805, %v2845, 0.0
        %2864 = vadd.xlane.f32.xlu0 %v2863
        %v2865 = vpop.xlane.xlu0 %2864
        %v2866 = vsel %vm2805, %v2847, 0.0
        %2867 = vadd.xlane.f32.xlu0 %v2866
        %v2868 = vpop.xlane.xlu0 %2867
        %v2869 = vsel %vm2805, %v2849, 0.0
        %2870 = vadd.xlane.f32.xlu0 %v2869
        %v2871 = vpop.xlane.xlu0 %2870
        %v2872 = vsel %vm2805, %v2851, 0.0
        %2873 = vadd.xlane.f32.xlu0 %v2872
        %v2874 = vpop.xlane.xlu0 %2873
        %v2875 = vsel %vm2805, %v2853, 0.0
        %2876 = vadd.xlane.f32.xlu0 %v2875
        %v2877 = vpop.xlane.xlu0 %2876
        %v2878 = vrcp.pop %v2856
        %v2879 = vrcp.pop %v2859
        %v2880 = vrcp.pop %v2862
        %v2881 = vrcp.pop %v2865
        %v2882 = vrcp.pop %v2868
        %v2883 = vrcp.pop %v2871
        %v2884 = vrcp.pop %v2874
        %v2885 = vrcp.pop %v2877
        %v2886 = vmul.f32 %v2839, %v2878
        %v2887 = vmul.f32 %v2841, %v2879
        %v2888 = vmul.f32 %v2843, %v2880
        %v2889 = vmul.f32 %v2845, %v2881
        %v2890 = vmul.f32 %v2847, %v2882
        %v2891 = vmul.f32 %v2849, %v2883
        %v2892 = vmul.f32 %v2851, %v2884
        %v2893 = vmul.f32 %v2853, %v2885
        %v2895 = vsel %vm2805, %v2886, 0
        %2897 = vmatprep.subr.mxu0 0.0
        %2898 = vmatpush1.msra.mxu0 %v2172
        %2899 = vmatprep.subr.mxu0 0.0
        %2900 = vmatpush1.msra.mxu0 0.0
        %2901 = vmatprep.subr.mxu0 0.0
        %2902 = vmatpush1.msra.mxu0 0.0
        %2903 = vmatprep.subr.mxu0 0.0
        %2904 = vmatpush1.msra.mxu0 0.0
        %2905 = vmatprep.subr.mxu0 0.0
        %2906 = vmatpush1.msra.mxu0 0.0
        %2907 = vmatprep.subr.mxu0 0.0
        %2908 = vmatpush1.msra.mxu0 0.0
        %2909 = vmatprep.subr.mxu0 0.0
        %2910 = vmatpush1.msra.mxu0 0.0
        %2911 = vmatprep.subr.mxu0 0.0
        %2912 = vmatpush1.msra.mxu0 0.0
        %2913 = vmatprep.subr.mxu0 0.0
        %2914 = vmatpush1.msra.mxu0 0.0
        %2915 = vmatprep.subr.mxu0 0.0
        %2916 = vmatpush1.msra.mxu0 0.0
        %2917 = vmatprep.subr.mxu0 0.0
        %2918 = vmatpush1.msra.mxu0 0.0
        %2919 = vmatprep.subr.mxu0 0.0
        %2920 = vmatpush1.msra.mxu0 0.0
        %2921 = vmatprep.subr.mxu0 0.0
        %2922 = vmatpush1.msra.mxu0 0.0
        %2923 = vmatprep.subr.mxu0 0.0
        %2924 = vmatpush1.msra.mxu0 0.0
        %2925 = vmatprep.subr.mxu0 0.0
        %2926 = vmatpush1.msra.mxu0 0.0
        %2927 = vmatprep.subr.mxu0 0.0
        %2928 = vmatpush1.msra.mxu0 0.0
        %2929 = vmatprep.subr.mxu0 0.0
        %2930 = vmatpush1.msra.mxu0 0.0
        %2931 = vmatprep.subr.mxu0 0.0
        %2932 = vmatpush1.msra.mxu0 0.0
        %2933 = vmatprep.subr.mxu0 0.0
        %2934 = vmatpush1.msra.mxu0 0.0
        %2935 = vmatprep.subr.mxu0 0.0
        %2936 = vmatpush1.msra.mxu0 0.0
        %2937 = vmatprep.subr.mxu0 0.0
        %2938 = vmatpush1.msra.mxu0 0.0
        %2939 = vmatprep.subr.mxu0 0.0
        %2940 = vmatpush1.msra.mxu0 0.0
        %2941 = vmatprep.subr.mxu0 0.0
        %2942 = vmatpush1.msra.mxu0 0.0
        %2943 = vmatprep.subr.mxu0 0.0
        %2944 = vmatpush1.msra.mxu0 0.0
        %2945 = vmatprep.subr.mxu0 0.0
        %2946 = vmatpush1.msra.mxu0 0.0
        %2947 = vmatprep.subr.mxu0 0.0
        %2948 = vmatpush1.msra.mxu0 0.0
        %2949 = vmatprep.subr.mxu0 0.0
        %2950 = vmatpush1.msra.mxu0 0.0
        %2951 = vmatprep.subr.mxu0 0.0
        %2952 = vmatpush1.msra.mxu0 0.0
        %2953 = vmatprep.subr.mxu0 0.0
        %2954 = vmatpush1.msra.mxu0 0.0
        %2955 = vmatprep.subr.mxu0 0.0
        %2956 = vmatpush1.msra.mxu0 0.0
        %2957 = vmatprep.subr.mxu0 0.0
        %2958 = vmatpush1.msra.mxu0 0.0
        %2959 = vmatprep.subr.mxu0 0.0
        %2960 = vmatpush1.msra.mxu0 0.0
        %2961 = vmatprep.mubr.f32.mxu0 0.0
        %2962 = vmatmul.mubr.f32.gmra.mrb[0].mxu0 %v2895
        %v2963 = vpop.f32.mrb[0].mxu0
        %v2964 = vadd.f32 0.0, %v2963
        %v2965 = vpop.f32.mrb[0].mxu0
        %2966 = vdwg.mxu0
        %v2968 = vsel %vm2805, %v2887, 0
        %2970 = vmatprep.subr.mxu0 0.0
        %2971 = vmatpush1.msra.mxu0 %v2173
        %2972 = vmatprep.subr.mxu0 0.0
        %2973 = vmatpush1.msra.mxu0 0.0
        %2974 = vmatprep.subr.mxu0 0.0
        %2975 = vmatpush1.msra.mxu0 0.0
        %2976 = vmatprep.subr.mxu0 0.0
        %2977 = vmatpush1.msra.mxu0 0.0
        %2978 = vmatprep.subr.mxu0 0.0
        %2979 = vmatpush1.msra.mxu0 0.0
        %2980 = vmatprep.subr.mxu0 0.0
        %2981 = vmatpush1.msra.mxu0 0.0
        %2982 = vmatprep.subr.mxu0 0.0
        %2983 = vmatpush1.msra.mxu0 0.0
        %2984 = vmatprep.subr.mxu0 0.0
        %2985 = vmatpush1.msra.mxu0 0.0
        %2986 = vmatprep.subr.mxu0 0.0
        %2987 = vmatpush1.msra.mxu0 0.0
        %2988 = vmatprep.subr.mxu0 0.0
        %2989 = vmatpush1.msra.mxu0 0.0
        %2990 = vmatprep.subr.mxu0 0.0
        %2991 = vmatpush1.msra.mxu0 0.0
        %2992 = vmatprep.subr.mxu0 0.0
        %2993 = vmatpush1.msra.mxu0 0.0
        %2994 = vmatprep.subr.mxu0 0.0
        %2995 = vmatpush1.msra.mxu0 0.0
        %2996 = vmatprep.subr.mxu0 0.0
        %2997 = vmatpush1.msra.mxu0 0.0
        %2998 = vmatprep.subr.mxu0 0.0
        %2999 = vmatpush1.msra.mxu0 0.0
        %3000 = vmatprep.subr.mxu0 0.0
        %3001 = vmatpush1.msra.mxu0 0.0
        %3002 = vmatprep.subr.mxu0 0.0
        %3003 = vmatpush1.msra.mxu0 0.0
        %3004 = vmatprep.subr.mxu0 0.0
        %3005 = vmatpush1.msra.mxu0 0.0
        %3006 = vmatprep.subr.mxu0 0.0
        %3007 = vmatpush1.msra.mxu0 0.0
        %3008 = vmatprep.subr.mxu0 0.0
        %3009 = vmatpush1.msra.mxu0 0.0
        %3010 = vmatprep.subr.mxu0 0.0
        %3011 = vmatpush1.msra.mxu0 0.0
        %3012 = vmatprep.subr.mxu0 0.0
        %3013 = vmatpush1.msra.mxu0 0.0
        %3014 = vmatprep.subr.mxu0 0.0
        %3015 = vmatpush1.msra.mxu0 0.0
        %3016 = vmatprep.subr.mxu0 0.0
        %3017 = vmatpush1.msra.mxu0 0.0
        %3018 = vmatprep.subr.mxu0 0.0
        %3019 = vmatpush1.msra.mxu0 0.0
        %3020 = vmatprep.subr.mxu0 0.0
        %3021 = vmatpush1.msra.mxu0 0.0
        %3022 = vmatprep.subr.mxu0 0.0
        %3023 = vmatpush1.msra.mxu0 0.0
        %3024 = vmatprep.subr.mxu0 0.0
        %3025 = vmatpush1.msra.mxu0 0.0
        %3026 = vmatprep.subr.mxu0 0.0
        %3027 = vmatpush1.msra.mxu0 0.0
        %3028 = vmatprep.subr.mxu0 0.0
        %3029 = vmatpush1.msra.mxu0 0.0
        %3030 = vmatprep.subr.mxu0 0.0
        %3031 = vmatpush1.msra.mxu0 0.0
        %3032 = vmatprep.subr.mxu0 0.0
        %3033 = vmatpush1.msra.mxu0 0.0
        %3034 = vmatprep.mubr.f32.mxu0 0.0
        %3035 = vmatmul.mubr.f32.gmra.mrb[0].mxu0 %v2968
        %v3036 = vpop.f32.mrb[0].mxu0
        %v3037 = vadd.f32 0.0, %v3036
        %v3038 = vpop.f32.mrb[0].mxu0
        %3039 = vdwg.mxu0
        %v3041 = vsel %vm2805, %v2888, 0
        %3043 = vmatprep.subr.mxu0 0.0
        %3044 = vmatpush1.msra.mxu0 %v2174
        %3045 = vmatprep.subr.mxu0 0.0
        %3046 = vmatpush1.msra.mxu0 0.0
        %3047 = vmatprep.subr.mxu0 0.0
        %3048 = vmatpush1.msra.mxu0 0.0
        %3049 = vmatprep.subr.mxu0 0.0
        %3050 = vmatpush1.msra.mxu0 0.0
        %3051 = vmatprep.subr.mxu0 0.0
        %3052 = vmatpush1.msra.mxu0 0.0
        %3053 = vmatprep.subr.mxu0 0.0
        %3054 = vmatpush1.msra.mxu0 0.0
        %3055 = vmatprep.subr.mxu0 0.0
        %3056 = vmatpush1.msra.mxu0 0.0
        %3057 = vmatprep.subr.mxu0 0.0
        %3058 = vmatpush1.msra.mxu0 0.0
        %3059 = vmatprep.subr.mxu0 0.0
        %3060 = vmatpush1.msra.mxu0 0.0
        %3061 = vmatprep.subr.mxu0 0.0
        %3062 = vmatpush1.msra.mxu0 0.0
        %3063 = vmatprep.subr.mxu0 0.0
        %3064 = vmatpush1.msra.mxu0 0.0
        %3065 = vmatprep.subr.mxu0 0.0
        %3066 = vmatpush1.msra.mxu0 0.0
        %3067 = vmatprep.subr.mxu0 0.0
        %3068 = vmatpush1.msra.mxu0 0.0
        %3069 = vmatprep.subr.mxu0 0.0
        %3070 = vmatpush1.msra.mxu0 0.0
        %3071 = vmatprep.subr.mxu0 0.0
        %3072 = vmatpush1.msra.mxu0 0.0
        %3073 = vmatprep.subr.mxu0 0.0
        %3074 = vmatpush1.msra.mxu0 0.0
        %3075 = vmatprep.subr.mxu0 0.0
        %3076 = vmatpush1.msra.mxu0 0.0
        %3077 = vmatprep.subr.mxu0 0.0
        %3078 = vmatpush1.msra.mxu0 0.0
        %3079 = vmatprep.subr.mxu0 0.0
        %3080 = vmatpush1.msra.mxu0 0.0
        %3081 = vmatprep.subr.mxu0 0.0
        %3082 = vmatpush1.msra.mxu0 0.0
        %3083 = vmatprep.subr.mxu0 0.0
        %3084 = vmatpush1.msra.mxu0 0.0
        %3085 = vmatprep.subr.mxu0 0.0
        %3086 = vmatpush1.msra.mxu0 0.0
        %3087 = vmatprep.subr.mxu0 0.0
        %3088 = vmatpush1.msra.mxu0 0.0
        %3089 = vmatprep.subr.mxu0 0.0
        %3090 = vmatpush1.msra.mxu0 0.0
        %3091 = vmatprep.subr.mxu0 0.0
        %3092 = vmatpush1.msra.mxu0 0.0
        %3093 = vmatprep.subr.mxu0 0.0
        %3094 = vmatpush1.msra.mxu0 0.0
        %3095 = vmatprep.subr.mxu0 0.0
        %3096 = vmatpush1.msra.mxu0 0.0
        %3097 = vmatprep.subr.mxu0 0.0
        %3098 = vmatpush1.msra.mxu0 0.0
        %3099 = vmatprep.subr.mxu0 0.0
        %3100 = vmatpush1.msra.mxu0 0.0
        %3101 = vmatprep.subr.mxu0 0.0
        %3102 = vmatpush1.msra.mxu0 0.0
        %3103 = vmatprep.subr.mxu0 0.0
        %3104 = vmatpush1.msra.mxu0 0.0
        %3105 = vmatprep.subr.mxu0 0.0
        %3106 = vmatpush1.msra.mxu0 0.0
        %3107 = vmatprep.mubr.f32.mxu0 0.0
        %3108 = vmatmul.mubr.f32.gmra.mrb[0].mxu0 %v3041
        %v3109 = vpop.f32.mrb[0].mxu0
        %v3110 = vadd.f32 0.0, %v3109
        %v3111 = vpop.f32.mrb[0].mxu0
        %3112 = vdwg.mxu0
        %v3114 = vsel %vm2805, %v2889, 0
        %3116 = vmatprep.subr.mxu0 0.0
        %3117 = vmatpush1.msra.mxu0 %v2175
        %3118 = vmatprep.subr.mxu0 0.0
        %3119 = vmatpush1.msra.mxu0 0.0
        %3120 = vmatprep.subr.mxu0 0.0
        %3121 = vmatpush1.msra.mxu0 0.0
        %3122 = vmatprep.subr.mxu0 0.0
        %3123 = vmatpush1.msra.mxu0 0.0
        %3124 = vmatprep.subr.mxu0 0.0
        %3125 = vmatpush1.msra.mxu0 0.0
        %3126 = vmatprep.subr.mxu0 0.0
        %3127 = vmatpush1.msra.mxu0 0.0
        %3128 = vmatprep.subr.mxu0 0.0
        %3129 = vmatpush1.msra.mxu0 0.0
        %3130 = vmatprep.subr.mxu0 0.0
        %3131 = vmatpush1.msra.mxu0 0.0
        %3132 = vmatprep.subr.mxu0 0.0
        %3133 = vmatpush1.msra.mxu0 0.0
        %3134 = vmatprep.subr.mxu0 0.0
        %3135 = vmatpush1.msra.mxu0 0.0
        %3136 = vmatprep.subr.mxu0 0.0
        %3137 = vmatpush1.msra.mxu0 0.0
        %3138 = vmatprep.subr.mxu0 0.0
        %3139 = vmatpush1.msra.mxu0 0.0
        %3140 = vmatprep.subr.mxu0 0.0
        %3141 = vmatpush1.msra.mxu0 0.0
        %3142 = vmatprep.subr.mxu0 0.0
        %3143 = vmatpush1.msra.mxu0 0.0
        %3144 = vmatprep.subr.mxu0 0.0
        %3145 = vmatpush1.msra.mxu0 0.0
        %3146 = vmatprep.subr.mxu0 0.0
        %3147 = vmatpush1.msra.mxu0 0.0
        %3148 = vmatprep.subr.mxu0 0.0
        %3149 = vmatpush1.msra.mxu0 0.0
        %3150 = vmatprep.subr.mxu0 0.0
        %3151 = vmatpush1.msra.mxu0 0.0
        %3152 = vmatprep.subr.mxu0 0.0
        %3153 = vmatpush1.msra.mxu0 0.0
        %3154 = vmatprep.subr.mxu0 0.0
        %3155 = vmatpush1.msra.mxu0 0.0
        %3156 = vmatprep.subr.mxu0 0.0
        %3157 = vmatpush1.msra.mxu0 0.0
        %3158 = vmatprep.subr.mxu0 0.0
        %3159 = vmatpush1.msra.mxu0 0.0
        %3160 = vmatprep.subr.mxu0 0.0
        %3161 = vmatpush1.msra.mxu0 0.0
        %3162 = vmatprep.subr.mxu0 0.0
        %3163 = vmatpush1.msra.mxu0 0.0
        %3164 = vmatprep.subr.mxu0 0.0
        %3165 = vmatpush1.msra.mxu0 0.0
        %3166 = vmatprep.subr.mxu0 0.0
        %3167 = vmatpush1.msra.mxu0 0.0
        %3168 = vmatprep.subr.mxu0 0.0
        %3169 = vmatpush1.msra.mxu0 0.0
        %3170 = vmatprep.subr.mxu0 0.0
        %3171 = vmatpush1.msra.mxu0 0.0
        %3172 = vmatprep.subr.mxu0 0.0
        %3173 = vmatpush1.msra.mxu0 0.0
        %3174 = vmatprep.subr.mxu0 0.0
        %3175 = vmatpush1.msra.mxu0 0.0
        %3176 = vmatprep.subr.mxu0 0.0
        %3177 = vmatpush1.msra.mxu0 0.0
        %3178 = vmatprep.subr.mxu0 0.0
        %3179 = vmatpush1.msra.mxu0 0.0
        %3180 = vmatprep.mubr.f32.mxu0 0.0
        %3181 = vmatmul.mubr.f32.gmra.mrb[0].mxu0 %v3114
        %v3182 = vpop.f32.mrb[0].mxu0
        %v3183 = vadd.f32 0.0, %v3182
        %v3184 = vpop.f32.mrb[0].mxu0
        %3185 = vdwg.mxu0
        %v3187 = vsel %vm2805, %v2890, 0
        %3189 = vmatprep.subr.mxu0 0.0
        %3190 = vmatpush1.msra.mxu0 %v2176
        %3191 = vmatprep.subr.mxu0 0.0
        %3192 = vmatpush1.msra.mxu0 0.0
        %3193 = vmatprep.subr.mxu0 0.0
        %3194 = vmatpush1.msra.mxu0 0.0
        %3195 = vmatprep.subr.mxu0 0.0
        %3196 = vmatpush1.msra.mxu0 0.0
        %3197 = vmatprep.subr.mxu0 0.0
        %3198 = vmatpush1.msra.mxu0 0.0
        %3199 = vmatprep.subr.mxu0 0.0
        %3200 = vmatpush1.msra.mxu0 0.0
        %3201 = vmatprep.subr.mxu0 0.0
        %3202 = vmatpush1.msra.mxu0 0.0
        %3203 = vmatprep.subr.mxu0 0.0
        %3204 = vmatpush1.msra.mxu0 0.0
        %3205 = vmatprep.subr.mxu0 0.0
        %3206 = vmatpush1.msra.mxu0 0.0
        %3207 = vmatprep.subr.mxu0 0.0
        %3208 = vmatpush1.msra.mxu0 0.0
        %3209 = vmatprep.subr.mxu0 0.0
        %3210 = vmatpush1.msra.mxu0 0.0
        %3211 = vmatprep.subr.mxu0 0.0
        %3212 = vmatpush1.msra.mxu0 0.0
        %3213 = vmatprep.subr.mxu0 0.0
        %3214 = vmatpush1.msra.mxu0 0.0
        %3215 = vmatprep.subr.mxu0 0.0
        %3216 = vmatpush1.msra.mxu0 0.0
        %3217 = vmatprep.subr.mxu0 0.0
        %3218 = vmatpush1.msra.mxu0 0.0
        %3219 = vmatprep.subr.mxu0 0.0
        %3220 = vmatpush1.msra.mxu0 0.0
        %3221 = vmatprep.subr.mxu0 0.0
        %3222 = vmatpush1.msra.mxu0 0.0
        %3223 = vmatprep.subr.mxu0 0.0
        %3224 = vmatpush1.msra.mxu0 0.0
        %3225 = vmatprep.subr.mxu0 0.0
        %3226 = vmatpush1.msra.mxu0 0.0
        %3227 = vmatprep.subr.mxu0 0.0
        %3228 = vmatpush1.msra.mxu0 0.0
        %3229 = vmatprep.subr.mxu0 0.0
        %3230 = vmatpush1.msra.mxu0 0.0
        %3231 = vmatprep.subr.mxu0 0.0
        %3232 = vmatpush1.msra.mxu0 0.0
        %3233 = vmatprep.subr.mxu0 0.0
        %3234 = vmatpush1.msra.mxu0 0.0
        %3235 = vmatprep.subr.mxu0 0.0
        %3236 = vmatpush1.msra.mxu0 0.0
        %3237 = vmatprep.subr.mxu0 0.0
        %3238 = vmatpush1.msra.mxu0 0.0
        %3239 = vmatprep.subr.mxu0 0.0
        %3240 = vmatpush1.msra.mxu0 0.0
        %3241 = vmatprep.subr.mxu0 0.0
        %3242 = vmatpush1.msra.mxu0 0.0
        %3243 = vmatprep.subr.mxu0 0.0
        %3244 = vmatpush1.msra.mxu0 0.0
        %3245 = vmatprep.subr.mxu0 0.0
        %3246 = vmatpush1.msra.mxu0 0.0
        %3247 = vmatprep.subr.mxu0 0.0
        %3248 = vmatpush1.msra.mxu0 0.0
        %3249 = vmatprep.subr.mxu0 0.0
        %3250 = vmatpush1.msra.mxu0 0.0
        %3251 = vmatprep.subr.mxu0 0.0
        %3252 = vmatpush1.msra.mxu0 0.0
        %3253 = vmatprep.mubr.f32.mxu0 0.0
        %3254 = vmatmul.mubr.f32.gmra.mrb[0].mxu0 %v3187
        %v3255 = vpop.f32.mrb[0].mxu0
        %v3256 = vadd.f32 0.0, %v3255
        %v3257 = vpop.f32.mrb[0].mxu0
        %3258 = vdwg.mxu0
        %v3260 = vsel %vm2805, %v2891, 0
        %3262 = vmatprep.subr.mxu0 0.0
        %3263 = vmatpush1.msra.mxu0 %v2177
        %3264 = vmatprep.subr.mxu0 0.0
        %3265 = vmatpush1.msra.mxu0 0.0
        %3266 = vmatprep.subr.mxu0 0.0
        %3267 = vmatpush1.msra.mxu0 0.0
        %3268 = vmatprep.subr.mxu0 0.0
        %3269 = vmatpush1.msra.mxu0 0.0
        %3270 = vmatprep.subr.mxu0 0.0
        %3271 = vmatpush1.msra.mxu0 0.0
        %3272 = vmatprep.subr.mxu0 0.0
        %3273 = vmatpush1.msra.mxu0 0.0
        %3274 = vmatprep.subr.mxu0 0.0
        %3275 = vmatpush1.msra.mxu0 0.0
        %3276 = vmatprep.subr.mxu0 0.0
        %3277 = vmatpush1.msra.mxu0 0.0
        %3278 = vmatprep.subr.mxu0 0.0
        %3279 = vmatpush1.msra.mxu0 0.0
        %3280 = vmatprep.subr.mxu0 0.0
        %3281 = vmatpush1.msra.mxu0 0.0
        %3282 = vmatprep.subr.mxu0 0.0
        %3283 = vmatpush1.msra.mxu0 0.0
        %3284 = vmatprep.subr.mxu0 0.0
        %3285 = vmatpush1.msra.mxu0 0.0
        %3286 = vmatprep.subr.mxu0 0.0
        %3287 = vmatpush1.msra.mxu0 0.0
        %3288 = vmatprep.subr.mxu0 0.0
        %3289 = vmatpush1.msra.mxu0 0.0
        %3290 = vmatprep.subr.mxu0 0.0
        %3291 = vmatpush1.msra.mxu0 0.0
        %3292 = vmatprep.subr.mxu0 0.0
        %3293 = vmatpush1.msra.mxu0 0.0
        %3294 = vmatprep.subr.mxu0 0.0
        %3295 = vmatpush1.msra.mxu0 0.0
        %3296 = vmatprep.subr.mxu0 0.0
        %3297 = vmatpush1.msra.mxu0 0.0
        %3298 = vmatprep.subr.mxu0 0.0
        %3299 = vmatpush1.msra.mxu0 0.0
        %3300 = vmatprep.subr.mxu0 0.0
        %3301 = vmatpush1.msra.mxu0 0.0
        %3302 = vmatprep.subr.mxu0 0.0
        %3303 = vmatpush1.msra.mxu0 0.0
        %3304 = vmatprep.subr.mxu0 0.0
        %3305 = vmatpush1.msra.mxu0 0.0
        %3306 = vmatprep.subr.mxu0 0.0
        %3307 = vmatpush1.msra.mxu0 0.0
        %3308 = vmatprep.subr.mxu0 0.0
        %3309 = vmatpush1.msra.mxu0 0.0
        %3310 = vmatprep.subr.mxu0 0.0
        %3311 = vmatpush1.msra.mxu0 0.0
        %3312 = vmatprep.subr.mxu0 0.0
        %3313 = vmatpush1.msra.mxu0 0.0
        %3314 = vmatprep.subr.mxu0 0.0
        %3315 = vmatpush1.msra.mxu0 0.0
        %3316 = vmatprep.subr.mxu0 0.0
        %3317 = vmatpush1.msra.mxu0 0.0
        %3318 = vmatprep.subr.mxu0 0.0
        %3319 = vmatpush1.msra.mxu0 0.0
        %3320 = vmatprep.subr.mxu0 0.0
        %3321 = vmatpush1.msra.mxu0 0.0
        %3322 = vmatprep.subr.mxu0 0.0
        %3323 = vmatpush1.msra.mxu0 0.0
        %3324 = vmatprep.subr.mxu0 0.0
        %3325 = vmatpush1.msra.mxu0 0.0
        %3326 = vmatprep.mubr.f32.mxu0 0.0
        %3327 = vmatmul.mubr.f32.gmra.mrb[0].mxu0 %v3260
        %v3328 = vpop.f32.mrb[0].mxu0
        %v3329 = vadd.f32 0.0, %v3328
        %v3330 = vpop.f32.mrb[0].mxu0
        %3331 = vdwg.mxu0
        %v3333 = vsel %vm2805, %v2892, 0
        %3335 = vmatprep.subr.mxu0 0.0
        %3336 = vmatpush1.msra.mxu0 %v2178
        %3337 = vmatprep.subr.mxu0 0.0
        %3338 = vmatpush1.msra.mxu0 0.0
        %3339 = vmatprep.subr.mxu0 0.0
        %3340 = vmatpush1.msra.mxu0 0.0
        %3341 = vmatprep.subr.mxu0 0.0
        %3342 = vmatpush1.msra.mxu0 0.0
        %3343 = vmatprep.subr.mxu0 0.0
        %3344 = vmatpush1.msra.mxu0 0.0
        %3345 = vmatprep.subr.mxu0 0.0
        %3346 = vmatpush1.msra.mxu0 0.0
        %3347 = vmatprep.subr.mxu0 0.0
        %3348 = vmatpush1.msra.mxu0 0.0
        %3349 = vmatprep.subr.mxu0 0.0
        %3350 = vmatpush1.msra.mxu0 0.0
        %3351 = vmatprep.subr.mxu0 0.0
        %3352 = vmatpush1.msra.mxu0 0.0
        %3353 = vmatprep.subr.mxu0 0.0
        %3354 = vmatpush1.msra.mxu0 0.0
        %3355 = vmatprep.subr.mxu0 0.0
        %3356 = vmatpush1.msra.mxu0 0.0
        %3357 = vmatprep.subr.mxu0 0.0
        %3358 = vmatpush1.msra.mxu0 0.0
        %3359 = vmatprep.subr.mxu0 0.0
        %3360 = vmatpush1.msra.mxu0 0.0
        %3361 = vmatprep.subr.mxu0 0.0
        %3362 = vmatpush1.msra.mxu0 0.0
        %3363 = vmatprep.subr.mxu0 0.0
        %3364 = vmatpush1.msra.mxu0 0.0
        %3365 = vmatprep.subr.mxu0 0.0
        %3366 = vmatpush1.msra.mxu0 0.0
        %3367 = vmatprep.subr.mxu0 0.0
        %3368 = vmatpush1.msra.mxu0 0.0
        %3369 = vmatprep.subr.mxu0 0.0
        %3370 = vmatpush1.msra.mxu0 0.0
        %3371 = vmatprep.subr.mxu0 0.0
        %3372 = vmatpush1.msra.mxu0 0.0
        %3373 = vmatprep.subr.mxu0 0.0
        %3374 = vmatpush1.msra.mxu0 0.0
        %3375 = vmatprep.subr.mxu0 0.0
        %3376 = vmatpush1.msra.mxu0 0.0
        %3377 = vmatprep.subr.mxu0 0.0
        %3378 = vmatpush1.msra.mxu0 0.0
        %3379 = vmatprep.subr.mxu0 0.0
        %3380 = vmatpush1.msra.mxu0 0.0
        %3381 = vmatprep.subr.mxu0 0.0
        %3382 = vmatpush1.msra.mxu0 0.0
        %3383 = vmatprep.subr.mxu0 0.0
        %3384 = vmatpush1.msra.mxu0 0.0
        %3385 = vmatprep.subr.mxu0 0.0
        %3386 = vmatpush1.msra.mxu0 0.0
        %3387 = vmatprep.subr.mxu0 0.0
        %3388 = vmatpush1.msra.mxu0 0.0
        %3389 = vmatprep.subr.mxu0 0.0
        %3390 = vmatpush1.msra.mxu0 0.0
        %3391 = vmatprep.subr.mxu0 0.0
        %3392 = vmatpush1.msra.mxu0 0.0
        %3393 = vmatprep.subr.mxu0 0.0
        %3394 = vmatpush1.msra.mxu0 0.0
        %3395 = vmatprep.subr.mxu0 0.0
        %3396 = vmatpush1.msra.mxu0 0.0
        %3397 = vmatprep.subr.mxu0 0.0
        %3398 = vmatpush1.msra.mxu0 0.0
        %3399 = vmatprep.mubr.f32.mxu0 0.0
        %3400 = vmatmul.mubr.f32.gmra.mrb[0].mxu0 %v3333
        %v3401 = vpop.f32.mrb[0].mxu0
        %v3402 = vadd.f32 0.0, %v3401
        %v3403 = vpop.f32.mrb[0].mxu0
        %3404 = vdwg.mxu0
        %v3406 = vsel %vm2805, %v2893, 0
        %3408 = vmatprep.subr.mxu0 0.0
        %3409 = vmatpush1.msra.mxu0 %v2179
        %3410 = vmatprep.subr.mxu0 0.0
        %3411 = vmatpush1.msra.mxu0 0.0
        %3412 = vmatprep.subr.mxu0 0.0
        %3413 = vmatpush1.msra.mxu0 0.0
        %3414 = vmatprep.subr.mxu0 0.0
        %3415 = vmatpush1.msra.mxu0 0.0
        %3416 = vmatprep.subr.mxu0 0.0
        %3417 = vmatpush1.msra.mxu0 0.0
        %3418 = vmatprep.subr.mxu0 0.0
        %3419 = vmatpush1.msra.mxu0 0.0
        %3420 = vmatprep.subr.mxu0 0.0
        %3421 = vmatpush1.msra.mxu0 0.0
        %3422 = vmatprep.subr.mxu0 0.0
        %3423 = vmatpush1.msra.mxu0 0.0
        %3424 = vmatprep.subr.mxu0 0.0
        %3425 = vmatpush1.msra.mxu0 0.0
        %3426 = vmatprep.subr.mxu0 0.0
        %3427 = vmatpush1.msra.mxu0 0.0
        %3428 = vmatprep.subr.mxu0 0.0
        %3429 = vmatpush1.msra.mxu0 0.0
        %3430 = vmatprep.subr.mxu0 0.0
        %3431 = vmatpush1.msra.mxu0 0.0
        %3432 = vmatprep.subr.mxu0 0.0
        %3433 = vmatpush1.msra.mxu0 0.0
        %3434 = vmatprep.subr.mxu0 0.0
        %3435 = vmatpush1.msra.mxu0 0.0
        %3436 = vmatprep.subr.mxu0 0.0
        %3437 = vmatpush1.msra.mxu0 0.0
        %3438 = vmatprep.subr.mxu0 0.0
        %3439 = vmatpush1.msra.mxu0 0.0
        %3440 = vmatprep.subr.mxu0 0.0
        %3441 = vmatpush1.msra.mxu0 0.0
        %3442 = vmatprep.subr.mxu0 0.0
        %3443 = vmatpush1.msra.mxu0 0.0
        %3444 = vmatprep.subr.mxu0 0.0
        %3445 = vmatpush1.msra.mxu0 0.0
        %3446 = vmatprep.subr.mxu0 0.0
        %3447 = vmatpush1.msra.mxu0 0.0
        %3448 = vmatprep.subr.mxu0 0.0
        %3449 = vmatpush1.msra.mxu0 0.0
        %3450 = vmatprep.subr.mxu0 0.0
        %3451 = vmatpush1.msra.mxu0 0.0
        %3452 = vmatprep.subr.mxu0 0.0
        %3453 = vmatpush1.msra.mxu0 0.0
        %3454 = vmatprep.subr.mxu0 0.0
        %3455 = vmatpush1.msra.mxu0 0.0
        %3456 = vmatprep.subr.mxu0 0.0
        %3457 = vmatpush1.msra.mxu0 0.0
        %3458 = vmatprep.subr.mxu0 0.0
        %3459 = vmatpush1.msra.mxu0 0.0
        %3460 = vmatprep.subr.mxu0 0.0
        %3461 = vmatpush1.msra.mxu0 0.0
        %3462 = vmatprep.subr.mxu0 0.0
        %3463 = vmatpush1.msra.mxu0 0.0
        %3464 = vmatprep.subr.mxu0 0.0
        %3465 = vmatpush1.msra.mxu0 0.0
        %3466 = vmatprep.subr.mxu0 0.0
        %3467 = vmatpush1.msra.mxu0 0.0
        %3468 = vmatprep.subr.mxu0 0.0
        %3469 = vmatpush1.msra.mxu0 0.0
        %3470 = vmatprep.subr.mxu0 0.0
        %3471 = vmatpush1.msra.mxu0 0.0
        %3472 = vmatprep.mubr.f32.mxu0 0.0
        %3473 = vmatmul.mubr.f32.gmra.mrb[0].mxu0 %v3406
        %v3474 = vpop.f32.mrb[0].mxu0
        %v3475 = vadd.f32 0.0, %v3474
        %v3476 = vpop.f32.mrb[0].mxu0
        %3477 = vdwg.mxu0
        %v3478 = vcombine.low %v2964, %v3110
        %v3479 = vcombine.high %v2964, %v3110
        %v3481 = vunpack.c.l.s4 1983009808
        %v3482 = vunpack.c.0.s8 %v3481
        %v3483 = vlaneseq
        %v3484 = vshrl.u32 %v3483, 7
        %v3485 = vsub.s32 %v3482, %v3484
        %v3486 = vrot.slane %v3478, %v3485
        %v3488 = vunpack.c.l.s4 1983009808
        %v3489 = vunpack.c.0.s8 %v3488
        %v3490 = vlaneseq
        %v3491 = vshrl.u32 %v3490, 7
        %v3492 = vsub.s32 %v3489, %v3491
        %v3493 = vrot.slane %v3479, %v3492
        %v3494 = vcombine.low %v3037, %v3183
        %v3495 = vcombine.high %v3037, %v3183
        %v3497 = vunpack.c.l.s4 1983009808
        %v3498 = vunpack.c.0.s8 %v3497
        %v3499 = vlaneseq
        %v3500 = vshrl.u32 %v3499, 7
        %v3501 = vsub.s32 %v3498, %v3500
        %v3502 = vrot.slane %v3494, %v3501
        %v3504 = vunpack.c.l.s4 1983009808
        %v3505 = vunpack.c.0.s8 %v3504
        %v3506 = vlaneseq
        %v3507 = vshrl.u32 %v3506, 7
        %v3508 = vsub.s32 %v3505, %v3507
        %v3509 = vrot.slane %v3495, %v3508
        %v3510 = vcombine.low %v3256, %v3402
        %v3511 = vcombine.high %v3256, %v3402
        %v3513 = vunpack.c.l.s4 1983009808
        %v3514 = vunpack.c.0.s8 %v3513
        %v3515 = vlaneseq
        %v3516 = vshrl.u32 %v3515, 7
        %v3517 = vsub.s32 %v3514, %v3516
        %v3518 = vrot.slane %v3510, %v3517
        %v3520 = vunpack.c.l.s4 1983009808
        %v3521 = vunpack.c.0.s8 %v3520
        %v3522 = vlaneseq
        %v3523 = vshrl.u32 %v3522, 7
        %v3524 = vsub.s32 %v3521, %v3523
        %v3525 = vrot.slane %v3511, %v3524
        %v3526 = vcombine.low %v3329, %v3475
        %v3527 = vcombine.high %v3329, %v3475
        %v3529 = vunpack.c.l.s4 1983009808
        %v3530 = vunpack.c.0.s8 %v3529
        %v3531 = vlaneseq
        %v3532 = vshrl.u32 %v3531, 7
        %v3533 = vsub.s32 %v3530, %v3532
        %v3534 = vrot.slane %v3526, %v3533
        %v3536 = vunpack.c.l.s4 1983009808
        %v3537 = vunpack.c.0.s8 %v3536
        %v3538 = vlaneseq
        %v3539 = vshrl.u32 %v3538, 7
        %v3540 = vsub.s32 %v3537, %v3539
        %v3541 = vrot.slane %v3527, %v3540
        %v3542 = vcombine.low %v3486, %v3502
        %v3543 = vcombine.high %v3486, %v3502
        %v3545 = vunpack.c.l.s4 1934713408
        %v3546 = vunpack.c.0.s8 %v3545
        %v3547 = vlaneseq
        %v3548 = vshrl.u32 %v3547, 7
        %v3549 = vsub.s32 %v3546, %v3548
        %v3550 = vrot.slane %v3542, %v3549
        %v3552 = vunpack.c.l.s4 1934713408
        %v3553 = vunpack.c.0.s8 %v3552
        %v3554 = vlaneseq
        %v3555 = vshrl.u32 %v3554, 7
        %v3556 = vsub.s32 %v3553, %v3555
        %v3557 = vrot.slane %v3543, %v3556
        %v3558 = vcombine.low %v3493, %v3509
        %v3559 = vcombine.high %v3493, %v3509
        %v3561 = vunpack.c.l.s4 1934713408
        %v3562 = vunpack.c.0.s8 %v3561
        %v3563 = vlaneseq
        %v3564 = vshrl.u32 %v3563, 7
        %v3565 = vsub.s32 %v3562, %v3564
        %v3566 = vrot.slane %v3558, %v3565
        %v3568 = vunpack.c.l.s4 1934713408
        %v3569 = vunpack.c.0.s8 %v3568
        %v3570 = vlaneseq
        %v3571 = vshrl.u32 %v3570, 7
        %v3572 = vsub.s32 %v3569, %v3571
        %v3573 = vrot.slane %v3559, %v3572
        %v3574 = vcombine.low %v3518, %v3534
        %v3575 = vcombine.high %v3518, %v3534
        %v3577 = vunpack.c.l.s4 1934713408
        %v3578 = vunpack.c.0.s8 %v3577
        %v3579 = vlaneseq
        %v3580 = vshrl.u32 %v3579, 7
        %v3581 = vsub.s32 %v3578, %v3580
        %v3582 = vrot.slane %v3574, %v3581
        %v3584 = vunpack.c.l.s4 1934713408
        %v3585 = vunpack.c.0.s8 %v3584
        %v3586 = vlaneseq
        %v3587 = vshrl.u32 %v3586, 7
        %v3588 = vsub.s32 %v3585, %v3587
        %v3589 = vrot.slane %v3575, %v3588
        %v3590 = vcombine.low %v3525, %v3541
        %v3591 = vcombine.high %v3525, %v3541
        %v3593 = vunpack.c.l.s4 1934713408
        %v3594 = vunpack.c.0.s8 %v3593
        %v3595 = vlaneseq
        %v3596 = vshrl.u32 %v3595, 7
        %v3597 = vsub.s32 %v3594, %v3596
        %v3598 = vrot.slane %v3590, %v3597
        %v3600 = vunpack.c.l.s4 1934713408
        %v3601 = vunpack.c.0.s8 %v3600
        %v3602 = vlaneseq
        %v3603 = vshrl.u32 %v3602, 7
        %v3604 = vsub.s32 %v3601, %v3603
        %v3605 = vrot.slane %v3591, %v3604
        %v3606 = vcombine.low %v3550, %v3582
        %v3607 = vcombine.high %v3550, %v3582
        %v3608 = vcombine.low %v3557, %v3589
        %v3609 = vcombine.high %v3557, %v3589
        %v3610 = vcombine.low %v3566, %v3598
        %v3611 = vcombine.high %v3566, %v3598
        %v3612 = vcombine.low %v3573, %v3605
        %v3613 = vcombine.high %v3573, %v3605
        %v3614 = vcombine.low %v3606, %v3608
        %v3615 = vcombine.high %v3606, %v3608
        %v3617 = vunpack.c.l.s4 1983009808
        %v3618 = vunpack.c.0.s8 %v3617
        %v3619 = vlaneseq
        %v3620 = vshrl.u32 %v3619, 7
        %v3621 = vsub.s32 %v3618, %v3620
        %v3622 = vrot.slane %v3614, %v3621
        %v3624 = vunpack.c.l.s4 1983009808
        %v3625 = vunpack.c.0.s8 %v3624
        %v3626 = vlaneseq
        %v3627 = vshrl.u32 %v3626, 7
        %v3628 = vsub.s32 %v3625, %v3627
        %v3629 = vrot.slane %v3615, %v3628
        %v3630 = vcombine.low %v3607, %v3609
        %v3631 = vcombine.high %v3607, %v3609
        %v3633 = vunpack.c.l.s4 1983009808
        %v3634 = vunpack.c.0.s8 %v3633
        %v3635 = vlaneseq
        %v3636 = vshrl.u32 %v3635, 7
        %v3637 = vsub.s32 %v3634, %v3636
        %v3638 = vrot.slane %v3630, %v3637
        %v3640 = vunpack.c.l.s4 1983009808
        %v3641 = vunpack.c.0.s8 %v3640
        %v3642 = vlaneseq
        %v3643 = vshrl.u32 %v3642, 7
        %v3644 = vsub.s32 %v3641, %v3643
        %v3645 = vrot.slane %v3631, %v3644
        %v3646 = vcombine.low %v3610, %v3612
        %v3647 = vcombine.high %v3610, %v3612
        %v3649 = vunpack.c.l.s4 1983009808
        %v3650 = vunpack.c.0.s8 %v3649
        %v3651 = vlaneseq
        %v3652 = vshrl.u32 %v3651, 7
        %v3653 = vsub.s32 %v3650, %v3652
        %v3654 = vrot.slane %v3646, %v3653
        %v3656 = vunpack.c.l.s4 1983009808
        %v3657 = vunpack.c.0.s8 %v3656
        %v3658 = vlaneseq
        %v3659 = vshrl.u32 %v3658, 7
        %v3660 = vsub.s32 %v3657, %v3659
        %v3661 = vrot.slane %v3647, %v3660
        %v3662 = vcombine.low %v3611, %v3613
        %v3663 = vcombine.high %v3611, %v3613
        %v3665 = vunpack.c.l.s4 1983009808
        %v3666 = vunpack.c.0.s8 %v3665
        %v3667 = vlaneseq
        %v3668 = vshrl.u32 %v3667, 7
        %v3669 = vsub.s32 %v3666, %v3668
        %v3670 = vrot.slane %v3662, %v3669
        %v3672 = vunpack.c.l.s4 1983009808
        %v3673 = vunpack.c.0.s8 %v3672
        %v3674 = vlaneseq
        %v3675 = vshrl.u32 %v3674, 7
        %v3676 = vsub.s32 %v3673, %v3675
        %v3677 = vrot.slane %v3663, %v3676
        %v3678 = vcombine.low %v3622, %v3638
        %v3679 = vcombine.high %v3622, %v3638
        %v3681 = vunpack.c.l.s4 1934713408
        %v3682 = vunpack.c.0.s8 %v3681
        %v3683 = vlaneseq
        %v3684 = vshrl.u32 %v3683, 7
        %v3685 = vsub.s32 %v3682, %v3684
        %v3686 = vrot.slane %v3678, %v3685
        %v3688 = vunpack.c.l.s4 1934713408
        %v3689 = vunpack.c.0.s8 %v3688
        %v3690 = vlaneseq
        %v3691 = vshrl.u32 %v3690, 7
        %v3692 = vsub.s32 %v3689, %v3691
        %v3693 = vrot.slane %v3679, %v3692
        %v3694 = vcombine.low %v3629, %v3645
        %v3695 = vcombine.high %v3629, %v3645
        %v3697 = vunpack.c.l.s4 1934713408
        %v3698 = vunpack.c.0.s8 %v3697
        %v3699 = vlaneseq
        %v3700 = vshrl.u32 %v3699, 7
        %v3701 = vsub.s32 %v3698, %v3700
        %v3702 = vrot.slane %v3694, %v3701
        %v3704 = vunpack.c.l.s4 1934713408
        %v3705 = vunpack.c.0.s8 %v3704
        %v3706 = vlaneseq
        %v3707 = vshrl.u32 %v3706, 7
        %v3708 = vsub.s32 %v3705, %v3707
        %v3709 = vrot.slane %v3695, %v3708
        %v3710 = vcombine.low %v3654, %v3670
        %v3711 = vcombine.high %v3654, %v3670
        %v3713 = vunpack.c.l.s4 1934713408
        %v3714 = vunpack.c.0.s8 %v3713
        %v3715 = vlaneseq
        %v3716 = vshrl.u32 %v3715, 7
        %v3717 = vsub.s32 %v3714, %v3716
        %v3718 = vrot.slane %v3710, %v3717
        %v3720 = vunpack.c.l.s4 1934713408
        %v3721 = vunpack.c.0.s8 %v3720
        %v3722 = vlaneseq
        %v3723 = vshrl.u32 %v3722, 7
        %v3724 = vsub.s32 %v3721, %v3723
        %v3725 = vrot.slane %v3711, %v3724
        %v3726 = vcombine.low %v3661, %v3677
        %v3727 = vcombine.high %v3661, %v3677
        %v3729 = vunpack.c.l.s4 1934713408
        %v3730 = vunpack.c.0.s8 %v3729
        %v3731 = vlaneseq
        %v3732 = vshrl.u32 %v3731, 7
        %v3733 = vsub.s32 %v3730, %v3732
        %v3734 = vrot.slane %v3726, %v3733
        %v3736 = vunpack.c.l.s4 1934713408
        %v3737 = vunpack.c.0.s8 %v3736
        %v3738 = vlaneseq
        %v3739 = vshrl.u32 %v3738, 7
        %v3740 = vsub.s32 %v3737, %v3739
        %v3741 = vrot.slane %v3727, %v3740
        %v3742 = vcombine.low %v3686, %v3718
        %v3743 = vcombine.high %v3686, %v3718
        %v3744 = vcombine.low %v3693, %v3725
        %v3745 = vcombine.high %v3693, %v3725
        %v3746 = vcombine.low %v3702, %v3734
        %v3747 = vcombine.high %v3702, %v3734
        %v3748 = vcombine.low %v3709, %v3741
        %v3749 = vcombine.high %v3709, %v3741
        %3751 = vrot.lane.b32.xlu0 %v3743, 16
        %v3752 = vpop.permute.xlu0 %3751
        %3755 = vrot.lane.b32.xlu0 %v3744, 32
        %v3756 = vpop.permute.xlu0 %3755
        %3759 = vrot.lane.b32.xlu0 %v3745, 48
        %v3760 = vpop.permute.xlu0 %3759
        %3763 = vrot.lane.b32.xlu0 %v3746, 64
        %v3764 = vpop.permute.xlu0 %3763
        %3767 = vrot.lane.b32.xlu0 %v3747, 80
        %v3768 = vpop.permute.xlu0 %3767
        %3771 = vrot.lane.b32.xlu0 %v3748, 96
        %v3772 = vpop.permute.xlu0 %3771
        %3775 = vrot.lane.b32.xlu0 %v3749, 112
        %v3776 = vpop.permute.xlu0 %3775
        %v3778 = vsel %vm2180, %v3742, %v3752
        %vm3779 = vcmask 261120
        %v3780 = vsel %vm3779, %v3778, %v3756
        %vm3781 = vcmask 392192
        %v3782 = vsel %vm3781, %v3780, %v3760
        %vm3783 = vcmask 523264
        %v3784 = vsel %vm3783, %v3782, %v3764
        %vm3785 = vcmask 654336
        %v3786 = vsel %vm3785, %v3784, %v3768
        %vm3787 = vcmask 785408
        %v3788 = vsel %vm3787, %v3786, %v3772
        %vm3789 = vcmask 916480
        %v3790 = vsel %vm3789, %v3788, %v3776
        %v3791 = vpack.c.bf16 %v3790, %v3790
        %v3792 = vld [vmem:[%s813] sm:$0xf]
        %v3793 = vld [vmem:[%s813 + $0x4] sm:$0xf]
        %v3794 = vld [vmem:[%s813 + $0x8] sm:$0xf]
        %v3795 = vld [vmem:[%s813 + $0xc] sm:$0xf]
        %v3796 = vld [vmem:[%s813 + $0x10] sm:$0xf]
        %v3797 = vld [vmem:[%s813 + $0x14] sm:$0xf]
        %v3798 = vld [vmem:[%s813 + $0x18] sm:$0xf]
        %v3799 = vld [vmem:[%s813 + $0x1c] sm:$0xf]
        %v3800 = vld [vmem:[%s813 + $0x20] sm:$0xf]
        %v3801 = vld [vmem:[%s813 + $0x24] sm:$0xf]
        %v3802 = vld [vmem:[%s813 + $0x28] sm:$0xf]
        %v3803 = vld [vmem:[%s813 + $0x2c] sm:$0xf]
        %v3804 = vld [vmem:[%s813 + $0x30] sm:$0xf]
        %v3805 = vld [vmem:[%s813 + $0x34] sm:$0xf]
        %v3806 = vld [vmem:[%s813 + $0x38] sm:$0xf]
        %v3807 = vld [vmem:[%s813 + $0x3c] sm:$0xf]
        %v3808 = vld [vmem:[%s821] sm:$0x1]
        %v3810 = vlaneseq
        %v3811 = vshrl.u32 %v3810, 7
        %v3812 = vsub.s32 0, %v3811
        %v3813 = vrot.slane %v3808, %v3812
        %v3831 = vunpack.c.l.b16 %v3792
        %v3832 = vunpack.c.l.b16 %v3793
        %v3833 = vunpack.c.l.b16 %v3794
        %v3834 = vunpack.c.l.b16 %v3795
        %v3835 = vunpack.c.l.b16 %v3796
        %v3836 = vunpack.c.l.b16 %v3797
        %v3837 = vunpack.c.l.b16 %v3798
        %v3838 = vunpack.c.l.b16 %v3799
        %v3839 = vunpack.c.l.b16 %v3800
        %v3840 = vunpack.c.l.b16 %v3801
        %v3841 = vunpack.c.l.b16 %v3802
        %v3842 = vunpack.c.l.b16 %v3803
        %v3843 = vunpack.c.l.b16 %v3804
        %v3844 = vunpack.c.l.b16 %v3805
        %v3845 = vunpack.c.l.b16 %v3806
        %v3846 = vunpack.c.l.b16 %v3807
        %v3847 = vpack.c.b16 %v3832, %v3831
        %v3848 = vpack.c.b16 %v3834, %v3833
        %v3849 = vpack.c.b16 %v3836, %v3835
        %v3850 = vpack.c.b16 %v3838, %v3837
        %v3851 = vpack.c.b16 %v3840, %v3839
        %v3852 = vpack.c.b16 %v3842, %v3841
        %v3853 = vpack.c.b16 %v3844, %v3843
        %v3854 = vpack.c.b16 %v3846, %v3845
        %3863 = vmatprep.subr.bf16.mxu0 0
        %3864 = vmatpush1.bf16.msra.mxu0 %v3847
        %3865 = vmatprep.subr.bf16.mxu0 0
        %3866 = vmatpush1.bf16.msra.mxu0 %v3848
        %3867 = vmatprep.subr.bf16.mxu0 0
        %3868 = vmatpush1.bf16.msra.mxu0 %v3849
        %3869 = vmatprep.subr.bf16.mxu0 0
        %3870 = vmatpush1.bf16.msra.mxu0 %v3850
        %3871 = vmatprep.subr.bf16.mxu0 0
        %3872 = vmatpush1.bf16.msra.mxu0 %v3851
        %3873 = vmatprep.subr.bf16.mxu0 0
        %3874 = vmatpush1.bf16.msra.mxu0 %v3852
        %3875 = vmatprep.subr.bf16.mxu0 0
        %3876 = vmatpush1.bf16.msra.mxu0 %v3853
        %3877 = vmatprep.subr.bf16.mxu0 0
        %3878 = vmatpush1.bf16.msra.mxu0 %v3854
        %3879 = vmatprep.subr.bf16.mxu0 0
        %3880 = vmatpush1.bf16.msra.mxu0 0
        %3881 = vmatprep.subr.bf16.mxu0 0
        %3882 = vmatpush1.bf16.msra.mxu0 0
        %3883 = vmatprep.subr.bf16.mxu0 0
        %3884 = vmatpush1.bf16.msra.mxu0 0
        %3885 = vmatprep.subr.bf16.mxu0 0
        %3886 = vmatpush1.bf16.msra.mxu0 0
        %3887 = vmatprep.subr.bf16.mxu0 0
        %3888 = vmatpush1.bf16.msra.mxu0 0
        %3889 = vmatprep.subr.bf16.mxu0 0
        %3890 = vmatpush1.bf16.msra.mxu0 0
        %3891 = vmatprep.subr.bf16.mxu0 0
        %3892 = vmatpush1.bf16.msra.mxu0 0
        %3893 = vmatprep.subr.bf16.mxu0 0
        %3894 = vmatpush1.bf16.msra.mxu0 0
        %3895 = vmatprep.mubr.bf16.mxu0 0
        %3896 = vmatmul.mubr.bf16.gmra.mrb[0].mxu0 %v3791
        %v3897 = vpop.f32.mrb[0].mxu0
        %v3898 = vadd.f32 %v3813, %v3897
        %v3899 = vpop.f32.mrb[0].mxu0
        %v3900 = vpop.f32.mrb[0].mxu0
        %v3901 = vpop.f32.mrb[0].mxu0
        %3902 = vdwg.mxu0
        %v3903 = vadd.f32 %v1037, %v3898
        %v3904 = vld [vmem:[%s1029] sm:$0x1]
        %v3905 = vld [vmem:[%s1029 + $0x1] sm:$0x1]
        %3906 = vadd.xlane.f32.xlu0 %v3903
        %v3907 = vpop.xlane.xlu0 %3906
        %v3908 = vrcp.pop 128.0
        %v3909 = vmul.f32 %v3907, %v3908
        %v3910 = vsub.f32 %v3903, %v3909
        %v3911 = vmul.f32 %v3910, %v3910
        %3912 = vadd.xlane.f32.xlu0 %v3911
        %v3913 = vpop.xlane.xlu0 %3912
        %v3914 = vmul.f32 %v3913, %v3908
        %v3915 = vadd.f32 %v3914, 1e-05
        %v3916 = vrsqrt.pop %v3915
        %v3917 = vmul.f32 %v3910, %v3916
        %v3918 = vlaneseq
        %v3919 = vshrl.u32 %v3918, 7
        %v3920 = vsub.s32 0, %v3919
        %v3921 = vrot.slane %v3904, %v3920
        %v3922 = vmul.f32 %v3917, %v3921
        %v3923 = vlaneseq
        %v3924 = vshrl.u32 %v3923, 7
        %v3925 = vsub.s32 0, %v3924
        %v3926 = vrot.slane %v3905, %v3925
        %v3927 = vadd.f32 %v3922, %v3926
        %v3928 = vld [vmem:[%s1016] sm:$0xf]
        %v3929 = vld [vmem:[%s830] sm:$0xf]
        %v3930 = vld [vmem:[%s830 + $0x4] sm:$0xf]
        %v3931 = vld [vmem:[%s830 + $0x8] sm:$0xf]
        %v3932 = vld [vmem:[%s830 + $0xc] sm:$0xf]
        %v3933 = vld [vmem:[%s830 + $0x10] sm:$0xf]
        %v3934 = vld [vmem:[%s830 + $0x14] sm:$0xf]
        %v3935 = vld [vmem:[%s830 + $0x18] sm:$0xf]
        %v3936 = vld [vmem:[%s830 + $0x1c] sm:$0xf]
        %v3937 = vld [vmem:[%s830 + $0x20] sm:$0xf]
        %v3938 = vld [vmem:[%s830 + $0x24] sm:$0xf]
        %v3939 = vld [vmem:[%s830 + $0x28] sm:$0xf]
        %v3940 = vld [vmem:[%s830 + $0x2c] sm:$0xf]
        %v3941 = vld [vmem:[%s830 + $0x30] sm:$0xf]
        %v3942 = vld [vmem:[%s830 + $0x34] sm:$0xf]
        %v3943 = vld [vmem:[%s830 + $0x38] sm:$0xf]
        %v3944 = vld [vmem:[%s830 + $0x3c] sm:$0xf]
        %v3945 = vld [vmem:[%s838] sm:$0x1]
        %v3947 = vlaneseq
        %v3948 = vshrl.u32 %v3947, 7
        %v3949 = vsub.s32 0, %v3948
        %v3950 = vrot.slane %v3945, %v3949
        %v3968 = vunpack.c.l.b16 %v3929
        %v3969 = vunpack.c.l.b16 %v3930
        %v3970 = vunpack.c.l.b16 %v3931
        %v3971 = vunpack.c.l.b16 %v3932
        %v3972 = vunpack.c.l.b16 %v3933
        %v3973 = vunpack.c.l.b16 %v3934
        %v3974 = vunpack.c.l.b16 %v3935
        %v3975 = vunpack.c.l.b16 %v3936
        %v3976 = vunpack.c.l.b16 %v3937
        %v3977 = vunpack.c.l.b16 %v3938
        %v3978 = vunpack.c.l.b16 %v3939
        %v3979 = vunpack.c.l.b16 %v3940
        %v3980 = vunpack.c.l.b16 %v3941
        %v3981 = vunpack.c.l.b16 %v3942
        %v3982 = vunpack.c.l.b16 %v3943
        %v3983 = vunpack.c.l.b16 %v3944
        %v3984 = vpack.c.b16 %v3969, %v3968
        %v3985 = vpack.c.b16 %v3971, %v3970
        %v3986 = vpack.c.b16 %v3973, %v3972
        %v3987 = vpack.c.b16 %v3975, %v3974
        %v3988 = vpack.c.b16 %v3977, %v3976
        %v3989 = vpack.c.b16 %v3979, %v3978
        %v3990 = vpack.c.b16 %v3981, %v3980
        %v3991 = vpack.c.b16 %v3983, %v3982
        %4000 = vmatprep.subr.bf16.mxu0 0
        %4001 = vmatpush1.bf16.msra.mxu0 %v3984
        %4002 = vmatprep.subr.bf16.mxu0 0
        %4003 = vmatpush1.bf16.msra.mxu0 %v3985
        %4004 = vmatprep.subr.bf16.mxu0 0
        %4005 = vmatpush1.bf16.msra.mxu0 %v3986
        %4006 = vmatprep.subr.bf16.mxu0 0
        %4007 = vmatpush1.bf16.msra.mxu0 %v3987
        %4008 = vmatprep.subr.bf16.mxu0 0
        %4009 = vmatpush1.bf16.msra.mxu0 %v3988
        %4010 = vmatprep.subr.bf16.mxu0 0
        %4011 = vmatpush1.bf16.msra.mxu0 %v3989
        %4012 = vmatprep.subr.bf16.mxu0 0
        %4013 = vmatpush1.bf16.msra.mxu0 %v3990
        %4014 = vmatprep.subr.bf16.mxu0 0
        %4015 = vmatpush1.bf16.msra.mxu0 %v3991
        %4016 = vmatprep.subr.bf16.mxu0 0
        %4017 = vmatpush1.bf16.msra.mxu0 0
        %4018 = vmatprep.subr.bf16.mxu0 0
        %4019 = vmatpush1.bf16.msra.mxu0 0
        %4020 = vmatprep.subr.bf16.mxu0 0
        %4021 = vmatpush1.bf16.msra.mxu0 0
        %4022 = vmatprep.subr.bf16.mxu0 0
        %4023 = vmatpush1.bf16.msra.mxu0 0
        %4024 = vmatprep.subr.bf16.mxu0 0
        %4025 = vmatpush1.bf16.msra.mxu0 0
        %4026 = vmatprep.subr.bf16.mxu0 0
        %4027 = vmatpush1.bf16.msra.mxu0 0
        %4028 = vmatprep.subr.bf16.mxu0 0
        %4029 = vmatpush1.bf16.msra.mxu0 0
        %4030 = vmatprep.subr.bf16.mxu0 0
        %4031 = vmatpush1.bf16.msra.mxu0 0
        %4032 = vmatprep.mubr.bf16.mxu0 0
        %4033 = vmatmul.mubr.bf16.gmra.mrb[0].mxu0 %v3928
        %v4034 = vpop.f32.mrb[0].mxu0
        %v4035 = vadd.f32 %v3950, %v4034
        %v4036 = vpop.f32.mrb[0].mxu0
        %v4037 = vpop.f32.mrb[0].mxu0
        %v4038 = vpop.f32.mrb[0].mxu0
        %4039 = vdwg.mxu0
        %v4040 = vpack.c.bf16 %v4035, %v4035
        %v4041 = vld [vmem:[%s847] sm:$0xf]
        %v4042 = vld [vmem:[%s847 + $0x4] sm:$0xf]
        %v4043 = vld [vmem:[%s847 + $0x8] sm:$0xf]
        %v4044 = vld [vmem:[%s847 + $0xc] sm:$0xf]
        %v4045 = vld [vmem:[%s847 + $0x10] sm:$0xf]
        %v4046 = vld [vmem:[%s847 + $0x14] sm:$0xf]
        %v4047 = vld [vmem:[%s847 + $0x18] sm:$0xf]
        %v4048 = vld [vmem:[%s847 + $0x1c] sm:$0xf]
        %v4049 = vld [vmem:[%s847 + $0x20] sm:$0xf]
        %v4050 = vld [vmem:[%s847 + $0x24] sm:$0xf]
        %v4051 = vld [vmem:[%s847 + $0x28] sm:$0xf]
        %v4052 = vld [vmem:[%s847 + $0x2c] sm:$0xf]
        %v4053 = vld [vmem:[%s847 + $0x30] sm:$0xf]
        %v4054 = vld [vmem:[%s847 + $0x34] sm:$0xf]
        %v4055 = vld [vmem:[%s847 + $0x38] sm:$0xf]
        %v4056 = vld [vmem:[%s847 + $0x3c] sm:$0xf]
        %v4057 = vld [vmem:[%s855] sm:$0x1]
        %v4059 = vlaneseq
        %v4060 = vshrl.u32 %v4059, 7
        %v4061 = vsub.s32 0, %v4060
        %v4062 = vrot.slane %v4057, %v4061
        %v4080 = vunpack.c.l.b16 %v4041
        %v4081 = vunpack.c.l.b16 %v4042
        %v4082 = vunpack.c.l.b16 %v4043
        %v4083 = vunpack.c.l.b16 %v4044
        %v4084 = vunpack.c.l.b16 %v4045
        %v4085 = vunpack.c.l.b16 %v4046
        %v4086 = vunpack.c.l.b16 %v4047
        %v4087 = vunpack.c.l.b16 %v4048
        %v4088 = vunpack.c.l.b16 %v4049
        %v4089 = vunpack.c.l.b16 %v4050
        %v4090 = vunpack.c.l.b16 %v4051
        %v4091 = vunpack.c.l.b16 %v4052
        %v4092 = vunpack.c.l.b16 %v4053
        %v4093 = vunpack.c.l.b16 %v4054
        %v4094 = vunpack.c.l.b16 %v4055
        %v4095 = vunpack.c.l.b16 %v4056
        %v4096 = vpack.c.b16 %v4081, %v4080
        %v4097 = vpack.c.b16 %v4083, %v4082
        %v4098 = vpack.c.b16 %v4085, %v4084
        %v4099 = vpack.c.b16 %v4087, %v4086
        %v4100 = vpack.c.b16 %v4089, %v4088
        %v4101 = vpack.c.b16 %v4091, %v4090
        %v4102 = vpack.c.b16 %v4093, %v4092
        %v4103 = vpack.c.b16 %v4095, %v4094
        %4112 = vmatprep.subr.bf16.mxu0 0
        %4113 = vmatpush1.bf16.msra.mxu0 %v4096
        %4114 = vmatprep.subr.bf16.mxu0 0
        %4115 = vmatpush1.bf16.msra.mxu0 %v4097
        %4116 = vmatprep.subr.bf16.mxu0 0
        %4117 = vmatpush1.bf16.msra.mxu0 %v4098
        %4118 = vmatprep.subr.bf16.mxu0 0
        %4119 = vmatpush1.bf16.msra.mxu0 %v4099
        %4120 = vmatprep.subr.bf16.mxu0 0
        %4121 = vmatpush1.bf16.msra.mxu0 %v4100
        %4122 = vmatprep.subr.bf16.mxu0 0
        %4123 = vmatpush1.bf16.msra.mxu0 %v4101
        %4124 = vmatprep.subr.bf16.mxu0 0
        %4125 = vmatpush1.bf16.msra.mxu0 %v4102
        %4126 = vmatprep.subr.bf16.mxu0 0
        %4127 = vmatpush1.bf16.msra.mxu0 %v4103
        %4128 = vmatprep.subr.bf16.mxu0 0
        %4129 = vmatpush1.bf16.msra.mxu0 0
        %4130 = vmatprep.subr.bf16.mxu0 0
        %4131 = vmatpush1.bf16.msra.mxu0 0
        %4132 = vmatprep.subr.bf16.mxu0 0
        %4133 = vmatpush1.bf16.msra.mxu0 0
        %4134 = vmatprep.subr.bf16.mxu0 0
        %4135 = vmatpush1.bf16.msra.mxu0 0
        %4136 = vmatprep.subr.bf16.mxu0 0
        %4137 = vmatpush1.bf16.msra.mxu0 0
        %4138 = vmatprep.subr.bf16.mxu0 0
        %4139 = vmatpush1.bf16.msra.mxu0 0
        %4140 = vmatprep.subr.bf16.mxu0 0
        %4141 = vmatpush1.bf16.msra.mxu0 0
        %4142 = vmatprep.subr.bf16.mxu0 0
        %4143 = vmatpush1.bf16.msra.mxu0 0
        %4144 = vmatprep.mubr.bf16.mxu0 0
        %4145 = vmatmul.mubr.bf16.gmra.mrb[0].mxu0 %v4040
        %v4146 = vpop.f32.mrb[0].mxu0
        %v4147 = vadd.f32 %v4062, %v4146
        %v4148 = vpop.f32.mrb[0].mxu0
        %v4149 = vpop.f32.mrb[0].mxu0
        %v4150 = vpop.f32.mrb[0].mxu0
        %4151 = vdwg.mxu0
        %v4152 = vadd.f32 %v3927, %v4147
        %v4153 = vld [vmem:[%s1029 + $0x2] sm:$0x1]
        %v4154 = vld [vmem:[%s1029 + $0x3] sm:$0x1]
        %4155 = vadd.xlane.f32.xlu0 %v4152
        %v4156 = vpop.xlane.xlu0 %4155
        %v4157 = vmul.f32 %v4156, %v3908
        %v4158 = vsub.f32 %v4152, %v4157
        %v4159 = vmul.f32 %v4158, %v4158
        %4160 = vadd.xlane.f32.xlu0 %v4159
        %v4161 = vpop.xlane.xlu0 %4160
        %v4162 = vmul.f32 %v4161, %v3908
        %v4163 = vadd.f32 %v4162, 1e-05
        %v4164 = vrsqrt.pop %v4163
        %v4165 = vmul.f32 %v4158, %v4164
        %v4166 = vlaneseq
        %v4167 = vshrl.u32 %v4166, 7
        %v4168 = vsub.s32 0, %v4167
        %v4169 = vrot.slane %v4153, %v4168
        %v4170 = vmul.f32 %v4165, %v4169
        %v4171 = vlaneseq
        %v4172 = vshrl.u32 %v4171, 7
        %v4173 = vsub.s32 0, %v4172
        %v4174 = vrot.slane %v4154, %v4173
        %v4175 = vadd.f32 %v4170, %v4174
        %v4176 = vpack.c.bf16 %v4175, %v4175
        %v4177 = vld [vmem:[%s864] sm:$0xff]
        %v4178 = vld [vmem:[%s864 + $0x8] sm:$0xff]
        %v4179 = vld [vmem:[%s864 + $0x10] sm:$0xff]
        %v4180 = vld [vmem:[%s864 + $0x18] sm:$0xff]
        %v4181 = vld [vmem:[%s864 + $0x20] sm:$0xff]
        %v4182 = vld [vmem:[%s864 + $0x28] sm:$0xff]
        %v4183 = vld [vmem:[%s864 + $0x30] sm:$0xff]
        %v4184 = vld [vmem:[%s864 + $0x38] sm:$0xff]
        %v4185 = vld [vmem:[%s864 + $0x40] sm:$0xff]
        %v4186 = vld [vmem:[%s864 + $0x48] sm:$0xff]
        %v4187 = vld [vmem:[%s864 + $0x50] sm:$0xff]
        %v4188 = vld [vmem:[%s864 + $0x58] sm:$0xff]
        %v4189 = vld [vmem:[%s864 + $0x60] sm:$0xff]
        %v4190 = vld [vmem:[%s864 + $0x68] sm:$0xff]
        %v4191 = vld [vmem:[%s864 + $0x70] sm:$0xff]
        %v4192 = vld [vmem:[%s864 + $0x78] sm:$0xff]
        %v4193 = vld [vmem:[%s864 + $0x80] sm:$0xff]
        %v4194 = vld [vmem:[%s864 + $0x88] sm:$0xff]
        %v4195 = vld [vmem:[%s864 + $0x90] sm:$0xff]
        %v4196 = vld [vmem:[%s864 + $0x98] sm:$0xff]
        %v4197 = vld [vmem:[%s864 + $0xa0] sm:$0xff]
        %v4198 = vld [vmem:[%s864 + $0xa8] sm:$0xff]
        %v4199 = vld [vmem:[%s864 + $0xb0] sm:$0xff]
        %v4200 = vld [vmem:[%s864 + $0xb8] sm:$0xff]
        %v4201 = vld [vmem:[%s864 + $0xc0] sm:$0xff]
        %v4202 = vld [vmem:[%s864 + $0xc8] sm:$0xff]
        %v4203 = vld [vmem:[%s864 + $0xd0] sm:$0xff]
        %v4204 = vld [vmem:[%s864 + $0xd8] sm:$0xff]
        %v4205 = vld [vmem:[%s864 + $0xe0] sm:$0xff]
        %v4206 = vld [vmem:[%s864 + $0xe8] sm:$0xff]
        %v4207 = vld [vmem:[%s864 + $0xf0] sm:$0xff]
        %v4208 = vld [vmem:[%s864 + $0xf8] sm:$0xff]
        %v4209 = vld [vmem:[%s864 + $0x100] sm:$0xff]
        %v4210 = vld [vmem:[%s864 + $0x108] sm:$0xff]
        %v4211 = vld [vmem:[%s864 + $0x110] sm:$0xff]
        %v4212 = vld [vmem:[%s864 + $0x118] sm:$0xff]
        %v4213 = vld [vmem:[%s864 + $0x120] sm:$0xff]
        %v4214 = vld [vmem:[%s864 + $0x128] sm:$0xff]
        %v4215 = vld [vmem:[%s864 + $0x130] sm:$0xff]
        %v4216 = vld [vmem:[%s864 + $0x138] sm:$0xff]
        %v4217 = vld [vmem:[%s864 + $0x140] sm:$0xff]
        %v4218 = vld [vmem:[%s864 + $0x148] sm:$0xff]
        %v4219 = vld [vmem:[%s864 + $0x150] sm:$0xff]
        %v4220 = vld [vmem:[%s864 + $0x158] sm:$0xff]
        %v4221 = vld [vmem:[%s864 + $0x160] sm:$0xff]
        %v4222 = vld [vmem:[%s864 + $0x168] sm:$0xff]
        %v4223 = vld [vmem:[%s864 + $0x170] sm:$0xff]
        %v4224 = vld [vmem:[%s864 + $0x178] sm:$0xff]
        %v4225 = vld [vmem:[%s864 + $0x180] sm:$0xff]
        %v4226 = vld [vmem:[%s864 + $0x188] sm:$0xff]
        %v4227 = vld [vmem:[%s864 + $0x190] sm:$0xff]
        %v4228 = vld [vmem:[%s864 + $0x198] sm:$0xff]
        %v4229 = vld [vmem:[%s864 + $0x1a0] sm:$0xff]
        %v4230 = vld [vmem:[%s864 + $0x1a8] sm:$0xff]
        %v4231 = vld [vmem:[%s864 + $0x1b0] sm:$0xff]
        %v4232 = vld [vmem:[%s864 + $0x1b8] sm:$0xff]
        %v4233 = vld [vmem:[%s864 + $0x1c0] sm:$0xff]
        %v4234 = vld [vmem:[%s864 + $0x1c8] sm:$0xff]
        %v4235 = vld [vmem:[%s864 + $0x1d0] sm:$0xff]
        %v4236 = vld [vmem:[%s864 + $0x1d8] sm:$0xff]
        %v4237 = vld [vmem:[%s864 + $0x1e0] sm:$0xff]
        %v4238 = vld [vmem:[%s864 + $0x1e8] sm:$0xff]
        %v4239 = vld [vmem:[%s864 + $0x1f0] sm:$0xff]
        %v4240 = vld [vmem:[%s864 + $0x1f8] sm:$0xff]
        %v4241 = vld [vmem:[%s864 + $0x200] sm:$0xff]
        %v4242 = vld [vmem:[%s864 + $0x208] sm:$0xff]
        %v4243 = vld [vmem:[%s864 + $0x210] sm:$0xff]
        %v4244 = vld [vmem:[%s864 + $0x218] sm:$0xff]
        %v4245 = vld [vmem:[%s864 + $0x220] sm:$0xff]
        %v4246 = vld [vmem:[%s864 + $0x228] sm:$0xff]
        %v4247 = vld [vmem:[%s864 + $0x230] sm:$0xff]
        %v4248 = vld [vmem:[%s864 + $0x238] sm:$0xff]
        %v4249 = vld [vmem:[%s864 + $0x240] sm:$0xff]
        %v4250 = vld [vmem:[%s864 + $0x248] sm:$0xff]
        %v4251 = vld [vmem:[%s864 + $0x250] sm:$0xff]
        %v4252 = vld [vmem:[%s864 + $0x258] sm:$0xff]
        %v4253 = vld [vmem:[%s864 + $0x260] sm:$0xff]
        %v4254 = vld [vmem:[%s864 + $0x268] sm:$0xff]
        %v4255 = vld [vmem:[%s864 + $0x270] sm:$0xff]
        %v4256 = vld [vmem:[%s864 + $0x278] sm:$0xff]
        %v4257 = vld [vmem:[%s864 + $0x280] sm:$0xff]
        %v4258 = vld [vmem:[%s864 + $0x288] sm:$0xff]
        %v4259 = vld [vmem:[%s864 + $0x290] sm:$0xff]
        %v4260 = vld [vmem:[%s864 + $0x298] sm:$0xff]
        %v4261 = vld [vmem:[%s864 + $0x2a0] sm:$0xff]
        %v4262 = vld [vmem:[%s864 + $0x2a8] sm:$0xff]
        %v4263 = vld [vmem:[%s864 + $0x2b0] sm:$0xff]
        %v4264 = vld [vmem:[%s864 + $0x2b8] sm:$0xff]
        %v4265 = vld [vmem:[%s864 + $0x2c0] sm:$0xff]
        %v4266 = vld [vmem:[%s864 + $0x2c8] sm:$0xff]
        %v4267 = vld [vmem:[%s864 + $0x2d0] sm:$0xff]
        %v4268 = vld [vmem:[%s864 + $0x2d8] sm:$0xff]
        %v4269 = vld [vmem:[%s864 + $0x2e0] sm:$0xff]
        %v4270 = vld [vmem:[%s864 + $0x2e8] sm:$0xff]
        %v4271 = vld [vmem:[%s864 + $0x2f0] sm:$0xff]
        %v4272 = vld [vmem:[%s864 + $0x2f8] sm:$0xff]
        %v4273 = vld [vmem:[%s864 + $0x300] sm:$0xff]
        %v4274 = vld [vmem:[%s864 + $0x308] sm:$0xff]
        %v4275 = vld [vmem:[%s864 + $0x310] sm:$0xff]
        %v4276 = vld [vmem:[%s864 + $0x318] sm:$0xff]
        %v4277 = vld [vmem:[%s864 + $0x320] sm:$0xff]
        %v4278 = vld [vmem:[%s864 + $0x328] sm:$0xff]
        %v4279 = vld [vmem:[%s864 + $0x330] sm:$0xff]
        %v4280 = vld [vmem:[%s864 + $0x338] sm:$0xff]
        %v4281 = vld [vmem:[%s864 + $0x340] sm:$0xff]
        %v4282 = vld [vmem:[%s864 + $0x348] sm:$0xff]
        %v4283 = vld [vmem:[%s864 + $0x350] sm:$0xff]
        %v4284 = vld [vmem:[%s864 + $0x358] sm:$0xff]
        %v4285 = vld [vmem:[%s864 + $0x360] sm:$0xff]
        %v4286 = vld [vmem:[%s864 + $0x368] sm:$0xff]
        %v4287 = vld [vmem:[%s864 + $0x370] sm:$0xff]
        %v4288 = vld [vmem:[%s864 + $0x378] sm:$0xff]
        %v4289 = vld [vmem:[%s864 + $0x380] sm:$0xff]
        %v4290 = vld [vmem:[%s864 + $0x388] sm:$0xff]
        %v4291 = vld [vmem:[%s864 + $0x390] sm:$0xff]
        %v4292 = vld [vmem:[%s864 + $0x398] sm:$0xff]
        %v4293 = vld [vmem:[%s864 + $0x3a0] sm:$0xff]
        %v4294 = vld [vmem:[%s864 + $0x3a8] sm:$0xff]
        %v4295 = vld [vmem:[%s864 + $0x3b0] sm:$0xff]
        %v4296 = vld [vmem:[%s864 + $0x3b8] sm:$0xff]
        %v4297 = vld [vmem:[%s864 + $0x3c0] sm:$0xff]
        %v4298 = vld [vmem:[%s864 + $0x3c8] sm:$0xff]
        %v4299 = vld [vmem:[%s864 + $0x3d0] sm:$0xff]
        %v4300 = vld [vmem:[%s864 + $0x3d8] sm:$0xff]
        %v4301 = vld [vmem:[%s864 + $0x3e0] sm:$0xff]
        %v4302 = vld [vmem:[%s864 + $0x3e8] sm:$0xff]
        %v4303 = vld [vmem:[%s864 + $0x3f0] sm:$0xff]
        %v4304 = vld [vmem:[%s864 + $0x3f8] sm:$0xff]
        %v4305 = vld [vmem:[%s873] sm:$0xff]
        %v4306 = vld [vmem:[%s873 + $0x8] sm:$0xff]
        %v4309 = vlaneseq
        %v4310 = vshrl.u32 %v4309, 7
        %v4311 = vsub.s32 0, %v4310
        %v4312 = vrot.slane %v4305, %v4311
        %v4313 = vlaneseq
        %v4314 = vshrl.u32 %v4313, 7
        %v4315 = vsub.s32 1, %v4314
        %v4316 = vrot.slane %v4305, %v4315
        %v4317 = vlaneseq
        %v4318 = vshrl.u32 %v4317, 7
        %v4319 = vsub.s32 2, %v4318
        %v4320 = vrot.slane %v4305, %v4319
        %v4321 = vlaneseq
        %v4322 = vshrl.u32 %v4321, 7
        %v4323 = vsub.s32 3, %v4322
        %v4324 = vrot.slane %v4305, %v4323
        %v4325 = vlaneseq
        %v4326 = vshrl.u32 %v4325, 7
        %v4327 = vsub.s32 4, %v4326
        %v4328 = vrot.slane %v4305, %v4327
        %v4329 = vlaneseq
        %v4330 = vshrl.u32 %v4329, 7
        %v4331 = vsub.s32 5, %v4330
        %v4332 = vrot.slane %v4305, %v4331
        %v4333 = vlaneseq
        %v4334 = vshrl.u32 %v4333, 7
        %v4335 = vsub.s32 6, %v4334
        %v4336 = vrot.slane %v4305, %v4335
        %v4337 = vlaneseq
        %v4338 = vshrl.u32 %v4337, 7
        %v4339 = vsub.s32 7, %v4338
        %v4340 = vrot.slane %v4305, %v4339
        %v4341 = vlaneseq
        %v4342 = vshrl.u32 %v4341, 7
        %v4343 = vsub.s32 0, %v4342
        %v4344 = vrot.slane %v4306, %v4343
        %v4345 = vlaneseq
        %v4346 = vshrl.u32 %v4345, 7
        %v4347 = vsub.s32 1, %v4346
        %v4348 = vrot.slane %v4306, %v4347
        %v4349 = vlaneseq
        %v4350 = vshrl.u32 %v4349, 7
        %v4351 = vsub.s32 2, %v4350
        %v4352 = vrot.slane %v4306, %v4351
        %v4353 = vlaneseq
        %v4354 = vshrl.u32 %v4353, 7
        %v4355 = vsub.s32 3, %v4354
        %v4356 = vrot.slane %v4306, %v4355
        %v4357 = vlaneseq
        %v4358 = vshrl.u32 %v4357, 7
        %v4359 = vsub.s32 4, %v4358
        %v4360 = vrot.slane %v4306, %v4359
        %v4361 = vlaneseq
        %v4362 = vshrl.u32 %v4361, 7
        %v4363 = vsub.s32 5, %v4362
        %v4364 = vrot.slane %v4306, %v4363
        %v4365 = vlaneseq
        %v4366 = vshrl.u32 %v4365, 7
        %v4367 = vsub.s32 6, %v4366
        %v4368 = vrot.slane %v4306, %v4367
        %v4369 = vlaneseq
        %v4370 = vshrl.u32 %v4369, 7
        %v4371 = vsub.s32 7, %v4370
        %v4372 = vrot.slane %v4306, %v4371
        %v4517 = vunpack.c.l.b16 %v4177
        %v4518 = vunpack.c.h.b16 %v4177
        %v4519 = vunpack.c.l.b16 %v4178
        %v4520 = vunpack.c.h.b16 %v4178
        %v4521 = vunpack.c.l.b16 %v4179
        %v4522 = vunpack.c.h.b16 %v4179
        %v4523 = vunpack.c.l.b16 %v4180
        %v4524 = vunpack.c.h.b16 %v4180
        %v4525 = vunpack.c.l.b16 %v4181
        %v4526 = vunpack.c.h.b16 %v4181
        %v4527 = vunpack.c.l.b16 %v4182
        %v4528 = vunpack.c.h.b16 %v4182
        %v4529 = vunpack.c.l.b16 %v4183
        %v4530 = vunpack.c.h.b16 %v4183
        %v4531 = vunpack.c.l.b16 %v4184
        %v4532 = vunpack.c.h.b16 %v4184
        %v4533 = vunpack.c.l.b16 %v4185
        %v4534 = vunpack.c.h.b16 %v4185
        %v4535 = vunpack.c.l.b16 %v4186
        %v4536 = vunpack.c.h.b16 %v4186
        %v4537 = vunpack.c.l.b16 %v4187
        %v4538 = vunpack.c.h.b16 %v4187
        %v4539 = vunpack.c.l.b16 %v4188
        %v4540 = vunpack.c.h.b16 %v4188
        %v4541 = vunpack.c.l.b16 %v4189
        %v4542 = vunpack.c.h.b16 %v4189
        %v4543 = vunpack.c.l.b16 %v4190
        %v4544 = vunpack.c.h.b16 %v4190
        %v4545 = vunpack.c.l.b16 %v4191
        %v4546 = vunpack.c.h.b16 %v4191
        %v4547 = vunpack.c.l.b16 %v4192
        %v4548 = vunpack.c.h.b16 %v4192
        %v4549 = vunpack.c.l.b16 %v4193
        %v4550 = vunpack.c.h.b16 %v4193
        %v4551 = vunpack.c.l.b16 %v4194
        %v4552 = vunpack.c.h.b16 %v4194
        %v4553 = vunpack.c.l.b16 %v4195
        %v4554 = vunpack.c.h.b16 %v4195
        %v4555 = vunpack.c.l.b16 %v4196
        %v4556 = vunpack.c.h.b16 %v4196
        %v4557 = vunpack.c.l.b16 %v4197
        %v4558 = vunpack.c.h.b16 %v4197
        %v4559 = vunpack.c.l.b16 %v4198
        %v4560 = vunpack.c.h.b16 %v4198
        %v4561 = vunpack.c.l.b16 %v4199
        %v4562 = vunpack.c.h.b16 %v4199
        %v4563 = vunpack.c.l.b16 %v4200
        %v4564 = vunpack.c.h.b16 %v4200
        %v4565 = vunpack.c.l.b16 %v4201
        %v4566 = vunpack.c.h.b16 %v4201
        %v4567 = vunpack.c.l.b16 %v4202
        %v4568 = vunpack.c.h.b16 %v4202
        %v4569 = vunpack.c.l.b16 %v4203
        %v4570 = vunpack.c.h.b16 %v4203
        %v4571 = vunpack.c.l.b16 %v4204
        %v4572 = vunpack.c.h.b16 %v4204
        %v4573 = vunpack.c.l.b16 %v4205
        %v4574 = vunpack.c.h.b16 %v4205
        %v4575 = vunpack.c.l.b16 %v4206
        %v4576 = vunpack.c.h.b16 %v4206
        %v4577 = vunpack.c.l.b16 %v4207
        %v4578 = vunpack.c.h.b16 %v4207
        %v4579 = vunpack.c.l.b16 %v4208
        %v4580 = vunpack.c.h.b16 %v4208
        %v4581 = vunpack.c.l.b16 %v4209
        %v4582 = vunpack.c.h.b16 %v4209
        %v4583 = vunpack.c.l.b16 %v4210
        %v4584 = vunpack.c.h.b16 %v4210
        %v4585 = vunpack.c.l.b16 %v4211
        %v4586 = vunpack.c.h.b16 %v4211
        %v4587 = vunpack.c.l.b16 %v4212
        %v4588 = vunpack.c.h.b16 %v4212
        %v4589 = vunpack.c.l.b16 %v4213
        %v4590 = vunpack.c.h.b16 %v4213
        %v4591 = vunpack.c.l.b16 %v4214
        %v4592 = vunpack.c.h.b16 %v4214
        %v4593 = vunpack.c.l.b16 %v4215
        %v4594 = vunpack.c.h.b16 %v4215
        %v4595 = vunpack.c.l.b16 %v4216
        %v4596 = vunpack.c.h.b16 %v4216
        %v4597 = vunpack.c.l.b16 %v4217
        %v4598 = vunpack.c.h.b16 %v4217
        %v4599 = vunpack.c.l.b16 %v4218
        %v4600 = vunpack.c.h.b16 %v4218
        %v4601 = vunpack.c.l.b16 %v4219
        %v4602 = vunpack.c.h.b16 %v4219
        %v4603 = vunpack.c.l.b16 %v4220
        %v4604 = vunpack.c.h.b16 %v4220
        %v4605 = vunpack.c.l.b16 %v4221
        %v4606 = vunpack.c.h.b16 %v4221
        %v4607 = vunpack.c.l.b16 %v4222
        %v4608 = vunpack.c.h.b16 %v4222
        %v4609 = vunpack.c.l.b16 %v4223
        %v4610 = vunpack.c.h.b16 %v4223
        %v4611 = vunpack.c.l.b16 %v4224
        %v4612 = vunpack.c.h.b16 %v4224
        %v4613 = vunpack.c.l.b16 %v4225
        %v4614 = vunpack.c.h.b16 %v4225
        %v4615 = vunpack.c.l.b16 %v4226
        %v4616 = vunpack.c.h.b16 %v4226
        %v4617 = vunpack.c.l.b16 %v4227
        %v4618 = vunpack.c.h.b16 %v4227
        %v4619 = vunpack.c.l.b16 %v4228
        %v4620 = vunpack.c.h.b16 %v4228
        %v4621 = vunpack.c.l.b16 %v4229
        %v4622 = vunpack.c.h.b16 %v4229
        %v4623 = vunpack.c.l.b16 %v4230
        %v4624 = vunpack.c.h.b16 %v4230
        %v4625 = vunpack.c.l.b16 %v4231
        %v4626 = vunpack.c.h.b16 %v4231
        %v4627 = vunpack.c.l.b16 %v4232
        %v4628 = vunpack.c.h.b16 %v4232
        %v4629 = vunpack.c.l.b16 %v4233
        %v4630 = vunpack.c.h.b16 %v4233
        %v4631 = vunpack.c.l.b16 %v4234
        %v4632 = vunpack.c.h.b16 %v4234
        %v4633 = vunpack.c.l.b16 %v4235
        %v4634 = vunpack.c.h.b16 %v4235
        %v4635 = vunpack.c.l.b16 %v4236
        %v4636 = vunpack.c.h.b16 %v4236
        %v4637 = vunpack.c.l.b16 %v4237
        %v4638 = vunpack.c.h.b16 %v4237
        %v4639 = vunpack.c.l.b16 %v4238
        %v4640 = vunpack.c.h.b16 %v4238
        %v4641 = vunpack.c.l.b16 %v4239
        %v4642 = vunpack.c.h.b16 %v4239
        %v4643 = vunpack.c.l.b16 %v4240
        %v4644 = vunpack.c.h.b16 %v4240
        %v4645 = vunpack.c.l.b16 %v4241
        %v4646 = vunpack.c.h.b16 %v4241
        %v4647 = vunpack.c.l.b16 %v4242
        %v4648 = vunpack.c.h.b16 %v4242
        %v4649 = vunpack.c.l.b16 %v4243
        %v4650 = vunpack.c.h.b16 %v4243
        %v4651 = vunpack.c.l.b16 %v4244
        %v4652 = vunpack.c.h.b16 %v4244
        %v4653 = vunpack.c.l.b16 %v4245
        %v4654 = vunpack.c.h.b16 %v4245
        %v4655 = vunpack.c.l.b16 %v4246
        %v4656 = vunpack.c.h.b16 %v4246
        %v4657 = vunpack.c.l.b16 %v4247
        %v4658 = vunpack.c.h.b16 %v4247
        %v4659 = vunpack.c.l.b16 %v4248
        %v4660 = vunpack.c.h.b16 %v4248
        %v4661 = vunpack.c.l.b16 %v4249
        %v4662 = vunpack.c.h.b16 %v4249
        %v4663 = vunpack.c.l.b16 %v4250
        %v4664 = vunpack.c.h.b16 %v4250
        %v4665 = vunpack.c.l.b16 %v4251
        %v4666 = vunpack.c.h.b16 %v4251
        %v4667 = vunpack.c.l.b16 %v4252
        %v4668 = vunpack.c.h.b16 %v4252
        %v4669 = vunpack.c.l.b16 %v4253
        %v4670 = vunpack.c.h.b16 %v4253
        %v4671 = vunpack.c.l.b16 %v4254
        %v4672 = vunpack.c.h.b16 %v4254
        %v4673 = vunpack.c.l.b16 %v4255
        %v4674 = vunpack.c.h.b16 %v4255
        %v4675 = vunpack.c.l.b16 %v4256
        %v4676 = vunpack.c.h.b16 %v4256
        %v4677 = vunpack.c.l.b16 %v4257
        %v4678 = vunpack.c.h.b16 %v4257
        %v4679 = vunpack.c.l.b16 %v4258
        %v4680 = vunpack.c.h.b16 %v4258
        %v4681 = vunpack.c.l.b16 %v4259
        %v4682 = vunpack.c.h.b16 %v4259
        %v4683 = vunpack.c.l.b16 %v4260
        %v4684 = vunpack.c.h.b16 %v4260
        %v4685 = vunpack.c.l.b16 %v4261
        %v4686 = vunpack.c.h.b16 %v4261
        %v4687 = vunpack.c.l.b16 %v4262
        %v4688 = vunpack.c.h.b16 %v4262
        %v4689 = vunpack.c.l.b16 %v4263
        %v4690 = vunpack.c.h.b16 %v4263
        %v4691 = vunpack.c.l.b16 %v4264
        %v4692 = vunpack.c.h.b16 %v4264
        %v4693 = vunpack.c.l.b16 %v4265
        %v4694 = vunpack.c.h.b16 %v4265
        %v4695 = vunpack.c.l.b16 %v4266
        %v4696 = vunpack.c.h.b16 %v4266
        %v4697 = vunpack.c.l.b16 %v4267
        %v4698 = vunpack.c.h.b16 %v4267
        %v4699 = vunpack.c.l.b16 %v4268
        %v4700 = vunpack.c.h.b16 %v4268
        %v4701 = vunpack.c.l.b16 %v4269
        %v4702 = vunpack.c.h.b16 %v4269
        %v4703 = vunpack.c.l.b16 %v4270
        %v4704 = vunpack.c.h.b16 %v4270
        %v4705 = vunpack.c.l.b16 %v4271
        %v4706 = vunpack.c.h.b16 %v4271
        %v4707 = vunpack.c.l.b16 %v4272
        %v4708 = vunpack.c.h.b16 %v4272
        %v4709 = vunpack.c.l.b16 %v4273
        %v4710 = vunpack.c.h.b16 %v4273
        %v4711 = vunpack.c.l.b16 %v4274
        %v4712 = vunpack.c.h.b16 %v4274
        %v4713 = vunpack.c.l.b16 %v4275
        %v4714 = vunpack.c.h.b16 %v4275
        %v4715 = vunpack.c.l.b16 %v4276
        %v4716 = vunpack.c.h.b16 %v4276
        %v4717 = vunpack.c.l.b16 %v4277
        %v4718 = vunpack.c.h.b16 %v4277
        %v4719 = vunpack.c.l.b16 %v4278
        %v4720 = vunpack.c.h.b16 %v4278
        %v4721 = vunpack.c.l.b16 %v4279
        %v4722 = vunpack.c.h.b16 %v4279
        %v4723 = vunpack.c.l.b16 %v4280
        %v4724 = vunpack.c.h.b16 %v4280
        %v4725 = vunpack.c.l.b16 %v4281
        %v4726 = vunpack.c.h.b16 %v4281
        %v4727 = vunpack.c.l.b16 %v4282
        %v4728 = vunpack.c.h.b16 %v4282
        %v4729 = vunpack.c.l.b16 %v4283
        %v4730 = vunpack.c.h.b16 %v4283
        %v4731 = vunpack.c.l.b16 %v4284
        %v4732 = vunpack.c.h.b16 %v4284
        %v4733 = vunpack.c.l.b16 %v4285
        %v4734 = vunpack.c.h.b16 %v4285
        %v4735 = vunpack.c.l.b16 %v4286
        %v4736 = vunpack.c.h.b16 %v4286
        %v4737 = vunpack.c.l.b16 %v4287
        %v4738 = vunpack.c.h.b16 %v4287
        %v4739 = vunpack.c.l.b16 %v4288
        %v4740 = vunpack.c.h.b16 %v4288
        %v4741 = vunpack.c.l.b16 %v4289
        %v4742 = vunpack.c.h.b16 %v4289
        %v4743 = vunpack.c.l.b16 %v4290
        %v4744 = vunpack.c.h.b16 %v4290
        %v4745 = vunpack.c.l.b16 %v4291
        %v4746 = vunpack.c.h.b16 %v4291
        %v4747 = vunpack.c.l.b16 %v4292
        %v4748 = vunpack.c.h.b16 %v4292
        %v4749 = vunpack.c.l.b16 %v4293
        %v4750 = vunpack.c.h.b16 %v4293
        %v4751 = vunpack.c.l.b16 %v4294
        %v4752 = vunpack.c.h.b16 %v4294
        %v4753 = vunpack.c.l.b16 %v4295
        %v4754 = vunpack.c.h.b16 %v4295
        %v4755 = vunpack.c.l.b16 %v4296
        %v4756 = vunpack.c.h.b16 %v4296
        %v4757 = vunpack.c.l.b16 %v4297
        %v4758 = vunpack.c.h.b16 %v4297
        %v4759 = vunpack.c.l.b16 %v4298
        %v4760 = vunpack.c.h.b16 %v4298
        %v4761 = vunpack.c.l.b16 %v4299
        %v4762 = vunpack.c.h.b16 %v4299
        %v4763 = vunpack.c.l.b16 %v4300
        %v4764 = vunpack.c.h.b16 %v4300
        %v4765 = vunpack.c.l.b16 %v4301
        %v4766 = vunpack.c.h.b16 %v4301
        %v4767 = vunpack.c.l.b16 %v4302
        %v4768 = vunpack.c.h.b16 %v4302
        %v4769 = vunpack.c.l.b16 %v4303
        %v4770 = vunpack.c.h.b16 %v4303
        %v4771 = vunpack.c.l.b16 %v4304
        %v4772 = vunpack.c.h.b16 %v4304
        %v4773 = vpack.c.b16 %v4533, %v4517
        %v4774 = vpack.c.b16 %v4534, %v4518
        %v4775 = vpack.c.b16 %v4535, %v4519
        %v4776 = vpack.c.b16 %v4536, %v4520
        %v4777 = vpack.c.b16 %v4537, %v4521
        %v4778 = vpack.c.b16 %v4538, %v4522
        %v4779 = vpack.c.b16 %v4539, %v4523
        %v4780 = vpack.c.b16 %v4540, %v4524
        %v4781 = vpack.c.b16 %v4541, %v4525
        %v4782 = vpack.c.b16 %v4542, %v4526
        %v4783 = vpack.c.b16 %v4543, %v4527
        %v4784 = vpack.c.b16 %v4544, %v4528
        %v4785 = vpack.c.b16 %v4545, %v4529
        %v4786 = vpack.c.b16 %v4546, %v4530
        %v4787 = vpack.c.b16 %v4547, %v4531
        %v4788 = vpack.c.b16 %v4548, %v4532
        %v4789 = vpack.c.b16 %v4565, %v4549
        %v4790 = vpack.c.b16 %v4566, %v4550
        %v4791 = vpack.c.b16 %v4567, %v4551
        %v4792 = vpack.c.b16 %v4568, %v4552
        %v4793 = vpack.c.b16 %v4569, %v4553
        %v4794 = vpack.c.b16 %v4570, %v4554
        %v4795 = vpack.c.b16 %v4571, %v4555
        %v4796 = vpack.c.b16 %v4572, %v4556
        %v4797 = vpack.c.b16 %v4573, %v4557
        %v4798 = vpack.c.b16 %v4574, %v4558
        %v4799 = vpack.c.b16 %v4575, %v4559
        %v4800 = vpack.c.b16 %v4576, %v4560
        %v4801 = vpack.c.b16 %v4577, %v4561
        %v4802 = vpack.c.b16 %v4578, %v4562
        %v4803 = vpack.c.b16 %v4579, %v4563
        %v4804 = vpack.c.b16 %v4580, %v4564
        %v4805 = vpack.c.b16 %v4597, %v4581
        %v4806 = vpack.c.b16 %v4598, %v4582
        %v4807 = vpack.c.b16 %v4599, %v4583
        %v4808 = vpack.c.b16 %v4600, %v4584
        %v4809 = vpack.c.b16 %v4601, %v4585
        %v4810 = vpack.c.b16 %v4602, %v4586
        %v4811 = vpack.c.b16 %v4603, %v4587
        %v4812 = vpack.c.b16 %v4604, %v4588
        %v4813 = vpack.c.b16 %v4605, %v4589
        %v4814 = vpack.c.b16 %v4606, %v4590
        %v4815 = vpack.c.b16 %v4607, %v4591
        %v4816 = vpack.c.b16 %v4608, %v4592
        %v4817 = vpack.c.b16 %v4609, %v4593
        %v4818 = vpack.c.b16 %v4610, %v4594
        %v4819 = vpack.c.b16 %v4611, %v4595
        %v4820 = vpack.c.b16 %v4612, %v4596
        %v4821 = vpack.c.b16 %v4629, %v4613
        %v4822 = vpack.c.b16 %v4630, %v4614
        %v4823 = vpack.c.b16 %v4631, %v4615
        %v4824 = vpack.c.b16 %v4632, %v4616
        %v4825 = vpack.c.b16 %v4633, %v4617
        %v4826 = vpack.c.b16 %v4634, %v4618
        %v4827 = vpack.c.b16 %v4635, %v4619
        %v4828 = vpack.c.b16 %v4636, %v4620
        %v4829 = vpack.c.b16 %v4637, %v4621
        %v4830 = vpack.c.b16 %v4638, %v4622
        %v4831 = vpack.c.b16 %v4639, %v4623
        %v4832 = vpack.c.b16 %v4640, %v4624
        %v4833 = vpack.c.b16 %v4641, %v4625
        %v4834 = vpack.c.b16 %v4642, %v4626
        %v4835 = vpack.c.b16 %v4643, %v4627
        %v4836 = vpack.c.b16 %v4644, %v4628
        %v4837 = vpack.c.b16 %v4661, %v4645
        %v4838 = vpack.c.b16 %v4662, %v4646
        %v4839 = vpack.c.b16 %v4663, %v4647
        %v4840 = vpack.c.b16 %v4664, %v4648
        %v4841 = vpack.c.b16 %v4665, %v4649
        %v4842 = vpack.c.b16 %v4666, %v4650
        %v4843 = vpack.c.b16 %v4667, %v4651
        %v4844 = vpack.c.b16 %v4668, %v4652
        %v4845 = vpack.c.b16 %v4669, %v4653
        %v4846 = vpack.c.b16 %v4670, %v4654
        %v4847 = vpack.c.b16 %v4671, %v4655
        %v4848 = vpack.c.b16 %v4672, %v4656
        %v4849 = vpack.c.b16 %v4673, %v4657
        %v4850 = vpack.c.b16 %v4674, %v4658
        %v4851 = vpack.c.b16 %v4675, %v4659
        %v4852 = vpack.c.b16 %v4676, %v4660
        %v4853 = vpack.c.b16 %v4693, %v4677
        %v4854 = vpack.c.b16 %v4694, %v4678
        %v4855 = vpack.c.b16 %v4695, %v4679
        %v4856 = vpack.c.b16 %v4696, %v4680
        %v4857 = vpack.c.b16 %v4697, %v4681
        %v4858 = vpack.c.b16 %v4698, %v4682
        %v4859 = vpack.c.b16 %v4699, %v4683
        %v4860 = vpack.c.b16 %v4700, %v4684
        %v4861 = vpack.c.b16 %v4701, %v4685
        %v4862 = vpack.c.b16 %v4702, %v4686
        %v4863 = vpack.c.b16 %v4703, %v4687
        %v4864 = vpack.c.b16 %v4704, %v4688
        %v4865 = vpack.c.b16 %v4705, %v4689
        %v4866 = vpack.c.b16 %v4706, %v4690
        %v4867 = vpack.c.b16 %v4707, %v4691
        %v4868 = vpack.c.b16 %v4708, %v4692
        %v4869 = vpack.c.b16 %v4725, %v4709
        %v4870 = vpack.c.b16 %v4726, %v4710
        %v4871 = vpack.c.b16 %v4727, %v4711
        %v4872 = vpack.c.b16 %v4728, %v4712
        %v4873 = vpack.c.b16 %v4729, %v4713
        %v4874 = vpack.c.b16 %v4730, %v4714
        %v4875 = vpack.c.b16 %v4731, %v4715
        %v4876 = vpack.c.b16 %v4732, %v4716
        %v4877 = vpack.c.b16 %v4733, %v4717
        %v4878 = vpack.c.b16 %v4734, %v4718
        %v4879 = vpack.c.b16 %v4735, %v4719
        %v4880 = vpack.c.b16 %v4736, %v4720
        %v4881 = vpack.c.b16 %v4737, %v4721
        %v4882 = vpack.c.b16 %v4738, %v4722
        %v4883 = vpack.c.b16 %v4739, %v4723
        %v4884 = vpack.c.b16 %v4740, %v4724
        %v4885 = vpack.c.b16 %v4757, %v4741
        %v4886 = vpack.c.b16 %v4758, %v4742
        %v4887 = vpack.c.b16 %v4759, %v4743
        %v4888 = vpack.c.b16 %v4760, %v4744
        %v4889 = vpack.c.b16 %v4761, %v4745
        %v4890 = vpack.c.b16 %v4762, %v4746
        %v4891 = vpack.c.b16 %v4763, %v4747
        %v4892 = vpack.c.b16 %v4764, %v4748
        %v4893 = vpack.c.b16 %v4765, %v4749
        %v4894 = vpack.c.b16 %v4766, %v4750
        %v4895 = vpack.c.b16 %v4767, %v4751
        %v4896 = vpack.c.b16 %v4768, %v4752
        %v4897 = vpack.c.b16 %v4769, %v4753
        %v4898 = vpack.c.b16 %v4770, %v4754
        %v4899 = vpack.c.b16 %v4771, %v4755
        %v4900 = vpack.c.b16 %v4772, %v4756
        %5029 = vmatprep.subr.bf16.mxu0 %v4774
        %5030 = vmatpush1.bf16.msra.mxu0 %v4773
        %5031 = vmatprep.subr.bf16.mxu0 %v4790
        %5032 = vmatpush1.bf16.msra.mxu0 %v4789
        %5033 = vmatprep.subr.bf16.mxu0 %v4806
        %5034 = vmatpush1.bf16.msra.mxu0 %v4805
        %5035 = vmatprep.subr.bf16.mxu0 %v4822
        %5036 = vmatpush1.bf16.msra.mxu0 %v4821
        %5037 = vmatprep.subr.bf16.mxu0 %v4838
        %5038 = vmatpush1.bf16.msra.mxu0 %v4837
        %5039 = vmatprep.subr.bf16.mxu0 %v4854
        %5040 = vmatpush1.bf16.msra.mxu0 %v4853
        %5041 = vmatprep.subr.bf16.mxu0 %v4870
        %5042 = vmatpush1.bf16.msra.mxu0 %v4869
        %5043 = vmatprep.subr.bf16.mxu0 %v4886
        %5044 = vmatpush1.bf16.msra.mxu0 %v4885
        %5045 = vmatprep.subr.bf16.mxu0 0
        %5046 = vmatpush1.bf16.msra.mxu0 0
        %5047 = vmatprep.subr.bf16.mxu0 0
        %5048 = vmatpush1.bf16.msra.mxu0 0
        %5049 = vmatprep.subr.bf16.mxu0 0
        %5050 = vmatpush1.bf16.msra.mxu0 0
        %5051 = vmatprep.subr.bf16.mxu0 0
        %5052 = vmatpush1.bf16.msra.mxu0 0
        %5053 = vmatprep.subr.bf16.mxu0 0
        %5054 = vmatpush1.bf16.msra.mxu0 0
        %5055 = vmatprep.subr.bf16.mxu0 0
        %5056 = vmatpush1.bf16.msra.mxu0 0
        %5057 = vmatprep.subr.bf16.mxu0 0
        %5058 = vmatpush1.bf16.msra.mxu0 0
        %5059 = vmatprep.subr.bf16.mxu0 0
        %5060 = vmatpush1.bf16.msra.mxu0 0
        %5061 = vmatprep.mubr.bf16.mxu0 0
        %5062 = vmatmul.mubr.bf16.gmra.mrb[0].mxu0 %v4176
        %v5063 = vpop.f32.mrb[0].mxu0
        %v5064 = vadd.f32 %v4312, %v5063
        %v5065 = vpop.f32.mrb[0].mxu0
        %v5066 = vadd.f32 %v4316, %v5065
        %v5067 = vpop.f32.mrb[0].mxu0
        %v5068 = vpop.f32.mrb[0].mxu0
        %5069 = vdwg.mxu0
        %5070 = vmatprep.subr.bf16.mxu0 %v4776
        %5071 = vmatpush1.bf16.msra.mxu0 %v4775
        %5072 = vmatprep.subr.bf16.mxu0 %v4792
        %5073 = vmatpush1.bf16.msra.mxu0 %v4791
        %5074 = vmatprep.subr.bf16.mxu0 %v4808
        %5075 = vmatpush1.bf16.msra.mxu0 %v4807
        %5076 = vmatprep.subr.bf16.mxu0 %v4824
        %5077 = vmatpush1.bf16.msra.mxu0 %v4823
        %5078 = vmatprep.subr.bf16.mxu0 %v4840
        %5079 = vmatpush1.bf16.msra.mxu0 %v4839
        %5080 = vmatprep.subr.bf16.mxu0 %v4856
        %5081 = vmatpush1.bf16.msra.mxu0 %v4855
        %5082 = vmatprep.subr.bf16.mxu0 %v4872
        %5083 = vmatpush1.bf16.msra.mxu0 %v4871
        %5084 = vmatprep.subr.bf16.mxu0 %v4888
        %5085 = vmatpush1.bf16.msra.mxu0 %v4887
        %5086 = vmatprep.subr.bf16.mxu0 0
        %5087 = vmatpush1.bf16.msra.mxu0 0
        %5088 = vmatprep.subr.bf16.mxu0 0
        %5089 = vmatpush1.bf16.msra.mxu0 0
        %5090 = vmatprep.subr.bf16.mxu0 0
        %5091 = vmatpush1.bf16.msra.mxu0 0
        %5092 = vmatprep.subr.bf16.mxu0 0
        %5093 = vmatpush1.bf16.msra.mxu0 0
        %5094 = vmatprep.subr.bf16.mxu0 0
        %5095 = vmatpush1.bf16.msra.mxu0 0
        %5096 = vmatprep.subr.bf16.mxu0 0
        %5097 = vmatpush1.bf16.msra.mxu0 0
        %5098 = vmatprep.subr.bf16.mxu0 0
        %5099 = vmatpush1.bf16.msra.mxu0 0
        %5100 = vmatprep.subr.bf16.mxu0 0
        %5101 = vmatpush1.bf16.msra.mxu0 0
        %5102 = vmatprep.mubr.bf16.mxu0 0
        %5103 = vmatmul.mubr.bf16.gmra.mrb[0].mxu0 %v4176
        %v5104 = vpop.f32.mrb[0].mxu0
        %v5105 = vadd.f32 %v4320, %v5104
        %v5106 = vpop.f32.mrb[0].mxu0
        %v5107 = vadd.f32 %v4324, %v5106
        %v5108 = vpop.f32.mrb[0].mxu0
        %v5109 = vpop.f32.mrb[0].mxu0
        %5110 = vdwg.mxu0
        %5111 = vmatprep.subr.bf16.mxu0 %v4778
        %5112 = vmatpush1.bf16.msra.mxu0 %v4777
        %5113 = vmatprep.subr.bf16.mxu0 %v4794
        %5114 = vmatpush1.bf16.msra.mxu0 %v4793
        %5115 = vmatprep.subr.bf16.mxu0 %v4810
        %5116 = vmatpush1.bf16.msra.mxu0 %v4809
        %5117 = vmatprep.subr.bf16.mxu0 %v4826
        %5118 = vmatpush1.bf16.msra.mxu0 %v4825
        %5119 = vmatprep.subr.bf16.mxu0 %v4842
        %5120 = vmatpush1.bf16.msra.mxu0 %v4841
        %5121 = vmatprep.subr.bf16.mxu0 %v4858
        %5122 = vmatpush1.bf16.msra.mxu0 %v4857
        %5123 = vmatprep.subr.bf16.mxu0 %v4874
        %5124 = vmatpush1.bf16.msra.mxu0 %v4873
        %5125 = vmatprep.subr.bf16.mxu0 %v4890
        %5126 = vmatpush1.bf16.msra.mxu0 %v4889
        %5127 = vmatprep.subr.bf16.mxu0 0
        %5128 = vmatpush1.bf16.msra.mxu0 0
        %5129 = vmatprep.subr.bf16.mxu0 0
        %5130 = vmatpush1.bf16.msra.mxu0 0
        %5131 = vmatprep.subr.bf16.mxu0 0
        %5132 = vmatpush1.bf16.msra.mxu0 0
        %5133 = vmatprep.subr.bf16.mxu0 0
        %5134 = vmatpush1.bf16.msra.mxu0 0
        %5135 = vmatprep.subr.bf16.mxu0 0
        %5136 = vmatpush1.bf16.msra.mxu0 0
        %5137 = vmatprep.subr.bf16.mxu0 0
        %5138 = vmatpush1.bf16.msra.mxu0 0
        %5139 = vmatprep.subr.bf16.mxu0 0
        %5140 = vmatpush1.bf16.msra.mxu0 0
        %5141 = vmatprep.subr.bf16.mxu0 0
        %5142 = vmatpush1.bf16.msra.mxu0 0
        %5143 = vmatprep.mubr.bf16.mxu0 0
        %5144 = vmatmul.mubr.bf16.gmra.mrb[0].mxu0 %v4176
        %v5145 = vpop.f32.mrb[0].mxu0
        %v5146 = vadd.f32 %v4328, %v5145
        %v5147 = vpop.f32.mrb[0].mxu0
        %v5148 = vadd.f32 %v4332, %v5147
        %v5149 = vpop.f32.mrb[0].mxu0
        %v5150 = vpop.f32.mrb[0].mxu0
        %5151 = vdwg.mxu0
        %5152 = vmatprep.subr.bf16.mxu0 %v4780
        %5153 = vmatpush1.bf16.msra.mxu0 %v4779
        %5154 = vmatprep.subr.bf16.mxu0 %v4796
        %5155 = vmatpush1.bf16.msra.mxu0 %v4795
        %5156 = vmatprep.subr.bf16.mxu0 %v4812
        %5157 = vmatpush1.bf16.msra.mxu0 %v4811
        %5158 = vmatprep.subr.bf16.mxu0 %v4828
        %5159 = vmatpush1.bf16.msra.mxu0 %v4827
        %5160 = vmatprep.subr.bf16.mxu0 %v4844
        %5161 = vmatpush1.bf16.msra.mxu0 %v4843
        %5162 = vmatprep.subr.bf16.mxu0 %v4860
        %5163 = vmatpush1.bf16.msra.mxu0 %v4859
        %5164 = vmatprep.subr.bf16.mxu0 %v4876
        %5165 = vmatpush1.bf16.msra.mxu0 %v4875
        %5166 = vmatprep.subr.bf16.mxu0 %v4892
        %5167 = vmatpush1.bf16.msra.mxu0 %v4891
        %5168 = vmatprep.subr.bf16.mxu0 0
        %5169 = vmatpush1.bf16.msra.mxu0 0
        %5170 = vmatprep.subr.bf16.mxu0 0
        %5171 = vmatpush1.bf16.msra.mxu0 0
        %5172 = vmatprep.subr.bf16.mxu0 0
        %5173 = vmatpush1.bf16.msra.mxu0 0
        %5174 = vmatprep.subr.bf16.mxu0 0
        %5175 = vmatpush1.bf16.msra.mxu0 0
        %5176 = vmatprep.subr.bf16.mxu0 0
        %5177 = vmatpush1.bf16.msra.mxu0 0
        %5178 = vmatprep.subr.bf16.mxu0 0
        %5179 = vmatpush1.bf16.msra.mxu0 0
        %5180 = vmatprep.subr.bf16.mxu0 0
        %5181 = vmatpush1.bf16.msra.mxu0 0
        %5182 = vmatprep.subr.bf16.mxu0 0
        %5183 = vmatpush1.bf16.msra.mxu0 0
        %5184 = vmatprep.mubr.bf16.mxu0 0
        %5185 = vmatmul.mubr.bf16.gmra.mrb[0].mxu0 %v4176
        %v5186 = vpop.f32.mrb[0].mxu0
        %v5187 = vadd.f32 %v4336, %v5186
        %v5188 = vpop.f32.mrb[0].mxu0
        %v5189 = vadd.f32 %v4340, %v5188
        %v5190 = vpop.f32.mrb[0].mxu0
        %v5191 = vpop.f32.mrb[0].mxu0
        %5192 = vdwg.mxu0
        %5193 = vmatprep.subr.bf16.mxu0 %v4782
        %5194 = vmatpush1.bf16.msra.mxu0 %v4781
        %5195 = vmatprep.subr.bf16.mxu0 %v4798
        %5196 = vmatpush1.bf16.msra.mxu0 %v4797
        %5197 = vmatprep.subr.bf16.mxu0 %v4814
        %5198 = vmatpush1.bf16.msra.mxu0 %v4813
        %5199 = vmatprep.subr.bf16.mxu0 %v4830
        %5200 = vmatpush1.bf16.msra.mxu0 %v4829
        %5201 = vmatprep.subr.bf16.mxu0 %v4846
        %5202 = vmatpush1.bf16.msra.mxu0 %v4845
        %5203 = vmatprep.subr.bf16.mxu0 %v4862
        %5204 = vmatpush1.bf16.msra.mxu0 %v4861
        %5205 = vmatprep.subr.bf16.mxu0 %v4878
        %5206 = vmatpush1.bf16.msra.mxu0 %v4877
        %5207 = vmatprep.subr.bf16.mxu0 %v4894
        %5208 = vmatpush1.bf16.msra.mxu0 %v4893
        %5209 = vmatprep.subr.bf16.mxu0 0
        %5210 = vmatpush1.bf16.msra.mxu0 0
        %5211 = vmatprep.subr.bf16.mxu0 0
        %5212 = vmatpush1.bf16.msra.mxu0 0
        %5213 = vmatprep.subr.bf16.mxu0 0
        %5214 = vmatpush1.bf16.msra.mxu0 0
        %5215 = vmatprep.subr.bf16.mxu0 0
        %5216 = vmatpush1.bf16.msra.mxu0 0
        %5217 = vmatprep.subr.bf16.mxu0 0
        %5218 = vmatpush1.bf16.msra.mxu0 0
        %5219 = vmatprep.subr.bf16.mxu0 0
        %5220 = vmatpush1.bf16.msra.mxu0 0
        %5221 = vmatprep.subr.bf16.mxu0 0
        %5222 = vmatpush1.bf16.msra.mxu0 0
        %5223 = vmatprep.subr.bf16.mxu0 0
        %5224 = vmatpush1.bf16.msra.mxu0 0
        %5225 = vmatprep.mubr.bf16.mxu0 0
        %5226 = vmatmul.mubr.bf16.gmra.mrb[0].mxu0 %v4176
        %v5227 = vpop.f32.mrb[0].mxu0
        %v5228 = vadd.f32 %v4344, %v5227
        %v5229 = vpop.f32.mrb[0].mxu0
        %v5230 = vadd.f32 %v4348, %v5229
        %v5231 = vpop.f32.mrb[0].mxu0
        %v5232 = vpop.f32.mrb[0].mxu0
        %5233 = vdwg.mxu0
        %5234 = vmatprep.subr.bf16.mxu0 %v4784
        %5235 = vmatpush1.bf16.msra.mxu0 %v4783
        %5236 = vmatprep.subr.bf16.mxu0 %v4800
        %5237 = vmatpush1.bf16.msra.mxu0 %v4799
        %5238 = vmatprep.subr.bf16.mxu0 %v4816
        %5239 = vmatpush1.bf16.msra.mxu0 %v4815
        %5240 = vmatprep.subr.bf16.mxu0 %v4832
        %5241 = vmatpush1.bf16.msra.mxu0 %v4831
        %5242 = vmatprep.subr.bf16.mxu0 %v4848
        %5243 = vmatpush1.bf16.msra.mxu0 %v4847
        %5244 = vmatprep.subr.bf16.mxu0 %v4864
        %5245 = vmatpush1.bf16.msra.mxu0 %v4863
        %5246 = vmatprep.subr.bf16.mxu0 %v4880
        %5247 = vmatpush1.bf16.msra.mxu0 %v4879
        %5248 = vmatprep.subr.bf16.mxu0 %v4896
        %5249 = vmatpush1.bf16.msra.mxu0 %v4895
        %5250 = vmatprep.subr.bf16.mxu0 0
        %5251 = vmatpush1.bf16.msra.mxu0 0
        %5252 = vmatprep.subr.bf16.mxu0 0
        %5253 = vmatpush1.bf16.msra.mxu0 0
        %5254 = vmatprep.subr.bf16.mxu0 0
        %5255 = vmatpush1.bf16.msra.mxu0 0
        %5256 = vmatprep.subr.bf16.mxu0 0
        %5257 = vmatpush1.bf16.msra.mxu0 0
        %5258 = vmatprep.subr.bf16.mxu0 0
        %5259 = vmatpush1.bf16.msra.mxu0 0
        %5260 = vmatprep.subr.bf16.mxu0 0
        %5261 = vmatpush1.bf16.msra.mxu0 0
        %5262 = vmatprep.subr.bf16.mxu0 0
        %5263 = vmatpush1.bf16.msra.mxu0 0
        %5264 = vmatprep.subr.bf16.mxu0 0
        %5265 = vmatpush1.bf16.msra.mxu0 0
        %5266 = vmatprep.mubr.bf16.mxu0 0
        %5267 = vmatmul.mubr.bf16.gmra.mrb[0].mxu0 %v4176
        %v5268 = vpop.f32.mrb[0].mxu0
        %v5269 = vadd.f32 %v4352, %v5268
        %v5270 = vpop.f32.mrb[0].mxu0
        %v5271 = vadd.f32 %v4356, %v5270
        %v5272 = vpop.f32.mrb[0].mxu0
        %v5273 = vpop.f32.mrb[0].mxu0
        %5274 = vdwg.mxu0
        %5275 = vmatprep.subr.bf16.mxu0 %v4786
        %5276 = vmatpush1.bf16.msra.mxu0 %v4785
        %5277 = vmatprep.subr.bf16.mxu0 %v4802
        %5278 = vmatpush1.bf16.msra.mxu0 %v4801
        %5279 = vmatprep.subr.bf16.mxu0 %v4818
        %5280 = vmatpush1.bf16.msra.mxu0 %v4817
        %5281 = vmatprep.subr.bf16.mxu0 %v4834
        %5282 = vmatpush1.bf16.msra.mxu0 %v4833
        %5283 = vmatprep.subr.bf16.mxu0 %v4850
        %5284 = vmatpush1.bf16.msra.mxu0 %v4849
        %5285 = vmatprep.subr.bf16.mxu0 %v4866
        %5286 = vmatpush1.bf16.msra.mxu0 %v4865
        %5287 = vmatprep.subr.bf16.mxu0 %v4882
        %5288 = vmatpush1.bf16.msra.mxu0 %v4881
        %5289 = vmatprep.subr.bf16.mxu0 %v4898
        %5290 = vmatpush1.bf16.msra.mxu0 %v4897
        %5291 = vmatprep.subr.bf16.mxu0 0
        %5292 = vmatpush1.bf16.msra.mxu0 0
        %5293 = vmatprep.subr.bf16.mxu0 0
        %5294 = vmatpush1.bf16.msra.mxu0 0
        %5295 = vmatprep.subr.bf16.mxu0 0
        %5296 = vmatpush1.bf16.msra.mxu0 0
        %5297 = vmatprep.subr.bf16.mxu0 0
        %5298 = vmatpush1.bf16.msra.mxu0 0
        %5299 = vmatprep.subr.bf16.mxu0 0
        %5300 = vmatpush1.bf16.msra.mxu0 0
        %5301 = vmatprep.subr.bf16.mxu0 0
        %5302 = vmatpush1.bf16.msra.mxu0 0
        %5303 = vmatprep.subr.bf16.mxu0 0
        %5304 = vmatpush1.bf16.msra.mxu0 0
        %5305 = vmatprep.subr.bf16.mxu0 0
        %5306 = vmatpush1.bf16.msra.mxu0 0
        %5307 = vmatprep.mubr.bf16.mxu0 0
        %5308 = vmatmul.mubr.bf16.gmra.mrb[0].mxu0 %v4176
        %v5309 = vpop.f32.mrb[0].mxu0
        %v5310 = vadd.f32 %v4360, %v5309
        %v5311 = vpop.f32.mrb[0].mxu0
        %v5312 = vadd.f32 %v4364, %v5311
        %v5313 = vpop.f32.mrb[0].mxu0
        %v5314 = vpop.f32.mrb[0].mxu0
        %5315 = vdwg.mxu0
        %5316 = vmatprep.subr.bf16.mxu0 %v4788
        %5317 = vmatpush1.bf16.msra.mxu0 %v4787
        %5318 = vmatprep.subr.bf16.mxu0 %v4804
        %5319 = vmatpush1.bf16.msra.mxu0 %v4803
        %5320 = vmatprep.subr.bf16.mxu0 %v4820
        %5321 = vmatpush1.bf16.msra.mxu0 %v4819
        %5322 = vmatprep.subr.bf16.mxu0 %v4836
        %5323 = vmatpush1.bf16.msra.mxu0 %v4835
        %5324 = vmatprep.subr.bf16.mxu0 %v4852
        %5325 = vmatpush1.bf16.msra.mxu0 %v4851
        %5326 = vmatprep.subr.bf16.mxu0 %v4868
        %5327 = vmatpush1.bf16.msra.mxu0 %v4867
        %5328 = vmatprep.subr.bf16.mxu0 %v4884
        %5329 = vmatpush1.bf16.msra.mxu0 %v4883
        %5330 = vmatprep.subr.bf16.mxu0 %v4900
        %5331 = vmatpush1.bf16.msra.mxu0 %v4899
        %5332 = vmatprep.subr.bf16.mxu0 0
        %5333 = vmatpush1.bf16.msra.mxu0 0
        %5334 = vmatprep.subr.bf16.mxu0 0
        %5335 = vmatpush1.bf16.msra.mxu0 0
        %5336 = vmatprep.subr.bf16.mxu0 0
        %5337 = vmatpush1.bf16.msra.mxu0 0
        %5338 = vmatprep.subr.bf16.mxu0 0
        %5339 = vmatpush1.bf16.msra.mxu0 0
        %5340 = vmatprep.subr.bf16.mxu0 0
        %5341 = vmatpush1.bf16.msra.mxu0 0
        %5342 = vmatprep.subr.bf16.mxu0 0
        %5343 = vmatpush1.bf16.msra.mxu0 0
        %5344 = vmatprep.subr.bf16.mxu0 0
        %5345 = vmatpush1.bf16.msra.mxu0 0
        %5346 = vmatprep.subr.bf16.mxu0 0
        %5347 = vmatpush1.bf16.msra.mxu0 0
        %5348 = vmatprep.mubr.bf16.mxu0 0
        %5349 = vmatmul.mubr.bf16.gmra.mrb[0].mxu0 %v4176
        %v5350 = vpop.f32.mrb[0].mxu0
        %v5351 = vadd.f32 %v4368, %v5350
        %v5352 = vpop.f32.mrb[0].mxu0
        %v5353 = vadd.f32 %v4372, %v5352
        %v5354 = vpop.f32.mrb[0].mxu0
        %v5355 = vpop.f32.mrb[0].mxu0
        %5356 = vdwg.mxu0
        %v5357 = vmax.f32 %v5064, 0.0
        %v5358 = vmax.f32 %v5066, 0.0
        %v5359 = vmax.f32 %v5105, 0.0
        %v5360 = vmax.f32 %v5107, 0.0
        %v5361 = vmax.f32 %v5146, 0.0
        %v5362 = vmax.f32 %v5148, 0.0
        %v5363 = vmax.f32 %v5187, 0.0
        %v5364 = vmax.f32 %v5189, 0.0
        %v5365 = vmax.f32 %v5228, 0.0
        %v5366 = vmax.f32 %v5230, 0.0
        %v5367 = vmax.f32 %v5269, 0.0
        %v5368 = vmax.f32 %v5271, 0.0
        %v5369 = vmax.f32 %v5310, 0.0
        %v5370 = vmax.f32 %v5312, 0.0
        %v5371 = vmax.f32 %v5351, 0.0
        %v5372 = vmax.f32 %v5353, 0.0
        %v5373 = vpack.c.bf16 %v5357, %v5357
        %v5374 = vpack.c.bf16 %v5358, %v5358
        %v5375 = vpack.c.bf16 %v5359, %v5359
        %v5376 = vpack.c.bf16 %v5360, %v5360
        %v5377 = vpack.c.bf16 %v5361, %v5361
        %v5378 = vpack.c.bf16 %v5362, %v5362
        %v5379 = vpack.c.bf16 %v5363, %v5363
        %v5380 = vpack.c.bf16 %v5364, %v5364
        %v5381 = vpack.c.bf16 %v5365, %v5365
        %v5382 = vpack.c.bf16 %v5366, %v5366
        %v5383 = vpack.c.bf16 %v5367, %v5367
        %v5384 = vpack.c.bf16 %v5368, %v5368
        %v5385 = vpack.c.bf16 %v5369, %v5369
        %v5386 = vpack.c.bf16 %v5370, %v5370
        %v5387 = vpack.c.bf16 %v5371, %v5371
        %v5388 = vpack.c.bf16 %v5372, %v5372
        %v5389 = vld [vmem:[%s882] sm:$0xf]
        %v5390 = vld [vmem:[%s882 + $0x4] sm:$0xf]
        %v5391 = vld [vmem:[%s882 + $0x8] sm:$0xf]
        %v5392 = vld [vmem:[%s882 + $0xc] sm:$0xf]
        %v5393 = vld [vmem:[%s882 + $0x10] sm:$0xf]
        %v5394 = vld [vmem:[%s882 + $0x14] sm:$0xf]
        %v5395 = vld [vmem:[%s882 + $0x18] sm:$0xf]
        %v5396 = vld [vmem:[%s882 + $0x1c] sm:$0xf]
        %v5397 = vld [vmem:[%s882 + $0x20] sm:$0xf]
        %v5398 = vld [vmem:[%s882 + $0x24] sm:$0xf]
        %v5399 = vld [vmem:[%s882 + $0x28] sm:$0xf]
        %v5400 = vld [vmem:[%s882 + $0x2c] sm:$0xf]
        %v5401 = vld [vmem:[%s882 + $0x30] sm:$0xf]
        %v5402 = vld [vmem:[%s882 + $0x34] sm:$0xf]
        %v5403 = vld [vmem:[%s882 + $0x38] sm:$0xf]
        %v5404 = vld [vmem:[%s882 + $0x3c] sm:$0xf]
        %v5405 = vld [vmem:[%s882 + $0x40] sm:$0xf]
        %v5406 = vld [vmem:[%s882 + $0x44] sm:$0xf]
        %v5407 = vld [vmem:[%s882 + $0x48] sm:$0xf]
        %v5408 = vld [vmem:[%s882 + $0x4c] sm:$0xf]
        %v5409 = vld [vmem:[%s882 + $0x50] sm:$0xf]
        %v5410 = vld [vmem:[%s882 + $0x54] sm:$0xf]
        %v5411 = vld [vmem:[%s882 + $0x58] sm:$0xf]
        %v5412 = vld [vmem:[%s882 + $0x5c] sm:$0xf]
        %v5413 = vld [vmem:[%s882 + $0x60] sm:$0xf]
        %v5414 = vld [vmem:[%s882 + $0x64] sm:$0xf]
        %v5415 = vld [vmem:[%s882 + $0x68] sm:$0xf]
        %v5416 = vld [vmem:[%s882 + $0x6c] sm:$0xf]
        %v5417 = vld [vmem:[%s882 + $0x70] sm:$0xf]
        %v5418 = vld [vmem:[%s882 + $0x74] sm:$0xf]
        %v5419 = vld [vmem:[%s882 + $0x78] sm:$0xf]
        %v5420 = vld [vmem:[%s882 + $0x7c] sm:$0xf]
        %v5421 = vld [vmem:[%s882 + $0x80] sm:$0xf]
        %v5422 = vld [vmem:[%s882 + $0x84] sm:$0xf]
        %v5423 = vld [vmem:[%s882 + $0x88] sm:$0xf]
        %v5424 = vld [vmem:[%s882 + $0x8c] sm:$0xf]
        %v5425 = vld [vmem:[%s882 + $0x90] sm:$0xf]
        %v5426 = vld [vmem:[%s882 + $0x94] sm:$0xf]
        %v5427 = vld [vmem:[%s882 + $0x98] sm:$0xf]
        %v5428 = vld [vmem:[%s882 + $0x9c] sm:$0xf]
        %v5429 = vld [vmem:[%s882 + $0xa0] sm:$0xf]
        %v5430 = vld [vmem:[%s882 + $0xa4] sm:$0xf]
        %v5431 = vld [vmem:[%s882 + $0xa8] sm:$0xf]
        %v5432 = vld [vmem:[%s882 + $0xac] sm:$0xf]
        %v5433 = vld [vmem:[%s882 + $0xb0] sm:$0xf]
        %v5434 = vld [vmem:[%s882 + $0xb4] sm:$0xf]
        %v5435 = vld [vmem:[%s882 + $0xb8] sm:$0xf]
        %v5436 = vld [vmem:[%s882 + $0xbc] sm:$0xf]
        %v5437 = vld [vmem:[%s882 + $0xc0] sm:$0xf]
        %v5438 = vld [vmem:[%s882 + $0xc4] sm:$0xf]
        %v5439 = vld [vmem:[%s882 + $0xc8] sm:$0xf]
        %v5440 = vld [vmem:[%s882 + $0xcc] sm:$0xf]
        %v5441 = vld [vmem:[%s882 + $0xd0] sm:$0xf]
        %v5442 = vld [vmem:[%s882 + $0xd4] sm:$0xf]
        %v5443 = vld [vmem:[%s882 + $0xd8] sm:$0xf]
        %v5444 = vld [vmem:[%s882 + $0xdc] sm:$0xf]
        %v5445 = vld [vmem:[%s882 + $0xe0] sm:$0xf]
        %v5446 = vld [vmem:[%s882 + $0xe4] sm:$0xf]
        %v5447 = vld [vmem:[%s882 + $0xe8] sm:$0xf]
        %v5448 = vld [vmem:[%s882 + $0xec] sm:$0xf]
        %v5449 = vld [vmem:[%s882 + $0xf0] sm:$0xf]
        %v5450 = vld [vmem:[%s882 + $0xf4] sm:$0xf]
        %v5451 = vld [vmem:[%s882 + $0xf8] sm:$0xf]
        %v5452 = vld [vmem:[%s882 + $0xfc] sm:$0xf]
        %v5453 = vld [vmem:[%s882 + $0x100] sm:$0xf]
        %v5454 = vld [vmem:[%s882 + $0x104] sm:$0xf]
        %v5455 = vld [vmem:[%s882 + $0x108] sm:$0xf]
        %v5456 = vld [vmem:[%s882 + $0x10c] sm:$0xf]
        %v5457 = vld [vmem:[%s882 + $0x110] sm:$0xf]
        %v5458 = vld [vmem:[%s882 + $0x114] sm:$0xf]
        %v5459 = vld [vmem:[%s882 + $0x118] sm:$0xf]
        %v5460 = vld [vmem:[%s882 + $0x11c] sm:$0xf]
        %v5461 = vld [vmem:[%s882 + $0x120] sm:$0xf]
        %v5462 = vld [vmem:[%s882 + $0x124] sm:$0xf]
        %v5463 = vld [vmem:[%s882 + $0x128] sm:$0xf]
        %v5464 = vld [vmem:[%s882 + $0x12c] sm:$0xf]
        %v5465 = vld [vmem:[%s882 + $0x130] sm:$0xf]
        %v5466 = vld [vmem:[%s882 + $0x134] sm:$0xf]
        %v5467 = vld [vmem:[%s882 + $0x138] sm:$0xf]
        %v5468 = vld [vmem:[%s882 + $0x13c] sm:$0xf]
        %v5469 = vld [vmem:[%s882 + $0x140] sm:$0xf]
        %v5470 = vld [vmem:[%s882 + $0x144] sm:$0xf]
        %v5471 = vld [vmem:[%s882 + $0x148] sm:$0xf]
        %v5472 = vld [vmem:[%s882 + $0x14c] sm:$0xf]
        %v5473 = vld [vmem:[%s882 + $0x150] sm:$0xf]
        %v5474 = vld [vmem:[%s882 + $0x154] sm:$0xf]
        %v5475 = vld [vmem:[%s882 + $0x158] sm:$0xf]
        %v5476 = vld [vmem:[%s882 + $0x15c] sm:$0xf]
        %v5477 = vld [vmem:[%s882 + $0x160] sm:$0xf]
        %v5478 = vld [vmem:[%s882 + $0x164] sm:$0xf]
        %v5479 = vld [vmem:[%s882 + $0x168] sm:$0xf]
        %v5480 = vld [vmem:[%s882 + $0x16c] sm:$0xf]
        %v5481 = vld [vmem:[%s882 + $0x170] sm:$0xf]
        %v5482 = vld [vmem:[%s882 + $0x174] sm:$0xf]
        %v5483 = vld [vmem:[%s882 + $0x178] sm:$0xf]
        %v5484 = vld [vmem:[%s882 + $0x17c] sm:$0xf]
        %v5485 = vld [vmem:[%s882 + $0x180] sm:$0xf]
        %v5486 = vld [vmem:[%s882 + $0x184] sm:$0xf]
        %v5487 = vld [vmem:[%s882 + $0x188] sm:$0xf]
        %v5488 = vld [vmem:[%s882 + $0x18c] sm:$0xf]
        %v5489 = vld [vmem:[%s882 + $0x190] sm:$0xf]
        %v5490 = vld [vmem:[%s882 + $0x194] sm:$0xf]
        %v5491 = vld [vmem:[%s882 + $0x198] sm:$0xf]
        %v5492 = vld [vmem:[%s882 + $0x19c] sm:$0xf]
        %v5493 = vld [vmem:[%s882 + $0x1a0] sm:$0xf]
        %v5494 = vld [vmem:[%s882 + $0x1a4] sm:$0xf]
        %v5495 = vld [vmem:[%s882 + $0x1a8] sm:$0xf]
        %v5496 = vld [vmem:[%s882 + $0x1ac] sm:$0xf]
        %v5497 = vld [vmem:[%s882 + $0x1b0] sm:$0xf]
        %v5498 = vld [vmem:[%s882 + $0x1b4] sm:$0xf]
        %v5499 = vld [vmem:[%s882 + $0x1b8] sm:$0xf]
        %v5500 = vld [vmem:[%s882 + $0x1bc] sm:$0xf]
        %v5501 = vld [vmem:[%s882 + $0x1c0] sm:$0xf]
        %v5502 = vld [vmem:[%s882 + $0x1c4] sm:$0xf]
        %v5503 = vld [vmem:[%s882 + $0x1c8] sm:$0xf]
        %v5504 = vld [vmem:[%s882 + $0x1cc] sm:$0xf]
        %v5505 = vld [vmem:[%s882 + $0x1d0] sm:$0xf]
        %v5506 = vld [vmem:[%s882 + $0x1d4] sm:$0xf]
        %v5507 = vld [vmem:[%s882 + $0x1d8] sm:$0xf]
        %v5508 = vld [vmem:[%s882 + $0x1dc] sm:$0xf]
        %v5509 = vld [vmem:[%s882 + $0x1e0] sm:$0xf]
        %v5510 = vld [vmem:[%s882 + $0x1e4] sm:$0xf]
        %v5511 = vld [vmem:[%s882 + $0x1e8] sm:$0xf]
        %v5512 = vld [vmem:[%s882 + $0x1ec] sm:$0xf]
        %v5513 = vld [vmem:[%s882 + $0x1f0] sm:$0xf]
        %v5514 = vld [vmem:[%s882 + $0x1f4] sm:$0xf]
        %v5515 = vld [vmem:[%s882 + $0x1f8] sm:$0xf]
        %v5516 = vld [vmem:[%s882 + $0x1fc] sm:$0xf]
        %v5517 = vld [vmem:[%s882 + $0x200] sm:$0xf]
        %v5518 = vld [vmem:[%s882 + $0x204] sm:$0xf]
        %v5519 = vld [vmem:[%s882 + $0x208] sm:$0xf]
        %v5520 = vld [vmem:[%s882 + $0x20c] sm:$0xf]
        %v5521 = vld [vmem:[%s882 + $0x210] sm:$0xf]
        %v5522 = vld [vmem:[%s882 + $0x214] sm:$0xf]
        %v5523 = vld [vmem:[%s882 + $0x218] sm:$0xf]
        %v5524 = vld [vmem:[%s882 + $0x21c] sm:$0xf]
        %v5525 = vld [vmem:[%s882 + $0x220] sm:$0xf]
        %v5526 = vld [vmem:[%s882 + $0x224] sm:$0xf]
        %v5527 = vld [vmem:[%s882 + $0x228] sm:$0xf]
        %v5528 = vld [vmem:[%s882 + $0x22c] sm:$0xf]
        %v5529 = vld [vmem:[%s882 + $0x230] sm:$0xf]
        %v5530 = vld [vmem:[%s882 + $0x234] sm:$0xf]
        %v5531 = vld [vmem:[%s882 + $0x238] sm:$0xf]
        %v5532 = vld [vmem:[%s882 + $0x23c] sm:$0xf]
        %v5533 = vld [vmem:[%s882 + $0x240] sm:$0xf]
        %v5534 = vld [vmem:[%s882 + $0x244] sm:$0xf]
        %v5535 = vld [vmem:[%s882 + $0x248] sm:$0xf]
        %v5536 = vld [vmem:[%s882 + $0x24c] sm:$0xf]
        %v5537 = vld [vmem:[%s882 + $0x250] sm:$0xf]
        %v5538 = vld [vmem:[%s882 + $0x254] sm:$0xf]
        %v5539 = vld [vmem:[%s882 + $0x258] sm:$0xf]
        %v5540 = vld [vmem:[%s882 + $0x25c] sm:$0xf]
        %v5541 = vld [vmem:[%s882 + $0x260] sm:$0xf]
        %v5542 = vld [vmem:[%s882 + $0x264] sm:$0xf]
        %v5543 = vld [vmem:[%s882 + $0x268] sm:$0xf]
        %v5544 = vld [vmem:[%s882 + $0x26c] sm:$0xf]
        %v5545 = vld [vmem:[%s882 + $0x270] sm:$0xf]
        %v5546 = vld [vmem:[%s882 + $0x274] sm:$0xf]
        %v5547 = vld [vmem:[%s882 + $0x278] sm:$0xf]
        %v5548 = vld [vmem:[%s882 + $0x27c] sm:$0xf]
        %v5549 = vld [vmem:[%s882 + $0x280] sm:$0xf]
        %v5550 = vld [vmem:[%s882 + $0x284] sm:$0xf]
        %v5551 = vld [vmem:[%s882 + $0x288] sm:$0xf]
        %v5552 = vld [vmem:[%s882 + $0x28c] sm:$0xf]
        %v5553 = vld [vmem:[%s882 + $0x290] sm:$0xf]
        %v5554 = vld [vmem:[%s882 + $0x294] sm:$0xf]
        %v5555 = vld [vmem:[%s882 + $0x298] sm:$0xf]
        %v5556 = vld [vmem:[%s882 + $0x29c] sm:$0xf]
        %v5557 = vld [vmem:[%s882 + $0x2a0] sm:$0xf]
        %v5558 = vld [vmem:[%s882 + $0x2a4] sm:$0xf]
        %v5559 = vld [vmem:[%s882 + $0x2a8] sm:$0xf]
        %v5560 = vld [vmem:[%s882 + $0x2ac] sm:$0xf]
        %v5561 = vld [vmem:[%s882 + $0x2b0] sm:$0xf]
        %v5562 = vld [vmem:[%s882 + $0x2b4] sm:$0xf]
        %v5563 = vld [vmem:[%s882 + $0x2b8] sm:$0xf]
        %v5564 = vld [vmem:[%s882 + $0x2bc] sm:$0xf]
        %v5565 = vld [vmem:[%s882 + $0x2c0] sm:$0xf]
        %v5566 = vld [vmem:[%s882 + $0x2c4] sm:$0xf]
        %v5567 = vld [vmem:[%s882 + $0x2c8] sm:$0xf]
        %v5568 = vld [vmem:[%s882 + $0x2cc] sm:$0xf]
        %v5569 = vld [vmem:[%s882 + $0x2d0] sm:$0xf]
        %v5570 = vld [vmem:[%s882 + $0x2d4] sm:$0xf]
        %v5571 = vld [vmem:[%s882 + $0x2d8] sm:$0xf]
        %v5572 = vld [vmem:[%s882 + $0x2dc] sm:$0xf]
        %v5573 = vld [vmem:[%s882 + $0x2e0] sm:$0xf]
        %v5574 = vld [vmem:[%s882 + $0x2e4] sm:$0xf]
        %v5575 = vld [vmem:[%s882 + $0x2e8] sm:$0xf]
        %v5576 = vld [vmem:[%s882 + $0x2ec] sm:$0xf]
        %v5577 = vld [vmem:[%s882 + $0x2f0] sm:$0xf]
        %v5578 = vld [vmem:[%s882 + $0x2f4] sm:$0xf]
        %v5579 = vld [vmem:[%s882 + $0x2f8] sm:$0xf]
        %v5580 = vld [vmem:[%s882 + $0x2fc] sm:$0xf]
        %v5581 = vld [vmem:[%s882 + $0x300] sm:$0xf]
        %v5582 = vld [vmem:[%s882 + $0x304] sm:$0xf]
        %v5583 = vld [vmem:[%s882 + $0x308] sm:$0xf]
        %v5584 = vld [vmem:[%s882 + $0x30c] sm:$0xf]
        %v5585 = vld [vmem:[%s882 + $0x310] sm:$0xf]
        %v5586 = vld [vmem:[%s882 + $0x314] sm:$0xf]
        %v5587 = vld [vmem:[%s882 + $0x318] sm:$0xf]
        %v5588 = vld [vmem:[%s882 + $0x31c] sm:$0xf]
        %v5589 = vld [vmem:[%s882 + $0x320] sm:$0xf]
        %v5590 = vld [vmem:[%s882 + $0x324] sm:$0xf]
        %v5591 = vld [vmem:[%s882 + $0x328] sm:$0xf]
        %v5592 = vld [vmem:[%s882 + $0x32c] sm:$0xf]
        %v5593 = vld [vmem:[%s882 + $0x330] sm:$0xf]
        %v5594 = vld [vmem:[%s882 + $0x334] sm:$0xf]
        %v5595 = vld [vmem:[%s882 + $0x338] sm:$0xf]
        %v5596 = vld [vmem:[%s882 + $0x33c] sm:$0xf]
        %v5597 = vld [vmem:[%s882 + $0x340] sm:$0xf]
        %v5598 = vld [vmem:[%s882 + $0x344] sm:$0xf]
        %v5599 = vld [vmem:[%s882 + $0x348] sm:$0xf]
        %v5600 = vld [vmem:[%s882 + $0x34c] sm:$0xf]
        %v5601 = vld [vmem:[%s882 + $0x350] sm:$0xf]
        %v5602 = vld [vmem:[%s882 + $0x354] sm:$0xf]
        %v5603 = vld [vmem:[%s882 + $0x358] sm:$0xf]
        %v5604 = vld [vmem:[%s882 + $0x35c] sm:$0xf]
        %v5605 = vld [vmem:[%s882 + $0x360] sm:$0xf]
        %v5606 = vld [vmem:[%s882 + $0x364] sm:$0xf]
        %v5607 = vld [vmem:[%s882 + $0x368] sm:$0xf]
        %v5608 = vld [vmem:[%s882 + $0x36c] sm:$0xf]
        %v5609 = vld [vmem:[%s882 + $0x370] sm:$0xf]
        %v5610 = vld [vmem:[%s882 + $0x374] sm:$0xf]
        %v5611 = vld [vmem:[%s882 + $0x378] sm:$0xf]
        %v5612 = vld [vmem:[%s882 + $0x37c] sm:$0xf]
        %v5613 = vld [vmem:[%s882 + $0x380] sm:$0xf]
        %v5614 = vld [vmem:[%s882 + $0x384] sm:$0xf]
        %v5615 = vld [vmem:[%s882 + $0x388] sm:$0xf]
        %v5616 = vld [vmem:[%s882 + $0x38c] sm:$0xf]
        %v5617 = vld [vmem:[%s882 + $0x390] sm:$0xf]
        %v5618 = vld [vmem:[%s882 + $0x394] sm:$0xf]
        %v5619 = vld [vmem:[%s882 + $0x398] sm:$0xf]
        %v5620 = vld [vmem:[%s882 + $0x39c] sm:$0xf]
        %v5621 = vld [vmem:[%s882 + $0x3a0] sm:$0xf]
        %v5622 = vld [vmem:[%s882 + $0x3a4] sm:$0xf]
        %v5623 = vld [vmem:[%s882 + $0x3a8] sm:$0xf]
        %v5624 = vld [vmem:[%s882 + $0x3ac] sm:$0xf]
        %v5625 = vld [vmem:[%s882 + $0x3b0] sm:$0xf]
        %v5626 = vld [vmem:[%s882 + $0x3b4] sm:$0xf]
        %v5627 = vld [vmem:[%s882 + $0x3b8] sm:$0xf]
        %v5628 = vld [vmem:[%s882 + $0x3bc] sm:$0xf]
        %v5629 = vld [vmem:[%s882 + $0x3c0] sm:$0xf]
        %v5630 = vld [vmem:[%s882 + $0x3c4] sm:$0xf]
        %v5631 = vld [vmem:[%s882 + $0x3c8] sm:$0xf]
        %v5632 = vld [vmem:[%s882 + $0x3cc] sm:$0xf]
        %v5633 = vld [vmem:[%s882 + $0x3d0] sm:$0xf]
        %v5634 = vld [vmem:[%s882 + $0x3d4] sm:$0xf]
        %v5635 = vld [vmem:[%s882 + $0x3d8] sm:$0xf]
        %v5636 = vld [vmem:[%s882 + $0x3dc] sm:$0xf]
        %v5637 = vld [vmem:[%s882 + $0x3e0] sm:$0xf]
        %v5638 = vld [vmem:[%s882 + $0x3e4] sm:$0xf]
        %v5639 = vld [vmem:[%s882 + $0x3e8] sm:$0xf]
        %v5640 = vld [vmem:[%s882 + $0x3ec] sm:$0xf]
        %v5641 = vld [vmem:[%s882 + $0x3f0] sm:$0xf]
        %v5642 = vld [vmem:[%s882 + $0x3f4] sm:$0xf]
        %v5643 = vld [vmem:[%s882 + $0x3f8] sm:$0xf]
        %v5644 = vld [vmem:[%s882 + $0x3fc] sm:$0xf]
        %v5645 = vld [vmem:[%s890] sm:$0x1]
        %v5647 = vlaneseq
        %v5648 = vshrl.u32 %v5647, 7
        %v5649 = vsub.s32 0, %v5648
        %v5650 = vrot.slane %v5645, %v5649
        %v5908 = vunpack.c.l.b16 %v5389
        %v5909 = vunpack.c.l.b16 %v5390
        %v5910 = vunpack.c.l.b16 %v5391
        %v5911 = vunpack.c.l.b16 %v5392
        %v5912 = vunpack.c.l.b16 %v5393
        %v5913 = vunpack.c.l.b16 %v5394
        %v5914 = vunpack.c.l.b16 %v5395
        %v5915 = vunpack.c.l.b16 %v5396
        %v5916 = vunpack.c.l.b16 %v5397
        %v5917 = vunpack.c.l.b16 %v5398
        %v5918 = vunpack.c.l.b16 %v5399
        %v5919 = vunpack.c.l.b16 %v5400
        %v5920 = vunpack.c.l.b16 %v5401
        %v5921 = vunpack.c.l.b16 %v5402
        %v5922 = vunpack.c.l.b16 %v5403
        %v5923 = vunpack.c.l.b16 %v5404
        %v5924 = vunpack.c.l.b16 %v5405
        %v5925 = vunpack.c.l.b16 %v5406
        %v5926 = vunpack.c.l.b16 %v5407
        %v5927 = vunpack.c.l.b16 %v5408
        %v5928 = vunpack.c.l.b16 %v5409
        %v5929 = vunpack.c.l.b16 %v5410
        %v5930 = vunpack.c.l.b16 %v5411
        %v5931 = vunpack.c.l.b16 %v5412
        %v5932 = vunpack.c.l.b16 %v5413
        %v5933 = vunpack.c.l.b16 %v5414
        %v5934 = vunpack.c.l.b16 %v5415
        %v5935 = vunpack.c.l.b16 %v5416
        %v5936 = vunpack.c.l.b16 %v5417
        %v5937 = vunpack.c.l.b16 %v5418
        %v5938 = vunpack.c.l.b16 %v5419
        %v5939 = vunpack.c.l.b16 %v5420
        %v5940 = vunpack.c.l.b16 %v5421
        %v5941 = vunpack.c.l.b16 %v5422
        %v5942 = vunpack.c.l.b16 %v5423
        %v5943 = vunpack.c.l.b16 %v5424
        %v5944 = vunpack.c.l.b16 %v5425
        %v5945 = vunpack.c.l.b16 %v5426
        %v5946 = vunpack.c.l.b16 %v5427
        %v5947 = vunpack.c.l.b16 %v5428
        %v5948 = vunpack.c.l.b16 %v5429
        %v5949 = vunpack.c.l.b16 %v5430
        %v5950 = vunpack.c.l.b16 %v5431
        %v5951 = vunpack.c.l.b16 %v5432
        %v5952 = vunpack.c.l.b16 %v5433
        %v5953 = vunpack.c.l.b16 %v5434
        %v5954 = vunpack.c.l.b16 %v5435
        %v5955 = vunpack.c.l.b16 %v5436
        %v5956 = vunpack.c.l.b16 %v5437
        %v5957 = vunpack.c.l.b16 %v5438
        %v5958 = vunpack.c.l.b16 %v5439
        %v5959 = vunpack.c.l.b16 %v5440
        %v5960 = vunpack.c.l.b16 %v5441
        %v5961 = vunpack.c.l.b16 %v5442
        %v5962 = vunpack.c.l.b16 %v5443
        %v5963 = vunpack.c.l.b16 %v5444
        %v5964 = vunpack.c.l.b16 %v5445
        %v5965 = vunpack.c.l.b16 %v5446
        %v5966 = vunpack.c.l.b16 %v5447
        %v5967 = vunpack.c.l.b16 %v5448
        %v5968 = vunpack.c.l.b16 %v5449
        %v5969 = vunpack.c.l.b16 %v5450
        %v5970 = vunpack.c.l.b16 %v5451
        %v5971 = vunpack.c.l.b16 %v5452
        %v5972 = vunpack.c.l.b16 %v5453
        %v5973 = vunpack.c.l.b16 %v5454
        %v5974 = vunpack.c.l.b16 %v5455
        %v5975 = vunpack.c.l.b16 %v5456
        %v5976 = vunpack.c.l.b16 %v5457
        %v5977 = vunpack.c.l.b16 %v5458
        %v5978 = vunpack.c.l.b16 %v5459
        %v5979 = vunpack.c.l.b16 %v5460
        %v5980 = vunpack.c.l.b16 %v5461
        %v5981 = vunpack.c.l.b16 %v5462
        %v5982 = vunpack.c.l.b16 %v5463
        %v5983 = vunpack.c.l.b16 %v5464
        %v5984 = vunpack.c.l.b16 %v5465
        %v5985 = vunpack.c.l.b16 %v5466
        %v5986 = vunpack.c.l.b16 %v5467
        %v5987 = vunpack.c.l.b16 %v5468
        %v5988 = vunpack.c.l.b16 %v5469
        %v5989 = vunpack.c.l.b16 %v5470
        %v5990 = vunpack.c.l.b16 %v5471
        %v5991 = vunpack.c.l.b16 %v5472
        %v5992 = vunpack.c.l.b16 %v5473
        %v5993 = vunpack.c.l.b16 %v5474
        %v5994 = vunpack.c.l.b16 %v5475
        %v5995 = vunpack.c.l.b16 %v5476
        %v5996 = vunpack.c.l.b16 %v5477
        %v5997 = vunpack.c.l.b16 %v5478
        %v5998 = vunpack.c.l.b16 %v5479
        %v5999 = vunpack.c.l.b16 %v5480
        %v6000 = vunpack.c.l.b16 %v5481
        %v6001 = vunpack.c.l.b16 %v5482
        %v6002 = vunpack.c.l.b16 %v5483
        %v6003 = vunpack.c.l.b16 %v5484
        %v6004 = vunpack.c.l.b16 %v5485
        %v6005 = vunpack.c.l.b16 %v5486
        %v6006 = vunpack.c.l.b16 %v5487
        %v6007 = vunpack.c.l.b16 %v5488
        %v6008 = vunpack.c.l.b16 %v5489
        %v6009 = vunpack.c.l.b16 %v5490
        %v6010 = vunpack.c.l.b16 %v5491
        %v6011 = vunpack.c.l.b16 %v5492
        %v6012 = vunpack.c.l.b16 %v5493
        %v6013 = vunpack.c.l.b16 %v5494
        %v6014 = vunpack.c.l.b16 %v5495
        %v6015 = vunpack.c.l.b16 %v5496
        %v6016 = vunpack.c.l.b16 %v5497
        %v6017 = vunpack.c.l.b16 %v5498
        %v6018 = vunpack.c.l.b16 %v5499
        %v6019 = vunpack.c.l.b16 %v5500
        %v6020 = vunpack.c.l.b16 %v5501
        %v6021 = vunpack.c.l.b16 %v5502
        %v6022 = vunpack.c.l.b16 %v5503
        %v6023 = vunpack.c.l.b16 %v5504
        %v6024 = vunpack.c.l.b16 %v5505
        %v6025 = vunpack.c.l.b16 %v5506
        %v6026 = vunpack.c.l.b16 %v5507
        %v6027 = vunpack.c.l.b16 %v5508
        %v6028 = vunpack.c.l.b16 %v5509
        %v6029 = vunpack.c.l.b16 %v5510
        %v6030 = vunpack.c.l.b16 %v5511
        %v6031 = vunpack.c.l.b16 %v5512
        %v6032 = vunpack.c.l.b16 %v5513
        %v6033 = vunpack.c.l.b16 %v5514
        %v6034 = vunpack.c.l.b16 %v5515
        %v6035 = vunpack.c.l.b16 %v5516
        %v6036 = vunpack.c.l.b16 %v5517
        %v6037 = vunpack.c.l.b16 %v5518
        %v6038 = vunpack.c.l.b16 %v5519
        %v6039 = vunpack.c.l.b16 %v5520
        %v6040 = vunpack.c.l.b16 %v5521
        %v6041 = vunpack.c.l.b16 %v5522
        %v6042 = vunpack.c.l.b16 %v5523
        %v6043 = vunpack.c.l.b16 %v5524
        %v6044 = vunpack.c.l.b16 %v5525
        %v6045 = vunpack.c.l.b16 %v5526
        %v6046 = vunpack.c.l.b16 %v5527
        %v6047 = vunpack.c.l.b16 %v5528
        %v6048 = vunpack.c.l.b16 %v5529
        %v6049 = vunpack.c.l.b16 %v5530
        %v6050 = vunpack.c.l.b16 %v5531
        %v6051 = vunpack.c.l.b16 %v5532
        %v6052 = vunpack.c.l.b16 %v5533
        %v6053 = vunpack.c.l.b16 %v5534
        %v6054 = vunpack.c.l.b16 %v5535
        %v6055 = vunpack.c.l.b16 %v5536
        %v6056 = vunpack.c.l.b16 %v5537
        %v6057 = vunpack.c.l.b16 %v5538
        %v6058 = vunpack.c.l.b16 %v5539
        %v6059 = vunpack.c.l.b16 %v5540
        %v6060 = vunpack.c.l.b16 %v5541
        %v6061 = vunpack.c.l.b16 %v5542
        %v6062 = vunpack.c.l.b16 %v5543
        %v6063 = vunpack.c.l.b16 %v5544
        %v6064 = vunpack.c.l.b16 %v5545
        %v6065 = vunpack.c.l.b16 %v5546
        %v6066 = vunpack.c.l.b16 %v5547
        %v6067 = vunpack.c.l.b16 %v5548
        %v6068 = vunpack.c.l.b16 %v5549
        %v6069 = vunpack.c.l.b16 %v5550
        %v6070 = vunpack.c.l.b16 %v5551
        %v6071 = vunpack.c.l.b16 %v5552
        %v6072 = vunpack.c.l.b16 %v5553
        %v6073 = vunpack.c.l.b16 %v5554
        %v6074 = vunpack.c.l.b16 %v5555
        %v6075 = vunpack.c.l.b16 %v5556
        %v6076 = vunpack.c.l.b16 %v5557
        %v6077 = vunpack.c.l.b16 %v5558
        %v6078 = vunpack.c.l.b16 %v5559
        %v6079 = vunpack.c.l.b16 %v5560
        %v6080 = vunpack.c.l.b16 %v5561
        %v6081 = vunpack.c.l.b16 %v5562
        %v6082 = vunpack.c.l.b16 %v5563
        %v6083 = vunpack.c.l.b16 %v5564
        %v6084 = vunpack.c.l.b16 %v5565
        %v6085 = vunpack.c.l.b16 %v5566
        %v6086 = vunpack.c.l.b16 %v5567
        %v6087 = vunpack.c.l.b16 %v5568
        %v6088 = vunpack.c.l.b16 %v5569
        %v6089 = vunpack.c.l.b16 %v5570
        %v6090 = vunpack.c.l.b16 %v5571
        %v6091 = vunpack.c.l.b16 %v5572
        %v6092 = vunpack.c.l.b16 %v5573
        %v6093 = vunpack.c.l.b16 %v5574
        %v6094 = vunpack.c.l.b16 %v5575
        %v6095 = vunpack.c.l.b16 %v5576
        %v6096 = vunpack.c.l.b16 %v5577
        %v6097 = vunpack.c.l.b16 %v5578
        %v6098 = vunpack.c.l.b16 %v5579
        %v6099 = vunpack.c.l.b16 %v5580
        %v6100 = vunpack.c.l.b16 %v5581
        %v6101 = vunpack.c.l.b16 %v5582
        %v6102 = vunpack.c.l.b16 %v5583
        %v6103 = vunpack.c.l.b16 %v5584
        %v6104 = vunpack.c.l.b16 %v5585
        %v6105 = vunpack.c.l.b16 %v5586
        %v6106 = vunpack.c.l.b16 %v5587
        %v6107 = vunpack.c.l.b16 %v5588
        %v6108 = vunpack.c.l.b16 %v5589
        %v6109 = vunpack.c.l.b16 %v5590
        %v6110 = vunpack.c.l.b16 %v5591
        %v6111 = vunpack.c.l.b16 %v5592
        %v6112 = vunpack.c.l.b16 %v5593
        %v6113 = vunpack.c.l.b16 %v5594
        %v6114 = vunpack.c.l.b16 %v5595
        %v6115 = vunpack.c.l.b16 %v5596
        %v6116 = vunpack.c.l.b16 %v5597
        %v6117 = vunpack.c.l.b16 %v5598
        %v6118 = vunpack.c.l.b16 %v5599
        %v6119 = vunpack.c.l.b16 %v5600
        %v6120 = vunpack.c.l.b16 %v5601
        %v6121 = vunpack.c.l.b16 %v5602
        %v6122 = vunpack.c.l.b16 %v5603
        %v6123 = vunpack.c.l.b16 %v5604
        %v6124 = vunpack.c.l.b16 %v5605
        %v6125 = vunpack.c.l.b16 %v5606
        %v6126 = vunpack.c.l.b16 %v5607
        %v6127 = vunpack.c.l.b16 %v5608
        %v6128 = vunpack.c.l.b16 %v5609
        %v6129 = vunpack.c.l.b16 %v5610
        %v6130 = vunpack.c.l.b16 %v5611
        %v6131 = vunpack.c.l.b16 %v5612
        %v6132 = vunpack.c.l.b16 %v5613
        %v6133 = vunpack.c.l.b16 %v5614
        %v6134 = vunpack.c.l.b16 %v5615
        %v6135 = vunpack.c.l.b16 %v5616
        %v6136 = vunpack.c.l.b16 %v5617
        %v6137 = vunpack.c.l.b16 %v5618
        %v6138 = vunpack.c.l.b16 %v5619
        %v6139 = vunpack.c.l.b16 %v5620
        %v6140 = vunpack.c.l.b16 %v5621
        %v6141 = vunpack.c.l.b16 %v5622
        %v6142 = vunpack.c.l.b16 %v5623
        %v6143 = vunpack.c.l.b16 %v5624
        %v6144 = vunpack.c.l.b16 %v5625
        %v6145 = vunpack.c.l.b16 %v5626
        %v6146 = vunpack.c.l.b16 %v5627
        %v6147 = vunpack.c.l.b16 %v5628
        %v6148 = vunpack.c.l.b16 %v5629
        %v6149 = vunpack.c.l.b16 %v5630
        %v6150 = vunpack.c.l.b16 %v5631
        %v6151 = vunpack.c.l.b16 %v5632
        %v6152 = vunpack.c.l.b16 %v5633
        %v6153 = vunpack.c.l.b16 %v5634
        %v6154 = vunpack.c.l.b16 %v5635
        %v6155 = vunpack.c.l.b16 %v5636
        %v6156 = vunpack.c.l.b16 %v5637
        %v6157 = vunpack.c.l.b16 %v5638
        %v6158 = vunpack.c.l.b16 %v5639
        %v6159 = vunpack.c.l.b16 %v5640
        %v6160 = vunpack.c.l.b16 %v5641
        %v6161 = vunpack.c.l.b16 %v5642
        %v6162 = vunpack.c.l.b16 %v5643
        %v6163 = vunpack.c.l.b16 %v5644
        %v6164 = vpack.c.b16 %v5909, %v5908
        %v6165 = vpack.c.b16 %v5911, %v5910
        %v6166 = vpack.c.b16 %v5913, %v5912
        %v6167 = vpack.c.b16 %v5915, %v5914
        %v6168 = vpack.c.b16 %v5917, %v5916
        %v6169 = vpack.c.b16 %v5919, %v5918
        %v6170 = vpack.c.b16 %v5921, %v5920
        %v6171 = vpack.c.b16 %v5923, %v5922
        %v6172 = vpack.c.b16 %v5925, %v5924
        %v6173 = vpack.c.b16 %v5927, %v5926
        %v6174 = vpack.c.b16 %v5929, %v5928
        %v6175 = vpack.c.b16 %v5931, %v5930
        %v6176 = vpack.c.b16 %v5933, %v5932
        %v6177 = vpack.c.b16 %v5935, %v5934
        %v6178 = vpack.c.b16 %v5937, %v5936
        %v6179 = vpack.c.b16 %v5939, %v5938
        %v6180 = vpack.c.b16 %v5941, %v5940
        %v6181 = vpack.c.b16 %v5943, %v5942
        %v6182 = vpack.c.b16 %v5945, %v5944
        %v6183 = vpack.c.b16 %v5947, %v5946
        %v6184 = vpack.c.b16 %v5949, %v5948
        %v6185 = vpack.c.b16 %v5951, %v5950
        %v6186 = vpack.c.b16 %v5953, %v5952
        %v6187 = vpack.c.b16 %v5955, %v5954
        %v6188 = vpack.c.b16 %v5957, %v5956
        %v6189 = vpack.c.b16 %v5959, %v5958
        %v6190 = vpack.c.b16 %v5961, %v5960
        %v6191 = vpack.c.b16 %v5963, %v5962
        %v6192 = vpack.c.b16 %v5965, %v5964
        %v6193 = vpack.c.b16 %v5967, %v5966
        %v6194 = vpack.c.b16 %v5969, %v5968
        %v6195 = vpack.c.b16 %v5971, %v5970
        %v6196 = vpack.c.b16 %v5973, %v5972
        %v6197 = vpack.c.b16 %v5975, %v5974
        %v6198 = vpack.c.b16 %v5977, %v5976
        %v6199 = vpack.c.b16 %v5979, %v5978
        %v6200 = vpack.c.b16 %v5981, %v5980
        %v6201 = vpack.c.b16 %v5983, %v5982
        %v6202 = vpack.c.b16 %v5985, %v5984
        %v6203 = vpack.c.b16 %v5987, %v5986
        %v6204 = vpack.c.b16 %v5989, %v5988
        %v6205 = vpack.c.b16 %v5991, %v5990
        %v6206 = vpack.c.b16 %v5993, %v5992
        %v6207 = vpack.c.b16 %v5995, %v5994
        %v6208 = vpack.c.b16 %v5997, %v5996
        %v6209 = vpack.c.b16 %v5999, %v5998
        %v6210 = vpack.c.b16 %v6001, %v6000
        %v6211 = vpack.c.b16 %v6003, %v6002
        %v6212 = vpack.c.b16 %v6005, %v6004
        %v6213 = vpack.c.b16 %v6007, %v6006
        %v6214 = vpack.c.b16 %v6009, %v6008
        %v6215 = vpack.c.b16 %v6011, %v6010
        %v6216 = vpack.c.b16 %v6013, %v6012
        %v6217 = vpack.c.b16 %v6015, %v6014
        %v6218 = vpack.c.b16 %v6017, %v6016
        %v6219 = vpack.c.b16 %v6019, %v6018
        %v6220 = vpack.c.b16 %v6021, %v6020
        %v6221 = vpack.c.b16 %v6023, %v6022
        %v6222 = vpack.c.b16 %v6025, %v6024
        %v6223 = vpack.c.b16 %v6027, %v6026
        %v6224 = vpack.c.b16 %v6029, %v6028
        %v6225 = vpack.c.b16 %v6031, %v6030
        %v6226 = vpack.c.b16 %v6033, %v6032
        %v6227 = vpack.c.b16 %v6035, %v6034
        %v6228 = vpack.c.b16 %v6037, %v6036
        %v6229 = vpack.c.b16 %v6039, %v6038
        %v6230 = vpack.c.b16 %v6041, %v6040
        %v6231 = vpack.c.b16 %v6043, %v6042
        %v6232 = vpack.c.b16 %v6045, %v6044
        %v6233 = vpack.c.b16 %v6047, %v6046
        %v6234 = vpack.c.b16 %v6049, %v6048
        %v6235 = vpack.c.b16 %v6051, %v6050
        %v6236 = vpack.c.b16 %v6053, %v6052
        %v6237 = vpack.c.b16 %v6055, %v6054
        %v6238 = vpack.c.b16 %v6057, %v6056
        %v6239 = vpack.c.b16 %v6059, %v6058
        %v6240 = vpack.c.b16 %v6061, %v6060
        %v6241 = vpack.c.b16 %v6063, %v6062
        %v6242 = vpack.c.b16 %v6065, %v6064
        %v6243 = vpack.c.b16 %v6067, %v6066
        %v6244 = vpack.c.b16 %v6069, %v6068
        %v6245 = vpack.c.b16 %v6071, %v6070
        %v6246 = vpack.c.b16 %v6073, %v6072
        %v6247 = vpack.c.b16 %v6075, %v6074
        %v6248 = vpack.c.b16 %v6077, %v6076
        %v6249 = vpack.c.b16 %v6079, %v6078
        %v6250 = vpack.c.b16 %v6081, %v6080
        %v6251 = vpack.c.b16 %v6083, %v6082
        %v6252 = vpack.c.b16 %v6085, %v6084
        %v6253 = vpack.c.b16 %v6087, %v6086
        %v6254 = vpack.c.b16 %v6089, %v6088
        %v6255 = vpack.c.b16 %v6091, %v6090
        %v6256 = vpack.c.b16 %v6093, %v6092
        %v6257 = vpack.c.b16 %v6095, %v6094
        %v6258 = vpack.c.b16 %v6097, %v6096
        %v6259 = vpack.c.b16 %v6099, %v6098
        %v6260 = vpack.c.b16 %v6101, %v6100
        %v6261 = vpack.c.b16 %v6103, %v6102
        %v6262 = vpack.c.b16 %v6105, %v6104
        %v6263 = vpack.c.b16 %v6107, %v6106
        %v6264 = vpack.c.b16 %v6109, %v6108
        %v6265 = vpack.c.b16 %v6111, %v6110
        %v6266 = vpack.c.b16 %v6113, %v6112
        %v6267 = vpack.c.b16 %v6115, %v6114
        %v6268 = vpack.c.b16 %v6117, %v6116
        %v6269 = vpack.c.b16 %v6119, %v6118
        %v6270 = vpack.c.b16 %v6121, %v6120
        %v6271 = vpack.c.b16 %v6123, %v6122
        %v6272 = vpack.c.b16 %v6125, %v6124
        %v6273 = vpack.c.b16 %v6127, %v6126
        %v6274 = vpack.c.b16 %v6129, %v6128
        %v6275 = vpack.c.b16 %v6131, %v6130
        %v6276 = vpack.c.b16 %v6133, %v6132
        %v6277 = vpack.c.b16 %v6135, %v6134
        %v6278 = vpack.c.b16 %v6137, %v6136
        %v6279 = vpack.c.b16 %v6139, %v6138
        %v6280 = vpack.c.b16 %v6141, %v6140
        %v6281 = vpack.c.b16 %v6143, %v6142
        %v6282 = vpack.c.b16 %v6145, %v6144
        %v6283 = vpack.c.b16 %v6147, %v6146
        %v6284 = vpack.c.b16 %v6149, %v6148
        %v6285 = vpack.c.b16 %v6151, %v6150
        %v6286 = vpack.c.b16 %v6153, %v6152
        %v6287 = vpack.c.b16 %v6155, %v6154
        %v6288 = vpack.c.b16 %v6157, %v6156
        %v6289 = vpack.c.b16 %v6159, %v6158
        %v6290 = vpack.c.b16 %v6161, %v6160
        %v6291 = vpack.c.b16 %v6163, %v6162
        %6420 = vmatprep.subr.bf16.mxu0 0
        %6421 = vmatpush1.bf16.msra.mxu0 %v6164
        %6422 = vmatprep.subr.bf16.mxu0 0
        %6423 = vmatpush1.bf16.msra.mxu0 %v6165
        %6424 = vmatprep.subr.bf16.mxu0 0
        %6425 = vmatpush1.bf16.msra.mxu0 %v6166
        %6426 = vmatprep.subr.bf16.mxu0 0
        %6427 = vmatpush1.bf16.msra.mxu0 %v6167
        %6428 = vmatprep.subr.bf16.mxu0 0
        %6429 = vmatpush1.bf16.msra.mxu0 %v6168
        %6430 = vmatprep.subr.bf16.mxu0 0
        %6431 = vmatpush1.bf16.msra.mxu0 %v6169
        %6432 = vmatprep.subr.bf16.mxu0 0
        %6433 = vmatpush1.bf16.msra.mxu0 %v6170
        %6434 = vmatprep.subr.bf16.mxu0 0
        %6435 = vmatpush1.bf16.msra.mxu0 %v6171
        %6436 = vmatprep.subr.bf16.mxu0 0
        %6437 = vmatpush1.bf16.msra.mxu0 %v6172
        %6438 = vmatprep.subr.bf16.mxu0 0
        %6439 = vmatpush1.bf16.msra.mxu0 %v6173
        %6440 = vmatprep.subr.bf16.mxu0 0
        %6441 = vmatpush1.bf16.msra.mxu0 %v6174
        %6442 = vmatprep.subr.bf16.mxu0 0
        %6443 = vmatpush1.bf16.msra.mxu0 %v6175
        %6444 = vmatprep.subr.bf16.mxu0 0
        %6445 = vmatpush1.bf16.msra.mxu0 %v6176
        %6446 = vmatprep.subr.bf16.mxu0 0
        %6447 = vmatpush1.bf16.msra.mxu0 %v6177
        %6448 = vmatprep.subr.bf16.mxu0 0
        %6449 = vmatpush1.bf16.msra.mxu0 %v6178
        %6450 = vmatprep.subr.bf16.mxu0 0
        %6451 = vmatpush1.bf16.msra.mxu0 %v6179
        %6452 = vmatprep.mubr.bf16.mxu0 %v5374
        %6453 = vmatmul.mubr.bf16.gmra.mrb[0].mxu0 %v5373
        %v6454 = vpop.f32.mrb[0].mxu0
        %v6455 = vadd.f32 %v5650, %v6454
        %v6456 = vpop.f32.mrb[0].mxu0
        %v6457 = vpop.f32.mrb[0].mxu0
        %v6458 = vpop.f32.mrb[0].mxu0
        %6459 = vdwg.mxu0
        %6460 = vmatprep.subr.bf16.mxu0 0
        %6461 = vmatpush1.bf16.msra.mxu0 %v6180
        %6462 = vmatprep.subr.bf16.mxu0 0
        %6463 = vmatpush1.bf16.msra.mxu0 %v6181
        %6464 = vmatprep.subr.bf16.mxu0 0
        %6465 = vmatpush1.bf16.msra.mxu0 %v6182
        %6466 = vmatprep.subr.bf16.mxu0 0
        %6467 = vmatpush1.bf16.msra.mxu0 %v6183
        %6468 = vmatprep.subr.bf16.mxu0 0
        %6469 = vmatpush1.bf16.msra.mxu0 %v6184
        %6470 = vmatprep.subr.bf16.mxu0 0
        %6471 = vmatpush1.bf16.msra.mxu0 %v6185
        %6472 = vmatprep.subr.bf16.mxu0 0
        %6473 = vmatpush1.bf16.msra.mxu0 %v6186
        %6474 = vmatprep.subr.bf16.mxu0 0
        %6475 = vmatpush1.bf16.msra.mxu0 %v6187
        %6476 = vmatprep.subr.bf16.mxu0 0
        %6477 = vmatpush1.bf16.msra.mxu0 %v6188
        %6478 = vmatprep.subr.bf16.mxu0 0
        %6479 = vmatpush1.bf16.msra.mxu0 %v6189
        %6480 = vmatprep.subr.bf16.mxu0 0
        %6481 = vmatpush1.bf16.msra.mxu0 %v6190
        %6482 = vmatprep.subr.bf16.mxu0 0
        %6483 = vmatpush1.bf16.msra.mxu0 %v6191
        %6484 = vmatprep.subr.bf16.mxu0 0
        %6485 = vmatpush1.bf16.msra.mxu0 %v6192
        %6486 = vmatprep.subr.bf16.mxu0 0
        %6487 = vmatpush1.bf16.msra.mxu0 %v6193
        %6488 = vmatprep.subr.bf16.mxu0 0
        %6489 = vmatpush1.bf16.msra.mxu0 %v6194
        %6490 = vmatprep.subr.bf16.mxu0 0
        %6491 = vmatpush1.bf16.msra.mxu0 %v6195
        %6492 = vmatprep.mubr.bf16.mxu0 %v5376
        %6493 = vmatmul.mubr.bf16.gmra.mrb[0].mxu0 %v5375
        %v6494 = vpop.f32.mrb[0].mxu0
        %v6495 = vadd.f32 %v6455, %v6494
        %v6496 = vpop.f32.mrb[0].mxu0
        %v6497 = vpop.f32.mrb[0].mxu0
        %v6498 = vpop.f32.mrb[0].mxu0
        %6499 = vdwg.mxu0
        %6500 = vmatprep.subr.bf16.mxu0 0
        %6501 = vmatpush1.bf16.msra.mxu0 %v6196
        %6502 = vmatprep.subr.bf16.mxu0 0
        %6503 = vmatpush1.bf16.msra.mxu0 %v6197
        %6504 = vmatprep.subr.bf16.mxu0 0
        %6505 = vmatpush1.bf16.msra.mxu0 %v6198
        %6506 = vmatprep.subr.bf16.mxu0 0
        %6507 = vmatpush1.bf16.msra.mxu0 %v6199
        %6508 = vmatprep.subr.bf16.mxu0 0
        %6509 = vmatpush1.bf16.msra.mxu0 %v6200
        %6510 = vmatprep.subr.bf16.mxu0 0
        %6511 = vmatpush1.bf16.msra.mxu0 %v6201
        %6512 = vmatprep.subr.bf16.mxu0 0
        %6513 = vmatpush1.bf16.msra.mxu0 %v6202
        %6514 = vmatprep.subr.bf16.mxu0 0
        %6515 = vmatpush1.bf16.msra.mxu0 %v6203
        %6516 = vmatprep.subr.bf16.mxu0 0
        %6517 = vmatpush1.bf16.msra.mxu0 %v6204
        %6518 = vmatprep.subr.bf16.mxu0 0
        %6519 = vmatpush1.bf16.msra.mxu0 %v6205
        %6520 = vmatprep.subr.bf16.mxu0 0
        %6521 = vmatpush1.bf16.msra.mxu0 %v6206
        %6522 = vmatprep.subr.bf16.mxu0 0
        %6523 = vmatpush1.bf16.msra.mxu0 %v6207
        %6524 = vmatprep.subr.bf16.mxu0 0
        %6525 = vmatpush1.bf16.msra.mxu0 %v6208
        %6526 = vmatprep.subr.bf16.mxu0 0
        %6527 = vmatpush1.bf16.msra.mxu0 %v6209
        %6528 = vmatprep.subr.bf16.mxu0 0
        %6529 = vmatpush1.bf16.msra.mxu0 %v6210
        %6530 = vmatprep.subr.bf16.mxu0 0
        %6531 = vmatpush1.bf16.msra.mxu0 %v6211
        %6532 = vmatprep.mubr.bf16.mxu0 %v5378
        %6533 = vmatmul.mubr.bf16.gmra.mrb[0].mxu0 %v5377
        %v6534 = vpop.f32.mrb[0].mxu0
        %v6535 = vadd.f32 %v6495, %v6534
        %v6536 = vpop.f32.mrb[0].mxu0
        %v6537 = vpop.f32.mrb[0].mxu0
        %v6538 = vpop.f32.mrb[0].mxu0
        %6539 = vdwg.mxu0
        %6540 = vmatprep.subr.bf16.mxu0 0
        %6541 = vmatpush1.bf16.msra.mxu0 %v6212
        %6542 = vmatprep.subr.bf16.mxu0 0
        %6543 = vmatpush1.bf16.msra.mxu0 %v6213
        %6544 = vmatprep.subr.bf16.mxu0 0
        %6545 = vmatpush1.bf16.msra.mxu0 %v6214
        %6546 = vmatprep.subr.bf16.mxu0 0
        %6547 = vmatpush1.bf16.msra.mxu0 %v6215
        %6548 = vmatprep.subr.bf16.mxu0 0
        %6549 = vmatpush1.bf16.msra.mxu0 %v6216
        %6550 = vmatprep.subr.bf16.mxu0 0
        %6551 = vmatpush1.bf16.msra.mxu0 %v6217
        %6552 = vmatprep.subr.bf16.mxu0 0
        %6553 = vmatpush1.bf16.msra.mxu0 %v6218
        %6554 = vmatprep.subr.bf16.mxu0 0
        %6555 = vmatpush1.bf16.msra.mxu0 %v6219
        %6556 = vmatprep.subr.bf16.mxu0 0
        %6557 = vmatpush1.bf16.msra.mxu0 %v6220
        %6558 = vmatprep.subr.bf16.mxu0 0
        %6559 = vmatpush1.bf16.msra.mxu0 %v6221
        %6560 = vmatprep.subr.bf16.mxu0 0
        %6561 = vmatpush1.bf16.msra.mxu0 %v6222
        %6562 = vmatprep.subr.bf16.mxu0 0
        %6563 = vmatpush1.bf16.msra.mxu0 %v6223
        %6564 = vmatprep.subr.bf16.mxu0 0
        %6565 = vmatpush1.bf16.msra.mxu0 %v6224
        %6566 = vmatprep.subr.bf16.mxu0 0
        %6567 = vmatpush1.bf16.msra.mxu0 %v6225
        %6568 = vmatprep.subr.bf16.mxu0 0
        %6569 = vmatpush1.bf16.msra.mxu0 %v6226
        %6570 = vmatprep.subr.bf16.mxu0 0
        %6571 = vmatpush1.bf16.msra.mxu0 %v6227
        %6572 = vmatprep.mubr.bf16.mxu0 %v5380
        %6573 = vmatmul.mubr.bf16.gmra.mrb[0].mxu0 %v5379
        %v6574 = vpop.f32.mrb[0].mxu0
        %v6575 = vadd.f32 %v6535, %v6574
        %v6576 = vpop.f32.mrb[0].mxu0
        %v6577 = vpop.f32.mrb[0].mxu0
        %v6578 = vpop.f32.mrb[0].mxu0
        %6579 = vdwg.mxu0
        %6580 = vmatprep.subr.bf16.mxu0 0
        %6581 = vmatpush1.bf16.msra.mxu0 %v6228
        %6582 = vmatprep.subr.bf16.mxu0 0
        %6583 = vmatpush1.bf16.msra.mxu0 %v6229
        %6584 = vmatprep.subr.bf16.mxu0 0
        %6585 = vmatpush1.bf16.msra.mxu0 %v6230
        %6586 = vmatprep.subr.bf16.mxu0 0
        %6587 = vmatpush1.bf16.msra.mxu0 %v6231
        %6588 = vmatprep.subr.bf16.mxu0 0
        %6589 = vmatpush1.bf16.msra.mxu0 %v6232
        %6590 = vmatprep.subr.bf16.mxu0 0
        %6591 = vmatpush1.bf16.msra.mxu0 %v6233
        %6592 = vmatprep.subr.bf16.mxu0 0
        %6593 = vmatpush1.bf16.msra.mxu0 %v6234
        %6594 = vmatprep.subr.bf16.mxu0 0
        %6595 = vmatpush1.bf16.msra.mxu0 %v6235
        %6596 = vmatprep.subr.bf16.mxu0 0
        %6597 = vmatpush1.bf16.msra.mxu0 %v6236
        %6598 = vmatprep.subr.bf16.mxu0 0
        %6599 = vmatpush1.bf16.msra.mxu0 %v6237
        %6600 = vmatprep.subr.bf16.mxu0 0
        %6601 = vmatpush1.bf16.msra.mxu0 %v6238
        %6602 = vmatprep.subr.bf16.mxu0 0
        %6603 = vmatpush1.bf16.msra.mxu0 %v6239
        %6604 = vmatprep.subr.bf16.mxu0 0
        %6605 = vmatpush1.bf16.msra.mxu0 %v6240
        %6606 = vmatprep.subr.bf16.mxu0 0
        %6607 = vmatpush1.bf16.msra.mxu0 %v6241
        %6608 = vmatprep.subr.bf16.mxu0 0
        %6609 = vmatpush1.bf16.msra.mxu0 %v6242
        %6610 = vmatprep.subr.bf16.mxu0 0
        %6611 = vmatpush1.bf16.msra.mxu0 %v6243
        %6612 = vmatprep.mubr.bf16.mxu0 %v5382
        %6613 = vmatmul.mubr.bf16.gmra.mrb[0].mxu0 %v5381
        %v6614 = vpop.f32.mrb[0].mxu0
        %v6615 = vadd.f32 %v6575, %v6614
        %v6616 = vpop.f32.mrb[0].mxu0
        %v6617 = vpop.f32.mrb[0].mxu0
        %v6618 = vpop.f32.mrb[0].mxu0
        %6619 = vdwg.mxu0
        %6620 = vmatprep.subr.bf16.mxu0 0
        %6621 = vmatpush1.bf16.msra.mxu0 %v6244
        %6622 = vmatprep.subr.bf16.mxu0 0
        %6623 = vmatpush1.bf16.msra.mxu0 %v6245
        %6624 = vmatprep.subr.bf16.mxu0 0
        %6625 = vmatpush1.bf16.msra.mxu0 %v6246
        %6626 = vmatprep.subr.bf16.mxu0 0
        %6627 = vmatpush1.bf16.msra.mxu0 %v6247
        %6628 = vmatprep.subr.bf16.mxu0 0
        %6629 = vmatpush1.bf16.msra.mxu0 %v6248
        %6630 = vmatprep.subr.bf16.mxu0 0
        %6631 = vmatpush1.bf16.msra.mxu0 %v6249
        %6632 = vmatprep.subr.bf16.mxu0 0
        %6633 = vmatpush1.bf16.msra.mxu0 %v6250
        %6634 = vmatprep.subr.bf16.mxu0 0
        %6635 = vmatpush1.bf16.msra.mxu0 %v6251
        %6636 = vmatprep.subr.bf16.mxu0 0
        %6637 = vmatpush1.bf16.msra.mxu0 %v6252
        %6638 = vmatprep.subr.bf16.mxu0 0
        %6639 = vmatpush1.bf16.msra.mxu0 %v6253
        %6640 = vmatprep.subr.bf16.mxu0 0
        %6641 = vmatpush1.bf16.msra.mxu0 %v6254
        %6642 = vmatprep.subr.bf16.mxu0 0
        %6643 = vmatpush1.bf16.msra.mxu0 %v6255
        %6644 = vmatprep.subr.bf16.mxu0 0
        %6645 = vmatpush1.bf16.msra.mxu0 %v6256
        %6646 = vmatprep.subr.bf16.mxu0 0
        %6647 = vmatpush1.bf16.msra.mxu0 %v6257
        %6648 = vmatprep.subr.bf16.mxu0 0
        %6649 = vmatpush1.bf16.msra.mxu0 %v6258
        %6650 = vmatprep.subr.bf16.mxu0 0
        %6651 = vmatpush1.bf16.msra.mxu0 %v6259
        %6652 = vmatprep.mubr.bf16.mxu0 %v5384
        %6653 = vmatmul.mubr.bf16.gmra.mrb[0].mxu0 %v5383
        %v6654 = vpop.f32.mrb[0].mxu0
        %v6655 = vadd.f32 %v6615, %v6654
        %v6656 = vpop.f32.mrb[0].mxu0
        %v6657 = vpop.f32.mrb[0].mxu0
        %v6658 = vpop.f32.mrb[0].mxu0
        %6659 = vdwg.mxu0
        %6660 = vmatprep.subr.bf16.mxu0 0
        %6661 = vmatpush1.bf16.msra.mxu0 %v6260
        %6662 = vmatprep.subr.bf16.mxu0 0
        %6663 = vmatpush1.bf16.msra.mxu0 %v6261
        %6664 = vmatprep.subr.bf16.mxu0 0
        %6665 = vmatpush1.bf16.msra.mxu0 %v6262
        %6666 = vmatprep.subr.bf16.mxu0 0
        %6667 = vmatpush1.bf16.msra.mxu0 %v6263
        %6668 = vmatprep.subr.bf16.mxu0 0
        %6669 = vmatpush1.bf16.msra.mxu0 %v6264
        %6670 = vmatprep.subr.bf16.mxu0 0
        %6671 = vmatpush1.bf16.msra.mxu0 %v6265
        %6672 = vmatprep.subr.bf16.mxu0 0
        %6673 = vmatpush1.bf16.msra.mxu0 %v6266
        %6674 = vmatprep.subr.bf16.mxu0 0
        %6675 = vmatpush1.bf16.msra.mxu0 %v6267
        %6676 = vmatprep.subr.bf16.mxu0 0
        %6677 = vmatpush1.bf16.msra.mxu0 %v6268
        %6678 = vmatprep.subr.bf16.mxu0 0
        %6679 = vmatpush1.bf16.msra.mxu0 %v6269
        %6680 = vmatprep.subr.bf16.mxu0 0
        %6681 = vmatpush1.bf16.msra.mxu0 %v6270
        %6682 = vmatprep.subr.bf16.mxu0 0
        %6683 = vmatpush1.bf16.msra.mxu0 %v6271
        %6684 = vmatprep.subr.bf16.mxu0 0
        %6685 = vmatpush1.bf16.msra.mxu0 %v6272
        %6686 = vmatprep.subr.bf16.mxu0 0
        %6687 = vmatpush1.bf16.msra.mxu0 %v6273
        %6688 = vmatprep.subr.bf16.mxu0 0
        %6689 = vmatpush1.bf16.msra.mxu0 %v6274
        %6690 = vmatprep.subr.bf16.mxu0 0
        %6691 = vmatpush1.bf16.msra.mxu0 %v6275
        %6692 = vmatprep.mubr.bf16.mxu0 %v5386
        %6693 = vmatmul.mubr.bf16.gmra.mrb[0].mxu0 %v5385
        %v6694 = vpop.f32.mrb[0].mxu0
        %v6695 = vadd.f32 %v6655, %v6694
        %v6696 = vpop.f32.mrb[0].mxu0
        %v6697 = vpop.f32.mrb[0].mxu0
        %v6698 = vpop.f32.mrb[0].mxu0
        %6699 = vdwg.mxu0
        %6700 = vmatprep.subr.bf16.mxu0 0
        %6701 = vmatpush1.bf16.msra.mxu0 %v6276
        %6702 = vmatprep.subr.bf16.mxu0 0
        %6703 = vmatpush1.bf16.msra.mxu0 %v6277
        %6704 = vmatprep.subr.bf16.mxu0 0
        %6705 = vmatpush1.bf16.msra.mxu0 %v6278
        %6706 = vmatprep.subr.bf16.mxu0 0
        %6707 = vmatpush1.bf16.msra.mxu0 %v6279
        %6708 = vmatprep.subr.bf16.mxu0 0
        %6709 = vmatpush1.bf16.msra.mxu0 %v6280
        %6710 = vmatprep.subr.bf16.mxu0 0
        %6711 = vmatpush1.bf16.msra.mxu0 %v6281
        %6712 = vmatprep.subr.bf16.mxu0 0
        %6713 = vmatpush1.bf16.msra.mxu0 %v6282
        %6714 = vmatprep.subr.bf16.mxu0 0
        %6715 = vmatpush1.bf16.msra.mxu0 %v6283
        %6716 = vmatprep.subr.bf16.mxu0 0
        %6717 = vmatpush1.bf16.msra.mxu0 %v6284
        %6718 = vmatprep.subr.bf16.mxu0 0
        %6719 = vmatpush1.bf16.msra.mxu0 %v6285
        %6720 = vmatprep.subr.bf16.mxu0 0
        %6721 = vmatpush1.bf16.msra.mxu0 %v6286
        %6722 = vmatprep.subr.bf16.mxu0 0
        %6723 = vmatpush1.bf16.msra.mxu0 %v6287
        %6724 = vmatprep.subr.bf16.mxu0 0
        %6725 = vmatpush1.bf16.msra.mxu0 %v6288
        %6726 = vmatprep.subr.bf16.mxu0 0
        %6727 = vmatpush1.bf16.msra.mxu0 %v6289
        %6728 = vmatprep.subr.bf16.mxu0 0
        %6729 = vmatpush1.bf16.msra.mxu0 %v6290
        %6730 = vmatprep.subr.bf16.mxu0 0
        %6731 = vmatpush1.bf16.msra.mxu0 %v6291
        %6732 = vmatprep.mubr.bf16.mxu0 %v5388
        %6733 = vmatmul.mubr.bf16.gmra.mrb[0].mxu0 %v5387
        %v6734 = vpop.f32.mrb[0].mxu0
        %v6735 = vadd.f32 %v6695, %v6734
        %v6736 = vpop.f32.mrb[0].mxu0
        %v6737 = vpop.f32.mrb[0].mxu0
        %v6738 = vpop.f32.mrb[0].mxu0
        %6739 = vdwg.mxu0
        %v6740 = vadd.f32 %v4175, %v6735
        %v6741 = vld [vmem:[%s1029 + $0x4] sm:$0x1]
        %v6742 = vld [vmem:[%s1029 + $0x5] sm:$0x1]
        %6743 = vadd.xlane.f32.xlu0 %v6740
        %v6744 = vpop.xlane.xlu0 %6743
        %v6745 = vmul.f32 %v6744, %v3908
        %v6746 = vsub.f32 %v6740, %v6745
        %v6747 = vmul.f32 %v6746, %v6746
        %6748 = vadd.xlane.f32.xlu0 %v6747
        %v6749 = vpop.xlane.xlu0 %6748
        %v6750 = vmul.f32 %v6749, %v3908
        %v6751 = vadd.f32 %v6750, 1e-05
        %v6752 = vrsqrt.pop %v6751
        %v6753 = vmul.f32 %v6746, %v6752
        %v6754 = vlaneseq
        %v6755 = vshrl.u32 %v6754, 7
        %v6756 = vsub.s32 0, %v6755
        %v6757 = vrot.slane %v6741, %v6756
        %v6758 = vmul.f32 %v6753, %v6757
        %v6759 = vlaneseq
        %v6760 = vshrl.u32 %v6759, 7
        %v6761 = vsub.s32 0, %v6760
        %v6762 = vrot.slane %v6742, %v6761
        %v6763 = vadd.f32 %v6758, %v6762
        %6764 = vst [vmem:[#allocation2] sm:$0xff] %v6763
        %p6765 = scmp.eq.s32.totalorder %s55, 1
        // Predicated region
        $region141: #{decoder_forward.1} parent=91 // pred_check
          %p6766 = pneg %p6765
        $region142: #{decoder_forward.1} parent=91 // pred_check_branch
          %6768 = sbr.rel (%p6766) target = $region144
        $region143: #{decoder_forward.1} parent=91 // pred_region
          %v6769 = vpack.c.bf16 %v6763, %v6763
          %v6770 = vld [vmem:[#allocation20] sm:$0xf]
          %v6771 = vld [vmem:[#allocation20 + $0x4] sm:$0xf]
          %v6772 = vld [vmem:[#allocation20 + $0x8] sm:$0xf]
          %v6773 = vld [vmem:[#allocation20 + $0xc] sm:$0xf]
          %v6774 = vld [vmem:[#allocation20 + $0x10] sm:$0xf]
          %v6775 = vld [vmem:[#allocation20 + $0x14] sm:$0xf]
          %v6776 = vld [vmem:[#allocation20 + $0x18] sm:$0xf]
          %v6777 = vld [vmem:[#allocation20 + $0x1c] sm:$0xf]
          %v6778 = vld [vmem:[#allocation20 + $0x20] sm:$0xf]
          %v6779 = vld [vmem:[#allocation20 + $0x24] sm:$0xf]
          %v6780 = vld [vmem:[#allocation20 + $0x28] sm:$0xf]
          %v6781 = vld [vmem:[#allocation20 + $0x2c] sm:$0xf]
          %v6782 = vld [vmem:[#allocation20 + $0x30] sm:$0xf]
          %v6783 = vld [vmem:[#allocation20 + $0x34] sm:$0xf]
          %v6784 = vld [vmem:[#allocation20 + $0x38] sm:$0xf]
          %v6785 = vld [vmem:[#allocation20 + $0x3c] sm:$0xf]
          %v6786 = vld [vmem:[%s17] sm:$0x1]
          %v6788 = vlaneseq
          %v6789 = vshrl.u32 %v6788, 7
          %v6790 = vsub.s32 0, %v6789
          %v6791 = vrot.slane %v6786, %v6790
          %v6809 = vunpack.c.l.b16 %v6770
          %v6810 = vunpack.c.l.b16 %v6771
          %v6811 = vunpack.c.l.b16 %v6772
          %v6812 = vunpack.c.l.b16 %v6773
          %v6813 = vunpack.c.l.b16 %v6774
          %v6814 = vunpack.c.l.b16 %v6775
          %v6815 = vunpack.c.l.b16 %v6776
          %v6816 = vunpack.c.l.b16 %v6777
          %v6817 = vunpack.c.l.b16 %v6778
          %v6818 = vunpack.c.l.b16 %v6779
          %v6819 = vunpack.c.l.b16 %v6780
          %v6820 = vunpack.c.l.b16 %v6781
          %v6821 = vunpack.c.l.b16 %v6782
          %v6822 = vunpack.c.l.b16 %v6783
          %v6823 = vunpack.c.l.b16 %v6784
          %v6824 = vunpack.c.l.b16 %v6785
          %v6825 = vpack.c.b16 %v6810, %v6809
          %v6826 = vpack.c.b16 %v6812, %v6811
          %v6827 = vpack.c.b16 %v6814, %v6813
          %v6828 = vpack.c.b16 %v6816, %v6815
          %v6829 = vpack.c.b16 %v6818, %v6817
          %v6830 = vpack.c.b16 %v6820, %v6819
          %v6831 = vpack.c.b16 %v6822, %v6821
          %v6832 = vpack.c.b16 %v6824, %v6823
          %6841 = vmatprep.subr.bf16.mxu0 0
          %6842 = vmatpush1.bf16.msra.mxu0 %v6825
          %6843 = vmatprep.subr.bf16.mxu0 0
          %6844 = vmatpush1.bf16.msra.mxu0 %v6826
          %6845 = vmatprep.subr.bf16.mxu0 0
          %6846 = vmatpush1.bf16.msra.mxu0 %v6827
          %6847 = vmatprep.subr.bf16.mxu0 0
          %6848 = vmatpush1.bf16.msra.mxu0 %v6828
          %6849 = vmatprep.subr.bf16.mxu0 0
          %6850 = vmatpush1.bf16.msra.mxu0 %v6829
          %6851 = vmatprep.subr.bf16.mxu0 0
          %6852 = vmatpush1.bf16.msra.mxu0 %v6830
          %6853 = vmatprep.subr.bf16.mxu0 0
          %6854 = vmatpush1.bf16.msra.mxu0 %v6831
          %6855 = vmatprep.subr.bf16.mxu0 0
          %6856 = vmatpush1.bf16.msra.mxu0 %v6832
          %6857 = vmatprep.subr.bf16.mxu0 0
          %6858 = vmatpush1.bf16.msra.mxu0 0
          %6859 = vmatprep.subr.bf16.mxu0 0
          %6860 = vmatpush1.bf16.msra.mxu0 0
          %6861 = vmatprep.subr.bf16.mxu0 0
          %6862 = vmatpush1.bf16.msra.mxu0 0
          %6863 = vmatprep.subr.bf16.mxu0 0
          %6864 = vmatpush1.bf16.msra.mxu0 0
          %6865 = vmatprep.subr.bf16.mxu0 0
          %6866 = vmatpush1.bf16.msra.mxu0 0
          %6867 = vmatprep.subr.bf16.mxu0 0
          %6868 = vmatpush1.bf16.msra.mxu0 0
          %6869 = vmatprep.subr.bf16.mxu0 0
          %6870 = vmatpush1.bf16.msra.mxu0 0
          %6871 = vmatprep.subr.bf16.mxu0 0
          %6872 = vmatpush1.bf16.msra.mxu0 0
          %6873 = vmatprep.mubr.bf16.mxu0 0
          %6874 = vmatmul.mubr.bf16.gmra.mrb[0].mxu0 %v6769
          %v6875 = vpop.f32.mrb[0].mxu0
          %v6876 = vadd.f32 %v6791, %v6875
          %v6877 = vpop.f32.mrb[0].mxu0
          %v6878 = vpop.f32.mrb[0].mxu0
          %v6879 = vpop.f32.mrb[0].mxu0
          %6880 = vdwg.mxu0
          %6881 = vst [vmem:[%s1008] sm:$0xff] %v6876
        $region144: #{decoder_forward.1} parent=91 // pred_fallthru
          _
        %s6882 = sand.u32 %s523, 1
        %s6883 = scalar_lea.sflag [#allocation5], %s6882
        %s6884 = sand.u32 %s523, 1
        %s6885 = smul.addr %s6884, 8
        %s6886 = scalar_lea.vmem [#allocation21], %s6885
        // Predicated region
        $region145: #{decoder_forward.1} parent=91 // pred_check
          %p6887 = pneg %p533
        $region146: #{decoder_forward.1} parent=91 // pred_check_branch
          %6889 = sbr.rel (%p6887) target = $region148
        $region147: #{decoder_forward.1} parent=91 // pred_region
          %s6891 = ssub.s32 128, 128
          %6892 = vsyncadd %s6883, %s6891
          %s6893 = smul.addr %s54, 128
          %s6894 = scalar_lea.hbm %s18, %s6893
          %s6896 = sshll.u32 %s6886, 4
          %s6897 = int_to_ptr.vmem [resolvable:$true] %s6896
          %6899 = dma.vmem_to_hbm [thread:$0]  %s6897, 128, %s6894, %s6883
        $region148: #{decoder_forward.1} parent=91 // pred_fallthru
          _
      $region92: #{decoder_forward.1} parent=5 // pred_fallthru
        _
      %p6900 = scmp.le.s32.totalorder 2, %s45
      // Predicated region
      $region149: #{decoder_forward.1} parent=5 // pred_check
        %p6901 = pneg %p6900
      $region150: #{decoder_forward.1} parent=5 // pred_check_branch
        %6903 = sbr.rel (%p6901) target = $region152
      $region151: #{decoder_forward.1} parent=5 // pred_region
        %s6904 = ssub.s32 %s45, 2
        // Predicated region
        $region153: #{decoder_forward.1} parent=151 // pred_check
          %p6905 = pneg %p539
        $region154: #{decoder_forward.1} parent=151 // pred_check_branch
          %6907 = sbr.rel (%p6905) target = $region156
        $region155: #{decoder_forward.1} parent=151 // pred_region
          %s6908 = sand.u32 %s524, 1
          %s6909 = scalar_lea.sflag [#allocation5], %s6908
          %s6910 = sand.u32 %s524, 1
          %s6911 = smul.addr %s6910, 8
          %s6912 = scalar_lea.vmem [#allocation21], %s6911
          %6913 = dma.done %s6909, 128
        $region156: #{decoder_forward.1} parent=151 // pred_fallthru
          _
      $region152: #{decoder_forward.1} parent=5 // pred_fallthru
        _
    $region6: #{decoder_forward.1} parent=1 // loop_footer
      %s49 = sadd.s32 1, %s45
    $region7: #{decoder_forward.1} parent=1 // loop_footer_branch
      %44 = sbr.rel target = $region3
    $region8: #{decoder_forward.1} parent=1 // loop_exit
      _
    %6914 = vsyncpa [#allocation4], 1
    %s6915 = scalar_lea.sflag [#allocation4], 1
    %6916 = vsyncpa %s6915, 1
    %6917 = vsyncpa [#allocation7], 1
    %s6918 = scalar_lea.sflag [#allocation7], 1
    %6919 = vsyncpa %s6918, 1
    %6920 = vsyncpa [#allocation10], 1
    %s6921 = scalar_lea.sflag [#allocation10], 1
    %6922 = vsyncpa %s6921, 1
    %6923 = vsyncpa [#allocation13], 1
    %s6924 = scalar_lea.sflag [#allocation13], 1
    %6925 = vsyncpa %s6924, 1
    %6926 = vsyncpa [#allocation16], 1
    %s6927 = scalar_lea.sflag [#allocation16], 1
    %6928 = vsyncpa %s6927, 1
    %6929 = vsyncpa [#allocation19], 1
    %s6930 = scalar_lea.sflag [#allocation19], 1
    %6931 = vsyncpa %s6930, 1
    %6932 = vsyncpa [#allocation5], 1
    %s6933 = scalar_lea.sflag [#allocation5], 1
    %6934 = vsyncpa %s6933, 1

</llo_original>
